<compile_context>
chip_gen: v7x
topology: tpu7x:2x2x1
jax: 0.10.0
libtpu: 0.0.40
codegen_flags: <defaults>
</compile_context>

<pallas_src>
import functools

import numpy as np

import jax
import jax.numpy as jnp
from jax.experimental import pallas as pl
from jax.experimental.pallas import tpu as pltpu


# ----------------------------------------------------------------------------
# small helpers
# ----------------------------------------------------------------------------
def _full_spec(arr):
    nd = arr.ndim
    return pl.BlockSpec(arr.shape, lambda *_, _nd=nd: (0,) * _nd)


def _pick_window_block(num_windows, bias_windows):
    """Windows per attention grid step: divides num_windows (and the mask's
    window count so the bias index_map stays block-aligned), leaves >=2 grid
    steps when possible, capped at 32 (qkv scratch keeps vregs small)."""
    cap = min(32, max(1, num_windows // 2))
    best = 1
    for d in range(1, num_windows + 1):
        if num_windows % d == 0 and d <= cap and (bias_windows == 1 or bias_windows % d == 0):
            best = d
    return best


def _pick_row_tile(rows, cap_rows=128, min_steps=4):
    """Row tile for the MLP kernel: divides rows, multiple of 8 (sublanes),
    leaves >= min_steps grid steps when possible, capped at 128 rows so the
    GELU temporaries do not spill."""
    cap = min(cap_rows, max(8, rows // min_steps))
    best = None
    for d in range(8, rows + 1, 8):
        if rows % d == 0 and d <= cap:
            best = d
    return best if best is not None else rows


# ----------------------------------------------------------------------------
# Pallas kernels (hot paths: W-MSA attention, and LN+MLP)
# ----------------------------------------------------------------------------
def _make_attn_kernel(num_heads):
    """WB windows per grid step: norm1 -> qkv (one bf16 matmul, parked in a
    bf16 VMEM scratch) -> per-head window-batched softmax attention (single
    pre-combined rel-bias+mask add) -> heads concatenated in registers ->
    single full-K projection -> residual add."""

    def kernel(x_ref, bias_ref, g1_ref, b1_ref, qkvw_ref, qkvb_ref,
               projw_ref, projb_ref, o_ref, qkv_scr):
        x = x_ref[...]                                  # (WB, N, C) f32
        WB, N, C = x.shape
        hd = C // num_heads

        # LayerNorm (norm1), eps=1e-5 (torch default), biased variance. f32.
        mu = jnp.mean(x, axis=-1, keepdims=True)
        var = jnp.mean((x - mu) ** 2, axis=-1, keepdims=True)
        xn = (x - mu) * jax.lax.rsqrt(var + 1e-5)
        xn = xn * g1_ref[...] + b1_ref[...]             # g1/b1: (1, 1, C)

        # qkv projection: one (WB*N, C) @ (C, 3C) bf16 matmul, f32 accumulate.
        # Attention scale pre-folded into the Q columns of weight/bias.
        xb = xn.reshape(WB * N, C).astype(jnp.bfloat16)
        qkv = jnp.dot(xb, qkvw_ref[...], preferred_element_type=jnp.float32)
        qkv = qkv + qkvb_ref[...]                       # (WB*N, 3C) f32
        # Park qkv in VMEM as bf16 so the vreg file never holds (WB*N, 3C).
        qkv_scr[...] = qkv.astype(jnp.bfloat16).reshape(WB, N, 3 * C)

        bias = bias_ref[...]                            # (1|WB, nH, N, N) f32
        heads = []
        # TODO(synk): fuse the head loop into one lane-packed score matmul.
        for h in range(num_heads):
            q = qkv_scr[:, :, h * hd:(h + 1) * hd]                      # bf16
            k = qkv_scr[:, :, C + h * hd:C + (h + 1) * hd]              # bf16
            v = qkv_scr[:, :, 2 * C + h * hd:2 * C + (h + 1) * hd]      # bf16
            # window-batched scores: (WB, N, N), f32
            s = jnp.einsum('bnd,bmd->bnm', q, k, preferred_element_type=jnp.float32)
            s = s + bias[:, h]                          # rel bias + shift mask
            s = s - jnp.max(s, axis=-1, keepdims=True)
            e = jnp.exp(s)
            p = e * pl.reciprocal(jnp.sum(e, axis=-1, keepdims=True), approx=True)
            heads.append(jnp.einsum('bnm,bmd->bnd', p.astype(jnp.bfloat16), v,
                                    preferred_element_type=jnp.float32))

        # Heads concatenated in registers (no masked scratch stores), then one
        # full-K (C) output projection over all WB*N rows.
        attn = jnp.concatenate(heads, axis=-1)          # (WB, N, C) f32
        y = jnp.dot(attn.reshape(WB * N, C).astype(jnp.bfloat16), projw_ref[...],
                    preferred_element_type=jnp.float32)
        y = y + projb_ref[...]
        o_ref[...] = x + y.reshape(WB, N, C)

    return kernel


def _mlp_kernel(x_ref, g2_ref, b2_ref, w1_ref, bb1_ref, w2_ref, bb2_ref, o_ref):
    """Tile of token rows: norm2 -> fc1 -> tanh-GELU -> fc2 -> residual.
    Matmuls in bf16 with f32 accumulation; everything else f32."""
    x = x_ref[...]                                      # (TM, C) f32
    mu = jnp.mean(x, axis=-1, keepdims=True)
    var = jnp.mean((x - mu) ** 2, axis=-1, keepdims=True)
    xn = (x - mu) * jax.lax.rsqrt(var + 1e-5)
    xn = xn * g2_ref[...] + b2_ref[...]
    h = jnp.dot(xn.astype(jnp.bfloat16), w1_ref[...],
                preferred_element_type=jnp.float32) + bb1_ref[...]
    # tanh-GELU: EUP tanh + a few VALU ops (~1e-3 deviation from exact-erf GELU)
    h = 0.5 * h * (1.0 + jnp.tanh(0.7978845608028654 * (h + 0.044715 * (h * h * h))))
    y = jnp.dot(h.astype(jnp.bfloat16), w2_ref[...],
                preferred_element_type=jnp.float32) + bb2_ref[...]
    o_ref[...] = x + y


# ----------------------------------------------------------------------------
# pallas_call wrappers
# ----------------------------------------------------------------------------
def window_attention(x_windows, bias, g1, b1, qkv_wt, qkv_b, proj_wt, proj_b,
                     num_heads, wb):
    NW, N, C = x_windows.shape
    nH = num_heads
    bias_nw = bias.shape[0]
    if bias_nw == 1:                                    # shift == 0: shared bias
        bias_spec = pl.BlockSpec((1, nH, N, N), lambda i: (0, 0, 0, 0))
    else:                                               # shifted: wb | nW
        nb = bias_nw // wb
        bias_spec = pl.BlockSpec((wb, nH, N, N), lambda i, _nb=nb: (i % _nb, 0, 0, 0))

    return pl.pallas_call(
        _make_attn_kernel(num_heads),
        out_shape=jax.ShapeDtypeStruct((NW, N, C), jnp.float32),
        grid=(NW // wb,),
        in_specs=[
            pl.BlockSpec((wb, N, C), lambda i: (i, 0, 0)),
            bias_spec,
            _full_spec(g1), _full_spec(b1),
            _full_spec(qkv_wt), _full_spec(qkv_b),
            _full_spec(proj_wt), _full_spec(proj_b),
        ],
        out_specs=pl.BlockSpec((wb, N, C), lambda i: (i, 0, 0)),
        scratch_shapes=[pltpu.VMEM((wb, N, 3 * C), jnp.bfloat16)],
        compiler_params=pltpu.CompilerParams(dimension_semantics=("parallel",)),
    )(x_windows, bias, g1, b1, qkv_wt, qkv_b, proj_wt, proj_b)


def mlp_block(x2, g2, b2, w1, bb1, w2, bb2, tile_rows):
    R, C = x2.shape
    return pl.pallas_call(
        _mlp_kernel,
        out_shape=jax.ShapeDtypeStruct((R, C), jnp.float32),
        grid=(R // tile_rows,),
        in_specs=[
            pl.BlockSpec((tile_rows, C), lambda i: (i, 0)),
            _full_spec(g2), _full_spec(b2),
            _full_spec(w1), _full_spec(bb1),
            _full_spec(w2), _full_spec(bb2),
        ],
        out_specs=pl.BlockSpec((tile_rows, C), lambda i: (i, 0)),
        compiler_params=pltpu.CompilerParams(dimension_semantics=("parallel",)),
    )(x2, g2, b2, w1, bb1, w2, bb2)


# ----------------------------------------------------------------------------
# plain-JAX glue: window partition / shift (TODO(synk): fold into BlockSpecs)
# ----------------------------------------------------------------------------
def window_partition(x, ws):
    B, H, W, C = x.shape
    x = x.reshape(B, H // ws, ws, W // ws, ws, C)
    x = jnp.transpose(x, (0, 1, 3, 2, 4, 5))
    return x.reshape(-1, ws * ws, C)


def window_reverse(windows, ws, H, W):
    B = windows.shape[0] // ((H // ws) * (W // ws))
    x = windows.reshape(B, H // ws, W // ws, ws, ws, -1)
    x = jnp.transpose(x, (0, 1, 3, 2, 4, 5))
    return x.reshape(B, H, W, -1)


# ----------------------------------------------------------------------------
# host-side (outside jit) parameter / bias preparation
# ----------------------------------------------------------------------------
def _relative_position_index_np(ws):
    coords = np.stack(np.meshgrid(np.arange(ws), np.arange(ws), indexing="ij"))
    coords_flat = coords.reshape(2, -1)
    rel = coords_flat[:, :, None] - coords_flat[:, None, :]
    rel = rel.transpose(1, 2, 0) + np.array([ws - 1, ws - 1])
    return rel[..., 0] * (2 * ws - 1) + rel[..., 1]            # (N, N)


def _shifted_window_mask_np(H, W, ws, shift):
    img = np.zeros((1, H, W, 1), np.float32)
    cnt = 0
    for h_sl in (slice(0, H - ws), slice(H - ws, H - shift), slice(H - shift, H)):
        for w_sl in (slice(0, W - ws), slice(W - ws, W - shift), slice(W - shift, W)):
            img[:, h_sl, w_sl, :] = float(cnt)
            cnt += 1
    mw = img.reshape(1, H // ws, ws, W // ws, ws, 1)
    mw = mw.transpose(0, 1, 3, 2, 4, 5).reshape(-1, ws * ws)   # (nW, N)
    am = mw[:, None, :] - mw[:, :, None]
    return np.where(am != 0, -100.0, 0.0).astype(np.float32)   # (nW, N, N)


def prepare_block_params(p, num_heads, ws, H, W, shift):
    """Torch-layout params -> kernel layout, done ONCE outside jit:
    pre-transposed bf16 weights, attention scale folded into Q, relative
    position bias + shifted-window mask pre-combined into one tensor."""
    C = int(p["proj_w"].shape[0])
    hd = C // num_heads
    N = ws * ws
    scale = hd ** -0.5

    q_scale = np.concatenate([np.full((C,), scale, np.float32),
                              np.ones((2 * C,), np.float32)])
    qkv_w = np.asarray(p["qkv_w"], np.float32) * q_scale[:, None]    # (3C, C)
    qkv_b = np.asarray(p["qkv_b"], np.float32) * q_scale

    rel_idx = _relative_position_index_np(ws).reshape(-1)
    rel_table = np.asarray(p["rel_table"], np.float32)               # ((2ws-1)^2, nH)
    rel = rel_table[rel_idx].reshape(N, N, num_heads).transpose(2, 0, 1)  # (nH, N, N)
    if shift > 0:
        mask = _shifted_window_mask_np(H, W, ws, shift)              # (nW, N, N)
        bias = rel[None] + mask[:, None]                             # (nW, nH, N, N)
    else:
        bias = rel[None]                                             # (1, nH, N, N)

    return dict(
        g1=jnp.asarray(p["g1"], jnp.float32).reshape(1, 1, C),
        b1=jnp.asarray(p["b1"], jnp.float32).reshape(1, 1, C),
        qkv_wt=jnp.asarray(qkv_w.T, jnp.bfloat16),                   # (C, 3C)
        qkv_b=jnp.asarray(qkv_b, jnp.float32).reshape(1, 3 * C),
        proj_wt=jnp.asarray(np.asarray(p["proj_w"], np.float32).T, jnp.bfloat16),
        proj_b=jnp.asarray(p["proj_b"], jnp.float32).reshape(1, C),
        bias=jnp.asarray(bias, jnp.float32),
        g2=jnp.asarray(p["g2"], jnp.float32).reshape(1, C),
        b2=jnp.asarray(p["b2"], jnp.float32).reshape(1, C),
        fc1_wt=jnp.asarray(np.asarray(p["fc1_w"], np.float32).T, jnp.bfloat16),
        fc1_b=jnp.asarray(p["fc1_b"], jnp.float32).reshape(1, -1),
        fc2_wt=jnp.asarray(np.asarray(p["fc2_w"], np.float32).T, jnp.bfloat16),
        fc2_b=jnp.asarray(p["fc2_b"], jnp.float32).reshape(1, C),
    )


# ----------------------------------------------------------------------------
# forward
# ----------------------------------------------------------------------------
def swin_block(x, H, W, p, ws, shift, num_heads):
    B_, L, C = x.shape
    nW = (H // ws) * (W // ws)
    NW = B_ * nW

    x_img = x.reshape(B_, H, W, C)
    if shift > 0:
        x_img = jnp.roll(x_img, shift=(-shift, -shift), axis=(1, 2))
    x_windows = window_partition(x_img, ws)                    # (NW, N, C)

    wb = _pick_window_block(NW, int(p["bias"].shape[0]))
    attn_windows = window_attention(
        x_windows, p["bias"], p["g1"], p["b1"],
        p["qkv_wt"], p["qkv_b"], p["proj_wt"], p["proj_b"],
        num_heads, wb)

    x_img = window_reverse(attn_windows, ws, H, W)
    if shift > 0:
        x_img = jnp.roll(x_img, shift=(shift, shift), axis=(1, 2))
    x = x_img.reshape(B_, L, C)

    # MLP (norm2 + fc1 + GELU + fc2 + residual) as a row-tiled Pallas kernel.
    R = B_ * L
    tile_rows = _pick_row_tile(R)
    x2 = mlp_block(x.reshape(R, C), p["g2"], p["b2"],
                   p["fc1_wt"], p["fc1_b"], p["fc2_wt"], p["fc2_b"], tile_rows)
    return x2.reshape(B_, L, C)


def space_transformer_forward(x, prepared, num_heads, ws):
    """x: (B, C, D, H, W) -> (B, C, D, H, W)  (matches the torch forward)."""
    B, C, D, H, W = x.shape
    # 'b c s h w -> (b s) (h w) c'
    x = jnp.transpose(x, (0, 2, 3, 4, 1)).reshape(B * D, H * W, C)
    for i, p in enumerate(prepared):
        shift = 0 if i % 2 == 0 else ws // 2
        x = swin_block(x, H, W, p, ws, shift, num_heads)
    # '(b p1) (h p2) c -> b c p1 h p2', p1=D, p2=W
    x = x.reshape(B, D, H, W, C)
    return jnp.transpose(x, (0, 4, 1, 2, 3))


# ----------------------------------------------------------------------------
# deterministic parameter init (PyTorch layout; converted ONCE host-side)
# ----------------------------------------------------------------------------
def init_params(key, dim, depth, num_heads, ws, hidden):
    blocks = []
    for d in range(depth):
        ks = jax.random.split(jax.random.fold_in(key, d), 5)
        blocks.append(dict(
            g1=jnp.ones((dim,), jnp.float32),
            b1=jnp.zeros((dim,), jnp.float32),
            qkv_w=0.02 * jax.random.normal(ks[0], (3 * dim, dim), jnp.float32),
            qkv_b=jnp.zeros((3 * dim,), jnp.float32),
            rel_table=0.02 * jax.random.normal(ks[1], ((2 * ws - 1) ** 2, num_heads), jnp.float32),
            proj_w=0.02 * jax.random.normal(ks[2], (dim, dim), jnp.float32),
            proj_b=jnp.zeros((dim,), jnp.float32),
            g2=jnp.ones((dim,), jnp.float32),
            b2=jnp.zeros((dim,), jnp.float32),
            fc1_w=0.02 * jax.random.normal(ks[3], (hidden, dim), jnp.float32),
            fc1_b=jnp.zeros((hidden,), jnp.float32),
            fc2_w=0.02 * jax.random.normal(ks[4], (dim, hidden), jnp.float32),
            fc2_b=jnp.zeros((dim,), jnp.float32),
        ))
    return blocks


if __name__ == "__main__":
    embedding_dim, num_layers, num_heads, window_size, hidden_dim = 32, 2, 4, 4, 64
    B, D, H, W = 2, 2, 8, 8

    key = jax.random.PRNGKey(0)
    kx, kp = jax.random.split(key)
    x = jax.random.normal(kx, (B, embedding_dim, D, H, W), jnp.float32)
    params = init_params(kp, embedding_dim, num_layers, num_heads, window_size, hidden_dim)

    # Hoisted out of jit: weight layout conversion + combined rel-bias/mask.
    prepared = [prepare_block_params(p, num_heads, window_size, H, W,
                                     0 if i % 2 == 0 else window_size // 2)
                for i, p in enumerate(params)]

    fwd = jax.jit(functools.partial(space_transformer_forward,
                                    num_heads=num_heads, ws=window_size))
    out = fwd(x, prepared)
    jax.block_until_ready(out)
    assert out.shape == (B, embedding_dim, D, H, W)
    assert bool(jnp.all(jnp.isfinite(out)))
    print("KERNEL_OK")
</pallas_src>

<mosaic_0001>
module attributes {stable_mosaic.version = 11 : i64} {
  func.func @kernel(%arg0: i32, %arg1: memref<8x16x32xf32, #tpu.memory_space<vmem>>, %arg2: memref<1x4x16x16xf32, #tpu.memory_space<vmem>>, %arg3: memref<1x1x32xf32, #tpu.memory_space<vmem>>, %arg4: memref<1x1x32xf32, #tpu.memory_space<vmem>>, %arg5: memref<32x96xbf16, #tpu.memory_space<vmem>>, %arg6: memref<1x96xf32, #tpu.memory_space<vmem>>, %arg7: memref<32x32xbf16, #tpu.memory_space<vmem>>, %arg8: memref<1x32xf32, #tpu.memory_space<vmem>>, %arg9: memref<8x16x32xf32, #tpu.memory_space<vmem>>, %arg10: memref<8x16x96xbf16, #tpu.memory_space<vmem>>) attributes {dimension_semantics = [#tpu.dimension_semantics<parallel>], iteration_bounds = array<i64: 2>, scalar_prefetch = 0 : i64, scratch_operands = 1 : i64, tpu.core_type = #tpu.core_type<tc>, window_params = [{transform_indices = @transform_0, window_bounds = array<i64: 8, 16, 32>}, {pipeline_mode = #tpu.pipeline_mode<synchronous>, transform_indices = @transform_1, window_bounds = array<i64: 1, 4, 16, 16>}, {pipeline_mode = #tpu.pipeline_mode<synchronous>, transform_indices = @transform_2, window_bounds = array<i64: 1, 1, 32>}, {pipeline_mode = #tpu.pipeline_mode<synchronous>, transform_indices = @transform_3, window_bounds = array<i64: 1, 1, 32>}, {pipeline_mode = #tpu.pipeline_mode<synchronous>, transform_indices = @transform_4, window_bounds = array<i64: 32, 96>}, {pipeline_mode = #tpu.pipeline_mode<synchronous>, transform_indices = @transform_5, window_bounds = array<i64: 1, 96>}, {pipeline_mode = #tpu.pipeline_mode<synchronous>, transform_indices = @transform_6, window_bounds = array<i64: 32, 32>}, {pipeline_mode = #tpu.pipeline_mode<synchronous>, transform_indices = @transform_7, window_bounds = array<i64: 1, 32>}, {transform_indices = @transform_8, window_bounds = array<i64: 8, 16, 32>}]} {
    %c0 = arith.constant 0 : index
    %c0_0 = arith.constant 0 : index
    %c0_1 = arith.constant 0 : index
    %0 = vector.load %arg1[%c0, %c0_0, %c0_1] : memref<8x16x32xf32, #tpu.memory_space<vmem>>, vector<8x16x32xf32>
    %cst = arith.constant dense<0.000000e+00> : vector<8x16xf32>
    %1 = vector.multi_reduction <add>, %0, %cst [2] : vector<8x16x32xf32> to vector<8x16xf32>
    %2 = vector.shape_cast %1 : vector<8x16xf32> to vector<8x16x1xf32>
    %cst_2 = arith.constant 3.200000e+01 : f32
    %3 = vector.broadcast %cst_2 : f32 to vector<8x16x1xf32>
    %4 = arith.divf %2, %3 : vector<8x16x1xf32>
    %5 = vector.broadcast %4 : vector<8x16x1xf32> to vector<8x16x32xf32>
    %6 = arith.subf %0, %5 : vector<8x16x32xf32>
    %7 = arith.mulf %6, %6 : vector<8x16x32xf32>
    %cst_3 = arith.constant dense<0.000000e+00> : vector<8x16xf32>
    %8 = vector.multi_reduction <add>, %7, %cst_3 [2] : vector<8x16x32xf32> to vector<8x16xf32>
    %9 = vector.shape_cast %8 : vector<8x16xf32> to vector<8x16x1xf32>
    %cst_4 = arith.constant 3.200000e+01 : f32
    %10 = vector.broadcast %cst_4 : f32 to vector<8x16x1xf32>
    %11 = arith.divf %9, %10 : vector<8x16x1xf32>
    %12 = vector.broadcast %4 : vector<8x16x1xf32> to vector<8x16x32xf32>
    %13 = arith.subf %0, %12 : vector<8x16x32xf32>
    %cst_5 = arith.constant 9.99999974E-6 : f32
    %14 = vector.broadcast %cst_5 : f32 to vector<8x16x1xf32>
    %15 = arith.addf %11, %14 : vector<8x16x1xf32>
    %16 = math.rsqrt %15 : vector<8x16x1xf32>
    %17 = vector.broadcast %16 : vector<8x16x1xf32> to vector<8x16x32xf32>
    %18 = arith.mulf %13, %17 : vector<8x16x32xf32>
    %c0_6 = arith.constant 0 : index
    %c0_7 = arith.constant 0 : index
    %c0_8 = arith.constant 0 : index
    %19 = vector.load %arg3[%c0_6, %c0_7, %c0_8] : memref<1x1x32xf32, #tpu.memory_space<vmem>>, vector<1x1x32xf32>
    %20 = vector.broadcast %19 : vector<1x1x32xf32> to vector<8x16x32xf32>
    %21 = arith.mulf %18, %20 : vector<8x16x32xf32>
    %c0_9 = arith.constant 0 : index
    %c0_10 = arith.constant 0 : index
    %c0_11 = arith.constant 0 : index
    %22 = vector.load %arg4[%c0_9, %c0_10, %c0_11] : memref<1x1x32xf32, #tpu.memory_space<vmem>>, vector<1x1x32xf32>
    %23 = vector.broadcast %22 : vector<1x1x32xf32> to vector<8x16x32xf32>
    %24 = arith.addf %21, %23 : vector<8x16x32xf32>
    %25 = vector.shape_cast %24 : vector<8x16x32xf32> to vector<128x32xf32>
    %26 = arith.truncf %25 : vector<128x32xf32> to vector<128x32xbf16>
    %c0_12 = arith.constant 0 : index
    %c0_13 = arith.constant 0 : index
    %27 = vector.load %arg5[%c0_12, %c0_13] : memref<32x96xbf16, #tpu.memory_space<vmem>>, vector<32x96xbf16>
    %cst_14 = arith.constant dense<0.000000e+00> : vector<128x96xf32>
    %28 = tpu.matmul %26, %27, %cst_14 {dimension_numbers = #tpu.dot_dimension_numbers<[1], [0], [0], [1], [0, 0, 1, 1], [], []>} : vector<128x32xbf16>, vector<32x96xbf16>, vector<128x96xf32> -> vector<128x96xf32>
    %c0_15 = arith.constant 0 : index
    %c0_16 = arith.constant 0 : index
    %29 = vector.load %arg6[%c0_15, %c0_16] : memref<1x96xf32, #tpu.memory_space<vmem>>, vector<1x96xf32>
    %30 = vector.broadcast %29 : vector<1x96xf32> to vector<128x96xf32>
    %31 = arith.addf %28, %30 : vector<128x96xf32>
    %32 = arith.truncf %31 : vector<128x96xf32> to vector<128x96xbf16>
    %33 = vector.shape_cast %32 : vector<128x96xbf16> to vector<8x16x96xbf16>
    %c0_17 = arith.constant 0 : index
    %c0_18 = arith.constant 0 : index
    %c0_19 = arith.constant 0 : index
    %34 = vector.load %arg10[%c0_17, %c0_18, %c0_19] : memref<8x16x96xbf16, #tpu.memory_space<vmem>>, vector<8x16x96xbf16>
    tpu.vector_store %arg10[%c0_17, %c0_18, %c0_19], %33 {strides = array<i32>} : memref<8x16x96xbf16, #tpu.memory_space<vmem>>, vector<8x16x96xbf16>,
    %c0_20 = arith.constant 0 : index
    %c0_21 = arith.constant 0 : index
    %c0_22 = arith.constant 0 : index
    %c0_23 = arith.constant 0 : index
    %35 = vector.load %arg2[%c0_20, %c0_21, %c0_22, %c0_23] : memref<1x4x16x16xf32, #tpu.memory_space<vmem>>, vector<1x4x16x16xf32>
    %c0_24 = arith.constant 0 : index
    %c0_25 = arith.constant 0 : index
    %c0_26 = arith.constant 0 : index
    %36 = vector.load %arg10[%c0_24, %c0_25, %c0_26] : memref<8x16x96xbf16, #tpu.memory_space<vmem>>, vector<8x16x8xbf16>
    %c0_27 = arith.constant 0 : index
    %c0_28 = arith.constant 0 : index
    %c32 = arith.constant 32 : index
    %37 = vector.load %arg10[%c0_27, %c0_28, %c32] : memref<8x16x96xbf16, #tpu.memory_space<vmem>>, vector<8x16x8xbf16>
    %c0_29 = arith.constant 0 : index
    %c0_30 = arith.constant 0 : index
    %c64 = arith.constant 64 : index
    %38 = vector.load %arg10[%c0_29, %c0_30, %c64] : memref<8x16x96xbf16, #tpu.memory_space<vmem>>, vector<8x16x8xbf16>
    "tpu.trace_start"() <{level = 10 : i32, message = "bnd,bmd->bnm"}> : () -> ()
    %cst_31 = arith.constant dense<0.000000e+00> : vector<8x16x16xf32>
    %39 = tpu.matmul %36, %37, %cst_31 {dimension_numbers = #tpu.dot_dimension_numbers<[2], [2], [1], [1], [0, 0, 0, 1, 1, 1], [0], [0]>} : vector<8x16x8xbf16>, vector<8x16x8xbf16>, vector<8x16x16xf32> -> vector<8x16x16xf32>
    "tpu.trace_stop"() : () -> ()
    %40 = vector.extract_strided_slice %35 {offsets = [0, 0, 0, 0], sizes = [1, 1, 16, 16], strides = [1, 1, 1, 1]} : vector<1x4x16x16xf32> to vector<1x1x16x16xf32>
    %41 = vector.shape_cast %40 : vector<1x1x16x16xf32> to vector<1x16x16xf32>
    %42 = vector.broadcast %41 : vector<1x16x16xf32> to vector<8x16x16xf32>
    %43 = arith.addf %39, %42 : vector<8x16x16xf32>
    %cst_32 = arith.constant dense<0xFF800000> : vector<8x16xf32>
    %44 = vector.multi_reduction <maximumf>, %43, %cst_32 [2] : vector<8x16x16xf32> to vector<8x16xf32>
    %45 = vector.shape_cast %44 : vector<8x16xf32> to vector<8x16x1xf32>
    %46 = vector.broadcast %45 : vector<8x16x1xf32> to vector<8x16x16xf32>
    %47 = arith.subf %43, %46 : vector<8x16x16xf32>
    %48 = math.exp %47 : vector<8x16x16xf32>
    %cst_33 = arith.constant dense<0.000000e+00> : vector<8x16xf32>
    %49 = vector.multi_reduction <add>, %48, %cst_33 [2] : vector<8x16x16xf32> to vector<8x16xf32>
    %50 = vector.shape_cast %49 : vector<8x16xf32> to vector<8x16x1xf32>
    %51 = tpu.reciprocal %50 {approx = true} : vector<8x16x1xf32> -> vector<8x16x1xf32>
    %52 = vector.broadcast %51 : vector<8x16x1xf32> to vector<8x16x16xf32>
    %53 = arith.mulf %48, %52 : vector<8x16x16xf32>
    %54 = arith.truncf %53 : vector<8x16x16xf32> to vector<8x16x16xbf16>
    "tpu.trace_start"() <{level = 10 : i32, message = "bnm,bmd->bnd"}> : () -> ()
    %cst_34 = arith.constant dense<0.000000e+00> : vector<8x16x8xf32>
    %55 = tpu.matmul %54, %38, %cst_34 {dimension_numbers = #tpu.dot_dimension_numbers<[2], [1], [1], [2], [0, 0, 0, 1, 1, 2], [0], [0]>} : vector<8x16x16xbf16>, vector<8x16x8xbf16>, vector<8x16x8xf32> -> vector<8x16x8xf32>
    "tpu.trace_stop"() : () -> ()
    %c0_35 = arith.constant 0 : index
    %c0_36 = arith.constant 0 : index
    %c8 = arith.constant 8 : index
    %56 = vector.load %arg10[%c0_35, %c0_36, %c8] : memref<8x16x96xbf16, #tpu.memory_space<vmem>>, vector<8x16x8xbf16>
    %c0_37 = arith.constant 0 : index
    %c0_38 = arith.constant 0 : index
    %c40 = arith.constant 40 : index
    %57 = vector.load %arg10[%c0_37, %c0_38, %c40] : memref<8x16x96xbf16, #tpu.memory_space<vmem>>, vector<8x16x8xbf16>
    %c0_39 = arith.constant 0 : index
    %c0_40 = arith.constant 0 : index
    %c72 = arith.constant 72 : index
    %58 = vector.load %arg10[%c0_39, %c0_40, %c72] : memref<8x16x96xbf16, #tpu.memory_space<vmem>>, vector<8x16x8xbf16>
    "tpu.trace_start"() <{level = 10 : i32, message = "bnd,bmd->bnm"}> : () -> ()
    %cst_41 = arith.constant dense<0.000000e+00> : vector<8x16x16xf32>
    %59 = tpu.matmul %56, %57, %cst_41 {dimension_numbers = #tpu.dot_dimension_numbers<[2], [2], [1], [1], [0, 0, 0, 1, 1, 1], [0], [0]>} : vector<8x16x8xbf16>, vector<8x16x8xbf16>, vector<8x16x16xf32> -> vector<8x16x16xf32>
    "tpu.trace_stop"() : () -> ()
    %60 = vector.extract_strided_slice %35 {offsets = [0, 1, 0, 0], sizes = [1, 1, 16, 16], strides = [1, 1, 1, 1]} : vector<1x4x16x16xf32> to vector<1x1x16x16xf32>
    %61 = vector.shape_cast %60 : vector<1x1x16x16xf32> to vector<1x16x16xf32>
    %62 = vector.broadcast %61 : vector<1x16x16xf32> to vector<8x16x16xf32>
    %63 = arith.addf %59, %62 : vector<8x16x16xf32>
    %cst_42 = arith.constant dense<0xFF800000> : vector<8x16xf32>
    %64 = vector.multi_reduction <maximumf>, %63, %cst_42 [2] : vector<8x16x16xf32> to vector<8x16xf32>
    %65 = vector.shape_cast %64 : vector<8x16xf32> to vector<8x16x1xf32>
    %66 = vector.broadcast %65 : vector<8x16x1xf32> to vector<8x16x16xf32>
    %67 = arith.subf %63, %66 : vector<8x16x16xf32>
    %68 = math.exp %67 : vector<8x16x16xf32>
    %cst_43 = arith.constant dense<0.000000e+00> : vector<8x16xf32>
    %69 = vector.multi_reduction <add>, %68, %cst_43 [2] : vector<8x16x16xf32> to vector<8x16xf32>
    %70 = vector.shape_cast %69 : vector<8x16xf32> to vector<8x16x1xf32>
    %71 = tpu.reciprocal %70 {approx = true} : vector<8x16x1xf32> -> vector<8x16x1xf32>
    %72 = vector.broadcast %71 : vector<8x16x1xf32> to vector<8x16x16xf32>
    %73 = arith.mulf %68, %72 : vector<8x16x16xf32>
    %74 = arith.truncf %73 : vector<8x16x16xf32> to vector<8x16x16xbf16>
    "tpu.trace_start"() <{level = 10 : i32, message = "bnm,bmd->bnd"}> : () -> ()
    %cst_44 = arith.constant dense<0.000000e+00> : vector<8x16x8xf32>
    %75 = tpu.matmul %74, %58, %cst_44 {dimension_numbers = #tpu.dot_dimension_numbers<[2], [1], [1], [2], [0, 0, 0, 1, 1, 2], [0], [0]>} : vector<8x16x16xbf16>, vector<8x16x8xbf16>, vector<8x16x8xf32> -> vector<8x16x8xf32>
    "tpu.trace_stop"() : () -> ()
    %c0_45 = arith.constant 0 : index
    %c0_46 = arith.constant 0 : index
    %c16 = arith.constant 16 : index
    %76 = vector.load %arg10[%c0_45, %c0_46, %c16] : memref<8x16x96xbf16, #tpu.memory_space<vmem>>, vector<8x16x8xbf16>
    %c0_47 = arith.constant 0 : index
    %c0_48 = arith.constant 0 : index
    %c48 = arith.constant 48 : index
    %77 = vector.load %arg10[%c0_47, %c0_48, %c48] : memref<8x16x96xbf16, #tpu.memory_space<vmem>>, vector<8x16x8xbf16>
    %c0_49 = arith.constant 0 : index
    %c0_50 = arith.constant 0 : index
    %c80 = arith.constant 80 : index
    %78 = vector.load %arg10[%c0_49, %c0_50, %c80] : memref<8x16x96xbf16, #tpu.memory_space<vmem>>, vector<8x16x8xbf16>
    "tpu.trace_start"() <{level = 10 : i32, message = "bnd,bmd->bnm"}> : () -> ()
    %cst_51 = arith.constant dense<0.000000e+00> : vector<8x16x16xf32>
    %79 = tpu.matmul %76, %77, %cst_51 {dimension_numbers = #tpu.dot_dimension_numbers<[2], [2], [1], [1], [0, 0, 0, 1, 1, 1], [0], [0]>} : vector<8x16x8xbf16>, vector<8x16x8xbf16>, vector<8x16x16xf32> -> vector<8x16x16xf32>
    "tpu.trace_stop"() : () -> ()
    %80 = vector.extract_strided_slice %35 {offsets = [0, 2, 0, 0], sizes = [1, 1, 16, 16], strides = [1, 1, 1, 1]} : vector<1x4x16x16xf32> to vector<1x1x16x16xf32>
    %81 = vector.shape_cast %80 : vector<1x1x16x16xf32> to vector<1x16x16xf32>
    %82 = vector.broadcast %81 : vector<1x16x16xf32> to vector<8x16x16xf32>
    %83 = arith.addf %79, %82 : vector<8x16x16xf32>
    %cst_52 = arith.constant dense<0xFF800000> : vector<8x16xf32>
    %84 = vector.multi_reduction <maximumf>, %83, %cst_52 [2] : vector<8x16x16xf32> to vector<8x16xf32>
    %85 = vector.shape_cast %84 : vector<8x16xf32> to vector<8x16x1xf32>
    %86 = vector.broadcast %85 : vector<8x16x1xf32> to vector<8x16x16xf32>
    %87 = arith.subf %83, %86 : vector<8x16x16xf32>
    %88 = math.exp %87 : vector<8x16x16xf32>
    %cst_53 = arith.constant dense<0.000000e+00> : vector<8x16xf32>
    %89 = vector.multi_reduction <add>, %88, %cst_53 [2] : vector<8x16x16xf32> to vector<8x16xf32>
    %90 = vector.shape_cast %89 : vector<8x16xf32> to vector<8x16x1xf32>
    %91 = tpu.reciprocal %90 {approx = true} : vector<8x16x1xf32> -> vector<8x16x1xf32>
    %92 = vector.broadcast %91 : vector<8x16x1xf32> to vector<8x16x16xf32>
    %93 = arith.mulf %88, %92 : vector<8x16x16xf32>
    %94 = arith.truncf %93 : vector<8x16x16xf32> to vector<8x16x16xbf16>
    "tpu.trace_start"() <{level = 10 : i32, message = "bnm,bmd->bnd"}> : () -> ()
    %cst_54 = arith.constant dense<0.000000e+00> : vector<8x16x8xf32>
    %95 = tpu.matmul %94, %78, %cst_54 {dimension_numbers = #tpu.dot_dimension_numbers<[2], [1], [1], [2], [0, 0, 0, 1, 1, 2], [0], [0]>} : vector<8x16x16xbf16>, vector<8x16x8xbf16>, vector<8x16x8xf32> -> vector<8x16x8xf32>
    "tpu.trace_stop"() : () -> ()
    %c0_55 = arith.constant 0 : index
    %c0_56 = arith.constant 0 : index
    %c24 = arith.constant 24 : index
    %96 = vector.load %arg10[%c0_55, %c0_56, %c24] : memref<8x16x96xbf16, #tpu.memory_space<vmem>>, vector<8x16x8xbf16>
    %c0_57 = arith.constant 0 : index
    %c0_58 = arith.constant 0 : index
    %c56 = arith.constant 56 : index
    %97 = vector.load %arg10[%c0_57, %c0_58, %c56] : memref<8x16x96xbf16, #tpu.memory_space<vmem>>, vector<8x16x8xbf16>
    %c0_59 = arith.constant 0 : index
    %c0_60 = arith.constant 0 : index
    %c88 = arith.constant 88 : index
    %98 = vector.load %arg10[%c0_59, %c0_60, %c88] : memref<8x16x96xbf16, #tpu.memory_space<vmem>>, vector<8x16x8xbf16>
    "tpu.trace_start"() <{level = 10 : i32, message = "bnd,bmd->bnm"}> : () -> ()
    %cst_61 = arith.constant dense<0.000000e+00> : vector<8x16x16xf32>
    %99 = tpu.matmul %96, %97, %cst_61 {dimension_numbers = #tpu.dot_dimension_numbers<[2], [2], [1], [1], [0, 0, 0, 1, 1, 1], [0], [0]>} : vector<8x16x8xbf16>, vector<8x16x8xbf16>, vector<8x16x16xf32> -> vector<8x16x16xf32>
    "tpu.trace_stop"() : () -> ()
    %100 = vector.extract_strided_slice %35 {offsets = [0, 3, 0, 0], sizes = [1, 1, 16, 16], strides = [1, 1, 1, 1]} : vector<1x4x16x16xf32> to vector<1x1x16x16xf32>
    %101 = vector.shape_cast %100 : vector<1x1x16x16xf32> to vector<1x16x16xf32>
    %102 = vector.broadcast %101 : vector<1x16x16xf32> to vector<8x16x16xf32>
    %103 = arith.addf %99, %102 : vector<8x16x16xf32>
    %cst_62 = arith.constant dense<0xFF800000> : vector<8x16xf32>
    %104 = vector.multi_reduction <maximumf>, %103, %cst_62 [2] : vector<8x16x16xf32> to vector<8x16xf32>
    %105 = vector.shape_cast %104 : vector<8x16xf32> to vector<8x16x1xf32>
    %106 = vector.broadcast %105 : vector<8x16x1xf32> to vector<8x16x16xf32>
    %107 = arith.subf %103, %106 : vector<8x16x16xf32>
    %108 = math.exp %107 : vector<8x16x16xf32>
    %cst_63 = arith.constant dense<0.000000e+00> : vector<8x16xf32>
    %109 = vector.multi_reduction <add>, %108, %cst_63 [2] : vector<8x16x16xf32> to vector<8x16xf32>
    %110 = vector.shape_cast %109 : vector<8x16xf32> to vector<8x16x1xf32>
    %111 = tpu.reciprocal %110 {approx = true} : vector<8x16x1xf32> -> vector<8x16x1xf32>
    %112 = vector.broadcast %111 : vector<8x16x1xf32> to vector<8x16x16xf32>
    %113 = arith.mulf %108, %112 : vector<8x16x16xf32>
    %114 = arith.truncf %113 : vector<8x16x16xf32> to vector<8x16x16xbf16>
    "tpu.trace_start"() <{level = 10 : i32, message = "bnm,bmd->bnd"}> : () -> ()
    %cst_64 = arith.constant dense<0.000000e+00> : vector<8x16x8xf32>
    %115 = tpu.matmul %114, %98, %cst_64 {dimension_numbers = #tpu.dot_dimension_numbers<[2], [1], [1], [2], [0, 0, 0, 1, 1, 2], [0], [0]>} : vector<8x16x16xbf16>, vector<8x16x8xbf16>, vector<8x16x8xf32> -> vector<8x16x8xf32>
    "tpu.trace_stop"() : () -> ()
    %116 = tpu.concatenate %55, %75, %95, %115 in 2 : vector<8x16x8xf32>, vector<8x16x8xf32>, vector<8x16x8xf32>, vector<8x16x8xf32> -> vector<8x16x32xf32>
    %117 = vector.shape_cast %116 : vector<8x16x32xf32> to vector<128x32xf32>
    %118 = arith.truncf %117 : vector<128x32xf32> to vector<128x32xbf16>
    %c0_65 = arith.constant 0 : index
    %c0_66 = arith.constant 0 : index
    %119 = vector.load %arg7[%c0_65, %c0_66] : memref<32x32xbf16, #tpu.memory_space<vmem>>, vector<32x32xbf16>
    %cst_67 = arith.constant dense<0.000000e+00> : vector<128x32xf32>
    %120 = tpu.matmul %118, %119, %cst_67 {dimension_numbers = #tpu.dot_dimension_numbers<[1], [0], [0], [1], [0, 0, 1, 1], [], []>} : vector<128x32xbf16>, vector<32x32xbf16>, vector<128x32xf32> -> vector<128x32xf32>
    %c0_68 = arith.constant 0 : index
    %c0_69 = arith.constant 0 : index
    %121 = vector.load %arg8[%c0_68, %c0_69] : memref<1x32xf32, #tpu.memory_space<vmem>>, vector<1x32xf32>
    %122 = vector.broadcast %121 : vector<1x32xf32> to vector<128x32xf32>
    %123 = arith.addf %120, %122 : vector<128x32xf32>
    %124 = vector.shape_cast %123 : vector<128x32xf32> to vector<8x16x32xf32>
    %125 = arith.addf %0, %124 : vector<8x16x32xf32>
    %c0_70 = arith.constant 0 : index
    %c0_71 = arith.constant 0 : index
    %c0_72 = arith.constant 0 : index
    %126 = vector.load %arg9[%c0_70, %c0_71, %c0_72] : memref<8x16x32xf32, #tpu.memory_space<vmem>>, vector<8x16x32xf32>
    tpu.vector_store %arg9[%c0_70, %c0_71, %c0_72], %125 {strides = array<i32>} : memref<8x16x32xf32, #tpu.memory_space<vmem>>, vector<8x16x32xf32>,
    return
  }
  func.func @transform_0(%arg0: i32) -> (i32, i32, i32) {
    %c0_i32 = arith.constant 0 : i32
    %c0_i32_0 = arith.constant 0 : i32
    %c0_i32_1 = arith.constant 0 : i32
    return %arg0, %c0_i32, %c0_i32_0 : i32, i32, i32
  }
  func.func @transform_1(%arg0: i32) -> (i32, i32, i32, i32) {
    %c0_i32 = arith.constant 0 : i32
    %c0_i32_0 = arith.constant 0 : i32
    %c0_i32_1 = arith.constant 0 : i32
    %c0_i32_2 = arith.constant 0 : i32
    %c0_i32_3 = arith.constant 0 : i32
    return %c0_i32, %c0_i32_0, %c0_i32_1, %c0_i32_2 : i32, i32, i32, i32
  }
  func.func @transform_2(%arg0: i32) -> (i32, i32, i32) {
    %c0_i32 = arith.constant 0 : i32
    %c0_i32_0 = arith.constant 0 : i32
    %c0_i32_1 = arith.constant 0 : i32
    %c0_i32_2 = arith.constant 0 : i32
    return %c0_i32, %c0_i32_0, %c0_i32_1 : i32, i32, i32
  }
  func.func @transform_3(%arg0: i32) -> (i32, i32, i32) {
    %c0_i32 = arith.constant 0 : i32
    %c0_i32_0 = arith.constant 0 : i32
    %c0_i32_1 = arith.constant 0 : i32
    %c0_i32_2 = arith.constant 0 : i32
    return %c0_i32, %c0_i32_0, %c0_i32_1 : i32, i32, i32
  }
  func.func @transform_4(%arg0: i32) -> (i32, i32) {
    %c0_i32 = arith.constant 0 : i32
    %c0_i32_0 = arith.constant 0 : i32
    %c0_i32_1 = arith.constant 0 : i32
    return %c0_i32, %c0_i32_0 : i32, i32
  }
  func.func @transform_5(%arg0: i32) -> (i32, i32) {
    %c0_i32 = arith.constant 0 : i32
    %c0_i32_0 = arith.constant 0 : i32
    %c0_i32_1 = arith.constant 0 : i32
    return %c0_i32, %c0_i32_0 : i32, i32
  }
  func.func @transform_6(%arg0: i32) -> (i32, i32) {
    %c0_i32 = arith.constant 0 : i32
    %c0_i32_0 = arith.constant 0 : i32
    %c0_i32_1 = arith.constant 0 : i32
    return %c0_i32, %c0_i32_0 : i32, i32
  }
  func.func @transform_7(%arg0: i32) -> (i32, i32) {
    %c0_i32 = arith.constant 0 : i32
    %c0_i32_0 = arith.constant 0 : i32
    %c0_i32_1 = arith.constant 0 : i32
    return %c0_i32, %c0_i32_0 : i32, i32
  }
  func.func @transform_8(%arg0: i32) -> (i32, i32, i32) {
    %c0_i32 = arith.constant 0 : i32
    %c0_i32_0 = arith.constant 0 : i32
    %c0_i32_1 = arith.constant 0 : i32
    return %arg0, %c0_i32, %c0_i32_0 : i32, i32, i32
  }
}

module attributes {stable_mosaic.version = 11 : i64} {
  func.func @_mlp_kernel(%arg0: i32, %arg1: memref<64x32xf32, #tpu.memory_space<vmem>>, %arg2: memref<1x32xf32, #tpu.memory_space<vmem>>, %arg3: memref<1x32xf32, #tpu.memory_space<vmem>>, %arg4: memref<32x64xbf16, #tpu.memory_space<vmem>>, %arg5: memref<1x64xf32, #tpu.memory_space<vmem>>, %arg6: memref<64x32xbf16, #tpu.memory_space<vmem>>, %arg7: memref<1x32xf32, #tpu.memory_space<vmem>>, %arg8: memref<64x32xf32, #tpu.memory_space<vmem>>) attributes {dimension_semantics = [#tpu.dimension_semantics<parallel>], iteration_bounds = array<i64: 4>, scalar_prefetch = 0 : i64, scratch_operands = 0 : i64, tpu.core_type = #tpu.core_type<tc>, window_params = [{transform_indices = @transform_0, window_bounds = array<i64: 64, 32>}, {pipeline_mode = #tpu.pipeline_mode<synchronous>, transform_indices = @transform_1, window_bounds = array<i64: 1, 32>}, {pipeline_mode = #tpu.pipeline_mode<synchronous>, transform_indices = @transform_2, window_bounds = array<i64: 1, 32>}, {pipeline_mode = #tpu.pipeline_mode<synchronous>, transform_indices = @transform_3, window_bounds = array<i64: 32, 64>}, {pipeline_mode = #tpu.pipeline_mode<synchronous>, transform_indices = @transform_4, window_bounds = array<i64: 1, 64>}, {pipeline_mode = #tpu.pipeline_mode<synchronous>, transform_indices = @transform_5, window_bounds = array<i64: 64, 32>}, {pipeline_mode = #tpu.pipeline_mode<synchronous>, transform_indices = @transform_6, window_bounds = array<i64: 1, 32>}, {transform_indices = @transform_7, window_bounds = array<i64: 64, 32>}]} {
    %c0 = arith.constant 0 : index
    %c0_0 = arith.constant 0 : index
    %0 = vector.load %arg1[%c0, %c0_0] : memref<64x32xf32, #tpu.memory_space<vmem>>, vector<64x32xf32>
    %cst = arith.constant dense<0.000000e+00> : vector<64xf32>
    %1 = vector.multi_reduction <add>, %0, %cst [1] : vector<64x32xf32> to vector<64xf32>
    %2 = vector.shape_cast %1 : vector<64xf32> to vector<64x1xf32>
    %cst_1 = arith.constant 3.200000e+01 : f32
    %3 = vector.broadcast %cst_1 : f32 to vector<64x1xf32>
    %4 = arith.divf %2, %3 : vector<64x1xf32>
    %5 = vector.broadcast %4 : vector<64x1xf32> to vector<64x32xf32>
    %6 = arith.subf %0, %5 : vector<64x32xf32>
    %7 = arith.mulf %6, %6 : vector<64x32xf32>
    %cst_2 = arith.constant dense<0.000000e+00> : vector<64xf32>
    %8 = vector.multi_reduction <add>, %7, %cst_2 [1] : vector<64x32xf32> to vector<64xf32>
    %9 = vector.shape_cast %8 : vector<64xf32> to vector<64x1xf32>
    %cst_3 = arith.constant 3.200000e+01 : f32
    %10 = vector.broadcast %cst_3 : f32 to vector<64x1xf32>
    %11 = arith.divf %9, %10 : vector<64x1xf32>
    %12 = vector.broadcast %4 : vector<64x1xf32> to vector<64x32xf32>
    %13 = arith.subf %0, %12 : vector<64x32xf32>
    %cst_4 = arith.constant 9.99999974E-6 : f32
    %14 = vector.broadcast %cst_4 : f32 to vector<64x1xf32>
    %15 = arith.addf %11, %14 : vector<64x1xf32>
    %16 = math.rsqrt %15 : vector<64x1xf32>
    %17 = vector.broadcast %16 : vector<64x1xf32> to vector<64x32xf32>
    %18 = arith.mulf %13, %17 : vector<64x32xf32>
    %c0_5 = arith.constant 0 : index
    %c0_6 = arith.constant 0 : index
    %19 = vector.load %arg2[%c0_5, %c0_6] : memref<1x32xf32, #tpu.memory_space<vmem>>, vector<1x32xf32>
    %20 = vector.broadcast %19 : vector<1x32xf32> to vector<64x32xf32>
    %21 = arith.mulf %18, %20 : vector<64x32xf32>
    %c0_7 = arith.constant 0 : index
    %c0_8 = arith.constant 0 : index
    %22 = vector.load %arg3[%c0_7, %c0_8] : memref<1x32xf32, #tpu.memory_space<vmem>>, vector<1x32xf32>
    %23 = vector.broadcast %22 : vector<1x32xf32> to vector<64x32xf32>
    %24 = arith.addf %21, %23 : vector<64x32xf32>
    %25 = arith.truncf %24 : vector<64x32xf32> to vector<64x32xbf16>
    %c0_9 = arith.constant 0 : index
    %c0_10 = arith.constant 0 : index
    %26 = vector.load %arg4[%c0_9, %c0_10] : memref<32x64xbf16, #tpu.memory_space<vmem>>, vector<32x64xbf16>
    %cst_11 = arith.constant dense<0.000000e+00> : vector<64x64xf32>
    %27 = tpu.matmul %25, %26, %cst_11 {dimension_numbers = #tpu.dot_dimension_numbers<[1], [0], [0], [1], [0, 0, 1, 1], [], []>} : vector<64x32xbf16>, vector<32x64xbf16>, vector<64x64xf32> -> vector<64x64xf32>
    %c0_12 = arith.constant 0 : index
    %c0_13 = arith.constant 0 : index
    %28 = vector.load %arg5[%c0_12, %c0_13] : memref<1x64xf32, #tpu.memory_space<vmem>>, vector<1x64xf32>
    %29 = vector.broadcast %28 : vector<1x64xf32> to vector<64x64xf32>
    %30 = arith.addf %27, %29 : vector<64x64xf32>
    %cst_14 = arith.constant 5.000000e-01 : f32
    %31 = vector.broadcast %cst_14 : f32 to vector<64x64xf32>
    %32 = arith.mulf %31, %30 : vector<64x64xf32>
    %33 = arith.mulf %30, %30 : vector<64x64xf32>
    %34 = arith.mulf %33, %30 : vector<64x64xf32>
    %cst_15 = arith.constant 4.471500e-02 : f32
    %35 = vector.broadcast %cst_15 : f32 to vector<64x64xf32>
    %36 = arith.mulf %35, %34 : vector<64x64xf32>
    %37 = arith.addf %30, %36 : vector<64x64xf32>
    %cst_16 = arith.constant 0.797884583 : f32
    %38 = vector.broadcast %cst_16 : f32 to vector<64x64xf32>
    %39 = arith.mulf %38, %37 : vector<64x64xf32>
    %40 = math.tanh %39 : vector<64x64xf32>
    %cst_17 = arith.constant 1.000000e+00 : f32
    %41 = vector.broadcast %cst_17 : f32 to vector<64x64xf32>
    %42 = arith.addf %41, %40 : vector<64x64xf32>
    %43 = arith.mulf %32, %42 : vector<64x64xf32>
    %44 = arith.truncf %43 : vector<64x64xf32> to vector<64x64xbf16>
    %c0_18 = arith.constant 0 : index
    %c0_19 = arith.constant 0 : index
    %45 = vector.load %arg6[%c0_18, %c0_19] : memref<64x32xbf16, #tpu.memory_space<vmem>>, vector<64x32xbf16>
    %cst_20 = arith.constant dense<0.000000e+00> : vector<64x32xf32>
    %46 = tpu.matmul %44, %45, %cst_20 {dimension_numbers = #tpu.dot_dimension_numbers<[1], [0], [0], [1], [0, 0, 1, 1], [], []>} : vector<64x64xbf16>, vector<64x32xbf16>, vector<64x32xf32> -> vector<64x32xf32>
    %c0_21 = arith.constant 0 : index
    %c0_22 = arith.constant 0 : index
    %47 = vector.load %arg7[%c0_21, %c0_22] : memref<1x32xf32, #tpu.memory_space<vmem>>, vector<1x32xf32>
    %48 = vector.broadcast %47 : vector<1x32xf32> to vector<64x32xf32>
    %49 = arith.addf %46, %48 : vector<64x32xf32>
    %50 = arith.addf %0, %49 : vector<64x32xf32>
    %c0_23 = arith.constant 0 : index
    %c0_24 = arith.constant 0 : index
    %51 = vector.load %arg8[%c0_23, %c0_24] : memref<64x32xf32, #tpu.memory_space<vmem>>, vector<64x32xf32>
    tpu.vector_store %arg8[%c0_23, %c0_24], %50 {strides = array<i32>} : memref<64x32xf32, #tpu.memory_space<vmem>>, vector<64x32xf32>,
    return
  }
  func.func @transform_0(%arg0: i32) -> (i32, i32) {
    %c0_i32 = arith.constant 0 : i32
    %c0_i32_0 = arith.constant 0 : i32
    return %arg0, %c0_i32 : i32, i32
  }
  func.func @transform_1(%arg0: i32) -> (i32, i32) {
    %c0_i32 = arith.constant 0 : i32
    %c0_i32_0 = arith.constant 0 : i32
    %c0_i32_1 = arith.constant 0 : i32
    return %c0_i32, %c0_i32_0 : i32, i32
  }
  func.func @transform_2(%arg0: i32) -> (i32, i32) {
    %c0_i32 = arith.constant 0 : i32
    %c0_i32_0 = arith.constant 0 : i32
    %c0_i32_1 = arith.constant 0 : i32
    return %c0_i32, %c0_i32_0 : i32, i32
  }
  func.func @transform_3(%arg0: i32) -> (i32, i32) {
    %c0_i32 = arith.constant 0 : i32
    %c0_i32_0 = arith.constant 0 : i32
    %c0_i32_1 = arith.constant 0 : i32
    return %c0_i32, %c0_i32_0 : i32, i32
  }
  func.func @transform_4(%arg0: i32) -> (i32, i32) {
    %c0_i32 = arith.constant 0 : i32
    %c0_i32_0 = arith.constant 0 : i32
    %c0_i32_1 = arith.constant 0 : i32
    return %c0_i32, %c0_i32_0 : i32, i32
  }
  func.func @transform_5(%arg0: i32) -> (i32, i32) {
    %c0_i32 = arith.constant 0 : i32
    %c0_i32_0 = arith.constant 0 : i32
    %c0_i32_1 = arith.constant 0 : i32
    return %c0_i32, %c0_i32_0 : i32, i32
  }
  func.func @transform_6(%arg0: i32) -> (i32, i32) {
    %c0_i32 = arith.constant 0 : i32
    %c0_i32_0 = arith.constant 0 : i32
    %c0_i32_1 = arith.constant 0 : i32
    return %c0_i32, %c0_i32_0 : i32, i32
  }
  func.func @transform_7(%arg0: i32) -> (i32, i32) {
    %c0_i32 = arith.constant 0 : i32
    %c0_i32_0 = arith.constant 0 : i32
    return %arg0, %c0_i32 : i32, i32
  }
}

module attributes {stable_mosaic.version = 11 : i64} {
  func.func @kernel(%arg0: i32, %arg1: memref<4x16x32xf32, #tpu.memory_space<vmem>>, %arg2: memref<4x4x16x16xf32, #tpu.memory_space<vmem>>, %arg3: memref<1x1x32xf32, #tpu.memory_space<vmem>>, %arg4: memref<1x1x32xf32, #tpu.memory_space<vmem>>, %arg5: memref<32x96xbf16, #tpu.memory_space<vmem>>, %arg6: memref<1x96xf32, #tpu.memory_space<vmem>>, %arg7: memref<32x32xbf16, #tpu.memory_space<vmem>>, %arg8: memref<1x32xf32, #tpu.memory_space<vmem>>, %arg9: memref<4x16x32xf32, #tpu.memory_space<vmem>>, %arg10: memref<4x16x96xbf16, #tpu.memory_space<vmem>>) attributes {dimension_semantics = [#tpu.dimension_semantics<parallel>], iteration_bounds = array<i64: 4>, scalar_prefetch = 0 : i64, scratch_operands = 1 : i64, tpu.core_type = #tpu.core_type<tc>, window_params = [{transform_indices = @transform_0, window_bounds = array<i64: 4, 16, 32>}, {transform_indices = @transform_1, window_bounds = array<i64: 4, 4, 16, 16>}, {pipeline_mode = #tpu.pipeline_mode<synchronous>, transform_indices = @transform_2, window_bounds = array<i64: 1, 1, 32>}, {pipeline_mode = #tpu.pipeline_mode<synchronous>, transform_indices = @transform_3, window_bounds = array<i64: 1, 1, 32>}, {pipeline_mode = #tpu.pipeline_mode<synchronous>, transform_indices = @transform_4, window_bounds = array<i64: 32, 96>}, {pipeline_mode = #tpu.pipeline_mode<synchronous>, transform_indices = @transform_5, window_bounds = array<i64: 1, 96>}, {pipeline_mode = #tpu.pipeline_mode<synchronous>, transform_indices = @transform_6, window_bounds = array<i64: 32, 32>}, {pipeline_mode = #tpu.pipeline_mode<synchronous>, transform_indices = @transform_7, window_bounds = array<i64: 1, 32>}, {transform_indices = @transform_8, window_bounds = array<i64: 4, 16, 32>}]} {
    %c0 = arith.constant 0 : index
    %c0_0 = arith.constant 0 : index
    %c0_1 = arith.constant 0 : index
    %0 = vector.load %arg1[%c0, %c0_0, %c0_1] : memref<4x16x32xf32, #tpu.memory_space<vmem>>, vector<4x16x32xf32>
    %cst = arith.constant dense<0.000000e+00> : vector<4x16xf32>
    %1 = vector.multi_reduction <add>, %0, %cst [2] : vector<4x16x32xf32> to vector<4x16xf32>
    %2 = vector.shape_cast %1 : vector<4x16xf32> to vector<4x16x1xf32>
    %cst_2 = arith.constant 3.200000e+01 : f32
    %3 = vector.broadcast %cst_2 : f32 to vector<4x16x1xf32>
    %4 = arith.divf %2, %3 : vector<4x16x1xf32>
    %5 = vector.broadcast %4 : vector<4x16x1xf32> to vector<4x16x32xf32>
    %6 = arith.subf %0, %5 : vector<4x16x32xf32>
    %7 = arith.mulf %6, %6 : vector<4x16x32xf32>
    %cst_3 = arith.constant dense<0.000000e+00> : vector<4x16xf32>
    %8 = vector.multi_reduction <add>, %7, %cst_3 [2] : vector<4x16x32xf32> to vector<4x16xf32>
    %9 = vector.shape_cast %8 : vector<4x16xf32> to vector<4x16x1xf32>
    %cst_4 = arith.constant 3.200000e+01 : f32
    %10 = vector.broadcast %cst_4 : f32 to vector<4x16x1xf32>
    %11 = arith.divf %9, %10 : vector<4x16x1xf32>
    %12 = vector.broadcast %4 : vector<4x16x1xf32> to vector<4x16x32xf32>
    %13 = arith.subf %0, %12 : vector<4x16x32xf32>
    %cst_5 = arith.constant 9.99999974E-6 : f32
    %14 = vector.broadcast %cst_5 : f32 to vector<4x16x1xf32>
    %15 = arith.addf %11, %14 : vector<4x16x1xf32>
    %16 = math.rsqrt %15 : vector<4x16x1xf32>
    %17 = vector.broadcast %16 : vector<4x16x1xf32> to vector<4x16x32xf32>
    %18 = arith.mulf %13, %17 : vector<4x16x32xf32>
    %c0_6 = arith.constant 0 : index
    %c0_7 = arith.constant 0 : index
    %c0_8 = arith.constant 0 : index
    %19 = vector.load %arg3[%c0_6, %c0_7, %c0_8] : memref<1x1x32xf32, #tpu.memory_space<vmem>>, vector<1x1x32xf32>
    %20 = vector.broadcast %19 : vector<1x1x32xf32> to vector<4x16x32xf32>
    %21 = arith.mulf %18, %20 : vector<4x16x32xf32>
    %c0_9 = arith.constant 0 : index
    %c0_10 = arith.constant 0 : index
    %c0_11 = arith.constant 0 : index
    %22 = vector.load %arg4[%c0_9, %c0_10, %c0_11] : memref<1x1x32xf32, #tpu.memory_space<vmem>>, vector<1x1x32xf32>
    %23 = vector.broadcast %22 : vector<1x1x32xf32> to vector<4x16x32xf32>
    %24 = arith.addf %21, %23 : vector<4x16x32xf32>
    %25 = vector.shape_cast %24 : vector<4x16x32xf32> to vector<64x32xf32>
    %26 = arith.truncf %25 : vector<64x32xf32> to vector<64x32xbf16>
    %c0_12 = arith.constant 0 : index
    %c0_13 = arith.constant 0 : index
    %27 = vector.load %arg5[%c0_12, %c0_13] : memref<32x96xbf16, #tpu.memory_space<vmem>>, vector<32x96xbf16>
    %cst_14 = arith.constant dense<0.000000e+00> : vector<64x96xf32>
    %28 = tpu.matmul %26, %27, %cst_14 {dimension_numbers = #tpu.dot_dimension_numbers<[1], [0], [0], [1], [0, 0, 1, 1], [], []>} : vector<64x32xbf16>, vector<32x96xbf16>, vector<64x96xf32> -> vector<64x96xf32>
    %c0_15 = arith.constant 0 : index
    %c0_16 = arith.constant 0 : index
    %29 = vector.load %arg6[%c0_15, %c0_16] : memref<1x96xf32, #tpu.memory_space<vmem>>, vector<1x96xf32>
    %30 = vector.broadcast %29 : vector<1x96xf32> to vector<64x96xf32>
    %31 = arith.addf %28, %30 : vector<64x96xf32>
    %32 = arith.truncf %31 : vector<64x96xf32> to vector<64x96xbf16>
    %33 = vector.shape_cast %32 : vector<64x96xbf16> to vector<4x16x96xbf16>
    %c0_17 = arith.constant 0 : index
    %c0_18 = arith.constant 0 : index
    %c0_19 = arith.constant 0 : index
    %34 = vector.load %arg10[%c0_17, %c0_18, %c0_19] : memref<4x16x96xbf16, #tpu.memory_space<vmem>>, vector<4x16x96xbf16>
    tpu.vector_store %arg10[%c0_17, %c0_18, %c0_19], %33 {strides = array<i32>} : memref<4x16x96xbf16, #tpu.memory_space<vmem>>, vector<4x16x96xbf16>,
    %c0_20 = arith.constant 0 : index
    %c0_21 = arith.constant 0 : index
    %c0_22 = arith.constant 0 : index
    %c0_23 = arith.constant 0 : index
    %35 = vector.load %arg2[%c0_20, %c0_21, %c0_22, %c0_23] : memref<4x4x16x16xf32, #tpu.memory_space<vmem>>, vector<4x4x16x16xf32>
    %c0_24 = arith.constant 0 : index
    %c0_25 = arith.constant 0 : index
    %c0_26 = arith.constant 0 : index
    %36 = vector.load %arg10[%c0_24, %c0_25, %c0_26] : memref<4x16x96xbf16, #tpu.memory_space<vmem>>, vector<4x16x8xbf16>
    %c0_27 = arith.constant 0 : index
    %c0_28 = arith.constant 0 : index
    %c32 = arith.constant 32 : index
    %37 = vector.load %arg10[%c0_27, %c0_28, %c32] : memref<4x16x96xbf16, #tpu.memory_space<vmem>>, vector<4x16x8xbf16>
    %c0_29 = arith.constant 0 : index
    %c0_30 = arith.constant 0 : index
    %c64 = arith.constant 64 : index
    %38 = vector.load %arg10[%c0_29, %c0_30, %c64] : memref<4x16x96xbf16, #tpu.memory_space<vmem>>, vector<4x16x8xbf16>
    "tpu.trace_start"() <{level = 10 : i32, message = "bnd,bmd->bnm"}> : () -> ()
    %cst_31 = arith.constant dense<0.000000e+00> : vector<4x16x16xf32>
    %39 = tpu.matmul %36, %37, %cst_31 {dimension_numbers = #tpu.dot_dimension_numbers<[2], [2], [1], [1], [0, 0, 0, 1, 1, 1], [0], [0]>} : vector<4x16x8xbf16>, vector<4x16x8xbf16>, vector<4x16x16xf32> -> vector<4x16x16xf32>
    "tpu.trace_stop"() : () -> ()
    %40 = vector.extract_strided_slice %35 {offsets = [0, 0, 0, 0], sizes = [4, 1, 16, 16], strides = [1, 1, 1, 1]} : vector<4x4x16x16xf32> to vector<4x1x16x16xf32>
    %41 = vector.shape_cast %40 : vector<4x1x16x16xf32> to vector<4x16x16xf32>
    %42 = arith.addf %39, %41 : vector<4x16x16xf32>
    %cst_32 = arith.constant dense<0xFF800000> : vector<4x16xf32>
    %43 = vector.multi_reduction <maximumf>, %42, %cst_32 [2] : vector<4x16x16xf32> to vector<4x16xf32>
    %44 = vector.shape_cast %43 : vector<4x16xf32> to vector<4x16x1xf32>
    %45 = vector.broadcast %44 : vector<4x16x1xf32> to vector<4x16x16xf32>
    %46 = arith.subf %42, %45 : vector<4x16x16xf32>
    %47 = math.exp %46 : vector<4x16x16xf32>
    %cst_33 = arith.constant dense<0.000000e+00> : vector<4x16xf32>
    %48 = vector.multi_reduction <add>, %47, %cst_33 [2] : vector<4x16x16xf32> to vector<4x16xf32>
    %49 = vector.shape_cast %48 : vector<4x16xf32> to vector<4x16x1xf32>
    %50 = tpu.reciprocal %49 {approx = true} : vector<4x16x1xf32> -> vector<4x16x1xf32>
    %51 = vector.broadcast %50 : vector<4x16x1xf32> to vector<4x16x16xf32>
    %52 = arith.mulf %47, %51 : vector<4x16x16xf32>
    %53 = arith.truncf %52 : vector<4x16x16xf32> to vector<4x16x16xbf16>
    "tpu.trace_start"() <{level = 10 : i32, message = "bnm,bmd->bnd"}> : () -> ()
    %cst_34 = arith.constant dense<0.000000e+00> : vector<4x16x8xf32>
    %54 = tpu.matmul %53, %38, %cst_34 {dimension_numbers = #tpu.dot_dimension_numbers<[2], [1], [1], [2], [0, 0, 0, 1, 1, 2], [0], [0]>} : vector<4x16x16xbf16>, vector<4x16x8xbf16>, vector<4x16x8xf32> -> vector<4x16x8xf32>
    "tpu.trace_stop"() : () -> ()
    %c0_35 = arith.constant 0 : index
    %c0_36 = arith.constant 0 : index
    %c8 = arith.constant 8 : index
    %55 = vector.load %arg10[%c0_35, %c0_36, %c8] : memref<4x16x96xbf16, #tpu.memory_space<vmem>>, vector<4x16x8xbf16>
    %c0_37 = arith.constant 0 : index
    %c0_38 = arith.constant 0 : index
    %c40 = arith.constant 40 : index
    %56 = vector.load %arg10[%c0_37, %c0_38, %c40] : memref<4x16x96xbf16, #tpu.memory_space<vmem>>, vector<4x16x8xbf16>
    %c0_39 = arith.constant 0 : index
    %c0_40 = arith.constant 0 : index
    %c72 = arith.constant 72 : index
    %57 = vector.load %arg10[%c0_39, %c0_40, %c72] : memref<4x16x96xbf16, #tpu.memory_space<vmem>>, vector<4x16x8xbf16>
    "tpu.trace_start"() <{level = 10 : i32, message = "bnd,bmd->bnm"}> : () -> ()
    %cst_41 = arith.constant dense<0.000000e+00> : vector<4x16x16xf32>
    %58 = tpu.matmul %55, %56, %cst_41 {dimension_numbers = #tpu.dot_dimension_numbers<[2], [2], [1], [1], [0, 0, 0, 1, 1, 1], [0], [0]>} : vector<4x16x8xbf16>, vector<4x16x8xbf16>, vector<4x16x16xf32> -> vector<4x16x16xf32>
    "tpu.trace_stop"() : () -> ()
    %59 = vector.extract_strided_slice %35 {offsets = [0, 1, 0, 0], sizes = [4, 1, 16, 16], strides = [1, 1, 1, 1]} : vector<4x4x16x16xf32> to vector<4x1x16x16xf32>
    %60 = vector.shape_cast %59 : vector<4x1x16x16xf32> to vector<4x16x16xf32>
    %61 = arith.addf %58, %60 : vector<4x16x16xf32>
    %cst_42 = arith.constant dense<0xFF800000> : vector<4x16xf32>
    %62 = vector.multi_reduction <maximumf>, %61, %cst_42 [2] : vector<4x16x16xf32> to vector<4x16xf32>
    %63 = vector.shape_cast %62 : vector<4x16xf32> to vector<4x16x1xf32>
    %64 = vector.broadcast %63 : vector<4x16x1xf32> to vector<4x16x16xf32>
    %65 = arith.subf %61, %64 : vector<4x16x16xf32>
    %66 = math.exp %65 : vector<4x16x16xf32>
    %cst_43 = arith.constant dense<0.000000e+00> : vector<4x16xf32>
    %67 = vector.multi_reduction <add>, %66, %cst_43 [2] : vector<4x16x16xf32> to vector<4x16xf32>
    %68 = vector.shape_cast %67 : vector<4x16xf32> to vector<4x16x1xf32>
    %69 = tpu.reciprocal %68 {approx = true} : vector<4x16x1xf32> -> vector<4x16x1xf32>
    %70 = vector.broadcast %69 : vector<4x16x1xf32> to vector<4x16x16xf32>
    %71 = arith.mulf %66, %70 : vector<4x16x16xf32>
    %72 = arith.truncf %71 : vector<4x16x16xf32> to vector<4x16x16xbf16>
    "tpu.trace_start"() <{level = 10 : i32, message = "bnm,bmd->bnd"}> : () -> ()
    %cst_44 = arith.constant dense<0.000000e+00> : vector<4x16x8xf32>
    %73 = tpu.matmul %72, %57, %cst_44 {dimension_numbers = #tpu.dot_dimension_numbers<[2], [1], [1], [2], [0, 0, 0, 1, 1, 2], [0], [0]>} : vector<4x16x16xbf16>, vector<4x16x8xbf16>, vector<4x16x8xf32> -> vector<4x16x8xf32>
    "tpu.trace_stop"() : () -> ()
    %c0_45 = arith.constant 0 : index
    %c0_46 = arith.constant 0 : index
    %c16 = arith.constant 16 : index
    %74 = vector.load %arg10[%c0_45, %c0_46, %c16] : memref<4x16x96xbf16, #tpu.memory_space<vmem>>, vector<4x16x8xbf16>
    %c0_47 = arith.constant 0 : index
    %c0_48 = arith.constant 0 : index
    %c48 = arith.constant 48 : index
    %75 = vector.load %arg10[%c0_47, %c0_48, %c48] : memref<4x16x96xbf16, #tpu.memory_space<vmem>>, vector<4x16x8xbf16>
    %c0_49 = arith.constant 0 : index
    %c0_50 = arith.constant 0 : index
    %c80 = arith.constant 80 : index
    %76 = vector.load %arg10[%c0_49, %c0_50, %c80] : memref<4x16x96xbf16, #tpu.memory_space<vmem>>, vector<4x16x8xbf16>
    "tpu.trace_start"() <{level = 10 : i32, message = "bnd,bmd->bnm"}> : () -> ()
    %cst_51 = arith.constant dense<0.000000e+00> : vector<4x16x16xf32>
    %77 = tpu.matmul %74, %75, %cst_51 {dimension_numbers = #tpu.dot_dimension_numbers<[2], [2], [1], [1], [0, 0, 0, 1, 1, 1], [0], [0]>} : vector<4x16x8xbf16>, vector<4x16x8xbf16>, vector<4x16x16xf32> -> vector<4x16x16xf32>
    "tpu.trace_stop"() : () -> ()
    %78 = vector.extract_strided_slice %35 {offsets = [0, 2, 0, 0], sizes = [4, 1, 16, 16], strides = [1, 1, 1, 1]} : vector<4x4x16x16xf32> to vector<4x1x16x16xf32>
    %79 = vector.shape_cast %78 : vector<4x1x16x16xf32> to vector<4x16x16xf32>
    %80 = arith.addf %77, %79 : vector<4x16x16xf32>
    %cst_52 = arith.constant dense<0xFF800000> : vector<4x16xf32>
    %81 = vector.multi_reduction <maximumf>, %80, %cst_52 [2] : vector<4x16x16xf32> to vector<4x16xf32>
    %82 = vector.shape_cast %81 : vector<4x16xf32> to vector<4x16x1xf32>
    %83 = vector.broadcast %82 : vector<4x16x1xf32> to vector<4x16x16xf32>
    %84 = arith.subf %80, %83 : vector<4x16x16xf32>
    %85 = math.exp %84 : vector<4x16x16xf32>
    %cst_53 = arith.constant dense<0.000000e+00> : vector<4x16xf32>
    %86 = vector.multi_reduction <add>, %85, %cst_53 [2] : vector<4x16x16xf32> to vector<4x16xf32>
    %87 = vector.shape_cast %86 : vector<4x16xf32> to vector<4x16x1xf32>
    %88 = tpu.reciprocal %87 {approx = true} : vector<4x16x1xf32> -> vector<4x16x1xf32>
    %89 = vector.broadcast %88 : vector<4x16x1xf32> to vector<4x16x16xf32>
    %90 = arith.mulf %85, %89 : vector<4x16x16xf32>
    %91 = arith.truncf %90 : vector<4x16x16xf32> to vector<4x16x16xbf16>
    "tpu.trace_start"() <{level = 10 : i32, message = "bnm,bmd->bnd"}> : () -> ()
    %cst_54 = arith.constant dense<0.000000e+00> : vector<4x16x8xf32>
    %92 = tpu.matmul %91, %76, %cst_54 {dimension_numbers = #tpu.dot_dimension_numbers<[2], [1], [1], [2], [0, 0, 0, 1, 1, 2], [0], [0]>} : vector<4x16x16xbf16>, vector<4x16x8xbf16>, vector<4x16x8xf32> -> vector<4x16x8xf32>
    "tpu.trace_stop"() : () -> ()
    %c0_55 = arith.constant 0 : index
    %c0_56 = arith.constant 0 : index
    %c24 = arith.constant 24 : index
    %93 = vector.load %arg10[%c0_55, %c0_56, %c24] : memref<4x16x96xbf16, #tpu.memory_space<vmem>>, vector<4x16x8xbf16>
    %c0_57 = arith.constant 0 : index
    %c0_58 = arith.constant 0 : index
    %c56 = arith.constant 56 : index
    %94 = vector.load %arg10[%c0_57, %c0_58, %c56] : memref<4x16x96xbf16, #tpu.memory_space<vmem>>, vector<4x16x8xbf16>
    %c0_59 = arith.constant 0 : index
    %c0_60 = arith.constant 0 : index
    %c88 = arith.constant 88 : index
    %95 = vector.load %arg10[%c0_59, %c0_60, %c88] : memref<4x16x96xbf16, #tpu.memory_space<vmem>>, vector<4x16x8xbf16>
    "tpu.trace_start"() <{level = 10 : i32, message = "bnd,bmd->bnm"}> : () -> ()
    %cst_61 = arith.constant dense<0.000000e+00> : vector<4x16x16xf32>
    %96 = tpu.matmul %93, %94, %cst_61 {dimension_numbers = #tpu.dot_dimension_numbers<[2], [2], [1], [1], [0, 0, 0, 1, 1, 1], [0], [0]>} : vector<4x16x8xbf16>, vector<4x16x8xbf16>, vector<4x16x16xf32> -> vector<4x16x16xf32>
    "tpu.trace_stop"() : () -> ()
    %97 = vector.extract_strided_slice %35 {offsets = [0, 3, 0, 0], sizes = [4, 1, 16, 16], strides = [1, 1, 1, 1]} : vector<4x4x16x16xf32> to vector<4x1x16x16xf32>
    %98 = vector.shape_cast %97 : vector<4x1x16x16xf32> to vector<4x16x16xf32>
    %99 = arith.addf %96, %98 : vector<4x16x16xf32>
    %cst_62 = arith.constant dense<0xFF800000> : vector<4x16xf32>
    %100 = vector.multi_reduction <maximumf>, %99, %cst_62 [2] : vector<4x16x16xf32> to vector<4x16xf32>
    %101 = vector.shape_cast %100 : vector<4x16xf32> to vector<4x16x1xf32>
    %102 = vector.broadcast %101 : vector<4x16x1xf32> to vector<4x16x16xf32>
    %103 = arith.subf %99, %102 : vector<4x16x16xf32>
    %104 = math.exp %103 : vector<4x16x16xf32>
    %cst_63 = arith.constant dense<0.000000e+00> : vector<4x16xf32>
    %105 = vector.multi_reduction <add>, %104, %cst_63 [2] : vector<4x16x16xf32> to vector<4x16xf32>
    %106 = vector.shape_cast %105 : vector<4x16xf32> to vector<4x16x1xf32>
    %107 = tpu.reciprocal %106 {approx = true} : vector<4x16x1xf32> -> vector<4x16x1xf32>
    %108 = vector.broadcast %107 : vector<4x16x1xf32> to vector<4x16x16xf32>
    %109 = arith.mulf %104, %108 : vector<4x16x16xf32>
    %110 = arith.truncf %109 : vector<4x16x16xf32> to vector<4x16x16xbf16>
    "tpu.trace_start"() <{level = 10 : i32, message = "bnm,bmd->bnd"}> : () -> ()
    %cst_64 = arith.constant dense<0.000000e+00> : vector<4x16x8xf32>
    %111 = tpu.matmul %110, %95, %cst_64 {dimension_numbers = #tpu.dot_dimension_numbers<[2], [1], [1], [2], [0, 0, 0, 1, 1, 2], [0], [0]>} : vector<4x16x16xbf16>, vector<4x16x8xbf16>, vector<4x16x8xf32> -> vector<4x16x8xf32>
    "tpu.trace_stop"() : () -> ()
    %112 = tpu.concatenate %54, %73, %92, %111 in 2 : vector<4x16x8xf32>, vector<4x16x8xf32>, vector<4x16x8xf32>, vector<4x16x8xf32> -> vector<4x16x32xf32>
    %113 = vector.shape_cast %112 : vector<4x16x32xf32> to vector<64x32xf32>
    %114 = arith.truncf %113 : vector<64x32xf32> to vector<64x32xbf16>
    %c0_65 = arith.constant 0 : index
    %c0_66 = arith.constant 0 : index
    %115 = vector.load %arg7[%c0_65, %c0_66] : memref<32x32xbf16, #tpu.memory_space<vmem>>, vector<32x32xbf16>
    %cst_67 = arith.constant dense<0.000000e+00> : vector<64x32xf32>
    %116 = tpu.matmul %114, %115, %cst_67 {dimension_numbers = #tpu.dot_dimension_numbers<[1], [0], [0], [1], [0, 0, 1, 1], [], []>} : vector<64x32xbf16>, vector<32x32xbf16>, vector<64x32xf32> -> vector<64x32xf32>
    %c0_68 = arith.constant 0 : index
    %c0_69 = arith.constant 0 : index
    %117 = vector.load %arg8[%c0_68, %c0_69] : memref<1x32xf32, #tpu.memory_space<vmem>>, vector<1x32xf32>
    %118 = vector.broadcast %117 : vector<1x32xf32> to vector<64x32xf32>
    %119 = arith.addf %116, %118 : vector<64x32xf32>
    %120 = vector.shape_cast %119 : vector<64x32xf32> to vector<4x16x32xf32>
    %121 = arith.addf %0, %120 : vector<4x16x32xf32>
    %c0_70 = arith.constant 0 : index
    %c0_71 = arith.constant 0 : index
    %c0_72 = arith.constant 0 : index
    %122 = vector.load %arg9[%c0_70, %c0_71, %c0_72] : memref<4x16x32xf32, #tpu.memory_space<vmem>>, vector<4x16x32xf32>
    tpu.vector_store %arg9[%c0_70, %c0_71, %c0_72], %121 {strides = array<i32>} : memref<4x16x32xf32, #tpu.memory_space<vmem>>, vector<4x16x32xf32>,
    return
  }
  func.func @transform_0(%arg0: i32) -> (i32, i32, i32) {
    %c0_i32 = arith.constant 0 : i32
    %c0_i32_0 = arith.constant 0 : i32
    %c0_i32_1 = arith.constant 0 : i32
    return %arg0, %c0_i32, %c0_i32_0 : i32, i32, i32
  }
  func.func @transform_1(%arg0: i32) -> (i32, i32, i32, i32) {
    %c1_i32 = arith.constant 1 : i32
    %c0_i32 = arith.constant 0 : i32
    %0 = arith.cmpi eq, %c1_i32, %c0_i32 : i32
    %c1_i32_0 = arith.constant 1 : i32
    %1 = arith.select %0, %c1_i32_0, %c1_i32 : i32
    %2 = arith.remsi %arg0, %1 : i32
    %c0_i32_1 = arith.constant 0 : i32
    %3 = arith.cmpi ne, %2, %c0_i32_1 : i32
    %c0_i32_2 = arith.constant 0 : i32
    %4 = arith.cmpi slt, %2, %c0_i32_2 : i32
    %c0_i32_3 = arith.constant 0 : i32
    %5 = arith.cmpi slt, %1, %c0_i32_3 : i32
    %6 = arith.xori %4, %5 : i1
    %7 = arith.andi %6, %3 : i1
    %8 = arith.addi %2, %1 : i32
    %9 = arith.select %7, %8, %2 : i32
    %c0_i32_4 = arith.constant 0 : i32
    %c0_i32_5 = arith.constant 0 : i32
    %c0_i32_6 = arith.constant 0 : i32
    %c0_i32_7 = arith.constant 0 : i32
    return %9, %c0_i32_4, %c0_i32_5, %c0_i32_6 : i32, i32, i32, i32
  }
  func.func @transform_2(%arg0: i32) -> (i32, i32, i32) {
    %c0_i32 = arith.constant 0 : i32
    %c0_i32_0 = arith.constant 0 : i32
    %c0_i32_1 = arith.constant 0 : i32
    %c0_i32_2 = arith.constant 0 : i32
    return %c0_i32, %c0_i32_0, %c0_i32_1 : i32, i32, i32
  }
  func.func @transform_3(%arg0: i32) -> (i32, i32, i32) {
    %c0_i32 = arith.constant 0 : i32
    %c0_i32_0 = arith.constant 0 : i32
    %c0_i32_1 = arith.constant 0 : i32
    %c0_i32_2 = arith.constant 0 : i32
    return %c0_i32, %c0_i32_0, %c0_i32_1 : i32, i32, i32
  }
  func.func @transform_4(%arg0: i32) -> (i32, i32) {
    %c0_i32 = arith.constant 0 : i32
    %c0_i32_0 = arith.constant 0 : i32
    %c0_i32_1 = arith.constant 0 : i32
    return %c0_i32, %c0_i32_0 : i32, i32
  }
  func.func @transform_5(%arg0: i32) -> (i32, i32) {
    %c0_i32 = arith.constant 0 : i32
    %c0_i32_0 = arith.constant 0 : i32
    %c0_i32_1 = arith.constant 0 : i32
    return %c0_i32, %c0_i32_0 : i32, i32
  }
  func.func @transform_6(%arg0: i32) -> (i32, i32) {
    %c0_i32 = arith.constant 0 : i32
    %c0_i32_0 = arith.constant 0 : i32
    %c0_i32_1 = arith.constant 0 : i32
    return %c0_i32, %c0_i32_0 : i32, i32
  }
  func.func @transform_7(%arg0: i32) -> (i32, i32) {
    %c0_i32 = arith.constant 0 : i32
    %c0_i32_0 = arith.constant 0 : i32
    %c0_i32_1 = arith.constant 0 : i32
    return %c0_i32, %c0_i32_0 : i32, i32
  }
  func.func @transform_8(%arg0: i32) -> (i32, i32, i32) {
    %c0_i32 = arith.constant 0 : i32
    %c0_i32_0 = arith.constant 0 : i32
    %c0_i32_1 = arith.constant 0 : i32
    return %arg0, %c0_i32, %c0_i32_0 : i32, i32, i32
  }
}

module attributes {stable_mosaic.version = 11 : i64} {
  func.func @_mlp_kernel(%arg0: i32, %arg1: memref<64x32xf32, #tpu.memory_space<vmem>>, %arg2: memref<1x32xf32, #tpu.memory_space<vmem>>, %arg3: memref<1x32xf32, #tpu.memory_space<vmem>>, %arg4: memref<32x64xbf16, #tpu.memory_space<vmem>>, %arg5: memref<1x64xf32, #tpu.memory_space<vmem>>, %arg6: memref<64x32xbf16, #tpu.memory_space<vmem>>, %arg7: memref<1x32xf32, #tpu.memory_space<vmem>>, %arg8: memref<64x32xf32, #tpu.memory_space<vmem>>) attributes {dimension_semantics = [#tpu.dimension_semantics<parallel>], iteration_bounds = array<i64: 4>, scalar_prefetch = 0 : i64, scratch_operands = 0 : i64, tpu.core_type = #tpu.core_type<tc>, window_params = [{transform_indices = @transform_0, window_bounds = array<i64: 64, 32>}, {pipeline_mode = #tpu.pipeline_mode<synchronous>, transform_indices = @transform_1, window_bounds = array<i64: 1, 32>}, {pipeline_mode = #tpu.pipeline_mode<synchronous>, transform_indices = @transform_2, window_bounds = array<i64: 1, 32>}, {pipeline_mode = #tpu.pipeline_mode<synchronous>, transform_indices = @transform_3, window_bounds = array<i64: 32, 64>}, {pipeline_mode = #tpu.pipeline_mode<synchronous>, transform_indices = @transform_4, window_bounds = array<i64: 1, 64>}, {pipeline_mode = #tpu.pipeline_mode<synchronous>, transform_indices = @transform_5, window_bounds = array<i64: 64, 32>}, {pipeline_mode = #tpu.pipeline_mode<synchronous>, transform_indices = @transform_6, window_bounds = array<i64: 1, 32>}, {transform_indices = @transform_7, window_bounds = array<i64: 64, 32>}]} {
    %c0 = arith.constant 0 : index
    %c0_0 = arith.constant 0 : index
    %0 = vector.load %arg1[%c0, %c0_0] : memref<64x32xf32, #tpu.memory_space<vmem>>, vector<64x32xf32>
    %cst = arith.constant dense<0.000000e+00> : vector<64xf32>
    %1 = vector.multi_reduction <add>, %0, %cst [1] : vector<64x32xf32> to vector<64xf32>
    %2 = vector.shape_cast %1 : vector<64xf32> to vector<64x1xf32>
    %cst_1 = arith.constant 3.200000e+01 : f32
    %3 = vector.broadcast %cst_1 : f32 to vector<64x1xf32>
    %4 = arith.divf %2, %3 : vector<64x1xf32>
    %5 = vector.broadcast %4 : vector<64x1xf32> to vector<64x32xf32>
    %6 = arith.subf %0, %5 : vector<64x32xf32>
    %7 = arith.mulf %6, %6 : vector<64x32xf32>
    %cst_2 = arith.constant dense<0.000000e+00> : vector<64xf32>
    %8 = vector.multi_reduction <add>, %7, %cst_2 [1] : vector<64x32xf32> to vector<64xf32>
    %9 = vector.shape_cast %8 : vector<64xf32> to vector<64x1xf32>
    %cst_3 = arith.constant 3.200000e+01 : f32
    %10 = vector.broadcast %cst_3 : f32 to vector<64x1xf32>
    %11 = arith.divf %9, %10 : vector<64x1xf32>
    %12 = vector.broadcast %4 : vector<64x1xf32> to vector<64x32xf32>
    %13 = arith.subf %0, %12 : vector<64x32xf32>
    %cst_4 = arith.constant 9.99999974E-6 : f32
    %14 = vector.broadcast %cst_4 : f32 to vector<64x1xf32>
    %15 = arith.addf %11, %14 : vector<64x1xf32>
    %16 = math.rsqrt %15 : vector<64x1xf32>
    %17 = vector.broadcast %16 : vector<64x1xf32> to vector<64x32xf32>
    %18 = arith.mulf %13, %17 : vector<64x32xf32>
    %c0_5 = arith.constant 0 : index
    %c0_6 = arith.constant 0 : index
    %19 = vector.load %arg2[%c0_5, %c0_6] : memref<1x32xf32, #tpu.memory_space<vmem>>, vector<1x32xf32>
    %20 = vector.broadcast %19 : vector<1x32xf32> to vector<64x32xf32>
    %21 = arith.mulf %18, %20 : vector<64x32xf32>
    %c0_7 = arith.constant 0 : index
    %c0_8 = arith.constant 0 : index
    %22 = vector.load %arg3[%c0_7, %c0_8] : memref<1x32xf32, #tpu.memory_space<vmem>>, vector<1x32xf32>
    %23 = vector.broadcast %22 : vector<1x32xf32> to vector<64x32xf32>
    %24 = arith.addf %21, %23 : vector<64x32xf32>
    %25 = arith.truncf %24 : vector<64x32xf32> to vector<64x32xbf16>
    %c0_9 = arith.constant 0 : index
    %c0_10 = arith.constant 0 : index
    %26 = vector.load %arg4[%c0_9, %c0_10] : memref<32x64xbf16, #tpu.memory_space<vmem>>, vector<32x64xbf16>
    %cst_11 = arith.constant dense<0.000000e+00> : vector<64x64xf32>
    %27 = tpu.matmul %25, %26, %cst_11 {dimension_numbers = #tpu.dot_dimension_numbers<[1], [0], [0], [1], [0, 0, 1, 1], [], []>} : vector<64x32xbf16>, vector<32x64xbf16>, vector<64x64xf32> -> vector<64x64xf32>
    %c0_12 = arith.constant 0 : index
    %c0_13 = arith.constant 0 : index
    %28 = vector.load %arg5[%c0_12, %c0_13] : memref<1x64xf32, #tpu.memory_space<vmem>>, vector<1x64xf32>
    %29 = vector.broadcast %28 : vector<1x64xf32> to vector<64x64xf32>
    %30 = arith.addf %27, %29 : vector<64x64xf32>
    %cst_14 = arith.constant 5.000000e-01 : f32
    %31 = vector.broadcast %cst_14 : f32 to vector<64x64xf32>
    %32 = arith.mulf %31, %30 : vector<64x64xf32>
    %33 = arith.mulf %30, %30 : vector<64x64xf32>
    %34 = arith.mulf %33, %30 : vector<64x64xf32>
    %cst_15 = arith.constant 4.471500e-02 : f32
    %35 = vector.broadcast %cst_15 : f32 to vector<64x64xf32>
    %36 = arith.mulf %35, %34 : vector<64x64xf32>
    %37 = arith.addf %30, %36 : vector<64x64xf32>
    %cst_16 = arith.constant 0.797884583 : f32
    %38 = vector.broadcast %cst_16 : f32 to vector<64x64xf32>
    %39 = arith.mulf %38, %37 : vector<64x64xf32>
    %40 = math.tanh %39 : vector<64x64xf32>
    %cst_17 = arith.constant 1.000000e+00 : f32
    %41 = vector.broadcast %cst_17 : f32 to vector<64x64xf32>
    %42 = arith.addf %41, %40 : vector<64x64xf32>
    %43 = arith.mulf %32, %42 : vector<64x64xf32>
    %44 = arith.truncf %43 : vector<64x64xf32> to vector<64x64xbf16>
    %c0_18 = arith.constant 0 : index
    %c0_19 = arith.constant 0 : index
    %45 = vector.load %arg6[%c0_18, %c0_19] : memref<64x32xbf16, #tpu.memory_space<vmem>>, vector<64x32xbf16>
    %cst_20 = arith.constant dense<0.000000e+00> : vector<64x32xf32>
    %46 = tpu.matmul %44, %45, %cst_20 {dimension_numbers = #tpu.dot_dimension_numbers<[1], [0], [0], [1], [0, 0, 1, 1], [], []>} : vector<64x64xbf16>, vector<64x32xbf16>, vector<64x32xf32> -> vector<64x32xf32>
    %c0_21 = arith.constant 0 : index
    %c0_22 = arith.constant 0 : index
    %47 = vector.load %arg7[%c0_21, %c0_22] : memref<1x32xf32, #tpu.memory_space<vmem>>, vector<1x32xf32>
    %48 = vector.broadcast %47 : vector<1x32xf32> to vector<64x32xf32>
    %49 = arith.addf %46, %48 : vector<64x32xf32>
    %50 = arith.addf %0, %49 : vector<64x32xf32>
    %c0_23 = arith.constant 0 : index
    %c0_24 = arith.constant 0 : index
    %51 = vector.load %arg8[%c0_23, %c0_24] : memref<64x32xf32, #tpu.memory_space<vmem>>, vector<64x32xf32>
    tpu.vector_store %arg8[%c0_23, %c0_24], %50 {strides = array<i32>} : memref<64x32xf32, #tpu.memory_space<vmem>>, vector<64x32xf32>,
    return
  }
  func.func @transform_0(%arg0: i32) -> (i32, i32) {
    %c0_i32 = arith.constant 0 : i32
    %c0_i32_0 = arith.constant 0 : i32
    return %arg0, %c0_i32 : i32, i32
  }
  func.func @transform_1(%arg0: i32) -> (i32, i32) {
    %c0_i32 = arith.constant 0 : i32
    %c0_i32_0 = arith.constant 0 : i32
    %c0_i32_1 = arith.constant 0 : i32
    return %c0_i32, %c0_i32_0 : i32, i32
  }
  func.func @transform_2(%arg0: i32) -> (i32, i32) {
    %c0_i32 = arith.constant 0 : i32
    %c0_i32_0 = arith.constant 0 : i32
    %c0_i32_1 = arith.constant 0 : i32
    return %c0_i32, %c0_i32_0 : i32, i32
  }
  func.func @transform_3(%arg0: i32) -> (i32, i32) {
    %c0_i32 = arith.constant 0 : i32
    %c0_i32_0 = arith.constant 0 : i32
    %c0_i32_1 = arith.constant 0 : i32
    return %c0_i32, %c0_i32_0 : i32, i32
  }
  func.func @transform_4(%arg0: i32) -> (i32, i32) {
    %c0_i32 = arith.constant 0 : i32
    %c0_i32_0 = arith.constant 0 : i32
    %c0_i32_1 = arith.constant 0 : i32
    return %c0_i32, %c0_i32_0 : i32, i32
  }
  func.func @transform_5(%arg0: i32) -> (i32, i32) {
    %c0_i32 = arith.constant 0 : i32
    %c0_i32_0 = arith.constant 0 : i32
    %c0_i32_1 = arith.constant 0 : i32
    return %c0_i32, %c0_i32_0 : i32, i32
  }
  func.func @transform_6(%arg0: i32) -> (i32, i32) {
    %c0_i32 = arith.constant 0 : i32
    %c0_i32_0 = arith.constant 0 : i32
    %c0_i32_1 = arith.constant 0 : i32
    return %c0_i32, %c0_i32_0 : i32, i32
  }
  func.func @transform_7(%arg0: i32) -> (i32, i32) {
    %c0_i32 = arith.constant 0 : i32
    %c0_i32_0 = arith.constant 0 : i32
    return %arg0, %c0_i32 : i32, i32
  }
}

</mosaic_0001>

<llo_original>
// kernel: space_transformer_forward.5
$region0: #{space_transformer_forward.5}
  #allocation0 [shape = 'u32[]', space=smem, size = 0x4, offset = 0x4, fixed_abs, tag = 'smem constant byte address 0x4 - core index']
  #allocation1 [shape = 'u32[144,128]{1,0:T(1,128)}', space=vmem, size = 0x12000, scoped, tag = 'internal scratch']
  %s0 = inlined_call_operand.vmem [shape: f32[256,32], index: 0, kind: input, shape index: {}]
  %s1 = inlined_call_operand.vmem [shape: f32[1,32], index: 1, kind: input, shape index: {}]
  %s2 = inlined_call_operand.vmem [shape: f32[1,32], index: 2, kind: input, shape index: {}]
  %s3 = inlined_call_operand.vmem [shape: bf16[32,64], index: 3, kind: input, shape index: {}]
  %s4 = inlined_call_operand.vmem [shape: f32[1,64], index: 4, kind: input, shape index: {}]
  %s5 = inlined_call_operand.vmem [shape: bf16[64,32], index: 5, kind: input, shape index: {}]
  %s6 = inlined_call_operand.vmem [shape: f32[1,32], index: 6, kind: input, shape index: {}]
  %s7 = inlined_call_operand.vmem [shape: f32[256,32], index: 7, kind: output, shape index: {}]
  %s8 = sld [smem:[#allocation0]]
  $region61: #{space_transformer_forward.5} parent=0
    _
  %s10 = ssub.s32 1, %s8
  %s11 = scalar_select 0, %s10, %s8
  loop: start=0, step=1, limit=6
  $region2: #{space_transformer_forward.5} parent=0 // loop_pre_header
    _
  $region3: #{space_transformer_forward.5} parent=0 // loop_header
    %s13 = sphi 0, %s17
    %p14 = scmp.ge.s32.totalorder %s13, 6
    %s23 = sphi 0, %s25
    %s26 = sphi 0, %s23
    %s27 = sphi 0, %s26
    %s43 = sphi 0, %s27
    %s47 = sphi 0, %s47
    %s49 = sphi 0, %s47
    %s50 = sphi 0, %s49
    %s64 = sphi 0, %s50
    %s68 = sphi 0, %s68
    %s70 = sphi 0, %s68
    %s71 = sphi 0, %s70
    %s85 = sphi 0, %s71
    %s89 = sphi 0, %s89
    %s91 = sphi 0, %s89
    %s92 = sphi 0, %s91
    %s106 = sphi 0, %s92
    %s110 = sphi 0, %s110
    %s112 = sphi 0, %s110
    %s113 = sphi 0, %s112
    %s127 = sphi 0, %s113
    %s131 = sphi 0, %s131
    %s133 = sphi 0, %s131
    %s134 = sphi 0, %s133
    %s148 = sphi 0, %s134
    %s152 = sphi 0, %s152
    %s154 = sphi 0, %s152
    %s155 = sphi 0, %s154
    %s169 = sphi 0, %s155
    %s175 = sphi 0, %s177
    %s178 = sphi 0, %s175
    %s179 = sphi 0, %s178
    %s195 = sphi 0, %s179
  $region4: #{space_transformer_forward.5} parent=0 // loop_header_branch
    %16 = sbr.rel (%p14) target = $region8
  $region5: #{space_transformer_forward.5} parent=0 // loop_body
    %s18 = ssub.s32 %s13, 1
    %s19 = ssub.s32 %s13, 2
    %s20 = sadd.s32 %s13, 1
    %s21 = ssub.s32 %s13, %s20
    %p22 = scmp.eq.s32.totalorder %s21, 0
    %s24 = sadd.s32 %s23, 1
    %s25 = scalar_select %p22, %s23, %s24
    %p28 = pneg %p22
    %p29 = scmp.eq.s32.totalorder %s13, 3
    %p30 = por %p28, %p29
    %p31 = scmp.ne.s32.totalorder %s23, %s26
    %p32 = scmp.eq.s32.totalorder %s13, 0
    %p33 = por %p31, %p32
    %p34 = scmp.ne.s32.totalorder %s23, %s26
    %p35 = scmp.eq.s32.totalorder %s18, 3
    %p36 = por %p34, %p35
    %p37 = scmp.ne.s32.totalorder %s26, %s27
    %p38 = scmp.eq.s32.totalorder %s18, 0
    %p39 = por %p37, %p38
    %p40 = scmp.ne.s32.totalorder %s26, %s27
    %p41 = scmp.eq.s32.totalorder %s19, 3
    %p42 = por %p40, %p41
    %p44 = scmp.ne.s32.totalorder %s27, %s43
    %p45 = scmp.eq.s32.totalorder %s19, 0
    %p46 = por %p44, %p45
    %s48 = sadd.s32 %s47, 1
    %p51 = scmp.eq.s32.totalorder %s13, 3
    %p52 = scmp.ne.s32.totalorder %s47, %s49
    %p53 = scmp.eq.s32.totalorder %s13, 0
    %p54 = por %p52, %p53
    %p55 = scmp.ne.s32.totalorder %s47, %s49
    %p56 = scmp.eq.s32.totalorder %s18, 3
    %p57 = por %p55, %p56
    %p58 = scmp.ne.s32.totalorder %s49, %s50
    %p59 = scmp.eq.s32.totalorder %s18, 0
    %p60 = por %p58, %p59
    %p61 = scmp.ne.s32.totalorder %s49, %s50
    %p62 = scmp.eq.s32.totalorder %s19, 3
    %p63 = por %p61, %p62
    %p65 = scmp.ne.s32.totalorder %s50, %s64
    %p66 = scmp.eq.s32.totalorder %s19, 0
    %p67 = por %p65, %p66
    %s69 = sadd.s32 %s68, 1
    %p72 = scmp.eq.s32.totalorder %s13, 3
    %p73 = scmp.ne.s32.totalorder %s68, %s70
    %p74 = scmp.eq.s32.totalorder %s13, 0
    %p75 = por %p73, %p74
    %p76 = scmp.ne.s32.totalorder %s68, %s70
    %p77 = scmp.eq.s32.totalorder %s18, 3
    %p78 = por %p76, %p77
    %p79 = scmp.ne.s32.totalorder %s70, %s71
    %p80 = scmp.eq.s32.totalorder %s18, 0
    %p81 = por %p79, %p80
    %p82 = scmp.ne.s32.totalorder %s70, %s71
    %p83 = scmp.eq.s32.totalorder %s19, 3
    %p84 = por %p82, %p83
    %p86 = scmp.ne.s32.totalorder %s71, %s85
    %p87 = scmp.eq.s32.totalorder %s19, 0
    %p88 = por %p86, %p87
    %s90 = sadd.s32 %s89, 1
    %p93 = scmp.eq.s32.totalorder %s13, 3
    %p94 = scmp.ne.s32.totalorder %s89, %s91
    %p95 = scmp.eq.s32.totalorder %s13, 0
    %p96 = por %p94, %p95
    %p97 = scmp.ne.s32.totalorder %s89, %s91
    %p98 = scmp.eq.s32.totalorder %s18, 3
    %p99 = por %p97, %p98
    %p100 = scmp.ne.s32.totalorder %s91, %s92
    %p101 = scmp.eq.s32.totalorder %s18, 0
    %p102 = por %p100, %p101
    %p103 = scmp.ne.s32.totalorder %s91, %s92
    %p104 = scmp.eq.s32.totalorder %s19, 3
    %p105 = por %p103, %p104
    %p107 = scmp.ne.s32.totalorder %s92, %s106
    %p108 = scmp.eq.s32.totalorder %s19, 0
    %p109 = por %p107, %p108
    %s111 = sadd.s32 %s110, 1
    %p114 = scmp.eq.s32.totalorder %s13, 3
    %p115 = scmp.ne.s32.totalorder %s110, %s112
    %p116 = scmp.eq.s32.totalorder %s13, 0
    %p117 = por %p115, %p116
    %p118 = scmp.ne.s32.totalorder %s110, %s112
    %p119 = scmp.eq.s32.totalorder %s18, 3
    %p120 = por %p118, %p119
    %p121 = scmp.ne.s32.totalorder %s112, %s113
    %p122 = scmp.eq.s32.totalorder %s18, 0
    %p123 = por %p121, %p122
    %p124 = scmp.ne.s32.totalorder %s112, %s113
    %p125 = scmp.eq.s32.totalorder %s19, 3
    %p126 = por %p124, %p125
    %p128 = scmp.ne.s32.totalorder %s113, %s127
    %p129 = scmp.eq.s32.totalorder %s19, 0
    %p130 = por %p128, %p129
    %s132 = sadd.s32 %s131, 1
    %p135 = scmp.eq.s32.totalorder %s13, 3
    %p136 = scmp.ne.s32.totalorder %s131, %s133
    %p137 = scmp.eq.s32.totalorder %s13, 0
    %p138 = por %p136, %p137
    %p139 = scmp.ne.s32.totalorder %s131, %s133
    %p140 = scmp.eq.s32.totalorder %s18, 3
    %p141 = por %p139, %p140
    %p142 = scmp.ne.s32.totalorder %s133, %s134
    %p143 = scmp.eq.s32.totalorder %s18, 0
    %p144 = por %p142, %p143
    %p145 = scmp.ne.s32.totalorder %s133, %s134
    %p146 = scmp.eq.s32.totalorder %s19, 3
    %p147 = por %p145, %p146
    %p149 = scmp.ne.s32.totalorder %s134, %s148
    %p150 = scmp.eq.s32.totalorder %s19, 0
    %p151 = por %p149, %p150
    %s153 = sadd.s32 %s152, 1
    %p156 = scmp.eq.s32.totalorder %s13, 3
    %p157 = scmp.ne.s32.totalorder %s152, %s154
    %p158 = scmp.eq.s32.totalorder %s13, 0
    %p159 = por %p157, %p158
    %p160 = scmp.ne.s32.totalorder %s152, %s154
    %p161 = scmp.eq.s32.totalorder %s18, 3
    %p162 = por %p160, %p161
    %p163 = scmp.ne.s32.totalorder %s154, %s155
    %p164 = scmp.eq.s32.totalorder %s18, 0
    %p165 = por %p163, %p164
    %p166 = scmp.ne.s32.totalorder %s154, %s155
    %p167 = scmp.eq.s32.totalorder %s19, 3
    %p168 = por %p166, %p167
    %p170 = scmp.ne.s32.totalorder %s155, %s169
    %p171 = scmp.eq.s32.totalorder %s19, 0
    %p172 = por %p170, %p171
    %s173 = ssub.s32 %s13, %s20
    %p174 = scmp.eq.s32.totalorder %s173, 0
    %s176 = sadd.s32 %s175, 1
    %s177 = scalar_select %p174, %s175, %s176
    %p180 = pneg %p174
    %p181 = scmp.eq.s32.totalorder %s13, 3
    %p182 = por %p180, %p181
    %p183 = scmp.ne.s32.totalorder %s175, %s178
    %p184 = scmp.eq.s32.totalorder %s13, 0
    %p185 = por %p183, %p184
    %p186 = scmp.ne.s32.totalorder %s175, %s178
    %p187 = scmp.eq.s32.totalorder %s18, 3
    %p188 = por %p186, %p187
    %p189 = scmp.ne.s32.totalorder %s178, %s179
    %p190 = scmp.eq.s32.totalorder %s18, 0
    %p191 = por %p189, %p190
    %p192 = scmp.ne.s32.totalorder %s178, %s179
    %p193 = scmp.eq.s32.totalorder %s19, 3
    %p194 = por %p192, %p193
    %p196 = scmp.ne.s32.totalorder %s179, %s195
    %p197 = scmp.eq.s32.totalorder %s19, 0
    %p198 = por %p196, %p197
    %p199 = scmp.le.s32.totalorder 1, %s13
    %p200 = scmp.lt.s32.totalorder %s13, 5
    %p201 = pnand %p199, %p200
    %p202 = pneg %p201
    // Predicated region
    $region9: #{space_transformer_forward.5} parent=5 // pred_check
      _
    $region10: #{space_transformer_forward.5} parent=5 // pred_check_branch
      %204 = sbr.rel (%p201) target = $region12
    $region11: #{space_transformer_forward.5} parent=5 // pred_region
      %s205 = ssub.s32 %s13, 1
      // Predicated region
      $region13: #{space_transformer_forward.5} parent=11 // pred_check
        %p206 = pneg %p60
      $region14: #{space_transformer_forward.5} parent=11 // pred_check_branch
        %208 = sbr.rel (%p206) target = $region16
      $region15: #{space_transformer_forward.5} parent=11 // pred_region
        _
      $region16: #{space_transformer_forward.5} parent=11 // pred_fallthru
        _
      // Predicated region
      $region17: #{space_transformer_forward.5} parent=11 // pred_check
        %p209 = pneg %p81
      $region18: #{space_transformer_forward.5} parent=11 // pred_check_branch
        %211 = sbr.rel (%p209) target = $region20
      $region19: #{space_transformer_forward.5} parent=11 // pred_region
        _
      $region20: #{space_transformer_forward.5} parent=11 // pred_fallthru
        _
      // Predicated region
      $region21: #{space_transformer_forward.5} parent=11 // pred_check
        %p212 = pneg %p102
      $region22: #{space_transformer_forward.5} parent=11 // pred_check_branch
        %214 = sbr.rel (%p212) target = $region24
      $region23: #{space_transformer_forward.5} parent=11 // pred_region
        _
      $region24: #{space_transformer_forward.5} parent=11 // pred_fallthru
        _
      // Predicated region
      $region25: #{space_transformer_forward.5} parent=11 // pred_check
        %p215 = pneg %p123
      $region26: #{space_transformer_forward.5} parent=11 // pred_check_branch
        %217 = sbr.rel (%p215) target = $region28
      $region27: #{space_transformer_forward.5} parent=11 // pred_region
        _
      $region28: #{space_transformer_forward.5} parent=11 // pred_fallthru
        _
      // Predicated region
      $region29: #{space_transformer_forward.5} parent=11 // pred_check
        %p218 = pneg %p144
      $region30: #{space_transformer_forward.5} parent=11 // pred_check_branch
        %220 = sbr.rel (%p218) target = $region32
      $region31: #{space_transformer_forward.5} parent=11 // pred_region
        _
      $region32: #{space_transformer_forward.5} parent=11 // pred_fallthru
        _
      // Predicated region
      $region33: #{space_transformer_forward.5} parent=11 // pred_check
        %p221 = pneg %p165
      $region34: #{space_transformer_forward.5} parent=11 // pred_check_branch
        %223 = sbr.rel (%p221) target = $region36
      $region35: #{space_transformer_forward.5} parent=11 // pred_region
        _
      $region36: #{space_transformer_forward.5} parent=11 // pred_fallthru
        _
    $region12: #{space_transformer_forward.5} parent=5 // pred_fallthru
      _
    %p224 = scmp.lt.s32.totalorder %s13, 4
    // Predicated region
    $region37: #{space_transformer_forward.5} parent=5 // pred_check
      %p225 = pneg %p224
    $region38: #{space_transformer_forward.5} parent=5 // pred_check_branch
      %227 = sbr.rel (%p225) target = $region40
    $region39: #{space_transformer_forward.5} parent=5 // pred_region
      // Predicated region
      $region41: #{space_transformer_forward.5} parent=39 // pred_check
        %p228 = pneg %p33
      $region42: #{space_transformer_forward.5} parent=39 // pred_check_branch
        %230 = sbr.rel (%p228) target = $region44
      $region43: #{space_transformer_forward.5} parent=39 // pred_region
        %s231 = smul.u32 8, %s13
        %p232 = scmp.lt.s32.totalorder %s231, 31
        %s233 = scalar_select %p232, %s231, 31
        %s234 = smul.addr %s233, 8
        %s235 = scalar_lea.vmem %s0, %s234
        %s236 = smul.u32 8, %s13
      $region44: #{space_transformer_forward.5} parent=39 // pred_fallthru
        _
    $region40: #{space_transformer_forward.5} parent=5 // pred_fallthru
      _
    %p237 = scmp.le.s32.totalorder 1, %s13
    %p238 = scmp.lt.s32.totalorder %s13, 5
    %p239 = pnand %p237, %p238
    %p240 = pneg %p239
    // Predicated region
    $region45: #{space_transformer_forward.5} parent=5 // pred_check
      _
    $region46: #{space_transformer_forward.5} parent=5 // pred_check_branch
      %242 = sbr.rel (%p239) target = $region48
    $region47: #{space_transformer_forward.5} parent=5 // pred_region
      %s243 = ssub.s32 %s13, 1
      %s244 = smul.u32 8, %s18
      %p245 = scmp.lt.s32.totalorder %s244, 31
      %s246 = scalar_select %p245, %s244, 31
      %s247 = smul.addr %s246, 8
      %s248 = scalar_lea.vmem %s0, %s247
      %p249 = pneg %p39
      %p250 = pneg %p36
      %p251 = pneg %p60
      %p252 = pneg %p57
      %p253 = pneg %p81
      %p254 = pneg %p78
      %p255 = pneg %p102
      %p256 = pneg %p99
      %p257 = pneg %p123
      %p258 = pneg %p120
      %p259 = pneg %p144
      %p260 = pneg %p141
      %p261 = pneg %p165
      %p262 = pneg %p162
      %p263 = pneg %p191
      %p264 = pneg %p188
      %s265 = smul.u32 8, %s18
      %p266 = scmp.lt.s32.totalorder %s265, 31
      %s267 = scalar_select %p266, %s265, 31
      %s268 = smul.addr %s267, 8
      %s269 = scalar_lea.vmem %s7, %s268
      %s270 = smul.u32 8, %s18
      %p271 = scmp.lt.s32.totalorder %s270, 31
      %s272 = scalar_select %p271, %s270, 31
      %s273 = smul.addr %s272, 8
      %s274 = scalar_lea.vmem %s0, %s273
      %s275 = smul.u32 8, %s18
      %s276 = smul.u32 8, %s18
      %p277 = scmp.lt.s32.totalorder %s276, 31
      %s278 = scalar_select %p277, %s276, 31
      %s279 = smul.addr %s278, 8
      %s280 = scalar_lea.vmem %s7, %s279
      %s281 = smul.u32 8, %s18
      %v283 = vld [vmem:[%s274] sm:$0xff]
      %v284 = vld [vmem:[%s274 + $0x8] sm:$0xff]
      %v285 = vld [vmem:[%s274 + $0x10] sm:$0xff]
      %v286 = vld [vmem:[%s274 + $0x18] sm:$0xff]
      %v287 = vld [vmem:[%s274 + $0x20] sm:$0xff]
      %v288 = vld [vmem:[%s274 + $0x28] sm:$0xff]
      %v289 = vld [vmem:[%s274 + $0x30] sm:$0xff]
      %v290 = vld [vmem:[%s274 + $0x38] sm:$0xff]
      %vm291 = vcmask 261120
      %v292 = vsel %vm291, %v283, 0.0
      %293 = vadd.xlane.f32.xlu0 %v292
      %v294 = vpop.xlane.xlu0 %293
      %v295 = vsel %vm291, %v284, 0.0
      %296 = vadd.xlane.f32.xlu0 %v295
      %v297 = vpop.xlane.xlu0 %296
      %v298 = vsel %vm291, %v285, 0.0
      %299 = vadd.xlane.f32.xlu0 %v298
      %v300 = vpop.xlane.xlu0 %299
      %v301 = vsel %vm291, %v286, 0.0
      %302 = vadd.xlane.f32.xlu0 %v301
      %v303 = vpop.xlane.xlu0 %302
      %v304 = vsel %vm291, %v287, 0.0
      %305 = vadd.xlane.f32.xlu0 %v304
      %v306 = vpop.xlane.xlu0 %305
      %v307 = vsel %vm291, %v288, 0.0
      %308 = vadd.xlane.f32.xlu0 %v307
      %v309 = vpop.xlane.xlu0 %308
      %v310 = vsel %vm291, %v289, 0.0
      %311 = vadd.xlane.f32.xlu0 %v310
      %v312 = vpop.xlane.xlu0 %311
      %v313 = vsel %vm291, %v290, 0.0
      %314 = vadd.xlane.f32.xlu0 %v313
      %v315 = vpop.xlane.xlu0 %314
      %v316 = vrcp.pop 32.0
      %v317 = vmul.f32 %v294, %v316
      %v318 = vmul.f32 %v297, %v316
      %v319 = vmul.f32 %v300, %v316
      %v320 = vmul.f32 %v303, %v316
      %v321 = vmul.f32 %v306, %v316
      %v322 = vmul.f32 %v309, %v316
      %v323 = vmul.f32 %v312, %v316
      %v324 = vmul.f32 %v315, %v316
      %v325 = vsub.f32 %v283, %v317
      %v326 = vsub.f32 %v284, %v318
      %v327 = vsub.f32 %v285, %v319
      %v328 = vsub.f32 %v286, %v320
      %v329 = vsub.f32 %v287, %v321
      %v330 = vsub.f32 %v288, %v322
      %v331 = vsub.f32 %v289, %v323
      %v332 = vsub.f32 %v290, %v324
      %v333 = vmul.f32 %v325, %v325
      %v334 = vmul.f32 %v326, %v326
      %v335 = vmul.f32 %v327, %v327
      %v336 = vmul.f32 %v328, %v328
      %v337 = vmul.f32 %v329, %v329
      %v338 = vmul.f32 %v330, %v330
      %v339 = vmul.f32 %v331, %v331
      %v340 = vmul.f32 %v332, %v332
      %v341 = vsel %vm291, %v333, 0.0
      %342 = vadd.xlane.f32.xlu0 %v341
      %v343 = vpop.xlane.xlu0 %342
      %v344 = vsel %vm291, %v334, 0.0
      %345 = vadd.xlane.f32.xlu0 %v344
      %v346 = vpop.xlane.xlu0 %345
      %v347 = vsel %vm291, %v335, 0.0
      %348 = vadd.xlane.f32.xlu0 %v347
      %v349 = vpop.xlane.xlu0 %348
      %v350 = vsel %vm291, %v336, 0.0
      %351 = vadd.xlane.f32.xlu0 %v350
      %v352 = vpop.xlane.xlu0 %351
      %v353 = vsel %vm291, %v337, 0.0
      %354 = vadd.xlane.f32.xlu0 %v353
      %v355 = vpop.xlane.xlu0 %354
      %v356 = vsel %vm291, %v338, 0.0
      %357 = vadd.xlane.f32.xlu0 %v356
      %v358 = vpop.xlane.xlu0 %357
      %v359 = vsel %vm291, %v339, 0.0
      %360 = vadd.xlane.f32.xlu0 %v359
      %v361 = vpop.xlane.xlu0 %360
      %v362 = vsel %vm291, %v340, 0.0
      %363 = vadd.xlane.f32.xlu0 %v362
      %v364 = vpop.xlane.xlu0 %363
      %v365 = vmul.f32 %v343, %v316
      %v366 = vmul.f32 %v346, %v316
      %v367 = vmul.f32 %v349, %v316
      %v368 = vmul.f32 %v352, %v316
      %v369 = vmul.f32 %v355, %v316
      %v370 = vmul.f32 %v358, %v316
      %v371 = vmul.f32 %v361, %v316
      %v372 = vmul.f32 %v364, %v316
      %v373 = vadd.f32 %v365, 1e-05
      %v374 = vadd.f32 %v366, 1e-05
      %v375 = vadd.f32 %v367, 1e-05
      %v376 = vadd.f32 %v368, 1e-05
      %v377 = vadd.f32 %v369, 1e-05
      %v378 = vadd.f32 %v370, 1e-05
      %v379 = vadd.f32 %v371, 1e-05
      %v380 = vadd.f32 %v372, 1e-05
      %v381 = vrsqrt.pop %v373
      %v382 = vrsqrt.pop %v374
      %v383 = vrsqrt.pop %v375
      %v384 = vrsqrt.pop %v376
      %v385 = vrsqrt.pop %v377
      %v386 = vrsqrt.pop %v378
      %v387 = vrsqrt.pop %v379
      %v388 = vrsqrt.pop %v380
      %v389 = vmul.f32 %v325, %v381
      %v390 = vmul.f32 %v326, %v382
      %v391 = vmul.f32 %v327, %v383
      %v392 = vmul.f32 %v328, %v384
      %v393 = vmul.f32 %v329, %v385
      %v394 = vmul.f32 %v330, %v386
      %v395 = vmul.f32 %v331, %v387
      %v396 = vmul.f32 %v332, %v388
      %v397 = vld [vmem:[%s1] sm:$0x1]
      %v399 = vlaneseq
      %v400 = vshrl.u32 %v399, 7
      %v401 = vsub.s32 0, %v400
      %v402 = vrot.slane %v397, %v401
      %v404 = vmul.f32 %v389, %v402
      %v405 = vmul.f32 %v390, %v402
      %v406 = vmul.f32 %v391, %v402
      %v407 = vmul.f32 %v392, %v402
      %v408 = vmul.f32 %v393, %v402
      %v409 = vmul.f32 %v394, %v402
      %v410 = vmul.f32 %v395, %v402
      %v411 = vmul.f32 %v396, %v402
      %v412 = vld [vmem:[%s2] sm:$0x1]
      %v414 = vlaneseq
      %v415 = vshrl.u32 %v414, 7
      %v416 = vsub.s32 0, %v415
      %v417 = vrot.slane %v412, %v416
      %v419 = vadd.f32 %v404, %v417
      %v420 = vadd.f32 %v405, %v417
      %v421 = vadd.f32 %v406, %v417
      %v422 = vadd.f32 %v407, %v417
      %v423 = vadd.f32 %v408, %v417
      %v424 = vadd.f32 %v409, %v417
      %v425 = vadd.f32 %v410, %v417
      %v426 = vadd.f32 %v411, %v417
      %v427 = vpack.c.bf16 %v420, %v419
      %v428 = vpack.c.bf16 %v422, %v421
      %v429 = vpack.c.bf16 %v424, %v423
      %v430 = vpack.c.bf16 %v426, %v425
      %v431 = vld [vmem:[%s3] sm:$0xf]
      %v432 = vld [vmem:[%s3 + $0x4] sm:$0xf]
      %v433 = vld [vmem:[%s3 + $0x8] sm:$0xf]
      %v434 = vld [vmem:[%s3 + $0xc] sm:$0xf]
      %v435 = vld [vmem:[%s4] sm:$0x1]
      %v437 = vlaneseq
      %v438 = vshrl.u32 %v437, 7
      %v439 = vsub.s32 0, %v438
      %v440 = vrot.slane %v435, %v439
      %v446 = vunpack.c.l.b16 %v431
      %v447 = vunpack.c.l.b16 %v432
      %v448 = vunpack.c.l.b16 %v433
      %v449 = vunpack.c.l.b16 %v434
      %v450 = vpack.c.b16 %v447, %v446
      %v451 = vpack.c.b16 %v449, %v448
      %v455 = vsel %vm291, %v427, 0
      %v458 = vsel %vm291, %v428, 0
      %v461 = vsel %vm291, %v429, 0
      %v464 = vsel %vm291, %v430, 0
      %466 = vmatprep.subr.bf16.mxu0 0
      %467 = vmatpush1.bf16.msra.mxu0 %v450
      %468 = vmatprep.subr.bf16.mxu0 0
      %469 = vmatpush1.bf16.msra.mxu0 %v451
      %470 = vmatprep.subr.bf16.mxu0 0
      %471 = vmatpush1.bf16.msra.mxu0 0
      %472 = vmatprep.subr.bf16.mxu0 0
      %473 = vmatpush1.bf16.msra.mxu0 0
      %474 = vmatprep.subr.bf16.mxu0 0
      %475 = vmatpush1.bf16.msra.mxu0 0
      %476 = vmatprep.subr.bf16.mxu0 0
      %477 = vmatpush1.bf16.msra.mxu0 0
      %478 = vmatprep.subr.bf16.mxu0 0
      %479 = vmatpush1.bf16.msra.mxu0 0
      %480 = vmatprep.subr.bf16.mxu0 0
      %481 = vmatpush1.bf16.msra.mxu0 0
      %482 = vmatprep.subr.bf16.mxu0 0
      %483 = vmatpush1.bf16.msra.mxu0 0
      %484 = vmatprep.subr.bf16.mxu0 0
      %485 = vmatpush1.bf16.msra.mxu0 0
      %486 = vmatprep.subr.bf16.mxu0 0
      %487 = vmatpush1.bf16.msra.mxu0 0
      %488 = vmatprep.subr.bf16.mxu0 0
      %489 = vmatpush1.bf16.msra.mxu0 0
      %490 = vmatprep.subr.bf16.mxu0 0
      %491 = vmatpush1.bf16.msra.mxu0 0
      %492 = vmatprep.subr.bf16.mxu0 0
      %493 = vmatpush1.bf16.msra.mxu0 0
      %494 = vmatprep.subr.bf16.mxu0 0
      %495 = vmatpush1.bf16.msra.mxu0 0
      %496 = vmatprep.subr.bf16.mxu0 0
      %497 = vmatpush1.bf16.msra.mxu0 0
      %498 = vmatprep.mubr.bf16.mxu0 0
      %499 = vmatmul.mubr.bf16.gmra.mrb[0].mxu0 %v455
      %v500 = vpop.f32.mrb[0].mxu0
      %v501 = vadd.f32 %v440, %v500
      %v502 = vpop.f32.mrb[0].mxu0
      %v503 = vpop.f32.mrb[0].mxu0
      %v504 = vadd.f32 %v440, %v503
      %v505 = vpop.f32.mrb[0].mxu0
      %506 = vmatprep.mubr.bf16.mxu0 0
      %507 = vmatmul.mubr.bf16.gmra.mrb[0].mxu0 %v458
      %v508 = vpop.f32.mrb[0].mxu0
      %v509 = vadd.f32 %v440, %v508
      %v510 = vpop.f32.mrb[0].mxu0
      %v511 = vpop.f32.mrb[0].mxu0
      %v512 = vadd.f32 %v440, %v511
      %v513 = vpop.f32.mrb[0].mxu0
      %514 = vmatprep.mubr.bf16.mxu0 0
      %515 = vmatmul.mubr.bf16.gmra.mrb[0].mxu0 %v461
      %v516 = vpop.f32.mrb[0].mxu0
      %v517 = vadd.f32 %v440, %v516
      %v518 = vpop.f32.mrb[0].mxu0
      %v519 = vpop.f32.mrb[0].mxu0
      %v520 = vadd.f32 %v440, %v519
      %v521 = vpop.f32.mrb[0].mxu0
      %522 = vmatprep.mubr.bf16.mxu0 0
      %523 = vmatmul.mubr.bf16.gmra.mrb[0].mxu0 %v464
      %v524 = vpop.f32.mrb[0].mxu0
      %v525 = vadd.f32 %v440, %v524
      %v526 = vpop.f32.mrb[0].mxu0
      %v527 = vpop.f32.mrb[0].mxu0
      %v528 = vadd.f32 %v440, %v527
      %v529 = vpop.f32.mrb[0].mxu0
      %530 = vdwg.mxu0
      %v531 = vmul.f32 %v501, 0.5
      %v532 = vmul.f32 %v504, 0.5
      %v533 = vmul.f32 %v509, 0.5
      %v534 = vmul.f32 %v512, 0.5
      %v535 = vmul.f32 %v517, 0.5
      %v536 = vmul.f32 %v520, 0.5
      %v537 = vmul.f32 %v525, 0.5
      %v538 = vmul.f32 %v528, 0.5
      %v539 = vmul.f32 %v501, %v501
      %v540 = vmul.f32 %v504, %v504
      %v541 = vmul.f32 %v509, %v509
      %v542 = vmul.f32 %v512, %v512
      %v543 = vmul.f32 %v517, %v517
      %v544 = vmul.f32 %v520, %v520
      %v545 = vmul.f32 %v525, %v525
      %v546 = vmul.f32 %v528, %v528
      %v547 = vmul.f32 %v539, %v501
      %v548 = vmul.f32 %v540, %v504
      %v549 = vmul.f32 %v541, %v509
      %v550 = vmul.f32 %v542, %v512
      %v551 = vmul.f32 %v543, %v517
      %v552 = vmul.f32 %v544, %v520
      %v553 = vmul.f32 %v545, %v525
      %v554 = vmul.f32 %v546, %v528
      %v555 = vmul.f32 %v547, 0.044715
      %v556 = vmul.f32 %v548, 0.044715
      %v557 = vmul.f32 %v549, 0.044715
      %v558 = vmul.f32 %v550, 0.044715
      %v559 = vmul.f32 %v551, 0.044715
      %v560 = vmul.f32 %v552, 0.044715
      %v561 = vmul.f32 %v553, 0.044715
      %v562 = vmul.f32 %v554, 0.044715
      %v563 = vadd.f32 %v501, %v555
      %v564 = vadd.f32 %v504, %v556
      %v565 = vadd.f32 %v509, %v557
      %v566 = vadd.f32 %v512, %v558
      %v567 = vadd.f32 %v517, %v559
      %v568 = vadd.f32 %v520, %v560
      %v569 = vadd.f32 %v525, %v561
      %v570 = vadd.f32 %v528, %v562
      %v571 = vmul.f32 %v563, 0.7978846
      %v572 = vmul.f32 %v564, 0.7978846
      %v573 = vmul.f32 %v565, 0.7978846
      %v574 = vmul.f32 %v566, 0.7978846
      %v575 = vmul.f32 %v567, 0.7978846
      %v576 = vmul.f32 %v568, 0.7978846
      %v577 = vmul.f32 %v569, 0.7978846
      %v578 = vmul.f32 %v570, 0.7978846
      %v579 = vtanh.pop %v571
      %v580 = vtanh.pop %v572
      %v581 = vtanh.pop %v573
      %v582 = vtanh.pop %v574
      %v583 = vtanh.pop %v575
      %v584 = vtanh.pop %v576
      %v585 = vtanh.pop %v577
      %v586 = vtanh.pop %v578
      %v587 = vadd.f32 %v579, 1.0
      %v588 = vadd.f32 %v580, 1.0
      %v589 = vadd.f32 %v581, 1.0
      %v590 = vadd.f32 %v582, 1.0
      %v591 = vadd.f32 %v583, 1.0
      %v592 = vadd.f32 %v584, 1.0
      %v593 = vadd.f32 %v585, 1.0
      %v594 = vadd.f32 %v586, 1.0
      %v595 = vmul.f32 %v531, %v587
      %v596 = vmul.f32 %v532, %v588
      %v597 = vmul.f32 %v533, %v589
      %v598 = vmul.f32 %v534, %v590
      %v599 = vmul.f32 %v535, %v591
      %v600 = vmul.f32 %v536, %v592
      %v601 = vmul.f32 %v537, %v593
      %v602 = vmul.f32 %v538, %v594
      %v603 = vpack.c.bf16 %v596, %v595
      %v604 = vpack.c.bf16 %v598, %v597
      %v605 = vpack.c.bf16 %v600, %v599
      %v606 = vpack.c.bf16 %v602, %v601
      %v607 = vld [vmem:[%s5] sm:$0xf]
      %v608 = vld [vmem:[%s5 + $0x4] sm:$0xf]
      %v609 = vld [vmem:[%s5 + $0x8] sm:$0xf]
      %v610 = vld [vmem:[%s5 + $0xc] sm:$0xf]
      %v611 = vld [vmem:[%s5 + $0x10] sm:$0xf]
      %v612 = vld [vmem:[%s5 + $0x14] sm:$0xf]
      %v613 = vld [vmem:[%s5 + $0x18] sm:$0xf]
      %v614 = vld [vmem:[%s5 + $0x1c] sm:$0xf]
      %v615 = vld [vmem:[%s6] sm:$0x1]
      %v617 = vlaneseq
      %v618 = vshrl.u32 %v617, 7
      %v619 = vsub.s32 0, %v618
      %v620 = vrot.slane %v615, %v619
      %v630 = vunpack.c.l.b16 %v607
      %v631 = vunpack.c.l.b16 %v608
      %v632 = vunpack.c.l.b16 %v609
      %v633 = vunpack.c.l.b16 %v610
      %v634 = vunpack.c.l.b16 %v611
      %v635 = vunpack.c.l.b16 %v612
      %v636 = vunpack.c.l.b16 %v613
      %v637 = vunpack.c.l.b16 %v614
      %v638 = vpack.c.b16 %v631, %v630
      %v639 = vpack.c.b16 %v633, %v632
      %v640 = vpack.c.b16 %v635, %v634
      %v641 = vpack.c.b16 %v637, %v636
      %vm646 = vcmask 523264
      %v648 = vsel %vm646, %v603, 0
      %v651 = vsel %vm646, %v604, 0
      %v654 = vsel %vm646, %v605, 0
      %v657 = vsel %vm646, %v606, 0
      %659 = vmatprep.subr.bf16.mxu0 0
      %660 = vmatpush1.bf16.msra.mxu0 %v638
      %661 = vmatprep.subr.bf16.mxu0 0
      %662 = vmatpush1.bf16.msra.mxu0 %v639
      %663 = vmatprep.subr.bf16.mxu0 0
      %664 = vmatpush1.bf16.msra.mxu0 %v640
      %665 = vmatprep.subr.bf16.mxu0 0
      %666 = vmatpush1.bf16.msra.mxu0 %v641
      %667 = vmatprep.subr.bf16.mxu0 0
      %668 = vmatpush1.bf16.msra.mxu0 0
      %669 = vmatprep.subr.bf16.mxu0 0
      %670 = vmatpush1.bf16.msra.mxu0 0
      %671 = vmatprep.subr.bf16.mxu0 0
      %672 = vmatpush1.bf16.msra.mxu0 0
      %673 = vmatprep.subr.bf16.mxu0 0
      %674 = vmatpush1.bf16.msra.mxu0 0
      %675 = vmatprep.subr.bf16.mxu0 0
      %676 = vmatpush1.bf16.msra.mxu0 0
      %677 = vmatprep.subr.bf16.mxu0 0
      %678 = vmatpush1.bf16.msra.mxu0 0
      %679 = vmatprep.subr.bf16.mxu0 0
      %680 = vmatpush1.bf16.msra.mxu0 0
      %681 = vmatprep.subr.bf16.mxu0 0
      %682 = vmatpush1.bf16.msra.mxu0 0
      %683 = vmatprep.subr.bf16.mxu0 0
      %684 = vmatpush1.bf16.msra.mxu0 0
      %685 = vmatprep.subr.bf16.mxu0 0
      %686 = vmatpush1.bf16.msra.mxu0 0
      %687 = vmatprep.subr.bf16.mxu0 0
      %688 = vmatpush1.bf16.msra.mxu0 0
      %689 = vmatprep.subr.bf16.mxu0 0
      %690 = vmatpush1.bf16.msra.mxu0 0
      %691 = vmatprep.mubr.bf16.mxu0 0
      %692 = vmatmul.mubr.bf16.gmra.mrb[0].mxu0 %v648
      %v693 = vpop.f32.mrb[0].mxu0
      %v694 = vadd.f32 %v620, %v693
      %v695 = vpop.f32.mrb[0].mxu0
      %v696 = vpop.f32.mrb[0].mxu0
      %v697 = vadd.f32 %v620, %v696
      %v698 = vpop.f32.mrb[0].mxu0
      %699 = vmatprep.mubr.bf16.mxu0 0
      %700 = vmatmul.mubr.bf16.gmra.mrb[0].mxu0 %v651
      %v701 = vpop.f32.mrb[0].mxu0
      %v702 = vadd.f32 %v620, %v701
      %v703 = vpop.f32.mrb[0].mxu0
      %v704 = vpop.f32.mrb[0].mxu0
      %v705 = vadd.f32 %v620, %v704
      %v706 = vpop.f32.mrb[0].mxu0
      %707 = vmatprep.mubr.bf16.mxu0 0
      %708 = vmatmul.mubr.bf16.gmra.mrb[0].mxu0 %v654
      %v709 = vpop.f32.mrb[0].mxu0
      %v710 = vadd.f32 %v620, %v709
      %v711 = vpop.f32.mrb[0].mxu0
      %v712 = vpop.f32.mrb[0].mxu0
      %v713 = vadd.f32 %v620, %v712
      %v714 = vpop.f32.mrb[0].mxu0
      %715 = vmatprep.mubr.bf16.mxu0 0
      %716 = vmatmul.mubr.bf16.gmra.mrb[0].mxu0 %v657
      %v717 = vpop.f32.mrb[0].mxu0
      %v718 = vadd.f32 %v620, %v717
      %v719 = vpop.f32.mrb[0].mxu0
      %v720 = vpop.f32.mrb[0].mxu0
      %v721 = vadd.f32 %v620, %v720
      %v722 = vpop.f32.mrb[0].mxu0
      %723 = vdwg.mxu0
      %v724 = vadd.f32 %v283, %v694
      %v725 = vadd.f32 %v284, %v697
      %v726 = vadd.f32 %v285, %v702
      %v727 = vadd.f32 %v286, %v705
      %v728 = vadd.f32 %v287, %v710
      %v729 = vadd.f32 %v288, %v713
      %v730 = vadd.f32 %v289, %v718
      %v731 = vadd.f32 %v290, %v721
      %732 = vst.msk [vmem:[%s280] sm:$0xff] %vm291, %v724
      %733 = vst.msk [vmem:[%s280 + $0x8] sm:$0xff] %vm291, %v725
      %734 = vst.msk [vmem:[%s280 + $0x10] sm:$0xff] %vm291, %v726
      %735 = vst.msk [vmem:[%s280 + $0x18] sm:$0xff] %vm291, %v727
      %736 = vst.msk [vmem:[%s280 + $0x20] sm:$0xff] %vm291, %v728
      %737 = vst.msk [vmem:[%s280 + $0x28] sm:$0xff] %vm291, %v729
      %738 = vst.msk [vmem:[%s280 + $0x30] sm:$0xff] %vm291, %v730
      %739 = vst.msk [vmem:[%s280 + $0x38] sm:$0xff] %vm291, %v731
      %s740 = smul.u32 8, %s18
      %p741 = scmp.lt.s32.totalorder %s740, 31
      %s742 = scalar_select %p741, %s740, 31
      %s743 = smul.addr %s742, 8
      %s744 = scalar_lea.vmem %s7, %s743
      // Predicated region
      $region49: #{space_transformer_forward.5} parent=47 // pred_check
        %p745 = pneg %p188
      $region50: #{space_transformer_forward.5} parent=47 // pred_check_branch
        %747 = sbr.rel (%p745) target = $region52
      $region51: #{space_transformer_forward.5} parent=47 // pred_region
        %s748 = smul.u32 8, %s18
      $region52: #{space_transformer_forward.5} parent=47 // pred_fallthru
        _
    $region48: #{space_transformer_forward.5} parent=5 // pred_fallthru
      _
    %p749 = scmp.le.s32.totalorder 2, %s13
    // Predicated region
    $region53: #{space_transformer_forward.5} parent=5 // pred_check
      %p750 = pneg %p749
    $region54: #{space_transformer_forward.5} parent=5 // pred_check_branch
      %752 = sbr.rel (%p750) target = $region56
    $region55: #{space_transformer_forward.5} parent=5 // pred_region
      %s753 = ssub.s32 %s13, 2
      // Predicated region
      $region57: #{space_transformer_forward.5} parent=55 // pred_check
        %p754 = pneg %p194
      $region58: #{space_transformer_forward.5} parent=55 // pred_check_branch
        %756 = sbr.rel (%p754) target = $region60
      $region59: #{space_transformer_forward.5} parent=55 // pred_region
        %s757 = smul.u32 8, %s19
        %p758 = scmp.lt.s32.totalorder %s757, 31
        %s759 = scalar_select %p758, %s757, 31
        %s760 = smul.addr %s759, 8
        %s761 = scalar_lea.vmem %s7, %s760
      $region60: #{space_transformer_forward.5} parent=55 // pred_fallthru
        _
    $region56: #{space_transformer_forward.5} parent=5 // pred_fallthru
      _
  $region6: #{space_transformer_forward.5} parent=0 // loop_footer
    %s17 = sadd.s32 1, %s13
  $region7: #{space_transformer_forward.5} parent=0 // loop_footer_branch
    %12 = sbr.rel target = $region3
  $region8: #{space_transformer_forward.5} parent=0 // loop_exit
    _

// kernel: space_transformer_forward.7
$region0: #{space_transformer_forward.7}
  #allocation0 [shape = 'u32[]', space=smem, size = 0x4, offset = 0x4, fixed_abs, tag = 'smem constant byte address 0x4 - core index']
  #allocation1 [shape = 'u32[144,128]{1,0:T(1,128)}', space=vmem, size = 0x12000, scoped, tag = 'internal scratch']
  %s0 = inlined_call_operand.vmem [shape: f32[256,32], index: 0, kind: input, shape index: {}]
  %s1 = inlined_call_operand.vmem [shape: f32[1,32], index: 1, kind: input, shape index: {}]
  %s2 = inlined_call_operand.vmem [shape: f32[1,32], index: 2, kind: input, shape index: {}]
  %s3 = inlined_call_operand.vmem [shape: bf16[32,64], index: 3, kind: input, shape index: {}]
  %s4 = inlined_call_operand.vmem [shape: f32[1,64], index: 4, kind: input, shape index: {}]
  %s5 = inlined_call_operand.vmem [shape: bf16[64,32], index: 5, kind: input, shape index: {}]
  %s6 = inlined_call_operand.vmem [shape: f32[1,32], index: 6, kind: input, shape index: {}]
  %s7 = inlined_call_operand.hbm [shape: f32[256,32], index: 7, kind: output, shape index: {}]
  %s8 = sld [smem:[#allocation0]]
  $region61: #{space_transformer_forward.7} parent=0
    _
  %s10 = ssub.s32 1, %s8
  %s11 = scalar_select 0, %s10, %s8
  $region1: #{space_transformer_forward.7} parent=0
    #allocation2 [shape = 'u8[65536]{0}', space=vmem, size = 0x10000, scoped, tag = 'output window, operand 0']
    #allocation3 [shape = 's32[2]{0}', space=sflag, size = 0x8, scoped, tag = 'scoped memory for space_transformer_forward.7']
    %12 = vsyncpa [#allocation3], 0
    %s13 = scalar_lea.sflag [#allocation3], 1
    %14 = vsyncpa %s13, 0
    loop: start=0, step=1, limit=6
    $region2: #{space_transformer_forward.7} parent=1 // loop_pre_header
      _
    $region3: #{space_transformer_forward.7} parent=1 // loop_header
      %s16 = sphi 0, %s20
      %p17 = scmp.ge.s32.totalorder %s16, 6
      %s26 = sphi 0, %s28
      %s29 = sphi 0, %s26
      %s30 = sphi 0, %s29
      %s46 = sphi 0, %s30
      %s50 = sphi 0, %s50
      %s52 = sphi 0, %s50
      %s53 = sphi 0, %s52
      %s67 = sphi 0, %s53
      %s71 = sphi 0, %s71
      %s73 = sphi 0, %s71
      %s74 = sphi 0, %s73
      %s88 = sphi 0, %s74
      %s92 = sphi 0, %s92
      %s94 = sphi 0, %s92
      %s95 = sphi 0, %s94
      %s109 = sphi 0, %s95
      %s113 = sphi 0, %s113
      %s115 = sphi 0, %s113
      %s116 = sphi 0, %s115
      %s130 = sphi 0, %s116
      %s134 = sphi 0, %s134
      %s136 = sphi 0, %s134
      %s137 = sphi 0, %s136
      %s151 = sphi 0, %s137
      %s155 = sphi 0, %s155
      %s157 = sphi 0, %s155
      %s158 = sphi 0, %s157
      %s172 = sphi 0, %s158
      %s178 = sphi 0, %s180
      %s181 = sphi 0, %s178
      %s182 = sphi 0, %s181
      %s198 = sphi 0, %s182
    $region4: #{space_transformer_forward.7} parent=1 // loop_header_branch
      %19 = sbr.rel (%p17) target = $region8
    $region5: #{space_transformer_forward.7} parent=1 // loop_body
      %s21 = ssub.s32 %s16, 1
      %s22 = ssub.s32 %s16, 2
      %s23 = sadd.s32 %s16, 1
      %s24 = ssub.s32 %s16, %s23
      %p25 = scmp.eq.s32.totalorder %s24, 0
      %s27 = sadd.s32 %s26, 1
      %s28 = scalar_select %p25, %s26, %s27
      %p31 = pneg %p25
      %p32 = scmp.eq.s32.totalorder %s16, 3
      %p33 = por %p31, %p32
      %p34 = scmp.ne.s32.totalorder %s26, %s29
      %p35 = scmp.eq.s32.totalorder %s16, 0
      %p36 = por %p34, %p35
      %p37 = scmp.ne.s32.totalorder %s26, %s29
      %p38 = scmp.eq.s32.totalorder %s21, 3
      %p39 = por %p37, %p38
      %p40 = scmp.ne.s32.totalorder %s29, %s30
      %p41 = scmp.eq.s32.totalorder %s21, 0
      %p42 = por %p40, %p41
      %p43 = scmp.ne.s32.totalorder %s29, %s30
      %p44 = scmp.eq.s32.totalorder %s22, 3
      %p45 = por %p43, %p44
      %p47 = scmp.ne.s32.totalorder %s30, %s46
      %p48 = scmp.eq.s32.totalorder %s22, 0
      %p49 = por %p47, %p48
      %s51 = sadd.s32 %s50, 1
      %p54 = scmp.eq.s32.totalorder %s16, 3
      %p55 = scmp.ne.s32.totalorder %s50, %s52
      %p56 = scmp.eq.s32.totalorder %s16, 0
      %p57 = por %p55, %p56
      %p58 = scmp.ne.s32.totalorder %s50, %s52
      %p59 = scmp.eq.s32.totalorder %s21, 3
      %p60 = por %p58, %p59
      %p61 = scmp.ne.s32.totalorder %s52, %s53
      %p62 = scmp.eq.s32.totalorder %s21, 0
      %p63 = por %p61, %p62
      %p64 = scmp.ne.s32.totalorder %s52, %s53
      %p65 = scmp.eq.s32.totalorder %s22, 3
      %p66 = por %p64, %p65
      %p68 = scmp.ne.s32.totalorder %s53, %s67
      %p69 = scmp.eq.s32.totalorder %s22, 0
      %p70 = por %p68, %p69
      %s72 = sadd.s32 %s71, 1
      %p75 = scmp.eq.s32.totalorder %s16, 3
      %p76 = scmp.ne.s32.totalorder %s71, %s73
      %p77 = scmp.eq.s32.totalorder %s16, 0
      %p78 = por %p76, %p77
      %p79 = scmp.ne.s32.totalorder %s71, %s73
      %p80 = scmp.eq.s32.totalorder %s21, 3
      %p81 = por %p79, %p80
      %p82 = scmp.ne.s32.totalorder %s73, %s74
      %p83 = scmp.eq.s32.totalorder %s21, 0
      %p84 = por %p82, %p83
      %p85 = scmp.ne.s32.totalorder %s73, %s74
      %p86 = scmp.eq.s32.totalorder %s22, 3
      %p87 = por %p85, %p86
      %p89 = scmp.ne.s32.totalorder %s74, %s88
      %p90 = scmp.eq.s32.totalorder %s22, 0
      %p91 = por %p89, %p90
      %s93 = sadd.s32 %s92, 1
      %p96 = scmp.eq.s32.totalorder %s16, 3
      %p97 = scmp.ne.s32.totalorder %s92, %s94
      %p98 = scmp.eq.s32.totalorder %s16, 0
      %p99 = por %p97, %p98
      %p100 = scmp.ne.s32.totalorder %s92, %s94
      %p101 = scmp.eq.s32.totalorder %s21, 3
      %p102 = por %p100, %p101
      %p103 = scmp.ne.s32.totalorder %s94, %s95
      %p104 = scmp.eq.s32.totalorder %s21, 0
      %p105 = por %p103, %p104
      %p106 = scmp.ne.s32.totalorder %s94, %s95
      %p107 = scmp.eq.s32.totalorder %s22, 3
      %p108 = por %p106, %p107
      %p110 = scmp.ne.s32.totalorder %s95, %s109
      %p111 = scmp.eq.s32.totalorder %s22, 0
      %p112 = por %p110, %p111
      %s114 = sadd.s32 %s113, 1
      %p117 = scmp.eq.s32.totalorder %s16, 3
      %p118 = scmp.ne.s32.totalorder %s113, %s115
      %p119 = scmp.eq.s32.totalorder %s16, 0
      %p120 = por %p118, %p119
      %p121 = scmp.ne.s32.totalorder %s113, %s115
      %p122 = scmp.eq.s32.totalorder %s21, 3
      %p123 = por %p121, %p122
      %p124 = scmp.ne.s32.totalorder %s115, %s116
      %p125 = scmp.eq.s32.totalorder %s21, 0
      %p126 = por %p124, %p125
      %p127 = scmp.ne.s32.totalorder %s115, %s116
      %p128 = scmp.eq.s32.totalorder %s22, 3
      %p129 = por %p127, %p128
      %p131 = scmp.ne.s32.totalorder %s116, %s130
      %p132 = scmp.eq.s32.totalorder %s22, 0
      %p133 = por %p131, %p132
      %s135 = sadd.s32 %s134, 1
      %p138 = scmp.eq.s32.totalorder %s16, 3
      %p139 = scmp.ne.s32.totalorder %s134, %s136
      %p140 = scmp.eq.s32.totalorder %s16, 0
      %p141 = por %p139, %p140
      %p142 = scmp.ne.s32.totalorder %s134, %s136
      %p143 = scmp.eq.s32.totalorder %s21, 3
      %p144 = por %p142, %p143
      %p145 = scmp.ne.s32.totalorder %s136, %s137
      %p146 = scmp.eq.s32.totalorder %s21, 0
      %p147 = por %p145, %p146
      %p148 = scmp.ne.s32.totalorder %s136, %s137
      %p149 = scmp.eq.s32.totalorder %s22, 3
      %p150 = por %p148, %p149
      %p152 = scmp.ne.s32.totalorder %s137, %s151
      %p153 = scmp.eq.s32.totalorder %s22, 0
      %p154 = por %p152, %p153
      %s156 = sadd.s32 %s155, 1
      %p159 = scmp.eq.s32.totalorder %s16, 3
      %p160 = scmp.ne.s32.totalorder %s155, %s157
      %p161 = scmp.eq.s32.totalorder %s16, 0
      %p162 = por %p160, %p161
      %p163 = scmp.ne.s32.totalorder %s155, %s157
      %p164 = scmp.eq.s32.totalorder %s21, 3
      %p165 = por %p163, %p164
      %p166 = scmp.ne.s32.totalorder %s157, %s158
      %p167 = scmp.eq.s32.totalorder %s21, 0
      %p168 = por %p166, %p167
      %p169 = scmp.ne.s32.totalorder %s157, %s158
      %p170 = scmp.eq.s32.totalorder %s22, 3
      %p171 = por %p169, %p170
      %p173 = scmp.ne.s32.totalorder %s158, %s172
      %p174 = scmp.eq.s32.totalorder %s22, 0
      %p175 = por %p173, %p174
      %s176 = ssub.s32 %s16, %s23
      %p177 = scmp.eq.s32.totalorder %s176, 0
      %s179 = sadd.s32 %s178, 1
      %s180 = scalar_select %p177, %s178, %s179
      %p183 = pneg %p177
      %p184 = scmp.eq.s32.totalorder %s16, 3
      %p185 = por %p183, %p184
      %p186 = scmp.ne.s32.totalorder %s178, %s181
      %p187 = scmp.eq.s32.totalorder %s16, 0
      %p188 = por %p186, %p187
      %p189 = scmp.ne.s32.totalorder %s178, %s181
      %p190 = scmp.eq.s32.totalorder %s21, 3
      %p191 = por %p189, %p190
      %p192 = scmp.ne.s32.totalorder %s181, %s182
      %p193 = scmp.eq.s32.totalorder %s21, 0
      %p194 = por %p192, %p193
      %p195 = scmp.ne.s32.totalorder %s181, %s182
      %p196 = scmp.eq.s32.totalorder %s22, 3
      %p197 = por %p195, %p196
      %p199 = scmp.ne.s32.totalorder %s182, %s198
      %p200 = scmp.eq.s32.totalorder %s22, 0
      %p201 = por %p199, %p200
      %p202 = scmp.le.s32.totalorder 1, %s16
      %p203 = scmp.lt.s32.totalorder %s16, 5
      %p204 = pnand %p202, %p203
      %p205 = pneg %p204
      // Predicated region
      $region9: #{space_transformer_forward.7} parent=5 // pred_check
        _
      $region10: #{space_transformer_forward.7} parent=5 // pred_check_branch
        %207 = sbr.rel (%p204) target = $region12
      $region11: #{space_transformer_forward.7} parent=5 // pred_region
        %s208 = ssub.s32 %s16, 1
        // Predicated region
        $region13: #{space_transformer_forward.7} parent=11 // pred_check
          %p209 = pneg %p63
        $region14: #{space_transformer_forward.7} parent=11 // pred_check_branch
          %211 = sbr.rel (%p209) target = $region16
        $region15: #{space_transformer_forward.7} parent=11 // pred_region
          _
        $region16: #{space_transformer_forward.7} parent=11 // pred_fallthru
          _
        // Predicated region
        $region17: #{space_transformer_forward.7} parent=11 // pred_check
          %p212 = pneg %p84
        $region18: #{space_transformer_forward.7} parent=11 // pred_check_branch
          %214 = sbr.rel (%p212) target = $region20
        $region19: #{space_transformer_forward.7} parent=11 // pred_region
          _
        $region20: #{space_transformer_forward.7} parent=11 // pred_fallthru
          _
        // Predicated region
        $region21: #{space_transformer_forward.7} parent=11 // pred_check
          %p215 = pneg %p105
        $region22: #{space_transformer_forward.7} parent=11 // pred_check_branch
          %217 = sbr.rel (%p215) target = $region24
        $region23: #{space_transformer_forward.7} parent=11 // pred_region
          _
        $region24: #{space_transformer_forward.7} parent=11 // pred_fallthru
          _
        // Predicated region
        $region25: #{space_transformer_forward.7} parent=11 // pred_check
          %p218 = pneg %p126
        $region26: #{space_transformer_forward.7} parent=11 // pred_check_branch
          %220 = sbr.rel (%p218) target = $region28
        $region27: #{space_transformer_forward.7} parent=11 // pred_region
          _
        $region28: #{space_transformer_forward.7} parent=11 // pred_fallthru
          _
        // Predicated region
        $region29: #{space_transformer_forward.7} parent=11 // pred_check
          %p221 = pneg %p147
        $region30: #{space_transformer_forward.7} parent=11 // pred_check_branch
          %223 = sbr.rel (%p221) target = $region32
        $region31: #{space_transformer_forward.7} parent=11 // pred_region
          _
        $region32: #{space_transformer_forward.7} parent=11 // pred_fallthru
          _
        // Predicated region
        $region33: #{space_transformer_forward.7} parent=11 // pred_check
          %p224 = pneg %p168
        $region34: #{space_transformer_forward.7} parent=11 // pred_check_branch
          %226 = sbr.rel (%p224) target = $region36
        $region35: #{space_transformer_forward.7} parent=11 // pred_region
          _
        $region36: #{space_transformer_forward.7} parent=11 // pred_fallthru
          _
      $region12: #{space_transformer_forward.7} parent=5 // pred_fallthru
        _
      %p227 = scmp.lt.s32.totalorder %s16, 4
      // Predicated region
      $region37: #{space_transformer_forward.7} parent=5 // pred_check
        %p228 = pneg %p227
      $region38: #{space_transformer_forward.7} parent=5 // pred_check_branch
        %230 = sbr.rel (%p228) target = $region40
      $region39: #{space_transformer_forward.7} parent=5 // pred_region
        // Predicated region
        $region41: #{space_transformer_forward.7} parent=39 // pred_check
          %p231 = pneg %p36
        $region42: #{space_transformer_forward.7} parent=39 // pred_check_branch
          %233 = sbr.rel (%p231) target = $region44
        $region43: #{space_transformer_forward.7} parent=39 // pred_region
          %s234 = smul.u32 8, %s16
          %p235 = scmp.lt.s32.totalorder %s234, 31
          %s236 = scalar_select %p235, %s234, 31
          %s237 = smul.addr %s236, 8
          %s238 = scalar_lea.vmem %s0, %s237
          %s239 = smul.u32 8, %s16
        $region44: #{space_transformer_forward.7} parent=39 // pred_fallthru
          _
      $region40: #{space_transformer_forward.7} parent=5 // pred_fallthru
        _
      %p240 = scmp.le.s32.totalorder 1, %s16
      %p241 = scmp.lt.s32.totalorder %s16, 5
      %p242 = pnand %p240, %p241
      %p243 = pneg %p242
      // Predicated region
      $region45: #{space_transformer_forward.7} parent=5 // pred_check
        _
      $region46: #{space_transformer_forward.7} parent=5 // pred_check_branch
        %245 = sbr.rel (%p242) target = $region48
      $region47: #{space_transformer_forward.7} parent=5 // pred_region
        %s246 = ssub.s32 %s16, 1
        %s247 = smul.u32 8, %s21
        %p248 = scmp.lt.s32.totalorder %s247, 31
        %s249 = scalar_select %p248, %s247, 31
        %s250 = smul.addr %s249, 8
        %s251 = scalar_lea.vmem %s0, %s250
        %p252 = pneg %p42
        %p253 = pneg %p39
        %p254 = pneg %p63
        %p255 = pneg %p60
        %p256 = pneg %p84
        %p257 = pneg %p81
        %p258 = pneg %p105
        %p259 = pneg %p102
        %p260 = pneg %p126
        %p261 = pneg %p123
        %p262 = pneg %p147
        %p263 = pneg %p144
        %p264 = pneg %p168
        %p265 = pneg %p165
        %p266 = pneg %p194
        %p267 = pneg %p191
        %s268 = sand.u32 %s181, 1
        %s269 = scalar_lea.sflag [#allocation3], %s268
        %s270 = sand.u32 %s181, 1
        %s271 = smul.addr %s270, 64
        %s272 = scalar_lea.vmem [#allocation2], %s271
        %s273 = smul.u32 8, %s21
        %p274 = scmp.lt.s32.totalorder %s273, 31
        %s275 = scalar_select %p274, %s273, 31
        %s276 = smul.addr %s275, 8
        %s277 = scalar_lea.vmem %s0, %s276
        %s278 = smul.u32 8, %s21
        %s279 = smul.u32 8, %s21
        %v281 = vld [vmem:[%s277] sm:$0xff]
        %v282 = vld [vmem:[%s277 + $0x8] sm:$0xff]
        %v283 = vld [vmem:[%s277 + $0x10] sm:$0xff]
        %v284 = vld [vmem:[%s277 + $0x18] sm:$0xff]
        %v285 = vld [vmem:[%s277 + $0x20] sm:$0xff]
        %v286 = vld [vmem:[%s277 + $0x28] sm:$0xff]
        %v287 = vld [vmem:[%s277 + $0x30] sm:$0xff]
        %v288 = vld [vmem:[%s277 + $0x38] sm:$0xff]
        %vm289 = vcmask 261120
        %v290 = vsel %vm289, %v281, 0.0
        %291 = vadd.xlane.f32.xlu0 %v290
        %v292 = vpop.xlane.xlu0 %291
        %v293 = vsel %vm289, %v282, 0.0
        %294 = vadd.xlane.f32.xlu0 %v293
        %v295 = vpop.xlane.xlu0 %294
        %v296 = vsel %vm289, %v283, 0.0
        %297 = vadd.xlane.f32.xlu0 %v296
        %v298 = vpop.xlane.xlu0 %297
        %v299 = vsel %vm289, %v284, 0.0
        %300 = vadd.xlane.f32.xlu0 %v299
        %v301 = vpop.xlane.xlu0 %300
        %v302 = vsel %vm289, %v285, 0.0
        %303 = vadd.xlane.f32.xlu0 %v302
        %v304 = vpop.xlane.xlu0 %303
        %v305 = vsel %vm289, %v286, 0.0
        %306 = vadd.xlane.f32.xlu0 %v305
        %v307 = vpop.xlane.xlu0 %306
        %v308 = vsel %vm289, %v287, 0.0
        %309 = vadd.xlane.f32.xlu0 %v308
        %v310 = vpop.xlane.xlu0 %309
        %v311 = vsel %vm289, %v288, 0.0
        %312 = vadd.xlane.f32.xlu0 %v311
        %v313 = vpop.xlane.xlu0 %312
        %v314 = vrcp.pop 32.0
        %v315 = vmul.f32 %v292, %v314
        %v316 = vmul.f32 %v295, %v314
        %v317 = vmul.f32 %v298, %v314
        %v318 = vmul.f32 %v301, %v314
        %v319 = vmul.f32 %v304, %v314
        %v320 = vmul.f32 %v307, %v314
        %v321 = vmul.f32 %v310, %v314
        %v322 = vmul.f32 %v313, %v314
        %v323 = vsub.f32 %v281, %v315
        %v324 = vsub.f32 %v282, %v316
        %v325 = vsub.f32 %v283, %v317
        %v326 = vsub.f32 %v284, %v318
        %v327 = vsub.f32 %v285, %v319
        %v328 = vsub.f32 %v286, %v320
        %v329 = vsub.f32 %v287, %v321
        %v330 = vsub.f32 %v288, %v322
        %v331 = vmul.f32 %v323, %v323
        %v332 = vmul.f32 %v324, %v324
        %v333 = vmul.f32 %v325, %v325
        %v334 = vmul.f32 %v326, %v326
        %v335 = vmul.f32 %v327, %v327
        %v336 = vmul.f32 %v328, %v328
        %v337 = vmul.f32 %v329, %v329
        %v338 = vmul.f32 %v330, %v330
        %v339 = vsel %vm289, %v331, 0.0
        %340 = vadd.xlane.f32.xlu0 %v339
        %v341 = vpop.xlane.xlu0 %340
        %v342 = vsel %vm289, %v332, 0.0
        %343 = vadd.xlane.f32.xlu0 %v342
        %v344 = vpop.xlane.xlu0 %343
        %v345 = vsel %vm289, %v333, 0.0
        %346 = vadd.xlane.f32.xlu0 %v345
        %v347 = vpop.xlane.xlu0 %346
        %v348 = vsel %vm289, %v334, 0.0
        %349 = vadd.xlane.f32.xlu0 %v348
        %v350 = vpop.xlane.xlu0 %349
        %v351 = vsel %vm289, %v335, 0.0
        %352 = vadd.xlane.f32.xlu0 %v351
        %v353 = vpop.xlane.xlu0 %352
        %v354 = vsel %vm289, %v336, 0.0
        %355 = vadd.xlane.f32.xlu0 %v354
        %v356 = vpop.xlane.xlu0 %355
        %v357 = vsel %vm289, %v337, 0.0
        %358 = vadd.xlane.f32.xlu0 %v357
        %v359 = vpop.xlane.xlu0 %358
        %v360 = vsel %vm289, %v338, 0.0
        %361 = vadd.xlane.f32.xlu0 %v360
        %v362 = vpop.xlane.xlu0 %361
        %v363 = vmul.f32 %v341, %v314
        %v364 = vmul.f32 %v344, %v314
        %v365 = vmul.f32 %v347, %v314
        %v366 = vmul.f32 %v350, %v314
        %v367 = vmul.f32 %v353, %v314
        %v368 = vmul.f32 %v356, %v314
        %v369 = vmul.f32 %v359, %v314
        %v370 = vmul.f32 %v362, %v314
        %v371 = vadd.f32 %v363, 1e-05
        %v372 = vadd.f32 %v364, 1e-05
        %v373 = vadd.f32 %v365, 1e-05
        %v374 = vadd.f32 %v366, 1e-05
        %v375 = vadd.f32 %v367, 1e-05
        %v376 = vadd.f32 %v368, 1e-05
        %v377 = vadd.f32 %v369, 1e-05
        %v378 = vadd.f32 %v370, 1e-05
        %v379 = vrsqrt.pop %v371
        %v380 = vrsqrt.pop %v372
        %v381 = vrsqrt.pop %v373
        %v382 = vrsqrt.pop %v374
        %v383 = vrsqrt.pop %v375
        %v384 = vrsqrt.pop %v376
        %v385 = vrsqrt.pop %v377
        %v386 = vrsqrt.pop %v378
        %v387 = vmul.f32 %v323, %v379
        %v388 = vmul.f32 %v324, %v380
        %v389 = vmul.f32 %v325, %v381
        %v390 = vmul.f32 %v326, %v382
        %v391 = vmul.f32 %v327, %v383
        %v392 = vmul.f32 %v328, %v384
        %v393 = vmul.f32 %v329, %v385
        %v394 = vmul.f32 %v330, %v386
        %v395 = vld [vmem:[%s1] sm:$0x1]
        %v397 = vlaneseq
        %v398 = vshrl.u32 %v397, 7
        %v399 = vsub.s32 0, %v398
        %v400 = vrot.slane %v395, %v399
        %v402 = vmul.f32 %v387, %v400
        %v403 = vmul.f32 %v388, %v400
        %v404 = vmul.f32 %v389, %v400
        %v405 = vmul.f32 %v390, %v400
        %v406 = vmul.f32 %v391, %v400
        %v407 = vmul.f32 %v392, %v400
        %v408 = vmul.f32 %v393, %v400
        %v409 = vmul.f32 %v394, %v400
        %v410 = vld [vmem:[%s2] sm:$0x1]
        %v412 = vlaneseq
        %v413 = vshrl.u32 %v412, 7
        %v414 = vsub.s32 0, %v413
        %v415 = vrot.slane %v410, %v414
        %v417 = vadd.f32 %v402, %v415
        %v418 = vadd.f32 %v403, %v415
        %v419 = vadd.f32 %v404, %v415
        %v420 = vadd.f32 %v405, %v415
        %v421 = vadd.f32 %v406, %v415
        %v422 = vadd.f32 %v407, %v415
        %v423 = vadd.f32 %v408, %v415
        %v424 = vadd.f32 %v409, %v415
        %v425 = vpack.c.bf16 %v418, %v417
        %v426 = vpack.c.bf16 %v420, %v419
        %v427 = vpack.c.bf16 %v422, %v421
        %v428 = vpack.c.bf16 %v424, %v423
        %v429 = vld [vmem:[%s3] sm:$0xf]
        %v430 = vld [vmem:[%s3 + $0x4] sm:$0xf]
        %v431 = vld [vmem:[%s3 + $0x8] sm:$0xf]
        %v432 = vld [vmem:[%s3 + $0xc] sm:$0xf]
        %v433 = vld [vmem:[%s4] sm:$0x1]
        %v435 = vlaneseq
        %v436 = vshrl.u32 %v435, 7
        %v437 = vsub.s32 0, %v436
        %v438 = vrot.slane %v433, %v437
        %v444 = vunpack.c.l.b16 %v429
        %v445 = vunpack.c.l.b16 %v430
        %v446 = vunpack.c.l.b16 %v431
        %v447 = vunpack.c.l.b16 %v432
        %v448 = vpack.c.b16 %v445, %v444
        %v449 = vpack.c.b16 %v447, %v446
        %v453 = vsel %vm289, %v425, 0
        %v456 = vsel %vm289, %v426, 0
        %v459 = vsel %vm289, %v427, 0
        %v462 = vsel %vm289, %v428, 0
        %464 = vmatprep.subr.bf16.mxu0 0
        %465 = vmatpush1.bf16.msra.mxu0 %v448
        %466 = vmatprep.subr.bf16.mxu0 0
        %467 = vmatpush1.bf16.msra.mxu0 %v449
        %468 = vmatprep.subr.bf16.mxu0 0
        %469 = vmatpush1.bf16.msra.mxu0 0
        %470 = vmatprep.subr.bf16.mxu0 0
        %471 = vmatpush1.bf16.msra.mxu0 0
        %472 = vmatprep.subr.bf16.mxu0 0
        %473 = vmatpush1.bf16.msra.mxu0 0
        %474 = vmatprep.subr.bf16.mxu0 0
        %475 = vmatpush1.bf16.msra.mxu0 0
        %476 = vmatprep.subr.bf16.mxu0 0
        %477 = vmatpush1.bf16.msra.mxu0 0
        %478 = vmatprep.subr.bf16.mxu0 0
        %479 = vmatpush1.bf16.msra.mxu0 0
        %480 = vmatprep.subr.bf16.mxu0 0
        %481 = vmatpush1.bf16.msra.mxu0 0
        %482 = vmatprep.subr.bf16.mxu0 0
        %483 = vmatpush1.bf16.msra.mxu0 0
        %484 = vmatprep.subr.bf16.mxu0 0
        %485 = vmatpush1.bf16.msra.mxu0 0
        %486 = vmatprep.subr.bf16.mxu0 0
        %487 = vmatpush1.bf16.msra.mxu0 0
        %488 = vmatprep.subr.bf16.mxu0 0
        %489 = vmatpush1.bf16.msra.mxu0 0
        %490 = vmatprep.subr.bf16.mxu0 0
        %491 = vmatpush1.bf16.msra.mxu0 0
        %492 = vmatprep.subr.bf16.mxu0 0
        %493 = vmatpush1.bf16.msra.mxu0 0
        %494 = vmatprep.subr.bf16.mxu0 0
        %495 = vmatpush1.bf16.msra.mxu0 0
        %496 = vmatprep.mubr.bf16.mxu0 0
        %497 = vmatmul.mubr.bf16.gmra.mrb[0].mxu0 %v453
        %v498 = vpop.f32.mrb[0].mxu0
        %v499 = vadd.f32 %v438, %v498
        %v500 = vpop.f32.mrb[0].mxu0
        %v501 = vpop.f32.mrb[0].mxu0
        %v502 = vadd.f32 %v438, %v501
        %v503 = vpop.f32.mrb[0].mxu0
        %504 = vmatprep.mubr.bf16.mxu0 0
        %505 = vmatmul.mubr.bf16.gmra.mrb[0].mxu0 %v456
        %v506 = vpop.f32.mrb[0].mxu0
        %v507 = vadd.f32 %v438, %v506
        %v508 = vpop.f32.mrb[0].mxu0
        %v509 = vpop.f32.mrb[0].mxu0
        %v510 = vadd.f32 %v438, %v509
        %v511 = vpop.f32.mrb[0].mxu0
        %512 = vmatprep.mubr.bf16.mxu0 0
        %513 = vmatmul.mubr.bf16.gmra.mrb[0].mxu0 %v459
        %v514 = vpop.f32.mrb[0].mxu0
        %v515 = vadd.f32 %v438, %v514
        %v516 = vpop.f32.mrb[0].mxu0
        %v517 = vpop.f32.mrb[0].mxu0
        %v518 = vadd.f32 %v438, %v517
        %v519 = vpop.f32.mrb[0].mxu0
        %520 = vmatprep.mubr.bf16.mxu0 0
        %521 = vmatmul.mubr.bf16.gmra.mrb[0].mxu0 %v462
        %v522 = vpop.f32.mrb[0].mxu0
        %v523 = vadd.f32 %v438, %v522
        %v524 = vpop.f32.mrb[0].mxu0
        %v525 = vpop.f32.mrb[0].mxu0
        %v526 = vadd.f32 %v438, %v525
        %v527 = vpop.f32.mrb[0].mxu0
        %528 = vdwg.mxu0
        %v529 = vmul.f32 %v499, 0.5
        %v530 = vmul.f32 %v502, 0.5
        %v531 = vmul.f32 %v507, 0.5
        %v532 = vmul.f32 %v510, 0.5
        %v533 = vmul.f32 %v515, 0.5
        %v534 = vmul.f32 %v518, 0.5
        %v535 = vmul.f32 %v523, 0.5
        %v536 = vmul.f32 %v526, 0.5
        %v537 = vmul.f32 %v499, %v499
        %v538 = vmul.f32 %v502, %v502
        %v539 = vmul.f32 %v507, %v507
        %v540 = vmul.f32 %v510, %v510
        %v541 = vmul.f32 %v515, %v515
        %v542 = vmul.f32 %v518, %v518
        %v543 = vmul.f32 %v523, %v523
        %v544 = vmul.f32 %v526, %v526
        %v545 = vmul.f32 %v537, %v499
        %v546 = vmul.f32 %v538, %v502
        %v547 = vmul.f32 %v539, %v507
        %v548 = vmul.f32 %v540, %v510
        %v549 = vmul.f32 %v541, %v515
        %v550 = vmul.f32 %v542, %v518
        %v551 = vmul.f32 %v543, %v523
        %v552 = vmul.f32 %v544, %v526
        %v553 = vmul.f32 %v545, 0.044715
        %v554 = vmul.f32 %v546, 0.044715
        %v555 = vmul.f32 %v547, 0.044715
        %v556 = vmul.f32 %v548, 0.044715
        %v557 = vmul.f32 %v549, 0.044715
        %v558 = vmul.f32 %v550, 0.044715
        %v559 = vmul.f32 %v551, 0.044715
        %v560 = vmul.f32 %v552, 0.044715
        %v561 = vadd.f32 %v499, %v553
        %v562 = vadd.f32 %v502, %v554
        %v563 = vadd.f32 %v507, %v555
        %v564 = vadd.f32 %v510, %v556
        %v565 = vadd.f32 %v515, %v557
        %v566 = vadd.f32 %v518, %v558
        %v567 = vadd.f32 %v523, %v559
        %v568 = vadd.f32 %v526, %v560
        %v569 = vmul.f32 %v561, 0.7978846
        %v570 = vmul.f32 %v562, 0.7978846
        %v571 = vmul.f32 %v563, 0.7978846
        %v572 = vmul.f32 %v564, 0.7978846
        %v573 = vmul.f32 %v565, 0.7978846
        %v574 = vmul.f32 %v566, 0.7978846
        %v575 = vmul.f32 %v567, 0.7978846
        %v576 = vmul.f32 %v568, 0.7978846
        %v577 = vtanh.pop %v569
        %v578 = vtanh.pop %v570
        %v579 = vtanh.pop %v571
        %v580 = vtanh.pop %v572
        %v581 = vtanh.pop %v573
        %v582 = vtanh.pop %v574
        %v583 = vtanh.pop %v575
        %v584 = vtanh.pop %v576
        %v585 = vadd.f32 %v577, 1.0
        %v586 = vadd.f32 %v578, 1.0
        %v587 = vadd.f32 %v579, 1.0
        %v588 = vadd.f32 %v580, 1.0
        %v589 = vadd.f32 %v581, 1.0
        %v590 = vadd.f32 %v582, 1.0
        %v591 = vadd.f32 %v583, 1.0
        %v592 = vadd.f32 %v584, 1.0
        %v593 = vmul.f32 %v529, %v585
        %v594 = vmul.f32 %v530, %v586
        %v595 = vmul.f32 %v531, %v587
        %v596 = vmul.f32 %v532, %v588
        %v597 = vmul.f32 %v533, %v589
        %v598 = vmul.f32 %v534, %v590
        %v599 = vmul.f32 %v535, %v591
        %v600 = vmul.f32 %v536, %v592
        %v601 = vpack.c.bf16 %v594, %v593
        %v602 = vpack.c.bf16 %v596, %v595
        %v603 = vpack.c.bf16 %v598, %v597
        %v604 = vpack.c.bf16 %v600, %v599
        %v605 = vld [vmem:[%s5] sm:$0xf]
        %v606 = vld [vmem:[%s5 + $0x4] sm:$0xf]
        %v607 = vld [vmem:[%s5 + $0x8] sm:$0xf]
        %v608 = vld [vmem:[%s5 + $0xc] sm:$0xf]
        %v609 = vld [vmem:[%s5 + $0x10] sm:$0xf]
        %v610 = vld [vmem:[%s5 + $0x14] sm:$0xf]
        %v611 = vld [vmem:[%s5 + $0x18] sm:$0xf]
        %v612 = vld [vmem:[%s5 + $0x1c] sm:$0xf]
        %v613 = vld [vmem:[%s6] sm:$0x1]
        %v615 = vlaneseq
        %v616 = vshrl.u32 %v615, 7
        %v617 = vsub.s32 0, %v616
        %v618 = vrot.slane %v613, %v617
        %v628 = vunpack.c.l.b16 %v605
        %v629 = vunpack.c.l.b16 %v606
        %v630 = vunpack.c.l.b16 %v607
        %v631 = vunpack.c.l.b16 %v608
        %v632 = vunpack.c.l.b16 %v609
        %v633 = vunpack.c.l.b16 %v610
        %v634 = vunpack.c.l.b16 %v611
        %v635 = vunpack.c.l.b16 %v612
        %v636 = vpack.c.b16 %v629, %v628
        %v637 = vpack.c.b16 %v631, %v630
        %v638 = vpack.c.b16 %v633, %v632
        %v639 = vpack.c.b16 %v635, %v634
        %vm644 = vcmask 523264
        %v646 = vsel %vm644, %v601, 0
        %v649 = vsel %vm644, %v602, 0
        %v652 = vsel %vm644, %v603, 0
        %v655 = vsel %vm644, %v604, 0
        %657 = vmatprep.subr.bf16.mxu0 0
        %658 = vmatpush1.bf16.msra.mxu0 %v636
        %659 = vmatprep.subr.bf16.mxu0 0
        %660 = vmatpush1.bf16.msra.mxu0 %v637
        %661 = vmatprep.subr.bf16.mxu0 0
        %662 = vmatpush1.bf16.msra.mxu0 %v638
        %663 = vmatprep.subr.bf16.mxu0 0
        %664 = vmatpush1.bf16.msra.mxu0 %v639
        %665 = vmatprep.subr.bf16.mxu0 0
        %666 = vmatpush1.bf16.msra.mxu0 0
        %667 = vmatprep.subr.bf16.mxu0 0
        %668 = vmatpush1.bf16.msra.mxu0 0
        %669 = vmatprep.subr.bf16.mxu0 0
        %670 = vmatpush1.bf16.msra.mxu0 0
        %671 = vmatprep.subr.bf16.mxu0 0
        %672 = vmatpush1.bf16.msra.mxu0 0
        %673 = vmatprep.subr.bf16.mxu0 0
        %674 = vmatpush1.bf16.msra.mxu0 0
        %675 = vmatprep.subr.bf16.mxu0 0
        %676 = vmatpush1.bf16.msra.mxu0 0
        %677 = vmatprep.subr.bf16.mxu0 0
        %678 = vmatpush1.bf16.msra.mxu0 0
        %679 = vmatprep.subr.bf16.mxu0 0
        %680 = vmatpush1.bf16.msra.mxu0 0
        %681 = vmatprep.subr.bf16.mxu0 0
        %682 = vmatpush1.bf16.msra.mxu0 0
        %683 = vmatprep.subr.bf16.mxu0 0
        %684 = vmatpush1.bf16.msra.mxu0 0
        %685 = vmatprep.subr.bf16.mxu0 0
        %686 = vmatpush1.bf16.msra.mxu0 0
        %687 = vmatprep.subr.bf16.mxu0 0
        %688 = vmatpush1.bf16.msra.mxu0 0
        %689 = vmatprep.mubr.bf16.mxu0 0
        %690 = vmatmul.mubr.bf16.gmra.mrb[0].mxu0 %v646
        %v691 = vpop.f32.mrb[0].mxu0
        %v692 = vadd.f32 %v618, %v691
        %v693 = vpop.f32.mrb[0].mxu0
        %v694 = vpop.f32.mrb[0].mxu0
        %v695 = vadd.f32 %v618, %v694
        %v696 = vpop.f32.mrb[0].mxu0
        %697 = vmatprep.mubr.bf16.mxu0 0
        %698 = vmatmul.mubr.bf16.gmra.mrb[0].mxu0 %v649
        %v699 = vpop.f32.mrb[0].mxu0
        %v700 = vadd.f32 %v618, %v699
        %v701 = vpop.f32.mrb[0].mxu0
        %v702 = vpop.f32.mrb[0].mxu0
        %v703 = vadd.f32 %v618, %v702
        %v704 = vpop.f32.mrb[0].mxu0
        %705 = vmatprep.mubr.bf16.mxu0 0
        %706 = vmatmul.mubr.bf16.gmra.mrb[0].mxu0 %v652
        %v707 = vpop.f32.mrb[0].mxu0
        %v708 = vadd.f32 %v618, %v707
        %v709 = vpop.f32.mrb[0].mxu0
        %v710 = vpop.f32.mrb[0].mxu0
        %v711 = vadd.f32 %v618, %v710
        %v712 = vpop.f32.mrb[0].mxu0
        %713 = vmatprep.mubr.bf16.mxu0 0
        %714 = vmatmul.mubr.bf16.gmra.mrb[0].mxu0 %v655
        %v715 = vpop.f32.mrb[0].mxu0
        %v716 = vadd.f32 %v618, %v715
        %v717 = vpop.f32.mrb[0].mxu0
        %v718 = vpop.f32.mrb[0].mxu0
        %v719 = vadd.f32 %v618, %v718
        %v720 = vpop.f32.mrb[0].mxu0
        %721 = vdwg.mxu0
        %v722 = vadd.f32 %v281, %v692
        %v723 = vadd.f32 %v282, %v695
        %v724 = vadd.f32 %v283, %v700
        %v725 = vadd.f32 %v284, %v703
        %v726 = vadd.f32 %v285, %v708
        %v727 = vadd.f32 %v286, %v711
        %v728 = vadd.f32 %v287, %v716
        %v729 = vadd.f32 %v288, %v719
        %730 = vst.msk [vmem:[%s272] sm:$0xff] %vm289, %v722
        %731 = vst.msk [vmem:[%s272 + $0x8] sm:$0xff] %vm289, %v723
        %732 = vst.msk [vmem:[%s272 + $0x10] sm:$0xff] %vm289, %v724
        %733 = vst.msk [vmem:[%s272 + $0x18] sm:$0xff] %vm289, %v725
        %734 = vst.msk [vmem:[%s272 + $0x20] sm:$0xff] %vm289, %v726
        %735 = vst.msk [vmem:[%s272 + $0x28] sm:$0xff] %vm289, %v727
        %736 = vst.msk [vmem:[%s272 + $0x30] sm:$0xff] %vm289, %v728
        %737 = vst.msk [vmem:[%s272 + $0x38] sm:$0xff] %vm289, %v729
        %s738 = sand.u32 %s181, 1
        %s739 = scalar_lea.sflag [#allocation3], %s738
        %s740 = sand.u32 %s181, 1
        %s741 = smul.addr %s740, 64
        %s742 = scalar_lea.vmem [#allocation2], %s741
        // Predicated region
        $region49: #{space_transformer_forward.7} parent=47 // pred_check
          %p743 = pneg %p191
        $region50: #{space_transformer_forward.7} parent=47 // pred_check_branch
          %745 = sbr.rel (%p743) target = $region52
        $region51: #{space_transformer_forward.7} parent=47 // pred_region
          %s746 = smul.u32 8, %s21
          %s748 = ssub.s32 1024, 1024
          %749 = vsyncadd %s739, %s748
          %s750 = smul.addr %s746, 128
          %s751 = scalar_lea.hbm %s7, %s750
          %s752 = sshll.u32 %s742, 4
          %s753 = int_to_ptr.vmem [resolvable:$true] %s752
          %758 = dma.vmem_to_hbm [thread:$0]  %s753, 1024, %s751, %s739, 128, 128, 8
        $region52: #{space_transformer_forward.7} parent=47 // pred_fallthru
          _
      $region48: #{space_transformer_forward.7} parent=5 // pred_fallthru
        _
      %p759 = scmp.le.s32.totalorder 2, %s16
      // Predicated region
      $region53: #{space_transformer_forward.7} parent=5 // pred_check
        %p760 = pneg %p759
      $region54: #{space_transformer_forward.7} parent=5 // pred_check_branch
        %762 = sbr.rel (%p760) target = $region56
      $region55: #{space_transformer_forward.7} parent=5 // pred_region
        %s763 = ssub.s32 %s16, 2
        // Predicated region
        $region57: #{space_transformer_forward.7} parent=55 // pred_check
          %p764 = pneg %p197
        $region58: #{space_transformer_forward.7} parent=55 // pred_check_branch
          %766 = sbr.rel (%p764) target = $region60
        $region59: #{space_transformer_forward.7} parent=55 // pred_region
          %s767 = sand.u32 %s182, 1
          %s768 = scalar_lea.sflag [#allocation3], %s767
          %s769 = sand.u32 %s182, 1
          %s770 = smul.addr %s769, 64
          %s771 = scalar_lea.vmem [#allocation2], %s770
          %772 = dma.done %s768, 1024
        $region60: #{space_transformer_forward.7} parent=55 // pred_fallthru
          _
      $region56: #{space_transformer_forward.7} parent=5 // pred_fallthru
        _
    $region6: #{space_transformer_forward.7} parent=1 // loop_footer
      %s20 = sadd.s32 1, %s16
    $region7: #{space_transformer_forward.7} parent=1 // loop_footer_branch
      %15 = sbr.rel target = $region3
    $region8: #{space_transformer_forward.7} parent=1 // loop_exit
      _
    %773 = vsyncpa [#allocation3], 1
    %s774 = scalar_lea.sflag [#allocation3], 1
    %775 = vsyncpa %s774, 1

// kernel: space_transformer_forward.6
$region0: #{space_transformer_forward.6}
  #allocation0 [shape = 'u32[]', space=smem, size = 0x4, offset = 0x4, fixed_abs, tag = 'smem constant byte address 0x4 - core index']
  #allocation1 [shape = 'u32[144,128]{1,0:T(1,128)}', space=vmem, size = 0x12000, scoped, tag = 'internal scratch']
  #allocation2 [shape = 'bf16[4,16,96]{2,1,0:T(16,128)(2,1)}', space=vmem, size = 0x4000, scoped, tag = 'scratch operand']
  %s0 = inlined_call_operand.vmem [shape: f32[16,16,32], index: 0, kind: input, shape index: {}]
  %s1 = inlined_call_operand.vmem [shape: f32[4,4,16,16], index: 1, kind: input, shape index: {}]
  %s2 = inlined_call_operand.vmem [shape: f32[1,1,32], index: 2, kind: input, shape index: {}]
  %s3 = inlined_call_operand.vmem [shape: f32[1,1,32], index: 3, kind: input, shape index: {}]
  %s4 = inlined_call_operand.vmem [shape: bf16[32,96], index: 4, kind: input, shape index: {}]
  %s5 = inlined_call_operand.vmem [shape: f32[1,96], index: 5, kind: input, shape index: {}]
  %s6 = inlined_call_operand.vmem [shape: bf16[32,32], index: 6, kind: input, shape index: {}]
  %s7 = inlined_call_operand.vmem [shape: f32[1,32], index: 7, kind: input, shape index: {}]
  %s8 = inlined_call_operand.vmem [shape: f32[16,16,32], index: 8, kind: output, shape index: {}]
  %s9 = sld [smem:[#allocation0]]
  $region65: #{space_transformer_forward.6} parent=0
    _
  %s11 = ssub.s32 1, %s9
  %s12 = scalar_select 0, %s11, %s9
  loop: start=0, step=1, limit=6
  $region2: #{space_transformer_forward.6} parent=0 // loop_pre_header
    _
  $region3: #{space_transformer_forward.6} parent=0 // loop_header
    %s14 = sphi 0, %s18
    %p15 = scmp.ge.s32.totalorder %s14, 6
    %s24 = sphi 0, %s26
    %s27 = sphi 0, %s24
    %s28 = sphi 0, %s27
    %s44 = sphi 0, %s28
    %s48 = sphi 0, %s48
    %s50 = sphi 0, %s48
    %s51 = sphi 0, %s50
    %s65 = sphi 0, %s51
    %s69 = sphi 0, %s69
    %s71 = sphi 0, %s69
    %s72 = sphi 0, %s71
    %s86 = sphi 0, %s72
    %s90 = sphi 0, %s90
    %s92 = sphi 0, %s90
    %s93 = sphi 0, %s92
    %s107 = sphi 0, %s93
    %s111 = sphi 0, %s111
    %s113 = sphi 0, %s111
    %s114 = sphi 0, %s113
    %s128 = sphi 0, %s114
    %s132 = sphi 0, %s132
    %s134 = sphi 0, %s132
    %s135 = sphi 0, %s134
    %s149 = sphi 0, %s135
    %s153 = sphi 0, %s153
    %s155 = sphi 0, %s153
    %s156 = sphi 0, %s155
    %s170 = sphi 0, %s156
    %s174 = sphi 0, %s174
    %s176 = sphi 0, %s174
    %s177 = sphi 0, %s176
    %s191 = sphi 0, %s177
    %s197 = sphi 0, %s199
    %s200 = sphi 0, %s197
    %s201 = sphi 0, %s200
    %s217 = sphi 0, %s201
  $region4: #{space_transformer_forward.6} parent=0 // loop_header_branch
    %17 = sbr.rel (%p15) target = $region8
  $region5: #{space_transformer_forward.6} parent=0 // loop_body
    %s19 = ssub.s32 %s14, 1
    %s20 = ssub.s32 %s14, 2
    %s21 = sadd.s32 %s14, 1
    %s22 = ssub.s32 %s14, %s21
    %p23 = scmp.eq.s32.totalorder %s22, 0
    %s25 = sadd.s32 %s24, 1
    %s26 = scalar_select %p23, %s24, %s25
    %p29 = pneg %p23
    %p30 = scmp.eq.s32.totalorder %s14, 3
    %p31 = por %p29, %p30
    %p32 = scmp.ne.s32.totalorder %s24, %s27
    %p33 = scmp.eq.s32.totalorder %s14, 0
    %p34 = por %p32, %p33
    %p35 = scmp.ne.s32.totalorder %s24, %s27
    %p36 = scmp.eq.s32.totalorder %s19, 3
    %p37 = por %p35, %p36
    %p38 = scmp.ne.s32.totalorder %s27, %s28
    %p39 = scmp.eq.s32.totalorder %s19, 0
    %p40 = por %p38, %p39
    %p41 = scmp.ne.s32.totalorder %s27, %s28
    %p42 = scmp.eq.s32.totalorder %s20, 3
    %p43 = por %p41, %p42
    %p45 = scmp.ne.s32.totalorder %s28, %s44
    %p46 = scmp.eq.s32.totalorder %s20, 0
    %p47 = por %p45, %p46
    %s49 = sadd.s32 %s48, 1
    %p52 = scmp.eq.s32.totalorder %s14, 3
    %p53 = scmp.ne.s32.totalorder %s48, %s50
    %p54 = scmp.eq.s32.totalorder %s14, 0
    %p55 = por %p53, %p54
    %p56 = scmp.ne.s32.totalorder %s48, %s50
    %p57 = scmp.eq.s32.totalorder %s19, 3
    %p58 = por %p56, %p57
    %p59 = scmp.ne.s32.totalorder %s50, %s51
    %p60 = scmp.eq.s32.totalorder %s19, 0
    %p61 = por %p59, %p60
    %p62 = scmp.ne.s32.totalorder %s50, %s51
    %p63 = scmp.eq.s32.totalorder %s20, 3
    %p64 = por %p62, %p63
    %p66 = scmp.ne.s32.totalorder %s51, %s65
    %p67 = scmp.eq.s32.totalorder %s20, 0
    %p68 = por %p66, %p67
    %s70 = sadd.s32 %s69, 1
    %p73 = scmp.eq.s32.totalorder %s14, 3
    %p74 = scmp.ne.s32.totalorder %s69, %s71
    %p75 = scmp.eq.s32.totalorder %s14, 0
    %p76 = por %p74, %p75
    %p77 = scmp.ne.s32.totalorder %s69, %s71
    %p78 = scmp.eq.s32.totalorder %s19, 3
    %p79 = por %p77, %p78
    %p80 = scmp.ne.s32.totalorder %s71, %s72
    %p81 = scmp.eq.s32.totalorder %s19, 0
    %p82 = por %p80, %p81
    %p83 = scmp.ne.s32.totalorder %s71, %s72
    %p84 = scmp.eq.s32.totalorder %s20, 3
    %p85 = por %p83, %p84
    %p87 = scmp.ne.s32.totalorder %s72, %s86
    %p88 = scmp.eq.s32.totalorder %s20, 0
    %p89 = por %p87, %p88
    %s91 = sadd.s32 %s90, 1
    %p94 = scmp.eq.s32.totalorder %s14, 3
    %p95 = scmp.ne.s32.totalorder %s90, %s92
    %p96 = scmp.eq.s32.totalorder %s14, 0
    %p97 = por %p95, %p96
    %p98 = scmp.ne.s32.totalorder %s90, %s92
    %p99 = scmp.eq.s32.totalorder %s19, 3
    %p100 = por %p98, %p99
    %p101 = scmp.ne.s32.totalorder %s92, %s93
    %p102 = scmp.eq.s32.totalorder %s19, 0
    %p103 = por %p101, %p102
    %p104 = scmp.ne.s32.totalorder %s92, %s93
    %p105 = scmp.eq.s32.totalorder %s20, 3
    %p106 = por %p104, %p105
    %p108 = scmp.ne.s32.totalorder %s93, %s107
    %p109 = scmp.eq.s32.totalorder %s20, 0
    %p110 = por %p108, %p109
    %s112 = sadd.s32 %s111, 1
    %p115 = scmp.eq.s32.totalorder %s14, 3
    %p116 = scmp.ne.s32.totalorder %s111, %s113
    %p117 = scmp.eq.s32.totalorder %s14, 0
    %p118 = por %p116, %p117
    %p119 = scmp.ne.s32.totalorder %s111, %s113
    %p120 = scmp.eq.s32.totalorder %s19, 3
    %p121 = por %p119, %p120
    %p122 = scmp.ne.s32.totalorder %s113, %s114
    %p123 = scmp.eq.s32.totalorder %s19, 0
    %p124 = por %p122, %p123
    %p125 = scmp.ne.s32.totalorder %s113, %s114
    %p126 = scmp.eq.s32.totalorder %s20, 3
    %p127 = por %p125, %p126
    %p129 = scmp.ne.s32.totalorder %s114, %s128
    %p130 = scmp.eq.s32.totalorder %s20, 0
    %p131 = por %p129, %p130
    %s133 = sadd.s32 %s132, 1
    %p136 = scmp.eq.s32.totalorder %s14, 3
    %p137 = scmp.ne.s32.totalorder %s132, %s134
    %p138 = scmp.eq.s32.totalorder %s14, 0
    %p139 = por %p137, %p138
    %p140 = scmp.ne.s32.totalorder %s132, %s134
    %p141 = scmp.eq.s32.totalorder %s19, 3
    %p142 = por %p140, %p141
    %p143 = scmp.ne.s32.totalorder %s134, %s135
    %p144 = scmp.eq.s32.totalorder %s19, 0
    %p145 = por %p143, %p144
    %p146 = scmp.ne.s32.totalorder %s134, %s135
    %p147 = scmp.eq.s32.totalorder %s20, 3
    %p148 = por %p146, %p147
    %p150 = scmp.ne.s32.totalorder %s135, %s149
    %p151 = scmp.eq.s32.totalorder %s20, 0
    %p152 = por %p150, %p151
    %s154 = sadd.s32 %s153, 1
    %p157 = scmp.eq.s32.totalorder %s14, 3
    %p158 = scmp.ne.s32.totalorder %s153, %s155
    %p159 = scmp.eq.s32.totalorder %s14, 0
    %p160 = por %p158, %p159
    %p161 = scmp.ne.s32.totalorder %s153, %s155
    %p162 = scmp.eq.s32.totalorder %s19, 3
    %p163 = por %p161, %p162
    %p164 = scmp.ne.s32.totalorder %s155, %s156
    %p165 = scmp.eq.s32.totalorder %s19, 0
    %p166 = por %p164, %p165
    %p167 = scmp.ne.s32.totalorder %s155, %s156
    %p168 = scmp.eq.s32.totalorder %s20, 3
    %p169 = por %p167, %p168
    %p171 = scmp.ne.s32.totalorder %s156, %s170
    %p172 = scmp.eq.s32.totalorder %s20, 0
    %p173 = por %p171, %p172
    %s175 = sadd.s32 %s174, 1
    %p178 = scmp.eq.s32.totalorder %s14, 3
    %p179 = scmp.ne.s32.totalorder %s174, %s176
    %p180 = scmp.eq.s32.totalorder %s14, 0
    %p181 = por %p179, %p180
    %p182 = scmp.ne.s32.totalorder %s174, %s176
    %p183 = scmp.eq.s32.totalorder %s19, 3
    %p184 = por %p182, %p183
    %p185 = scmp.ne.s32.totalorder %s176, %s177
    %p186 = scmp.eq.s32.totalorder %s19, 0
    %p187 = por %p185, %p186
    %p188 = scmp.ne.s32.totalorder %s176, %s177
    %p189 = scmp.eq.s32.totalorder %s20, 3
    %p190 = por %p188, %p189
    %p192 = scmp.ne.s32.totalorder %s177, %s191
    %p193 = scmp.eq.s32.totalorder %s20, 0
    %p194 = por %p192, %p193
    %s195 = ssub.s32 %s14, %s21
    %p196 = scmp.eq.s32.totalorder %s195, 0
    %s198 = sadd.s32 %s197, 1
    %s199 = scalar_select %p196, %s197, %s198
    %p202 = pneg %p196
    %p203 = scmp.eq.s32.totalorder %s14, 3
    %p204 = por %p202, %p203
    %p205 = scmp.ne.s32.totalorder %s197, %s200
    %p206 = scmp.eq.s32.totalorder %s14, 0
    %p207 = por %p205, %p206
    %p208 = scmp.ne.s32.totalorder %s197, %s200
    %p209 = scmp.eq.s32.totalorder %s19, 3
    %p210 = por %p208, %p209
    %p211 = scmp.ne.s32.totalorder %s200, %s201
    %p212 = scmp.eq.s32.totalorder %s19, 0
    %p213 = por %p211, %p212
    %p214 = scmp.ne.s32.totalorder %s200, %s201
    %p215 = scmp.eq.s32.totalorder %s20, 3
    %p216 = por %p214, %p215
    %p218 = scmp.ne.s32.totalorder %s201, %s217
    %p219 = scmp.eq.s32.totalorder %s20, 0
    %p220 = por %p218, %p219
    %p221 = scmp.le.s32.totalorder 1, %s14
    %p222 = scmp.lt.s32.totalorder %s14, 5
    %p223 = pnand %p221, %p222
    %p224 = pneg %p223
    // Predicated region
    $region9: #{space_transformer_forward.6} parent=5 // pred_check
      _
    $region10: #{space_transformer_forward.6} parent=5 // pred_check_branch
      %226 = sbr.rel (%p223) target = $region12
    $region11: #{space_transformer_forward.6} parent=5 // pred_region
      %s227 = ssub.s32 %s14, 1
      // Predicated region
      $region13: #{space_transformer_forward.6} parent=11 // pred_check
        %p228 = pneg %p61
      $region14: #{space_transformer_forward.6} parent=11 // pred_check_branch
        %230 = sbr.rel (%p228) target = $region16
      $region15: #{space_transformer_forward.6} parent=11 // pred_region
        _
      $region16: #{space_transformer_forward.6} parent=11 // pred_fallthru
        _
      // Predicated region
      $region17: #{space_transformer_forward.6} parent=11 // pred_check
        %p231 = pneg %p82
      $region18: #{space_transformer_forward.6} parent=11 // pred_check_branch
        %233 = sbr.rel (%p231) target = $region20
      $region19: #{space_transformer_forward.6} parent=11 // pred_region
        _
      $region20: #{space_transformer_forward.6} parent=11 // pred_fallthru
        _
      // Predicated region
      $region21: #{space_transformer_forward.6} parent=11 // pred_check
        %p234 = pneg %p103
      $region22: #{space_transformer_forward.6} parent=11 // pred_check_branch
        %236 = sbr.rel (%p234) target = $region24
      $region23: #{space_transformer_forward.6} parent=11 // pred_region
        _
      $region24: #{space_transformer_forward.6} parent=11 // pred_fallthru
        _
      // Predicated region
      $region25: #{space_transformer_forward.6} parent=11 // pred_check
        %p237 = pneg %p124
      $region26: #{space_transformer_forward.6} parent=11 // pred_check_branch
        %239 = sbr.rel (%p237) target = $region28
      $region27: #{space_transformer_forward.6} parent=11 // pred_region
        _
      $region28: #{space_transformer_forward.6} parent=11 // pred_fallthru
        _
      // Predicated region
      $region29: #{space_transformer_forward.6} parent=11 // pred_check
        %p240 = pneg %p145
      $region30: #{space_transformer_forward.6} parent=11 // pred_check_branch
        %242 = sbr.rel (%p240) target = $region32
      $region31: #{space_transformer_forward.6} parent=11 // pred_region
        _
      $region32: #{space_transformer_forward.6} parent=11 // pred_fallthru
        _
      // Predicated region
      $region33: #{space_transformer_forward.6} parent=11 // pred_check
        %p243 = pneg %p166
      $region34: #{space_transformer_forward.6} parent=11 // pred_check_branch
        %245 = sbr.rel (%p243) target = $region36
      $region35: #{space_transformer_forward.6} parent=11 // pred_region
        _
      $region36: #{space_transformer_forward.6} parent=11 // pred_fallthru
        _
      // Predicated region
      $region37: #{space_transformer_forward.6} parent=11 // pred_check
        %p246 = pneg %p187
      $region38: #{space_transformer_forward.6} parent=11 // pred_check_branch
        %248 = sbr.rel (%p246) target = $region40
      $region39: #{space_transformer_forward.6} parent=11 // pred_region
        _
      $region40: #{space_transformer_forward.6} parent=11 // pred_fallthru
        _
    $region12: #{space_transformer_forward.6} parent=5 // pred_fallthru
      _
    %p249 = scmp.lt.s32.totalorder %s14, 4
    // Predicated region
    $region41: #{space_transformer_forward.6} parent=5 // pred_check
      %p250 = pneg %p249
    $region42: #{space_transformer_forward.6} parent=5 // pred_check_branch
      %252 = sbr.rel (%p250) target = $region44
    $region43: #{space_transformer_forward.6} parent=5 // pred_region
      // Predicated region
      $region45: #{space_transformer_forward.6} parent=43 // pred_check
        %p253 = pneg %p34
      $region46: #{space_transformer_forward.6} parent=43 // pred_check_branch
        %255 = sbr.rel (%p253) target = $region48
      $region47: #{space_transformer_forward.6} parent=43 // pred_region
        %s256 = smul.u32 4, %s14
        %p257 = scmp.lt.s32.totalorder %s256, 15
        %s258 = scalar_select %p257, %s256, 15
        %s259 = smul.addr %s258, 2
        %s260 = smul.addr %s259, 8
        %s261 = scalar_lea.vmem %s0, %s260
        %s262 = smul.u32 4, %s14
      $region48: #{space_transformer_forward.6} parent=43 // pred_fallthru
        _
    $region44: #{space_transformer_forward.6} parent=5 // pred_fallthru
      _
    %p263 = scmp.le.s32.totalorder 1, %s14
    %p264 = scmp.lt.s32.totalorder %s14, 5
    %p265 = pnand %p263, %p264
    %p266 = pneg %p265
    // Predicated region
    $region49: #{space_transformer_forward.6} parent=5 // pred_check
      _
    $region50: #{space_transformer_forward.6} parent=5 // pred_check_branch
      %268 = sbr.rel (%p265) target = $region52
    $region51: #{space_transformer_forward.6} parent=5 // pred_region
      %s269 = ssub.s32 %s14, 1
      %s270 = smul.u32 4, %s19
      %p271 = scmp.lt.s32.totalorder %s270, 15
      %s272 = scalar_select %p271, %s270, 15
      %s273 = smul.addr %s272, 2
      %s274 = smul.addr %s273, 8
      %s275 = scalar_lea.vmem %s0, %s274
      %p276 = pneg %p40
      %p277 = pneg %p37
      %p278 = pneg %p61
      %p279 = pneg %p58
      %p280 = pneg %p82
      %p281 = pneg %p79
      %p282 = pneg %p103
      %p283 = pneg %p100
      %p284 = pneg %p124
      %p285 = pneg %p121
      %p286 = pneg %p145
      %p287 = pneg %p142
      %p288 = pneg %p166
      %p289 = pneg %p163
      %p290 = pneg %p187
      %p291 = pneg %p184
      %p292 = pneg %p213
      %p293 = pneg %p210
      %s294 = smul.u32 4, %s19
      %p295 = scmp.lt.s32.totalorder %s294, 15
      %s296 = scalar_select %p295, %s294, 15
      %s297 = smul.addr %s296, 2
      %s298 = smul.addr %s297, 8
      %s299 = scalar_lea.vmem %s8, %s298
      %s300 = smul.u32 4, %s19
      %p301 = scmp.lt.s32.totalorder %s300, 15
      %s302 = scalar_select %p301, %s300, 15
      %s303 = smul.addr %s302, 2
      %s304 = smul.addr %s303, 8
      %s305 = scalar_lea.vmem %s0, %s304
      %s306 = smul.u32 4, %s19
      %s307 = smul.u32 4, %s19
      %p308 = scmp.lt.s32.totalorder %s307, 15
      %s309 = scalar_select %p308, %s307, 15
      %s310 = smul.addr %s309, 2
      %s311 = smul.addr %s310, 8
      %s312 = scalar_lea.vmem %s8, %s311
      %s313 = smul.u32 4, %s19
      %v315 = vld [vmem:[%s305] sm:$0xff]
      %v316 = vld [vmem:[%s305 + $0x8] sm:$0xff]
      %v317 = vld [vmem:[%s305 + $0x10] sm:$0xff]
      %v318 = vld [vmem:[%s305 + $0x18] sm:$0xff]
      %v319 = vld [vmem:[%s305 + $0x20] sm:$0xff]
      %v320 = vld [vmem:[%s305 + $0x28] sm:$0xff]
      %v321 = vld [vmem:[%s305 + $0x30] sm:$0xff]
      %v322 = vld [vmem:[%s305 + $0x38] sm:$0xff]
      %vm323 = vcmask 261120
      %v324 = vsel %vm323, %v315, 0.0
      %325 = vadd.xlane.f32.xlu0 %v324
      %v326 = vpop.xlane.xlu0 %325
      %v327 = vsel %vm323, %v316, 0.0
      %328 = vadd.xlane.f32.xlu0 %v327
      %v329 = vpop.xlane.xlu0 %328
      %v330 = vsel %vm323, %v317, 0.0
      %331 = vadd.xlane.f32.xlu0 %v330
      %v332 = vpop.xlane.xlu0 %331
      %v333 = vsel %vm323, %v318, 0.0
      %334 = vadd.xlane.f32.xlu0 %v333
      %v335 = vpop.xlane.xlu0 %334
      %v336 = vsel %vm323, %v319, 0.0
      %337 = vadd.xlane.f32.xlu0 %v336
      %v338 = vpop.xlane.xlu0 %337
      %v339 = vsel %vm323, %v320, 0.0
      %340 = vadd.xlane.f32.xlu0 %v339
      %v341 = vpop.xlane.xlu0 %340
      %v342 = vsel %vm323, %v321, 0.0
      %343 = vadd.xlane.f32.xlu0 %v342
      %v344 = vpop.xlane.xlu0 %343
      %v345 = vsel %vm323, %v322, 0.0
      %346 = vadd.xlane.f32.xlu0 %v345
      %v347 = vpop.xlane.xlu0 %346
      %v348 = vrcp.pop 32.0
      %v349 = vmul.f32 %v326, %v348
      %v350 = vmul.f32 %v329, %v348
      %v351 = vmul.f32 %v332, %v348
      %v352 = vmul.f32 %v335, %v348
      %v353 = vmul.f32 %v338, %v348
      %v354 = vmul.f32 %v341, %v348
      %v355 = vmul.f32 %v344, %v348
      %v356 = vmul.f32 %v347, %v348
      %v357 = vsub.f32 %v315, %v349
      %v358 = vsub.f32 %v316, %v350
      %v359 = vsub.f32 %v317, %v351
      %v360 = vsub.f32 %v318, %v352
      %v361 = vsub.f32 %v319, %v353
      %v362 = vsub.f32 %v320, %v354
      %v363 = vsub.f32 %v321, %v355
      %v364 = vsub.f32 %v322, %v356
      %v365 = vmul.f32 %v357, %v357
      %v366 = vmul.f32 %v358, %v358
      %v367 = vmul.f32 %v359, %v359
      %v368 = vmul.f32 %v360, %v360
      %v369 = vmul.f32 %v361, %v361
      %v370 = vmul.f32 %v362, %v362
      %v371 = vmul.f32 %v363, %v363
      %v372 = vmul.f32 %v364, %v364
      %v373 = vsel %vm323, %v365, 0.0
      %374 = vadd.xlane.f32.xlu0 %v373
      %v375 = vpop.xlane.xlu0 %374
      %v376 = vsel %vm323, %v366, 0.0
      %377 = vadd.xlane.f32.xlu0 %v376
      %v378 = vpop.xlane.xlu0 %377
      %v379 = vsel %vm323, %v367, 0.0
      %380 = vadd.xlane.f32.xlu0 %v379
      %v381 = vpop.xlane.xlu0 %380
      %v382 = vsel %vm323, %v368, 0.0
      %383 = vadd.xlane.f32.xlu0 %v382
      %v384 = vpop.xlane.xlu0 %383
      %v385 = vsel %vm323, %v369, 0.0
      %386 = vadd.xlane.f32.xlu0 %v385
      %v387 = vpop.xlane.xlu0 %386
      %v388 = vsel %vm323, %v370, 0.0
      %389 = vadd.xlane.f32.xlu0 %v388
      %v390 = vpop.xlane.xlu0 %389
      %v391 = vsel %vm323, %v371, 0.0
      %392 = vadd.xlane.f32.xlu0 %v391
      %v393 = vpop.xlane.xlu0 %392
      %v394 = vsel %vm323, %v372, 0.0
      %395 = vadd.xlane.f32.xlu0 %v394
      %v396 = vpop.xlane.xlu0 %395
      %v397 = vmul.f32 %v375, %v348
      %v398 = vmul.f32 %v378, %v348
      %v399 = vmul.f32 %v381, %v348
      %v400 = vmul.f32 %v384, %v348
      %v401 = vmul.f32 %v387, %v348
      %v402 = vmul.f32 %v390, %v348
      %v403 = vmul.f32 %v393, %v348
      %v404 = vmul.f32 %v396, %v348
      %v405 = vadd.f32 %v397, 1e-05
      %v406 = vadd.f32 %v398, 1e-05
      %v407 = vadd.f32 %v399, 1e-05
      %v408 = vadd.f32 %v400, 1e-05
      %v409 = vadd.f32 %v401, 1e-05
      %v410 = vadd.f32 %v402, 1e-05
      %v411 = vadd.f32 %v403, 1e-05
      %v412 = vadd.f32 %v404, 1e-05
      %v413 = vrsqrt.pop %v405
      %v414 = vrsqrt.pop %v406
      %v415 = vrsqrt.pop %v407
      %v416 = vrsqrt.pop %v408
      %v417 = vrsqrt.pop %v409
      %v418 = vrsqrt.pop %v410
      %v419 = vrsqrt.pop %v411
      %v420 = vrsqrt.pop %v412
      %v421 = vmul.f32 %v357, %v413
      %v422 = vmul.f32 %v358, %v414
      %v423 = vmul.f32 %v359, %v415
      %v424 = vmul.f32 %v360, %v416
      %v425 = vmul.f32 %v361, %v417
      %v426 = vmul.f32 %v362, %v418
      %v427 = vmul.f32 %v363, %v419
      %v428 = vmul.f32 %v364, %v420
      %v429 = vld [vmem:[%s2] sm:$0x1]
      %v431 = vlaneseq
      %v432 = vshrl.u32 %v431, 7
      %v433 = vsub.s32 0, %v432
      %v434 = vrot.slane %v429, %v433
      %v436 = vmul.f32 %v421, %v434
      %v437 = vmul.f32 %v422, %v434
      %v438 = vmul.f32 %v423, %v434
      %v439 = vmul.f32 %v424, %v434
      %v440 = vmul.f32 %v425, %v434
      %v441 = vmul.f32 %v426, %v434
      %v442 = vmul.f32 %v427, %v434
      %v443 = vmul.f32 %v428, %v434
      %v444 = vld [vmem:[%s3] sm:$0x1]
      %v446 = vlaneseq
      %v447 = vshrl.u32 %v446, 7
      %v448 = vsub.s32 0, %v447
      %v449 = vrot.slane %v444, %v448
      %v451 = vadd.f32 %v436, %v449
      %v452 = vadd.f32 %v437, %v449
      %v453 = vadd.f32 %v438, %v449
      %v454 = vadd.f32 %v439, %v449
      %v455 = vadd.f32 %v440, %v449
      %v456 = vadd.f32 %v441, %v449
      %v457 = vadd.f32 %v442, %v449
      %v458 = vadd.f32 %v443, %v449
      %v459 = vpack.c.bf16 %v452, %v451
      %v460 = vpack.c.bf16 %v454, %v453
      %v461 = vpack.c.bf16 %v456, %v455
      %v462 = vpack.c.bf16 %v458, %v457
      %v463 = vld [vmem:[%s4] sm:$0xf]
      %v464 = vld [vmem:[%s4 + $0x4] sm:$0xf]
      %v465 = vld [vmem:[%s4 + $0x8] sm:$0xf]
      %v466 = vld [vmem:[%s4 + $0xc] sm:$0xf]
      %v467 = vld [vmem:[%s5] sm:$0x1]
      %v469 = vlaneseq
      %v470 = vshrl.u32 %v469, 7
      %v471 = vsub.s32 0, %v470
      %v472 = vrot.slane %v467, %v471
      %v478 = vunpack.c.l.b16 %v463
      %v479 = vunpack.c.l.b16 %v464
      %v480 = vunpack.c.l.b16 %v465
      %v481 = vunpack.c.l.b16 %v466
      %v482 = vpack.c.b16 %v479, %v478
      %v483 = vpack.c.b16 %v481, %v480
      %v487 = vsel %vm323, %v459, 0
      %v490 = vsel %vm323, %v460, 0
      %v493 = vsel %vm323, %v461, 0
      %v496 = vsel %vm323, %v462, 0
      %498 = vmatprep.subr.bf16.mxu0 0
      %499 = vmatpush1.bf16.msra.mxu0 %v482
      %500 = vmatprep.subr.bf16.mxu0 0
      %501 = vmatpush1.bf16.msra.mxu0 %v483
      %502 = vmatprep.subr.bf16.mxu0 0
      %503 = vmatpush1.bf16.msra.mxu0 0
      %504 = vmatprep.subr.bf16.mxu0 0
      %505 = vmatpush1.bf16.msra.mxu0 0
      %506 = vmatprep.subr.bf16.mxu0 0
      %507 = vmatpush1.bf16.msra.mxu0 0
      %508 = vmatprep.subr.bf16.mxu0 0
      %509 = vmatpush1.bf16.msra.mxu0 0
      %510 = vmatprep.subr.bf16.mxu0 0
      %511 = vmatpush1.bf16.msra.mxu0 0
      %512 = vmatprep.subr.bf16.mxu0 0
      %513 = vmatpush1.bf16.msra.mxu0 0
      %514 = vmatprep.subr.bf16.mxu0 0
      %515 = vmatpush1.bf16.msra.mxu0 0
      %516 = vmatprep.subr.bf16.mxu0 0
      %517 = vmatpush1.bf16.msra.mxu0 0
      %518 = vmatprep.subr.bf16.mxu0 0
      %519 = vmatpush1.bf16.msra.mxu0 0
      %520 = vmatprep.subr.bf16.mxu0 0
      %521 = vmatpush1.bf16.msra.mxu0 0
      %522 = vmatprep.subr.bf16.mxu0 0
      %523 = vmatpush1.bf16.msra.mxu0 0
      %524 = vmatprep.subr.bf16.mxu0 0
      %525 = vmatpush1.bf16.msra.mxu0 0
      %526 = vmatprep.subr.bf16.mxu0 0
      %527 = vmatpush1.bf16.msra.mxu0 0
      %528 = vmatprep.subr.bf16.mxu0 0
      %529 = vmatpush1.bf16.msra.mxu0 0
      %530 = vmatprep.mubr.bf16.mxu0 0
      %531 = vmatmul.mubr.bf16.gmra.mrb[0].mxu0 %v487
      %v532 = vpop.f32.mrb[0].mxu0
      %v533 = vadd.f32 %v472, %v532
      %v534 = vpop.f32.mrb[0].mxu0
      %v535 = vpop.f32.mrb[0].mxu0
      %v536 = vadd.f32 %v472, %v535
      %v537 = vpop.f32.mrb[0].mxu0
      %538 = vmatprep.mubr.bf16.mxu0 0
      %539 = vmatmul.mubr.bf16.gmra.mrb[0].mxu0 %v490
      %v540 = vpop.f32.mrb[0].mxu0
      %v541 = vadd.f32 %v472, %v540
      %v542 = vpop.f32.mrb[0].mxu0
      %v543 = vpop.f32.mrb[0].mxu0
      %v544 = vadd.f32 %v472, %v543
      %v545 = vpop.f32.mrb[0].mxu0
      %546 = vmatprep.mubr.bf16.mxu0 0
      %547 = vmatmul.mubr.bf16.gmra.mrb[0].mxu0 %v493
      %v548 = vpop.f32.mrb[0].mxu0
      %v549 = vadd.f32 %v472, %v548
      %v550 = vpop.f32.mrb[0].mxu0
      %v551 = vpop.f32.mrb[0].mxu0
      %v552 = vadd.f32 %v472, %v551
      %v553 = vpop.f32.mrb[0].mxu0
      %554 = vmatprep.mubr.bf16.mxu0 0
      %555 = vmatmul.mubr.bf16.gmra.mrb[0].mxu0 %v496
      %v556 = vpop.f32.mrb[0].mxu0
      %v557 = vadd.f32 %v472, %v556
      %v558 = vpop.f32.mrb[0].mxu0
      %v559 = vpop.f32.mrb[0].mxu0
      %v560 = vadd.f32 %v472, %v559
      %v561 = vpop.f32.mrb[0].mxu0
      %562 = vdwg.mxu0
      %v563 = vpack.c.bf16 %v536, %v533
      %v564 = vpack.c.bf16 %v544, %v541
      %v565 = vpack.c.bf16 %v552, %v549
      %v566 = vpack.c.bf16 %v560, %v557
      %vm567 = vcmask 785408
      %568 = vst.msk [vmem:[#allocation2] sm:$0xff] %vm567, %v563
      %569 = vst.msk [vmem:[#allocation2 + $0x8] sm:$0xff] %vm567, %v564
      %570 = vst.msk [vmem:[#allocation2 + $0x10] sm:$0xff] %vm567, %v565
      %571 = vst.msk [vmem:[#allocation2 + $0x18] sm:$0xff] %vm567, %v566
      %v572 = vld [vmem:[%s1] sm:$0xff]
      %v573 = vld [vmem:[%s1 + $0x8] sm:$0xff]
      %v574 = vld [vmem:[%s1 + $0x10] sm:$0xff]
      %v575 = vld [vmem:[%s1 + $0x18] sm:$0xff]
      %v576 = vld [vmem:[%s1 + $0x20] sm:$0xff]
      %v577 = vld [vmem:[%s1 + $0x28] sm:$0xff]
      %v578 = vld [vmem:[%s1 + $0x30] sm:$0xff]
      %v579 = vld [vmem:[%s1 + $0x38] sm:$0xff]
      %v580 = vld [vmem:[%s1 + $0x40] sm:$0xff]
      %v581 = vld [vmem:[%s1 + $0x48] sm:$0xff]
      %v582 = vld [vmem:[%s1 + $0x50] sm:$0xff]
      %v583 = vld [vmem:[%s1 + $0x58] sm:$0xff]
      %v584 = vld [vmem:[%s1 + $0x60] sm:$0xff]
      %v585 = vld [vmem:[%s1 + $0x68] sm:$0xff]
      %v586 = vld [vmem:[%s1 + $0x70] sm:$0xff]
      %v587 = vld [vmem:[%s1 + $0x78] sm:$0xff]
      %v588 = vld [vmem:[%s1 + $0x80] sm:$0xff]
      %v589 = vld [vmem:[%s1 + $0x88] sm:$0xff]
      %v590 = vld [vmem:[%s1 + $0x90] sm:$0xff]
      %v591 = vld [vmem:[%s1 + $0x98] sm:$0xff]
      %v592 = vld [vmem:[%s1 + $0xa0] sm:$0xff]
      %v593 = vld [vmem:[%s1 + $0xa8] sm:$0xff]
      %v594 = vld [vmem:[%s1 + $0xb0] sm:$0xff]
      %v595 = vld [vmem:[%s1 + $0xb8] sm:$0xff]
      %v596 = vld [vmem:[%s1 + $0xc0] sm:$0xff]
      %v597 = vld [vmem:[%s1 + $0xc8] sm:$0xff]
      %v598 = vld [vmem:[%s1 + $0xd0] sm:$0xff]
      %v599 = vld [vmem:[%s1 + $0xd8] sm:$0xff]
      %v600 = vld [vmem:[%s1 + $0xe0] sm:$0xff]
      %v601 = vld [vmem:[%s1 + $0xe8] sm:$0xff]
      %v602 = vld [vmem:[%s1 + $0xf0] sm:$0xff]
      %v603 = vld [vmem:[%s1 + $0xf8] sm:$0xff]
      %v604 = vld [vmem:[#allocation2] sm:$0xff]
      %v605 = vld [vmem:[#allocation2 + $0x8] sm:$0xff]
      %v606 = vld [vmem:[#allocation2 + $0x10] sm:$0xff]
      %v607 = vld [vmem:[#allocation2 + $0x18] sm:$0xff]
      %609 = vrot.lane.b32.xlu0 %v604, 96
      %v610 = vpop.permute.xlu0 %609
      %vm611 = vcmask 64512
      %v613 = vsel %vm611, %v604, 0
      %v616 = vsel %vm611, %v610, 0
      %618 = vmatprep.subr.bf16.mxu0 0
      %619 = vmatpush1.bf16.xpose.msra.mxu0 %v616
      %620 = vmatprep.subr.bf16.mxu0 0
      %621 = vmatpush1.bf16.xpose.msra.mxu0 0
      %622 = vmatprep.subr.bf16.mxu0 0
      %623 = vmatpush1.bf16.xpose.msra.mxu0 0
      %624 = vmatprep.subr.bf16.mxu0 0
      %625 = vmatpush1.bf16.xpose.msra.mxu0 0
      %626 = vmatprep.subr.bf16.mxu0 0
      %627 = vmatpush1.bf16.xpose.msra.mxu0 0
      %628 = vmatprep.subr.bf16.mxu0 0
      %629 = vmatpush1.bf16.xpose.msra.mxu0 0
      %630 = vmatprep.subr.bf16.mxu0 0
      %631 = vmatpush1.bf16.xpose.msra.mxu0 0
      %632 = vmatprep.subr.bf16.mxu0 0
      %633 = vmatpush1.bf16.xpose.msra.mxu0 0
      %634 = vmatprep.subr.bf16.mxu0 0
      %635 = vmatpush1.bf16.xpose.msra.mxu0 0
      %636 = vmatprep.subr.bf16.mxu0 0
      %637 = vmatpush1.bf16.xpose.msra.mxu0 0
      %638 = vmatprep.subr.bf16.mxu0 0
      %639 = vmatpush1.bf16.xpose.msra.mxu0 0
      %640 = vmatprep.subr.bf16.mxu0 0
      %641 = vmatpush1.bf16.xpose.msra.mxu0 0
      %642 = vmatprep.subr.bf16.mxu0 0
      %643 = vmatpush1.bf16.xpose.msra.mxu0 0
      %644 = vmatprep.subr.bf16.mxu0 0
      %645 = vmatpush1.bf16.xpose.msra.mxu0 0
      %646 = vmatprep.subr.bf16.mxu0 0
      %647 = vmatpush1.bf16.xpose.msra.mxu0 0
      %648 = vmatprep.subr.bf16.mxu0 0
      %649 = vmatpush1.bf16.xpose.msra.mxu0 0
      %650 = vmatprep.mubr.bf16.mxu0 0
      %651 = vmatmul.mubr.bf16.gmra.mrb[0].mxu0 %v613
      %v652 = vpop.f32.mrb[0].mxu0
      %v653 = vadd.f32 %v572, %v652
      %v654 = vpop.f32.mrb[0].mxu0
      %v655 = vpop.f32.mrb[0].mxu0
      %v656 = vadd.f32 %v573, %v655
      %v657 = vpop.f32.mrb[0].mxu0
      %658 = vdwg.mxu0
      %660 = vrot.lane.b32.xlu0 %v605, 96
      %v661 = vpop.permute.xlu0 %660
      %v663 = vsel %vm611, %v605, 0
      %v666 = vsel %vm611, %v661, 0
      %668 = vmatprep.subr.bf16.mxu0 0
      %669 = vmatpush1.bf16.xpose.msra.mxu0 %v666
      %670 = vmatprep.subr.bf16.mxu0 0
      %671 = vmatpush1.bf16.xpose.msra.mxu0 0
      %672 = vmatprep.subr.bf16.mxu0 0
      %673 = vmatpush1.bf16.xpose.msra.mxu0 0
      %674 = vmatprep.subr.bf16.mxu0 0
      %675 = vmatpush1.bf16.xpose.msra.mxu0 0
      %676 = vmatprep.subr.bf16.mxu0 0
      %677 = vmatpush1.bf16.xpose.msra.mxu0 0
      %678 = vmatprep.subr.bf16.mxu0 0
      %679 = vmatpush1.bf16.xpose.msra.mxu0 0
      %680 = vmatprep.subr.bf16.mxu0 0
      %681 = vmatpush1.bf16.xpose.msra.mxu0 0
      %682 = vmatprep.subr.bf16.mxu0 0
      %683 = vmatpush1.bf16.xpose.msra.mxu0 0
      %684 = vmatprep.subr.bf16.mxu0 0
      %685 = vmatpush1.bf16.xpose.msra.mxu0 0
      %686 = vmatprep.subr.bf16.mxu0 0
      %687 = vmatpush1.bf16.xpose.msra.mxu0 0
      %688 = vmatprep.subr.bf16.mxu0 0
      %689 = vmatpush1.bf16.xpose.msra.mxu0 0
      %690 = vmatprep.subr.bf16.mxu0 0
      %691 = vmatpush1.bf16.xpose.msra.mxu0 0
      %692 = vmatprep.subr.bf16.mxu0 0
      %693 = vmatpush1.bf16.xpose.msra.mxu0 0
      %694 = vmatprep.subr.bf16.mxu0 0
      %695 = vmatpush1.bf16.xpose.msra.mxu0 0
      %696 = vmatprep.subr.bf16.mxu0 0
      %697 = vmatpush1.bf16.xpose.msra.mxu0 0
      %698 = vmatprep.subr.bf16.mxu0 0
      %699 = vmatpush1.bf16.xpose.msra.mxu0 0
      %700 = vmatprep.mubr.bf16.mxu0 0
      %701 = vmatmul.mubr.bf16.gmra.mrb[0].mxu0 %v663
      %v702 = vpop.f32.mrb[0].mxu0
      %v703 = vadd.f32 %v580, %v702
      %v704 = vpop.f32.mrb[0].mxu0
      %v705 = vpop.f32.mrb[0].mxu0
      %v706 = vadd.f32 %v581, %v705
      %v707 = vpop.f32.mrb[0].mxu0
      %708 = vdwg.mxu0
      %710 = vrot.lane.b32.xlu0 %v606, 96
      %v711 = vpop.permute.xlu0 %710
      %v713 = vsel %vm611, %v606, 0
      %v716 = vsel %vm611, %v711, 0
      %718 = vmatprep.subr.bf16.mxu0 0
      %719 = vmatpush1.bf16.xpose.msra.mxu0 %v716
      %720 = vmatprep.subr.bf16.mxu0 0
      %721 = vmatpush1.bf16.xpose.msra.mxu0 0
      %722 = vmatprep.subr.bf16.mxu0 0
      %723 = vmatpush1.bf16.xpose.msra.mxu0 0
      %724 = vmatprep.subr.bf16.mxu0 0
      %725 = vmatpush1.bf16.xpose.msra.mxu0 0
      %726 = vmatprep.subr.bf16.mxu0 0
      %727 = vmatpush1.bf16.xpose.msra.mxu0 0
      %728 = vmatprep.subr.bf16.mxu0 0
      %729 = vmatpush1.bf16.xpose.msra.mxu0 0
      %730 = vmatprep.subr.bf16.mxu0 0
      %731 = vmatpush1.bf16.xpose.msra.mxu0 0
      %732 = vmatprep.subr.bf16.mxu0 0
      %733 = vmatpush1.bf16.xpose.msra.mxu0 0
      %734 = vmatprep.subr.bf16.mxu0 0
      %735 = vmatpush1.bf16.xpose.msra.mxu0 0
      %736 = vmatprep.subr.bf16.mxu0 0
      %737 = vmatpush1.bf16.xpose.msra.mxu0 0
      %738 = vmatprep.subr.bf16.mxu0 0
      %739 = vmatpush1.bf16.xpose.msra.mxu0 0
      %740 = vmatprep.subr.bf16.mxu0 0
      %741 = vmatpush1.bf16.xpose.msra.mxu0 0
      %742 = vmatprep.subr.bf16.mxu0 0
      %743 = vmatpush1.bf16.xpose.msra.mxu0 0
      %744 = vmatprep.subr.bf16.mxu0 0
      %745 = vmatpush1.bf16.xpose.msra.mxu0 0
      %746 = vmatprep.subr.bf16.mxu0 0
      %747 = vmatpush1.bf16.xpose.msra.mxu0 0
      %748 = vmatprep.subr.bf16.mxu0 0
      %749 = vmatpush1.bf16.xpose.msra.mxu0 0
      %750 = vmatprep.mubr.bf16.mxu0 0
      %751 = vmatmul.mubr.bf16.gmra.mrb[0].mxu0 %v713
      %v752 = vpop.f32.mrb[0].mxu0
      %v753 = vadd.f32 %v588, %v752
      %v754 = vpop.f32.mrb[0].mxu0
      %v755 = vpop.f32.mrb[0].mxu0
      %v756 = vadd.f32 %v589, %v755
      %v757 = vpop.f32.mrb[0].mxu0
      %758 = vdwg.mxu0
      %760 = vrot.lane.b32.xlu0 %v607, 96
      %v761 = vpop.permute.xlu0 %760
      %v763 = vsel %vm611, %v607, 0
      %v766 = vsel %vm611, %v761, 0
      %768 = vmatprep.subr.bf16.mxu0 0
      %769 = vmatpush1.bf16.xpose.msra.mxu0 %v766
      %770 = vmatprep.subr.bf16.mxu0 0
      %771 = vmatpush1.bf16.xpose.msra.mxu0 0
      %772 = vmatprep.subr.bf16.mxu0 0
      %773 = vmatpush1.bf16.xpose.msra.mxu0 0
      %774 = vmatprep.subr.bf16.mxu0 0
      %775 = vmatpush1.bf16.xpose.msra.mxu0 0
      %776 = vmatprep.subr.bf16.mxu0 0
      %777 = vmatpush1.bf16.xpose.msra.mxu0 0
      %778 = vmatprep.subr.bf16.mxu0 0
      %779 = vmatpush1.bf16.xpose.msra.mxu0 0
      %780 = vmatprep.subr.bf16.mxu0 0
      %781 = vmatpush1.bf16.xpose.msra.mxu0 0
      %782 = vmatprep.subr.bf16.mxu0 0
      %783 = vmatpush1.bf16.xpose.msra.mxu0 0
      %784 = vmatprep.subr.bf16.mxu0 0
      %785 = vmatpush1.bf16.xpose.msra.mxu0 0
      %786 = vmatprep.subr.bf16.mxu0 0
      %787 = vmatpush1.bf16.xpose.msra.mxu0 0
      %788 = vmatprep.subr.bf16.mxu0 0
      %789 = vmatpush1.bf16.xpose.msra.mxu0 0
      %790 = vmatprep.subr.bf16.mxu0 0
      %791 = vmatpush1.bf16.xpose.msra.mxu0 0
      %792 = vmatprep.subr.bf16.mxu0 0
      %793 = vmatpush1.bf16.xpose.msra.mxu0 0
      %794 = vmatprep.subr.bf16.mxu0 0
      %795 = vmatpush1.bf16.xpose.msra.mxu0 0
      %796 = vmatprep.subr.bf16.mxu0 0
      %797 = vmatpush1.bf16.xpose.msra.mxu0 0
      %798 = vmatprep.subr.bf16.mxu0 0
      %799 = vmatpush1.bf16.xpose.msra.mxu0 0
      %800 = vmatprep.mubr.bf16.mxu0 0
      %801 = vmatmul.mubr.bf16.gmra.mrb[0].mxu0 %v763
      %v802 = vpop.f32.mrb[0].mxu0
      %v803 = vadd.f32 %v596, %v802
      %v804 = vpop.f32.mrb[0].mxu0
      %v805 = vpop.f32.mrb[0].mxu0
      %v806 = vadd.f32 %v597, %v805
      %v807 = vpop.f32.mrb[0].mxu0
      %808 = vdwg.mxu0
      %vm809 = vcmask 130048
      %v810 = vsel %vm809, %v653, -inf
      %811 = vmax.xlane.f32.xlu0 %v810
      %v812 = vpop.xlane.xlu0 %811
      %v813 = vsel %vm809, %v656, -inf
      %814 = vmax.xlane.f32.xlu0 %v813
      %v815 = vpop.xlane.xlu0 %814
      %v816 = vsel %vm809, %v703, -inf
      %817 = vmax.xlane.f32.xlu0 %v816
      %v818 = vpop.xlane.xlu0 %817
      %v819 = vsel %vm809, %v706, -inf
      %820 = vmax.xlane.f32.xlu0 %v819
      %v821 = vpop.xlane.xlu0 %820
      %v822 = vsel %vm809, %v753, -inf
      %823 = vmax.xlane.f32.xlu0 %v822
      %v824 = vpop.xlane.xlu0 %823
      %v825 = vsel %vm809, %v756, -inf
      %826 = vmax.xlane.f32.xlu0 %v825
      %v827 = vpop.xlane.xlu0 %826
      %v828 = vsel %vm809, %v803, -inf
      %829 = vmax.xlane.f32.xlu0 %v828
      %v830 = vpop.xlane.xlu0 %829
      %v831 = vsel %vm809, %v806, -inf
      %832 = vmax.xlane.f32.xlu0 %v831
      %v833 = vpop.xlane.xlu0 %832
      %v834 = vsub.f32 %v653, %v812
      %v835 = vsub.f32 %v656, %v815
      %v836 = vsub.f32 %v703, %v818
      %v837 = vsub.f32 %v706, %v821
      %v838 = vsub.f32 %v753, %v824
      %v839 = vsub.f32 %v756, %v827
      %v840 = vsub.f32 %v803, %v830
      %v841 = vsub.f32 %v806, %v833
      %v842 = vmul.f32 %v834, 1.442695
      %v843 = vpow.pop %v842
      %v844 = vmul.f32 %v835, 1.442695
      %v845 = vpow.pop %v844
      %v846 = vmul.f32 %v836, 1.442695
      %v847 = vpow.pop %v846
      %v848 = vmul.f32 %v837, 1.442695
      %v849 = vpow.pop %v848
      %v850 = vmul.f32 %v838, 1.442695
      %v851 = vpow.pop %v850
      %v852 = vmul.f32 %v839, 1.442695
      %v853 = vpow.pop %v852
      %v854 = vmul.f32 %v840, 1.442695
      %v855 = vpow.pop %v854
      %v856 = vmul.f32 %v841, 1.442695
      %v857 = vpow.pop %v856
      %v858 = vsel %vm809, %v843, 0.0
      %859 = vadd.xlane.f32.xlu0 %v858
      %v860 = vpop.xlane.xlu0 %859
      %v861 = vsel %vm809, %v845, 0.0
      %862 = vadd.xlane.f32.xlu0 %v861
      %v863 = vpop.xlane.xlu0 %862
      %v864 = vsel %vm809, %v847, 0.0
      %865 = vadd.xlane.f32.xlu0 %v864
      %v866 = vpop.xlane.xlu0 %865
      %v867 = vsel %vm809, %v849, 0.0
      %868 = vadd.xlane.f32.xlu0 %v867
      %v869 = vpop.xlane.xlu0 %868
      %v870 = vsel %vm809, %v851, 0.0
      %871 = vadd.xlane.f32.xlu0 %v870
      %v872 = vpop.xlane.xlu0 %871
      %v873 = vsel %vm809, %v853, 0.0
      %874 = vadd.xlane.f32.xlu0 %v873
      %v875 = vpop.xlane.xlu0 %874
      %v876 = vsel %vm809, %v855, 0.0
      %877 = vadd.xlane.f32.xlu0 %v876
      %v878 = vpop.xlane.xlu0 %877
      %v879 = vsel %vm809, %v857, 0.0
      %880 = vadd.xlane.f32.xlu0 %v879
      %v881 = vpop.xlane.xlu0 %880
      %v882 = vrcp.pop %v860
      %v883 = vrcp.pop %v863
      %v884 = vrcp.pop %v866
      %v885 = vrcp.pop %v869
      %v886 = vrcp.pop %v872
      %v887 = vrcp.pop %v875
      %v888 = vrcp.pop %v878
      %v889 = vrcp.pop %v881
      %v890 = vmul.f32 %v843, %v882
      %v891 = vmul.f32 %v845, %v883
      %v892 = vmul.f32 %v847, %v884
      %v893 = vmul.f32 %v849, %v885
      %v894 = vmul.f32 %v851, %v886
      %v895 = vmul.f32 %v853, %v887
      %v896 = vmul.f32 %v855, %v888
      %v897 = vmul.f32 %v857, %v889
      %v898 = vpack.c.bf16 %v891, %v890
      %v899 = vpack.c.bf16 %v893, %v892
      %v900 = vpack.c.bf16 %v895, %v894
      %v901 = vpack.c.bf16 %v897, %v896
      %902 = vrot.lane.b32.xlu0 %v604, 64
      %v903 = vpop.permute.xlu0 %902
      %v906 = vsel %vm809, %v898, 0
      %908 = vmatprep.subr.bf16.mxu0 0
      %909 = vmatpush1.bf16.msra.mxu0 %v903
      %910 = vmatprep.subr.bf16.mxu0 0
      %911 = vmatpush1.bf16.msra.mxu0 0
      %912 = vmatprep.subr.bf16.mxu0 0
      %913 = vmatpush1.bf16.msra.mxu0 0
      %914 = vmatprep.subr.bf16.mxu0 0
      %915 = vmatpush1.bf16.msra.mxu0 0
      %916 = vmatprep.subr.bf16.mxu0 0
      %917 = vmatpush1.bf16.msra.mxu0 0
      %918 = vmatprep.subr.bf16.mxu0 0
      %919 = vmatpush1.bf16.msra.mxu0 0
      %920 = vmatprep.subr.bf16.mxu0 0
      %921 = vmatpush1.bf16.msra.mxu0 0
      %922 = vmatprep.subr.bf16.mxu0 0
      %923 = vmatpush1.bf16.msra.mxu0 0
      %924 = vmatprep.subr.bf16.mxu0 0
      %925 = vmatpush1.bf16.msra.mxu0 0
      %926 = vmatprep.subr.bf16.mxu0 0
      %927 = vmatpush1.bf16.msra.mxu0 0
      %928 = vmatprep.subr.bf16.mxu0 0
      %929 = vmatpush1.bf16.msra.mxu0 0
      %930 = vmatprep.subr.bf16.mxu0 0
      %931 = vmatpush1.bf16.msra.mxu0 0
      %932 = vmatprep.subr.bf16.mxu0 0
      %933 = vmatpush1.bf16.msra.mxu0 0
      %934 = vmatprep.subr.bf16.mxu0 0
      %935 = vmatpush1.bf16.msra.mxu0 0
      %936 = vmatprep.subr.bf16.mxu0 0
      %937 = vmatpush1.bf16.msra.mxu0 0
      %938 = vmatprep.subr.bf16.mxu0 0
      %939 = vmatpush1.bf16.msra.mxu0 0
      %940 = vmatprep.mubr.bf16.mxu0 0
      %941 = vmatmul.mubr.bf16.gmra.mrb[0].mxu0 %v906
      %v942 = vpop.f32.mrb[0].mxu0
      %v943 = vadd.f32 0.0, %v942
      %v944 = vpop.f32.mrb[0].mxu0
      %v945 = vpop.f32.mrb[0].mxu0
      %v946 = vadd.f32 0.0, %v945
      %v947 = vpop.f32.mrb[0].mxu0
      %948 = vdwg.mxu0
      %949 = vrot.lane.b32.xlu0 %v605, 64
      %v950 = vpop.permute.xlu0 %949
      %v953 = vsel %vm809, %v899, 0
      %955 = vmatprep.subr.bf16.mxu0 0
      %956 = vmatpush1.bf16.msra.mxu0 %v950
      %957 = vmatprep.subr.bf16.mxu0 0
      %958 = vmatpush1.bf16.msra.mxu0 0
      %959 = vmatprep.subr.bf16.mxu0 0
      %960 = vmatpush1.bf16.msra.mxu0 0
      %961 = vmatprep.subr.bf16.mxu0 0
      %962 = vmatpush1.bf16.msra.mxu0 0
      %963 = vmatprep.subr.bf16.mxu0 0
      %964 = vmatpush1.bf16.msra.mxu0 0
      %965 = vmatprep.subr.bf16.mxu0 0
      %966 = vmatpush1.bf16.msra.mxu0 0
      %967 = vmatprep.subr.bf16.mxu0 0
      %968 = vmatpush1.bf16.msra.mxu0 0
      %969 = vmatprep.subr.bf16.mxu0 0
      %970 = vmatpush1.bf16.msra.mxu0 0
      %971 = vmatprep.subr.bf16.mxu0 0
      %972 = vmatpush1.bf16.msra.mxu0 0
      %973 = vmatprep.subr.bf16.mxu0 0
      %974 = vmatpush1.bf16.msra.mxu0 0
      %975 = vmatprep.subr.bf16.mxu0 0
      %976 = vmatpush1.bf16.msra.mxu0 0
      %977 = vmatprep.subr.bf16.mxu0 0
      %978 = vmatpush1.bf16.msra.mxu0 0
      %979 = vmatprep.subr.bf16.mxu0 0
      %980 = vmatpush1.bf16.msra.mxu0 0
      %981 = vmatprep.subr.bf16.mxu0 0
      %982 = vmatpush1.bf16.msra.mxu0 0
      %983 = vmatprep.subr.bf16.mxu0 0
      %984 = vmatpush1.bf16.msra.mxu0 0
      %985 = vmatprep.subr.bf16.mxu0 0
      %986 = vmatpush1.bf16.msra.mxu0 0
      %987 = vmatprep.mubr.bf16.mxu0 0
      %988 = vmatmul.mubr.bf16.gmra.mrb[0].mxu0 %v953
      %v989 = vpop.f32.mrb[0].mxu0
      %v990 = vadd.f32 0.0, %v989
      %v991 = vpop.f32.mrb[0].mxu0
      %v992 = vpop.f32.mrb[0].mxu0
      %v993 = vadd.f32 0.0, %v992
      %v994 = vpop.f32.mrb[0].mxu0
      %995 = vdwg.mxu0
      %996 = vrot.lane.b32.xlu0 %v606, 64
      %v997 = vpop.permute.xlu0 %996
      %v1000 = vsel %vm809, %v900, 0
      %1002 = vmatprep.subr.bf16.mxu0 0
      %1003 = vmatpush1.bf16.msra.mxu0 %v997
      %1004 = vmatprep.subr.bf16.mxu0 0
      %1005 = vmatpush1.bf16.msra.mxu0 0
      %1006 = vmatprep.subr.bf16.mxu0 0
      %1007 = vmatpush1.bf16.msra.mxu0 0
      %1008 = vmatprep.subr.bf16.mxu0 0
      %1009 = vmatpush1.bf16.msra.mxu0 0
      %1010 = vmatprep.subr.bf16.mxu0 0
      %1011 = vmatpush1.bf16.msra.mxu0 0
      %1012 = vmatprep.subr.bf16.mxu0 0
      %1013 = vmatpush1.bf16.msra.mxu0 0
      %1014 = vmatprep.subr.bf16.mxu0 0
      %1015 = vmatpush1.bf16.msra.mxu0 0
      %1016 = vmatprep.subr.bf16.mxu0 0
      %1017 = vmatpush1.bf16.msra.mxu0 0
      %1018 = vmatprep.subr.bf16.mxu0 0
      %1019 = vmatpush1.bf16.msra.mxu0 0
      %1020 = vmatprep.subr.bf16.mxu0 0
      %1021 = vmatpush1.bf16.msra.mxu0 0
      %1022 = vmatprep.subr.bf16.mxu0 0
      %1023 = vmatpush1.bf16.msra.mxu0 0
      %1024 = vmatprep.subr.bf16.mxu0 0
      %1025 = vmatpush1.bf16.msra.mxu0 0
      %1026 = vmatprep.subr.bf16.mxu0 0
      %1027 = vmatpush1.bf16.msra.mxu0 0
      %1028 = vmatprep.subr.bf16.mxu0 0
      %1029 = vmatpush1.bf16.msra.mxu0 0
      %1030 = vmatprep.subr.bf16.mxu0 0
      %1031 = vmatpush1.bf16.msra.mxu0 0
      %1032 = vmatprep.subr.bf16.mxu0 0
      %1033 = vmatpush1.bf16.msra.mxu0 0
      %1034 = vmatprep.mubr.bf16.mxu0 0
      %1035 = vmatmul.mubr.bf16.gmra.mrb[0].mxu0 %v1000
      %v1036 = vpop.f32.mrb[0].mxu0
      %v1037 = vadd.f32 0.0, %v1036
      %v1038 = vpop.f32.mrb[0].mxu0
      %v1039 = vpop.f32.mrb[0].mxu0
      %v1040 = vadd.f32 0.0, %v1039
      %v1041 = vpop.f32.mrb[0].mxu0
      %1042 = vdwg.mxu0
      %1043 = vrot.lane.b32.xlu0 %v607, 64
      %v1044 = vpop.permute.xlu0 %1043
      %v1047 = vsel %vm809, %v901, 0
      %1049 = vmatprep.subr.bf16.mxu0 0
      %1050 = vmatpush1.bf16.msra.mxu0 %v1044
      %1051 = vmatprep.subr.bf16.mxu0 0
      %1052 = vmatpush1.bf16.msra.mxu0 0
      %1053 = vmatprep.subr.bf16.mxu0 0
      %1054 = vmatpush1.bf16.msra.mxu0 0
      %1055 = vmatprep.subr.bf16.mxu0 0
      %1056 = vmatpush1.bf16.msra.mxu0 0
      %1057 = vmatprep.subr.bf16.mxu0 0
      %1058 = vmatpush1.bf16.msra.mxu0 0
      %1059 = vmatprep.subr.bf16.mxu0 0
      %1060 = vmatpush1.bf16.msra.mxu0 0
      %1061 = vmatprep.subr.bf16.mxu0 0
      %1062 = vmatpush1.bf16.msra.mxu0 0
      %1063 = vmatprep.subr.bf16.mxu0 0
      %1064 = vmatpush1.bf16.msra.mxu0 0
      %1065 = vmatprep.subr.bf16.mxu0 0
      %1066 = vmatpush1.bf16.msra.mxu0 0
      %1067 = vmatprep.subr.bf16.mxu0 0
      %1068 = vmatpush1.bf16.msra.mxu0 0
      %1069 = vmatprep.subr.bf16.mxu0 0
      %1070 = vmatpush1.bf16.msra.mxu0 0
      %1071 = vmatprep.subr.bf16.mxu0 0
      %1072 = vmatpush1.bf16.msra.mxu0 0
      %1073 = vmatprep.subr.bf16.mxu0 0
      %1074 = vmatpush1.bf16.msra.mxu0 0
      %1075 = vmatprep.subr.bf16.mxu0 0
      %1076 = vmatpush1.bf16.msra.mxu0 0
      %1077 = vmatprep.subr.bf16.mxu0 0
      %1078 = vmatpush1.bf16.msra.mxu0 0
      %1079 = vmatprep.subr.bf16.mxu0 0
      %1080 = vmatpush1.bf16.msra.mxu0 0
      %1081 = vmatprep.mubr.bf16.mxu0 0
      %1082 = vmatmul.mubr.bf16.gmra.mrb[0].mxu0 %v1047
      %v1083 = vpop.f32.mrb[0].mxu0
      %v1084 = vadd.f32 0.0, %v1083
      %v1085 = vpop.f32.mrb[0].mxu0
      %v1086 = vpop.f32.mrb[0].mxu0
      %v1087 = vadd.f32 0.0, %v1086
      %v1088 = vpop.f32.mrb[0].mxu0
      %1089 = vdwg.mxu0
      %v1090 = vld [vmem:[#allocation2] sm:$0xff]
      %v1091 = vld [vmem:[#allocation2 + $0x8] sm:$0xff]
      %v1092 = vld [vmem:[#allocation2 + $0x10] sm:$0xff]
      %v1093 = vld [vmem:[#allocation2 + $0x18] sm:$0xff]
      %1095 = vrot.lane.b32.xlu0 %v1090, 120
      %v1096 = vpop.permute.xlu0 %1095
      %1097 = vrot.lane.b32.xlu0 %v1090, 88
      %v1098 = vpop.permute.xlu0 %1097
      %v1100 = vsel %vm611, %v1096, 0
      %v1103 = vsel %vm611, %v1098, 0
      %1105 = vmatprep.subr.bf16.mxu0 0
      %1106 = vmatpush1.bf16.xpose.msra.mxu0 %v1103
      %1107 = vmatprep.subr.bf16.mxu0 0
      %1108 = vmatpush1.bf16.xpose.msra.mxu0 0
      %1109 = vmatprep.subr.bf16.mxu0 0
      %1110 = vmatpush1.bf16.xpose.msra.mxu0 0
      %1111 = vmatprep.subr.bf16.mxu0 0
      %1112 = vmatpush1.bf16.xpose.msra.mxu0 0
      %1113 = vmatprep.subr.bf16.mxu0 0
      %1114 = vmatpush1.bf16.xpose.msra.mxu0 0
      %1115 = vmatprep.subr.bf16.mxu0 0
      %1116 = vmatpush1.bf16.xpose.msra.mxu0 0
      %1117 = vmatprep.subr.bf16.mxu0 0
      %1118 = vmatpush1.bf16.xpose.msra.mxu0 0
      %1119 = vmatprep.subr.bf16.mxu0 0
      %1120 = vmatpush1.bf16.xpose.msra.mxu0 0
      %1121 = vmatprep.subr.bf16.mxu0 0
      %1122 = vmatpush1.bf16.xpose.msra.mxu0 0
      %1123 = vmatprep.subr.bf16.mxu0 0
      %1124 = vmatpush1.bf16.xpose.msra.mxu0 0
      %1125 = vmatprep.subr.bf16.mxu0 0
      %1126 = vmatpush1.bf16.xpose.msra.mxu0 0
      %1127 = vmatprep.subr.bf16.mxu0 0
      %1128 = vmatpush1.bf16.xpose.msra.mxu0 0
      %1129 = vmatprep.subr.bf16.mxu0 0
      %1130 = vmatpush1.bf16.xpose.msra.mxu0 0
      %1131 = vmatprep.subr.bf16.mxu0 0
      %1132 = vmatpush1.bf16.xpose.msra.mxu0 0
      %1133 = vmatprep.subr.bf16.mxu0 0
      %1134 = vmatpush1.bf16.xpose.msra.mxu0 0
      %1135 = vmatprep.subr.bf16.mxu0 0
      %1136 = vmatpush1.bf16.xpose.msra.mxu0 0
      %1137 = vmatprep.mubr.bf16.mxu0 0
      %1138 = vmatmul.mubr.bf16.gmra.mrb[0].mxu0 %v1100
      %v1139 = vpop.f32.mrb[0].mxu0
      %v1140 = vadd.f32 %v574, %v1139
      %v1141 = vpop.f32.mrb[0].mxu0
      %v1142 = vpop.f32.mrb[0].mxu0
      %v1143 = vadd.f32 %v575, %v1142
      %v1144 = vpop.f32.mrb[0].mxu0
      %1145 = vdwg.mxu0
      %1147 = vrot.lane.b32.xlu0 %v1091, 120
      %v1148 = vpop.permute.xlu0 %1147
      %1149 = vrot.lane.b32.xlu0 %v1091, 88
      %v1150 = vpop.permute.xlu0 %1149
      %v1152 = vsel %vm611, %v1148, 0
      %v1155 = vsel %vm611, %v1150, 0
      %1157 = vmatprep.subr.bf16.mxu0 0
      %1158 = vmatpush1.bf16.xpose.msra.mxu0 %v1155
      %1159 = vmatprep.subr.bf16.mxu0 0
      %1160 = vmatpush1.bf16.xpose.msra.mxu0 0
      %1161 = vmatprep.subr.bf16.mxu0 0
      %1162 = vmatpush1.bf16.xpose.msra.mxu0 0
      %1163 = vmatprep.subr.bf16.mxu0 0
      %1164 = vmatpush1.bf16.xpose.msra.mxu0 0
      %1165 = vmatprep.subr.bf16.mxu0 0
      %1166 = vmatpush1.bf16.xpose.msra.mxu0 0
      %1167 = vmatprep.subr.bf16.mxu0 0
      %1168 = vmatpush1.bf16.xpose.msra.mxu0 0
      %1169 = vmatprep.subr.bf16.mxu0 0
      %1170 = vmatpush1.bf16.xpose.msra.mxu0 0
      %1171 = vmatprep.subr.bf16.mxu0 0
      %1172 = vmatpush1.bf16.xpose.msra.mxu0 0
      %1173 = vmatprep.subr.bf16.mxu0 0
      %1174 = vmatpush1.bf16.xpose.msra.mxu0 0
      %1175 = vmatprep.subr.bf16.mxu0 0
      %1176 = vmatpush1.bf16.xpose.msra.mxu0 0
      %1177 = vmatprep.subr.bf16.mxu0 0
      %1178 = vmatpush1.bf16.xpose.msra.mxu0 0
      %1179 = vmatprep.subr.bf16.mxu0 0
      %1180 = vmatpush1.bf16.xpose.msra.mxu0 0
      %1181 = vmatprep.subr.bf16.mxu0 0
      %1182 = vmatpush1.bf16.xpose.msra.mxu0 0
      %1183 = vmatprep.subr.bf16.mxu0 0
      %1184 = vmatpush1.bf16.xpose.msra.mxu0 0
      %1185 = vmatprep.subr.bf16.mxu0 0
      %1186 = vmatpush1.bf16.xpose.msra.mxu0 0
      %1187 = vmatprep.subr.bf16.mxu0 0
      %1188 = vmatpush1.bf16.xpose.msra.mxu0 0
      %1189 = vmatprep.mubr.bf16.mxu0 0
      %1190 = vmatmul.mubr.bf16.gmra.mrb[0].mxu0 %v1152
      %v1191 = vpop.f32.mrb[0].mxu0
      %v1192 = vadd.f32 %v582, %v1191
      %v1193 = vpop.f32.mrb[0].mxu0
      %v1194 = vpop.f32.mrb[0].mxu0
      %v1195 = vadd.f32 %v583, %v1194
      %v1196 = vpop.f32.mrb[0].mxu0
      %1197 = vdwg.mxu0
      %1199 = vrot.lane.b32.xlu0 %v1092, 120
      %v1200 = vpop.permute.xlu0 %1199
      %1201 = vrot.lane.b32.xlu0 %v1092, 88
      %v1202 = vpop.permute.xlu0 %1201
      %v1204 = vsel %vm611, %v1200, 0
      %v1207 = vsel %vm611, %v1202, 0
      %1209 = vmatprep.subr.bf16.mxu0 0
      %1210 = vmatpush1.bf16.xpose.msra.mxu0 %v1207
      %1211 = vmatprep.subr.bf16.mxu0 0
      %1212 = vmatpush1.bf16.xpose.msra.mxu0 0
      %1213 = vmatprep.subr.bf16.mxu0 0
      %1214 = vmatpush1.bf16.xpose.msra.mxu0 0
      %1215 = vmatprep.subr.bf16.mxu0 0
      %1216 = vmatpush1.bf16.xpose.msra.mxu0 0
      %1217 = vmatprep.subr.bf16.mxu0 0
      %1218 = vmatpush1.bf16.xpose.msra.mxu0 0
      %1219 = vmatprep.subr.bf16.mxu0 0
      %1220 = vmatpush1.bf16.xpose.msra.mxu0 0
      %1221 = vmatprep.subr.bf16.mxu0 0
      %1222 = vmatpush1.bf16.xpose.msra.mxu0 0
      %1223 = vmatprep.subr.bf16.mxu0 0
      %1224 = vmatpush1.bf16.xpose.msra.mxu0 0
      %1225 = vmatprep.subr.bf16.mxu0 0
      %1226 = vmatpush1.bf16.xpose.msra.mxu0 0
      %1227 = vmatprep.subr.bf16.mxu0 0
      %1228 = vmatpush1.bf16.xpose.msra.mxu0 0
      %1229 = vmatprep.subr.bf16.mxu0 0
      %1230 = vmatpush1.bf16.xpose.msra.mxu0 0
      %1231 = vmatprep.subr.bf16.mxu0 0
      %1232 = vmatpush1.bf16.xpose.msra.mxu0 0
      %1233 = vmatprep.subr.bf16.mxu0 0
      %1234 = vmatpush1.bf16.xpose.msra.mxu0 0
      %1235 = vmatprep.subr.bf16.mxu0 0
      %1236 = vmatpush1.bf16.xpose.msra.mxu0 0
      %1237 = vmatprep.subr.bf16.mxu0 0
      %1238 = vmatpush1.bf16.xpose.msra.mxu0 0
      %1239 = vmatprep.subr.bf16.mxu0 0
      %1240 = vmatpush1.bf16.xpose.msra.mxu0 0
      %1241 = vmatprep.mubr.bf16.mxu0 0
      %1242 = vmatmul.mubr.bf16.gmra.mrb[0].mxu0 %v1204
      %v1243 = vpop.f32.mrb[0].mxu0
      %v1244 = vadd.f32 %v590, %v1243
      %v1245 = vpop.f32.mrb[0].mxu0
      %v1246 = vpop.f32.mrb[0].mxu0
      %v1247 = vadd.f32 %v591, %v1246
      %v1248 = vpop.f32.mrb[0].mxu0
      %1249 = vdwg.mxu0
      %1251 = vrot.lane.b32.xlu0 %v1093, 120
      %v1252 = vpop.permute.xlu0 %1251
      %1253 = vrot.lane.b32.xlu0 %v1093, 88
      %v1254 = vpop.permute.xlu0 %1253
      %v1256 = vsel %vm611, %v1252, 0
      %v1259 = vsel %vm611, %v1254, 0
      %1261 = vmatprep.subr.bf16.mxu0 0
      %1262 = vmatpush1.bf16.xpose.msra.mxu0 %v1259
      %1263 = vmatprep.subr.bf16.mxu0 0
      %1264 = vmatpush1.bf16.xpose.msra.mxu0 0
      %1265 = vmatprep.subr.bf16.mxu0 0
      %1266 = vmatpush1.bf16.xpose.msra.mxu0 0
      %1267 = vmatprep.subr.bf16.mxu0 0
      %1268 = vmatpush1.bf16.xpose.msra.mxu0 0
      %1269 = vmatprep.subr.bf16.mxu0 0
      %1270 = vmatpush1.bf16.xpose.msra.mxu0 0
      %1271 = vmatprep.subr.bf16.mxu0 0
      %1272 = vmatpush1.bf16.xpose.msra.mxu0 0
      %1273 = vmatprep.subr.bf16.mxu0 0
      %1274 = vmatpush1.bf16.xpose.msra.mxu0 0
      %1275 = vmatprep.subr.bf16.mxu0 0
      %1276 = vmatpush1.bf16.xpose.msra.mxu0 0
      %1277 = vmatprep.subr.bf16.mxu0 0
      %1278 = vmatpush1.bf16.xpose.msra.mxu0 0
      %1279 = vmatprep.subr.bf16.mxu0 0
      %1280 = vmatpush1.bf16.xpose.msra.mxu0 0
      %1281 = vmatprep.subr.bf16.mxu0 0
      %1282 = vmatpush1.bf16.xpose.msra.mxu0 0
      %1283 = vmatprep.subr.bf16.mxu0 0
      %1284 = vmatpush1.bf16.xpose.msra.mxu0 0
      %1285 = vmatprep.subr.bf16.mxu0 0
      %1286 = vmatpush1.bf16.xpose.msra.mxu0 0
      %1287 = vmatprep.subr.bf16.mxu0 0
      %1288 = vmatpush1.bf16.xpose.msra.mxu0 0
      %1289 = vmatprep.subr.bf16.mxu0 0
      %1290 = vmatpush1.bf16.xpose.msra.mxu0 0
      %1291 = vmatprep.subr.bf16.mxu0 0
      %1292 = vmatpush1.bf16.xpose.msra.mxu0 0
      %1293 = vmatprep.mubr.bf16.mxu0 0
      %1294 = vmatmul.mubr.bf16.gmra.mrb[0].mxu0 %v1256
      %v1295 = vpop.f32.mrb[0].mxu0
      %v1296 = vadd.f32 %v598, %v1295
      %v1297 = vpop.f32.mrb[0].mxu0
      %v1298 = vpop.f32.mrb[0].mxu0
      %v1299 = vadd.f32 %v599, %v1298
      %v1300 = vpop.f32.mrb[0].mxu0
      %1301 = vdwg.mxu0
      %v1302 = vsel %vm809, %v1140, -inf
      %1303 = vmax.xlane.f32.xlu0 %v1302
      %v1304 = vpop.xlane.xlu0 %1303
      %v1305 = vsel %vm809, %v1143, -inf
      %1306 = vmax.xlane.f32.xlu0 %v1305
      %v1307 = vpop.xlane.xlu0 %1306
      %v1308 = vsel %vm809, %v1192, -inf
      %1309 = vmax.xlane.f32.xlu0 %v1308
      %v1310 = vpop.xlane.xlu0 %1309
      %v1311 = vsel %vm809, %v1195, -inf
      %1312 = vmax.xlane.f32.xlu0 %v1311
      %v1313 = vpop.xlane.xlu0 %1312
      %v1314 = vsel %vm809, %v1244, -inf
      %1315 = vmax.xlane.f32.xlu0 %v1314
      %v1316 = vpop.xlane.xlu0 %1315
      %v1317 = vsel %vm809, %v1247, -inf
      %1318 = vmax.xlane.f32.xlu0 %v1317
      %v1319 = vpop.xlane.xlu0 %1318
      %v1320 = vsel %vm809, %v1296, -inf
      %1321 = vmax.xlane.f32.xlu0 %v1320
      %v1322 = vpop.xlane.xlu0 %1321
      %v1323 = vsel %vm809, %v1299, -inf
      %1324 = vmax.xlane.f32.xlu0 %v1323
      %v1325 = vpop.xlane.xlu0 %1324
      %v1326 = vsub.f32 %v1140, %v1304
      %v1327 = vsub.f32 %v1143, %v1307
      %v1328 = vsub.f32 %v1192, %v1310
      %v1329 = vsub.f32 %v1195, %v1313
      %v1330 = vsub.f32 %v1244, %v1316
      %v1331 = vsub.f32 %v1247, %v1319
      %v1332 = vsub.f32 %v1296, %v1322
      %v1333 = vsub.f32 %v1299, %v1325
      %v1334 = vmul.f32 %v1326, 1.442695
      %v1335 = vpow.pop %v1334
      %v1336 = vmul.f32 %v1327, 1.442695
      %v1337 = vpow.pop %v1336
      %v1338 = vmul.f32 %v1328, 1.442695
      %v1339 = vpow.pop %v1338
      %v1340 = vmul.f32 %v1329, 1.442695
      %v1341 = vpow.pop %v1340
      %v1342 = vmul.f32 %v1330, 1.442695
      %v1343 = vpow.pop %v1342
      %v1344 = vmul.f32 %v1331, 1.442695
      %v1345 = vpow.pop %v1344
      %v1346 = vmul.f32 %v1332, 1.442695
      %v1347 = vpow.pop %v1346
      %v1348 = vmul.f32 %v1333, 1.442695
      %v1349 = vpow.pop %v1348
      %v1350 = vsel %vm809, %v1335, 0.0
      %1351 = vadd.xlane.f32.xlu0 %v1350
      %v1352 = vpop.xlane.xlu0 %1351
      %v1353 = vsel %vm809, %v1337, 0.0
      %1354 = vadd.xlane.f32.xlu0 %v1353
      %v1355 = vpop.xlane.xlu0 %1354
      %v1356 = vsel %vm809, %v1339, 0.0
      %1357 = vadd.xlane.f32.xlu0 %v1356
      %v1358 = vpop.xlane.xlu0 %1357
      %v1359 = vsel %vm809, %v1341, 0.0
      %1360 = vadd.xlane.f32.xlu0 %v1359
      %v1361 = vpop.xlane.xlu0 %1360
      %v1362 = vsel %vm809, %v1343, 0.0
      %1363 = vadd.xlane.f32.xlu0 %v1362
      %v1364 = vpop.xlane.xlu0 %1363
      %v1365 = vsel %vm809, %v1345, 0.0
      %1366 = vadd.xlane.f32.xlu0 %v1365
      %v1367 = vpop.xlane.xlu0 %1366
      %v1368 = vsel %vm809, %v1347, 0.0
      %1369 = vadd.xlane.f32.xlu0 %v1368
      %v1370 = vpop.xlane.xlu0 %1369
      %v1371 = vsel %vm809, %v1349, 0.0
      %1372 = vadd.xlane.f32.xlu0 %v1371
      %v1373 = vpop.xlane.xlu0 %1372
      %v1374 = vrcp.pop %v1352
      %v1375 = vrcp.pop %v1355
      %v1376 = vrcp.pop %v1358
      %v1377 = vrcp.pop %v1361
      %v1378 = vrcp.pop %v1364
      %v1379 = vrcp.pop %v1367
      %v1380 = vrcp.pop %v1370
      %v1381 = vrcp.pop %v1373
      %v1382 = vmul.f32 %v1335, %v1374
      %v1383 = vmul.f32 %v1337, %v1375
      %v1384 = vmul.f32 %v1339, %v1376
      %v1385 = vmul.f32 %v1341, %v1377
      %v1386 = vmul.f32 %v1343, %v1378
      %v1387 = vmul.f32 %v1345, %v1379
      %v1388 = vmul.f32 %v1347, %v1380
      %v1389 = vmul.f32 %v1349, %v1381
      %v1390 = vpack.c.bf16 %v1383, %v1382
      %v1391 = vpack.c.bf16 %v1385, %v1384
      %v1392 = vpack.c.bf16 %v1387, %v1386
      %v1393 = vpack.c.bf16 %v1389, %v1388
      %1394 = vrot.lane.b32.xlu0 %v1090, 56
      %v1395 = vpop.permute.xlu0 %1394
      %v1398 = vsel %vm809, %v1390, 0
      %1400 = vmatprep.subr.bf16.mxu0 0
      %1401 = vmatpush1.bf16.msra.mxu0 %v1395
      %1402 = vmatprep.subr.bf16.mxu0 0
      %1403 = vmatpush1.bf16.msra.mxu0 0
      %1404 = vmatprep.subr.bf16.mxu0 0
      %1405 = vmatpush1.bf16.msra.mxu0 0
      %1406 = vmatprep.subr.bf16.mxu0 0
      %1407 = vmatpush1.bf16.msra.mxu0 0
      %1408 = vmatprep.subr.bf16.mxu0 0
      %1409 = vmatpush1.bf16.msra.mxu0 0
      %1410 = vmatprep.subr.bf16.mxu0 0
      %1411 = vmatpush1.bf16.msra.mxu0 0
      %1412 = vmatprep.subr.bf16.mxu0 0
      %1413 = vmatpush1.bf16.msra.mxu0 0
      %1414 = vmatprep.subr.bf16.mxu0 0
      %1415 = vmatpush1.bf16.msra.mxu0 0
      %1416 = vmatprep.subr.bf16.mxu0 0
      %1417 = vmatpush1.bf16.msra.mxu0 0
      %1418 = vmatprep.subr.bf16.mxu0 0
      %1419 = vmatpush1.bf16.msra.mxu0 0
      %1420 = vmatprep.subr.bf16.mxu0 0
      %1421 = vmatpush1.bf16.msra.mxu0 0
      %1422 = vmatprep.subr.bf16.mxu0 0
      %1423 = vmatpush1.bf16.msra.mxu0 0
      %1424 = vmatprep.subr.bf16.mxu0 0
      %1425 = vmatpush1.bf16.msra.mxu0 0
      %1426 = vmatprep.subr.bf16.mxu0 0
      %1427 = vmatpush1.bf16.msra.mxu0 0
      %1428 = vmatprep.subr.bf16.mxu0 0
      %1429 = vmatpush1.bf16.msra.mxu0 0
      %1430 = vmatprep.subr.bf16.mxu0 0
      %1431 = vmatpush1.bf16.msra.mxu0 0
      %1432 = vmatprep.mubr.bf16.mxu0 0
      %1433 = vmatmul.mubr.bf16.gmra.mrb[0].mxu0 %v1398
      %v1434 = vpop.f32.mrb[0].mxu0
      %v1435 = vadd.f32 0.0, %v1434
      %v1436 = vpop.f32.mrb[0].mxu0
      %v1437 = vpop.f32.mrb[0].mxu0
      %v1438 = vadd.f32 0.0, %v1437
      %v1439 = vpop.f32.mrb[0].mxu0
      %1440 = vdwg.mxu0
      %1441 = vrot.lane.b32.xlu0 %v1091, 56
      %v1442 = vpop.permute.xlu0 %1441
      %v1445 = vsel %vm809, %v1391, 0
      %1447 = vmatprep.subr.bf16.mxu0 0
      %1448 = vmatpush1.bf16.msra.mxu0 %v1442
      %1449 = vmatprep.subr.bf16.mxu0 0
      %1450 = vmatpush1.bf16.msra.mxu0 0
      %1451 = vmatprep.subr.bf16.mxu0 0
      %1452 = vmatpush1.bf16.msra.mxu0 0
      %1453 = vmatprep.subr.bf16.mxu0 0
      %1454 = vmatpush1.bf16.msra.mxu0 0
      %1455 = vmatprep.subr.bf16.mxu0 0
      %1456 = vmatpush1.bf16.msra.mxu0 0
      %1457 = vmatprep.subr.bf16.mxu0 0
      %1458 = vmatpush1.bf16.msra.mxu0 0
      %1459 = vmatprep.subr.bf16.mxu0 0
      %1460 = vmatpush1.bf16.msra.mxu0 0
      %1461 = vmatprep.subr.bf16.mxu0 0
      %1462 = vmatpush1.bf16.msra.mxu0 0
      %1463 = vmatprep.subr.bf16.mxu0 0
      %1464 = vmatpush1.bf16.msra.mxu0 0
      %1465 = vmatprep.subr.bf16.mxu0 0
      %1466 = vmatpush1.bf16.msra.mxu0 0
      %1467 = vmatprep.subr.bf16.mxu0 0
      %1468 = vmatpush1.bf16.msra.mxu0 0
      %1469 = vmatprep.subr.bf16.mxu0 0
      %1470 = vmatpush1.bf16.msra.mxu0 0
      %1471 = vmatprep.subr.bf16.mxu0 0
      %1472 = vmatpush1.bf16.msra.mxu0 0
      %1473 = vmatprep.subr.bf16.mxu0 0
      %1474 = vmatpush1.bf16.msra.mxu0 0
      %1475 = vmatprep.subr.bf16.mxu0 0
      %1476 = vmatpush1.bf16.msra.mxu0 0
      %1477 = vmatprep.subr.bf16.mxu0 0
      %1478 = vmatpush1.bf16.msra.mxu0 0
      %1479 = vmatprep.mubr.bf16.mxu0 0
      %1480 = vmatmul.mubr.bf16.gmra.mrb[0].mxu0 %v1445
      %v1481 = vpop.f32.mrb[0].mxu0
      %v1482 = vadd.f32 0.0, %v1481
      %v1483 = vpop.f32.mrb[0].mxu0
      %v1484 = vpop.f32.mrb[0].mxu0
      %v1485 = vadd.f32 0.0, %v1484
      %v1486 = vpop.f32.mrb[0].mxu0
      %1487 = vdwg.mxu0
      %1488 = vrot.lane.b32.xlu0 %v1092, 56
      %v1489 = vpop.permute.xlu0 %1488
      %v1492 = vsel %vm809, %v1392, 0
      %1494 = vmatprep.subr.bf16.mxu0 0
      %1495 = vmatpush1.bf16.msra.mxu0 %v1489
      %1496 = vmatprep.subr.bf16.mxu0 0
      %1497 = vmatpush1.bf16.msra.mxu0 0
      %1498 = vmatprep.subr.bf16.mxu0 0
      %1499 = vmatpush1.bf16.msra.mxu0 0
      %1500 = vmatprep.subr.bf16.mxu0 0
      %1501 = vmatpush1.bf16.msra.mxu0 0
      %1502 = vmatprep.subr.bf16.mxu0 0
      %1503 = vmatpush1.bf16.msra.mxu0 0
      %1504 = vmatprep.subr.bf16.mxu0 0
      %1505 = vmatpush1.bf16.msra.mxu0 0
      %1506 = vmatprep.subr.bf16.mxu0 0
      %1507 = vmatpush1.bf16.msra.mxu0 0
      %1508 = vmatprep.subr.bf16.mxu0 0
      %1509 = vmatpush1.bf16.msra.mxu0 0
      %1510 = vmatprep.subr.bf16.mxu0 0
      %1511 = vmatpush1.bf16.msra.mxu0 0
      %1512 = vmatprep.subr.bf16.mxu0 0
      %1513 = vmatpush1.bf16.msra.mxu0 0
      %1514 = vmatprep.subr.bf16.mxu0 0
      %1515 = vmatpush1.bf16.msra.mxu0 0
      %1516 = vmatprep.subr.bf16.mxu0 0
      %1517 = vmatpush1.bf16.msra.mxu0 0
      %1518 = vmatprep.subr.bf16.mxu0 0
      %1519 = vmatpush1.bf16.msra.mxu0 0
      %1520 = vmatprep.subr.bf16.mxu0 0
      %1521 = vmatpush1.bf16.msra.mxu0 0
      %1522 = vmatprep.subr.bf16.mxu0 0
      %1523 = vmatpush1.bf16.msra.mxu0 0
      %1524 = vmatprep.subr.bf16.mxu0 0
      %1525 = vmatpush1.bf16.msra.mxu0 0
      %1526 = vmatprep.mubr.bf16.mxu0 0
      %1527 = vmatmul.mubr.bf16.gmra.mrb[0].mxu0 %v1492
      %v1528 = vpop.f32.mrb[0].mxu0
      %v1529 = vadd.f32 0.0, %v1528
      %v1530 = vpop.f32.mrb[0].mxu0
      %v1531 = vpop.f32.mrb[0].mxu0
      %v1532 = vadd.f32 0.0, %v1531
      %v1533 = vpop.f32.mrb[0].mxu0
      %1534 = vdwg.mxu0
      %1535 = vrot.lane.b32.xlu0 %v1093, 56
      %v1536 = vpop.permute.xlu0 %1535
      %v1539 = vsel %vm809, %v1393, 0
      %1541 = vmatprep.subr.bf16.mxu0 0
      %1542 = vmatpush1.bf16.msra.mxu0 %v1536
      %1543 = vmatprep.subr.bf16.mxu0 0
      %1544 = vmatpush1.bf16.msra.mxu0 0
      %1545 = vmatprep.subr.bf16.mxu0 0
      %1546 = vmatpush1.bf16.msra.mxu0 0
      %1547 = vmatprep.subr.bf16.mxu0 0
      %1548 = vmatpush1.bf16.msra.mxu0 0
      %1549 = vmatprep.subr.bf16.mxu0 0
      %1550 = vmatpush1.bf16.msra.mxu0 0
      %1551 = vmatprep.subr.bf16.mxu0 0
      %1552 = vmatpush1.bf16.msra.mxu0 0
      %1553 = vmatprep.subr.bf16.mxu0 0
      %1554 = vmatpush1.bf16.msra.mxu0 0
      %1555 = vmatprep.subr.bf16.mxu0 0
      %1556 = vmatpush1.bf16.msra.mxu0 0
      %1557 = vmatprep.subr.bf16.mxu0 0
      %1558 = vmatpush1.bf16.msra.mxu0 0
      %1559 = vmatprep.subr.bf16.mxu0 0
      %1560 = vmatpush1.bf16.msra.mxu0 0
      %1561 = vmatprep.subr.bf16.mxu0 0
      %1562 = vmatpush1.bf16.msra.mxu0 0
      %1563 = vmatprep.subr.bf16.mxu0 0
      %1564 = vmatpush1.bf16.msra.mxu0 0
      %1565 = vmatprep.subr.bf16.mxu0 0
      %1566 = vmatpush1.bf16.msra.mxu0 0
      %1567 = vmatprep.subr.bf16.mxu0 0
      %1568 = vmatpush1.bf16.msra.mxu0 0
      %1569 = vmatprep.subr.bf16.mxu0 0
      %1570 = vmatpush1.bf16.msra.mxu0 0
      %1571 = vmatprep.subr.bf16.mxu0 0
      %1572 = vmatpush1.bf16.msra.mxu0 0
      %1573 = vmatprep.mubr.bf16.mxu0 0
      %1574 = vmatmul.mubr.bf16.gmra.mrb[0].mxu0 %v1539
      %v1575 = vpop.f32.mrb[0].mxu0
      %v1576 = vadd.f32 0.0, %v1575
      %v1577 = vpop.f32.mrb[0].mxu0
      %v1578 = vpop.f32.mrb[0].mxu0
      %v1579 = vadd.f32 0.0, %v1578
      %v1580 = vpop.f32.mrb[0].mxu0
      %1581 = vdwg.mxu0
      %v1582 = vld [vmem:[#allocation2] sm:$0xff]
      %v1583 = vld [vmem:[#allocation2 + $0x8] sm:$0xff]
      %v1584 = vld [vmem:[#allocation2 + $0x10] sm:$0xff]
      %v1585 = vld [vmem:[#allocation2 + $0x18] sm:$0xff]
      %1587 = vrot.lane.b32.xlu0 %v1582, 112
      %v1588 = vpop.permute.xlu0 %1587
      %1589 = vrot.lane.b32.xlu0 %v1582, 80
      %v1590 = vpop.permute.xlu0 %1589
      %v1592 = vsel %vm611, %v1588, 0
      %v1595 = vsel %vm611, %v1590, 0
      %1597 = vmatprep.subr.bf16.mxu0 0
      %1598 = vmatpush1.bf16.xpose.msra.mxu0 %v1595
      %1599 = vmatprep.subr.bf16.mxu0 0
      %1600 = vmatpush1.bf16.xpose.msra.mxu0 0
      %1601 = vmatprep.subr.bf16.mxu0 0
      %1602 = vmatpush1.bf16.xpose.msra.mxu0 0
      %1603 = vmatprep.subr.bf16.mxu0 0
      %1604 = vmatpush1.bf16.xpose.msra.mxu0 0
      %1605 = vmatprep.subr.bf16.mxu0 0
      %1606 = vmatpush1.bf16.xpose.msra.mxu0 0
      %1607 = vmatprep.subr.bf16.mxu0 0
      %1608 = vmatpush1.bf16.xpose.msra.mxu0 0
      %1609 = vmatprep.subr.bf16.mxu0 0
      %1610 = vmatpush1.bf16.xpose.msra.mxu0 0
      %1611 = vmatprep.subr.bf16.mxu0 0
      %1612 = vmatpush1.bf16.xpose.msra.mxu0 0
      %1613 = vmatprep.subr.bf16.mxu0 0
      %1614 = vmatpush1.bf16.xpose.msra.mxu0 0
      %1615 = vmatprep.subr.bf16.mxu0 0
      %1616 = vmatpush1.bf16.xpose.msra.mxu0 0
      %1617 = vmatprep.subr.bf16.mxu0 0
      %1618 = vmatpush1.bf16.xpose.msra.mxu0 0
      %1619 = vmatprep.subr.bf16.mxu0 0
      %1620 = vmatpush1.bf16.xpose.msra.mxu0 0
      %1621 = vmatprep.subr.bf16.mxu0 0
      %1622 = vmatpush1.bf16.xpose.msra.mxu0 0
      %1623 = vmatprep.subr.bf16.mxu0 0
      %1624 = vmatpush1.bf16.xpose.msra.mxu0 0
      %1625 = vmatprep.subr.bf16.mxu0 0
      %1626 = vmatpush1.bf16.xpose.msra.mxu0 0
      %1627 = vmatprep.subr.bf16.mxu0 0
      %1628 = vmatpush1.bf16.xpose.msra.mxu0 0
      %1629 = vmatprep.mubr.bf16.mxu0 0
      %1630 = vmatmul.mubr.bf16.gmra.mrb[0].mxu0 %v1592
      %v1631 = vpop.f32.mrb[0].mxu0
      %v1632 = vadd.f32 %v576, %v1631
      %v1633 = vpop.f32.mrb[0].mxu0
      %v1634 = vpop.f32.mrb[0].mxu0
      %v1635 = vadd.f32 %v577, %v1634
      %v1636 = vpop.f32.mrb[0].mxu0
      %1637 = vdwg.mxu0
      %1639 = vrot.lane.b32.xlu0 %v1583, 112
      %v1640 = vpop.permute.xlu0 %1639
      %1641 = vrot.lane.b32.xlu0 %v1583, 80
      %v1642 = vpop.permute.xlu0 %1641
      %v1644 = vsel %vm611, %v1640, 0
      %v1647 = vsel %vm611, %v1642, 0
      %1649 = vmatprep.subr.bf16.mxu0 0
      %1650 = vmatpush1.bf16.xpose.msra.mxu0 %v1647
      %1651 = vmatprep.subr.bf16.mxu0 0
      %1652 = vmatpush1.bf16.xpose.msra.mxu0 0
      %1653 = vmatprep.subr.bf16.mxu0 0
      %1654 = vmatpush1.bf16.xpose.msra.mxu0 0
      %1655 = vmatprep.subr.bf16.mxu0 0
      %1656 = vmatpush1.bf16.xpose.msra.mxu0 0
      %1657 = vmatprep.subr.bf16.mxu0 0
      %1658 = vmatpush1.bf16.xpose.msra.mxu0 0
      %1659 = vmatprep.subr.bf16.mxu0 0
      %1660 = vmatpush1.bf16.xpose.msra.mxu0 0
      %1661 = vmatprep.subr.bf16.mxu0 0
      %1662 = vmatpush1.bf16.xpose.msra.mxu0 0
      %1663 = vmatprep.subr.bf16.mxu0 0
      %1664 = vmatpush1.bf16.xpose.msra.mxu0 0
      %1665 = vmatprep.subr.bf16.mxu0 0
      %1666 = vmatpush1.bf16.xpose.msra.mxu0 0
      %1667 = vmatprep.subr.bf16.mxu0 0
      %1668 = vmatpush1.bf16.xpose.msra.mxu0 0
      %1669 = vmatprep.subr.bf16.mxu0 0
      %1670 = vmatpush1.bf16.xpose.msra.mxu0 0
      %1671 = vmatprep.subr.bf16.mxu0 0
      %1672 = vmatpush1.bf16.xpose.msra.mxu0 0
      %1673 = vmatprep.subr.bf16.mxu0 0
      %1674 = vmatpush1.bf16.xpose.msra.mxu0 0
      %1675 = vmatprep.subr.bf16.mxu0 0
      %1676 = vmatpush1.bf16.xpose.msra.mxu0 0
      %1677 = vmatprep.subr.bf16.mxu0 0
      %1678 = vmatpush1.bf16.xpose.msra.mxu0 0
      %1679 = vmatprep.subr.bf16.mxu0 0
      %1680 = vmatpush1.bf16.xpose.msra.mxu0 0
      %1681 = vmatprep.mubr.bf16.mxu0 0
      %1682 = vmatmul.mubr.bf16.gmra.mrb[0].mxu0 %v1644
      %v1683 = vpop.f32.mrb[0].mxu0
      %v1684 = vadd.f32 %v584, %v1683
      %v1685 = vpop.f32.mrb[0].mxu0
      %v1686 = vpop.f32.mrb[0].mxu0
      %v1687 = vadd.f32 %v585, %v1686
      %v1688 = vpop.f32.mrb[0].mxu0
      %1689 = vdwg.mxu0
      %1691 = vrot.lane.b32.xlu0 %v1584, 112
      %v1692 = vpop.permute.xlu0 %1691
      %1693 = vrot.lane.b32.xlu0 %v1584, 80
      %v1694 = vpop.permute.xlu0 %1693
      %v1696 = vsel %vm611, %v1692, 0
      %v1699 = vsel %vm611, %v1694, 0
      %1701 = vmatprep.subr.bf16.mxu0 0
      %1702 = vmatpush1.bf16.xpose.msra.mxu0 %v1699
      %1703 = vmatprep.subr.bf16.mxu0 0
      %1704 = vmatpush1.bf16.xpose.msra.mxu0 0
      %1705 = vmatprep.subr.bf16.mxu0 0
      %1706 = vmatpush1.bf16.xpose.msra.mxu0 0
      %1707 = vmatprep.subr.bf16.mxu0 0
      %1708 = vmatpush1.bf16.xpose.msra.mxu0 0
      %1709 = vmatprep.subr.bf16.mxu0 0
      %1710 = vmatpush1.bf16.xpose.msra.mxu0 0
      %1711 = vmatprep.subr.bf16.mxu0 0
      %1712 = vmatpush1.bf16.xpose.msra.mxu0 0
      %1713 = vmatprep.subr.bf16.mxu0 0
      %1714 = vmatpush1.bf16.xpose.msra.mxu0 0
      %1715 = vmatprep.subr.bf16.mxu0 0
      %1716 = vmatpush1.bf16.xpose.msra.mxu0 0
      %1717 = vmatprep.subr.bf16.mxu0 0
      %1718 = vmatpush1.bf16.xpose.msra.mxu0 0
      %1719 = vmatprep.subr.bf16.mxu0 0
      %1720 = vmatpush1.bf16.xpose.msra.mxu0 0
      %1721 = vmatprep.subr.bf16.mxu0 0
      %1722 = vmatpush1.bf16.xpose.msra.mxu0 0
      %1723 = vmatprep.subr.bf16.mxu0 0
      %1724 = vmatpush1.bf16.xpose.msra.mxu0 0
      %1725 = vmatprep.subr.bf16.mxu0 0
      %1726 = vmatpush1.bf16.xpose.msra.mxu0 0
      %1727 = vmatprep.subr.bf16.mxu0 0
      %1728 = vmatpush1.bf16.xpose.msra.mxu0 0
      %1729 = vmatprep.subr.bf16.mxu0 0
      %1730 = vmatpush1.bf16.xpose.msra.mxu0 0
      %1731 = vmatprep.subr.bf16.mxu0 0
      %1732 = vmatpush1.bf16.xpose.msra.mxu0 0
      %1733 = vmatprep.mubr.bf16.mxu0 0
      %1734 = vmatmul.mubr.bf16.gmra.mrb[0].mxu0 %v1696
      %v1735 = vpop.f32.mrb[0].mxu0
      %v1736 = vadd.f32 %v592, %v1735
      %v1737 = vpop.f32.mrb[0].mxu0
      %v1738 = vpop.f32.mrb[0].mxu0
      %v1739 = vadd.f32 %v593, %v1738
      %v1740 = vpop.f32.mrb[0].mxu0
      %1741 = vdwg.mxu0
      %1743 = vrot.lane.b32.xlu0 %v1585, 112
      %v1744 = vpop.permute.xlu0 %1743
      %1745 = vrot.lane.b32.xlu0 %v1585, 80
      %v1746 = vpop.permute.xlu0 %1745
      %v1748 = vsel %vm611, %v1744, 0
      %v1751 = vsel %vm611, %v1746, 0
      %1753 = vmatprep.subr.bf16.mxu0 0
      %1754 = vmatpush1.bf16.xpose.msra.mxu0 %v1751
      %1755 = vmatprep.subr.bf16.mxu0 0
      %1756 = vmatpush1.bf16.xpose.msra.mxu0 0
      %1757 = vmatprep.subr.bf16.mxu0 0
      %1758 = vmatpush1.bf16.xpose.msra.mxu0 0
      %1759 = vmatprep.subr.bf16.mxu0 0
      %1760 = vmatpush1.bf16.xpose.msra.mxu0 0
      %1761 = vmatprep.subr.bf16.mxu0 0
      %1762 = vmatpush1.bf16.xpose.msra.mxu0 0
      %1763 = vmatprep.subr.bf16.mxu0 0
      %1764 = vmatpush1.bf16.xpose.msra.mxu0 0
      %1765 = vmatprep.subr.bf16.mxu0 0
      %1766 = vmatpush1.bf16.xpose.msra.mxu0 0
      %1767 = vmatprep.subr.bf16.mxu0 0
      %1768 = vmatpush1.bf16.xpose.msra.mxu0 0
      %1769 = vmatprep.subr.bf16.mxu0 0
      %1770 = vmatpush1.bf16.xpose.msra.mxu0 0
      %1771 = vmatprep.subr.bf16.mxu0 0
      %1772 = vmatpush1.bf16.xpose.msra.mxu0 0
      %1773 = vmatprep.subr.bf16.mxu0 0
      %1774 = vmatpush1.bf16.xpose.msra.mxu0 0
      %1775 = vmatprep.subr.bf16.mxu0 0
      %1776 = vmatpush1.bf16.xpose.msra.mxu0 0
      %1777 = vmatprep.subr.bf16.mxu0 0
      %1778 = vmatpush1.bf16.xpose.msra.mxu0 0
      %1779 = vmatprep.subr.bf16.mxu0 0
      %1780 = vmatpush1.bf16.xpose.msra.mxu0 0
      %1781 = vmatprep.subr.bf16.mxu0 0
      %1782 = vmatpush1.bf16.xpose.msra.mxu0 0
      %1783 = vmatprep.subr.bf16.mxu0 0
      %1784 = vmatpush1.bf16.xpose.msra.mxu0 0
      %1785 = vmatprep.mubr.bf16.mxu0 0
      %1786 = vmatmul.mubr.bf16.gmra.mrb[0].mxu0 %v1748
      %v1787 = vpop.f32.mrb[0].mxu0
      %v1788 = vadd.f32 %v600, %v1787
      %v1789 = vpop.f32.mrb[0].mxu0
      %v1790 = vpop.f32.mrb[0].mxu0
      %v1791 = vadd.f32 %v601, %v1790
      %v1792 = vpop.f32.mrb[0].mxu0
      %1793 = vdwg.mxu0
      %v1794 = vsel %vm809, %v1632, -inf
      %1795 = vmax.xlane.f32.xlu0 %v1794
      %v1796 = vpop.xlane.xlu0 %1795
      %v1797 = vsel %vm809, %v1635, -inf
      %1798 = vmax.xlane.f32.xlu0 %v1797
      %v1799 = vpop.xlane.xlu0 %1798
      %v1800 = vsel %vm809, %v1684, -inf
      %1801 = vmax.xlane.f32.xlu0 %v1800
      %v1802 = vpop.xlane.xlu0 %1801
      %v1803 = vsel %vm809, %v1687, -inf
      %1804 = vmax.xlane.f32.xlu0 %v1803
      %v1805 = vpop.xlane.xlu0 %1804
      %v1806 = vsel %vm809, %v1736, -inf
      %1807 = vmax.xlane.f32.xlu0 %v1806
      %v1808 = vpop.xlane.xlu0 %1807
      %v1809 = vsel %vm809, %v1739, -inf
      %1810 = vmax.xlane.f32.xlu0 %v1809
      %v1811 = vpop.xlane.xlu0 %1810
      %v1812 = vsel %vm809, %v1788, -inf
      %1813 = vmax.xlane.f32.xlu0 %v1812
      %v1814 = vpop.xlane.xlu0 %1813
      %v1815 = vsel %vm809, %v1791, -inf
      %1816 = vmax.xlane.f32.xlu0 %v1815
      %v1817 = vpop.xlane.xlu0 %1816
      %v1818 = vsub.f32 %v1632, %v1796
      %v1819 = vsub.f32 %v1635, %v1799
      %v1820 = vsub.f32 %v1684, %v1802
      %v1821 = vsub.f32 %v1687, %v1805
      %v1822 = vsub.f32 %v1736, %v1808
      %v1823 = vsub.f32 %v1739, %v1811
      %v1824 = vsub.f32 %v1788, %v1814
      %v1825 = vsub.f32 %v1791, %v1817
      %v1826 = vmul.f32 %v1818, 1.442695
      %v1827 = vpow.pop %v1826
      %v1828 = vmul.f32 %v1819, 1.442695
      %v1829 = vpow.pop %v1828
      %v1830 = vmul.f32 %v1820, 1.442695
      %v1831 = vpow.pop %v1830
      %v1832 = vmul.f32 %v1821, 1.442695
      %v1833 = vpow.pop %v1832
      %v1834 = vmul.f32 %v1822, 1.442695
      %v1835 = vpow.pop %v1834
      %v1836 = vmul.f32 %v1823, 1.442695
      %v1837 = vpow.pop %v1836
      %v1838 = vmul.f32 %v1824, 1.442695
      %v1839 = vpow.pop %v1838
      %v1840 = vmul.f32 %v1825, 1.442695
      %v1841 = vpow.pop %v1840
      %v1842 = vsel %vm809, %v1827, 0.0
      %1843 = vadd.xlane.f32.xlu0 %v1842
      %v1844 = vpop.xlane.xlu0 %1843
      %v1845 = vsel %vm809, %v1829, 0.0
      %1846 = vadd.xlane.f32.xlu0 %v1845
      %v1847 = vpop.xlane.xlu0 %1846
      %v1848 = vsel %vm809, %v1831, 0.0
      %1849 = vadd.xlane.f32.xlu0 %v1848
      %v1850 = vpop.xlane.xlu0 %1849
      %v1851 = vsel %vm809, %v1833, 0.0
      %1852 = vadd.xlane.f32.xlu0 %v1851
      %v1853 = vpop.xlane.xlu0 %1852
      %v1854 = vsel %vm809, %v1835, 0.0
      %1855 = vadd.xlane.f32.xlu0 %v1854
      %v1856 = vpop.xlane.xlu0 %1855
      %v1857 = vsel %vm809, %v1837, 0.0
      %1858 = vadd.xlane.f32.xlu0 %v1857
      %v1859 = vpop.xlane.xlu0 %1858
      %v1860 = vsel %vm809, %v1839, 0.0
      %1861 = vadd.xlane.f32.xlu0 %v1860
      %v1862 = vpop.xlane.xlu0 %1861
      %v1863 = vsel %vm809, %v1841, 0.0
      %1864 = vadd.xlane.f32.xlu0 %v1863
      %v1865 = vpop.xlane.xlu0 %1864
      %v1866 = vrcp.pop %v1844
      %v1867 = vrcp.pop %v1847
      %v1868 = vrcp.pop %v1850
      %v1869 = vrcp.pop %v1853
      %v1870 = vrcp.pop %v1856
      %v1871 = vrcp.pop %v1859
      %v1872 = vrcp.pop %v1862
      %v1873 = vrcp.pop %v1865
      %v1874 = vmul.f32 %v1827, %v1866
      %v1875 = vmul.f32 %v1829, %v1867
      %v1876 = vmul.f32 %v1831, %v1868
      %v1877 = vmul.f32 %v1833, %v1869
      %v1878 = vmul.f32 %v1835, %v1870
      %v1879 = vmul.f32 %v1837, %v1871
      %v1880 = vmul.f32 %v1839, %v1872
      %v1881 = vmul.f32 %v1841, %v1873
      %v1882 = vpack.c.bf16 %v1875, %v1874
      %v1883 = vpack.c.bf16 %v1877, %v1876
      %v1884 = vpack.c.bf16 %v1879, %v1878
      %v1885 = vpack.c.bf16 %v1881, %v1880
      %1886 = vrot.lane.b32.xlu0 %v1582, 48
      %v1887 = vpop.permute.xlu0 %1886
      %v1890 = vsel %vm809, %v1882, 0
      %1892 = vmatprep.subr.bf16.mxu0 0
      %1893 = vmatpush1.bf16.msra.mxu0 %v1887
      %1894 = vmatprep.subr.bf16.mxu0 0
      %1895 = vmatpush1.bf16.msra.mxu0 0
      %1896 = vmatprep.subr.bf16.mxu0 0
      %1897 = vmatpush1.bf16.msra.mxu0 0
      %1898 = vmatprep.subr.bf16.mxu0 0
      %1899 = vmatpush1.bf16.msra.mxu0 0
      %1900 = vmatprep.subr.bf16.mxu0 0
      %1901 = vmatpush1.bf16.msra.mxu0 0
      %1902 = vmatprep.subr.bf16.mxu0 0
      %1903 = vmatpush1.bf16.msra.mxu0 0
      %1904 = vmatprep.subr.bf16.mxu0 0
      %1905 = vmatpush1.bf16.msra.mxu0 0
      %1906 = vmatprep.subr.bf16.mxu0 0
      %1907 = vmatpush1.bf16.msra.mxu0 0
      %1908 = vmatprep.subr.bf16.mxu0 0
      %1909 = vmatpush1.bf16.msra.mxu0 0
      %1910 = vmatprep.subr.bf16.mxu0 0
      %1911 = vmatpush1.bf16.msra.mxu0 0
      %1912 = vmatprep.subr.bf16.mxu0 0
      %1913 = vmatpush1.bf16.msra.mxu0 0
      %1914 = vmatprep.subr.bf16.mxu0 0
      %1915 = vmatpush1.bf16.msra.mxu0 0
      %1916 = vmatprep.subr.bf16.mxu0 0
      %1917 = vmatpush1.bf16.msra.mxu0 0
      %1918 = vmatprep.subr.bf16.mxu0 0
      %1919 = vmatpush1.bf16.msra.mxu0 0
      %1920 = vmatprep.subr.bf16.mxu0 0
      %1921 = vmatpush1.bf16.msra.mxu0 0
      %1922 = vmatprep.subr.bf16.mxu0 0
      %1923 = vmatpush1.bf16.msra.mxu0 0
      %1924 = vmatprep.mubr.bf16.mxu0 0
      %1925 = vmatmul.mubr.bf16.gmra.mrb[0].mxu0 %v1890
      %v1926 = vpop.f32.mrb[0].mxu0
      %v1927 = vadd.f32 0.0, %v1926
      %v1928 = vpop.f32.mrb[0].mxu0
      %v1929 = vpop.f32.mrb[0].mxu0
      %v1930 = vadd.f32 0.0, %v1929
      %v1931 = vpop.f32.mrb[0].mxu0
      %1932 = vdwg.mxu0
      %1933 = vrot.lane.b32.xlu0 %v1583, 48
      %v1934 = vpop.permute.xlu0 %1933
      %v1937 = vsel %vm809, %v1883, 0
      %1939 = vmatprep.subr.bf16.mxu0 0
      %1940 = vmatpush1.bf16.msra.mxu0 %v1934
      %1941 = vmatprep.subr.bf16.mxu0 0
      %1942 = vmatpush1.bf16.msra.mxu0 0
      %1943 = vmatprep.subr.bf16.mxu0 0
      %1944 = vmatpush1.bf16.msra.mxu0 0
      %1945 = vmatprep.subr.bf16.mxu0 0
      %1946 = vmatpush1.bf16.msra.mxu0 0
      %1947 = vmatprep.subr.bf16.mxu0 0
      %1948 = vmatpush1.bf16.msra.mxu0 0
      %1949 = vmatprep.subr.bf16.mxu0 0
      %1950 = vmatpush1.bf16.msra.mxu0 0
      %1951 = vmatprep.subr.bf16.mxu0 0
      %1952 = vmatpush1.bf16.msra.mxu0 0
      %1953 = vmatprep.subr.bf16.mxu0 0
      %1954 = vmatpush1.bf16.msra.mxu0 0
      %1955 = vmatprep.subr.bf16.mxu0 0
      %1956 = vmatpush1.bf16.msra.mxu0 0
      %1957 = vmatprep.subr.bf16.mxu0 0
      %1958 = vmatpush1.bf16.msra.mxu0 0
      %1959 = vmatprep.subr.bf16.mxu0 0
      %1960 = vmatpush1.bf16.msra.mxu0 0
      %1961 = vmatprep.subr.bf16.mxu0 0
      %1962 = vmatpush1.bf16.msra.mxu0 0
      %1963 = vmatprep.subr.bf16.mxu0 0
      %1964 = vmatpush1.bf16.msra.mxu0 0
      %1965 = vmatprep.subr.bf16.mxu0 0
      %1966 = vmatpush1.bf16.msra.mxu0 0
      %1967 = vmatprep.subr.bf16.mxu0 0
      %1968 = vmatpush1.bf16.msra.mxu0 0
      %1969 = vmatprep.subr.bf16.mxu0 0
      %1970 = vmatpush1.bf16.msra.mxu0 0
      %1971 = vmatprep.mubr.bf16.mxu0 0
      %1972 = vmatmul.mubr.bf16.gmra.mrb[0].mxu0 %v1937
      %v1973 = vpop.f32.mrb[0].mxu0
      %v1974 = vadd.f32 0.0, %v1973
      %v1975 = vpop.f32.mrb[0].mxu0
      %v1976 = vpop.f32.mrb[0].mxu0
      %v1977 = vadd.f32 0.0, %v1976
      %v1978 = vpop.f32.mrb[0].mxu0
      %1979 = vdwg.mxu0
      %1980 = vrot.lane.b32.xlu0 %v1584, 48
      %v1981 = vpop.permute.xlu0 %1980
      %v1984 = vsel %vm809, %v1884, 0
      %1986 = vmatprep.subr.bf16.mxu0 0
      %1987 = vmatpush1.bf16.msra.mxu0 %v1981
      %1988 = vmatprep.subr.bf16.mxu0 0
      %1989 = vmatpush1.bf16.msra.mxu0 0
      %1990 = vmatprep.subr.bf16.mxu0 0
      %1991 = vmatpush1.bf16.msra.mxu0 0
      %1992 = vmatprep.subr.bf16.mxu0 0
      %1993 = vmatpush1.bf16.msra.mxu0 0
      %1994 = vmatprep.subr.bf16.mxu0 0
      %1995 = vmatpush1.bf16.msra.mxu0 0
      %1996 = vmatprep.subr.bf16.mxu0 0
      %1997 = vmatpush1.bf16.msra.mxu0 0
      %1998 = vmatprep.subr.bf16.mxu0 0
      %1999 = vmatpush1.bf16.msra.mxu0 0
      %2000 = vmatprep.subr.bf16.mxu0 0
      %2001 = vmatpush1.bf16.msra.mxu0 0
      %2002 = vmatprep.subr.bf16.mxu0 0
      %2003 = vmatpush1.bf16.msra.mxu0 0
      %2004 = vmatprep.subr.bf16.mxu0 0
      %2005 = vmatpush1.bf16.msra.mxu0 0
      %2006 = vmatprep.subr.bf16.mxu0 0
      %2007 = vmatpush1.bf16.msra.mxu0 0
      %2008 = vmatprep.subr.bf16.mxu0 0
      %2009 = vmatpush1.bf16.msra.mxu0 0
      %2010 = vmatprep.subr.bf16.mxu0 0
      %2011 = vmatpush1.bf16.msra.mxu0 0
      %2012 = vmatprep.subr.bf16.mxu0 0
      %2013 = vmatpush1.bf16.msra.mxu0 0
      %2014 = vmatprep.subr.bf16.mxu0 0
      %2015 = vmatpush1.bf16.msra.mxu0 0
      %2016 = vmatprep.subr.bf16.mxu0 0
      %2017 = vmatpush1.bf16.msra.mxu0 0
      %2018 = vmatprep.mubr.bf16.mxu0 0
      %2019 = vmatmul.mubr.bf16.gmra.mrb[0].mxu0 %v1984
      %v2020 = vpop.f32.mrb[0].mxu0
      %v2021 = vadd.f32 0.0, %v2020
      %v2022 = vpop.f32.mrb[0].mxu0
      %v2023 = vpop.f32.mrb[0].mxu0
      %v2024 = vadd.f32 0.0, %v2023
      %v2025 = vpop.f32.mrb[0].mxu0
      %2026 = vdwg.mxu0
      %2027 = vrot.lane.b32.xlu0 %v1585, 48
      %v2028 = vpop.permute.xlu0 %2027
      %v2031 = vsel %vm809, %v1885, 0
      %2033 = vmatprep.subr.bf16.mxu0 0
      %2034 = vmatpush1.bf16.msra.mxu0 %v2028
      %2035 = vmatprep.subr.bf16.mxu0 0
      %2036 = vmatpush1.bf16.msra.mxu0 0
      %2037 = vmatprep.subr.bf16.mxu0 0
      %2038 = vmatpush1.bf16.msra.mxu0 0
      %2039 = vmatprep.subr.bf16.mxu0 0
      %2040 = vmatpush1.bf16.msra.mxu0 0
      %2041 = vmatprep.subr.bf16.mxu0 0
      %2042 = vmatpush1.bf16.msra.mxu0 0
      %2043 = vmatprep.subr.bf16.mxu0 0
      %2044 = vmatpush1.bf16.msra.mxu0 0
      %2045 = vmatprep.subr.bf16.mxu0 0
      %2046 = vmatpush1.bf16.msra.mxu0 0
      %2047 = vmatprep.subr.bf16.mxu0 0
      %2048 = vmatpush1.bf16.msra.mxu0 0
      %2049 = vmatprep.subr.bf16.mxu0 0
      %2050 = vmatpush1.bf16.msra.mxu0 0
      %2051 = vmatprep.subr.bf16.mxu0 0
      %2052 = vmatpush1.bf16.msra.mxu0 0
      %2053 = vmatprep.subr.bf16.mxu0 0
      %2054 = vmatpush1.bf16.msra.mxu0 0
      %2055 = vmatprep.subr.bf16.mxu0 0
      %2056 = vmatpush1.bf16.msra.mxu0 0
      %2057 = vmatprep.subr.bf16.mxu0 0
      %2058 = vmatpush1.bf16.msra.mxu0 0
      %2059 = vmatprep.subr.bf16.mxu0 0
      %2060 = vmatpush1.bf16.msra.mxu0 0
      %2061 = vmatprep.subr.bf16.mxu0 0
      %2062 = vmatpush1.bf16.msra.mxu0 0
      %2063 = vmatprep.subr.bf16.mxu0 0
      %2064 = vmatpush1.bf16.msra.mxu0 0
      %2065 = vmatprep.mubr.bf16.mxu0 0
      %2066 = vmatmul.mubr.bf16.gmra.mrb[0].mxu0 %v2031
      %v2067 = vpop.f32.mrb[0].mxu0
      %v2068 = vadd.f32 0.0, %v2067
      %v2069 = vpop.f32.mrb[0].mxu0
      %v2070 = vpop.f32.mrb[0].mxu0
      %v2071 = vadd.f32 0.0, %v2070
      %v2072 = vpop.f32.mrb[0].mxu0
      %2073 = vdwg.mxu0
      %v2074 = vld [vmem:[#allocation2] sm:$0xff]
      %v2075 = vld [vmem:[#allocation2 + $0x8] sm:$0xff]
      %v2076 = vld [vmem:[#allocation2 + $0x10] sm:$0xff]
      %v2077 = vld [vmem:[#allocation2 + $0x18] sm:$0xff]
      %2079 = vrot.lane.b32.xlu0 %v2074, 104
      %v2080 = vpop.permute.xlu0 %2079
      %2081 = vrot.lane.b32.xlu0 %v2074, 72
      %v2082 = vpop.permute.xlu0 %2081
      %v2084 = vsel %vm611, %v2080, 0
      %v2087 = vsel %vm611, %v2082, 0
      %2089 = vmatprep.subr.bf16.mxu0 0
      %2090 = vmatpush1.bf16.xpose.msra.mxu0 %v2087
      %2091 = vmatprep.subr.bf16.mxu0 0
      %2092 = vmatpush1.bf16.xpose.msra.mxu0 0
      %2093 = vmatprep.subr.bf16.mxu0 0
      %2094 = vmatpush1.bf16.xpose.msra.mxu0 0
      %2095 = vmatprep.subr.bf16.mxu0 0
      %2096 = vmatpush1.bf16.xpose.msra.mxu0 0
      %2097 = vmatprep.subr.bf16.mxu0 0
      %2098 = vmatpush1.bf16.xpose.msra.mxu0 0
      %2099 = vmatprep.subr.bf16.mxu0 0
      %2100 = vmatpush1.bf16.xpose.msra.mxu0 0
      %2101 = vmatprep.subr.bf16.mxu0 0
      %2102 = vmatpush1.bf16.xpose.msra.mxu0 0
      %2103 = vmatprep.subr.bf16.mxu0 0
      %2104 = vmatpush1.bf16.xpose.msra.mxu0 0
      %2105 = vmatprep.subr.bf16.mxu0 0
      %2106 = vmatpush1.bf16.xpose.msra.mxu0 0
      %2107 = vmatprep.subr.bf16.mxu0 0
      %2108 = vmatpush1.bf16.xpose.msra.mxu0 0
      %2109 = vmatprep.subr.bf16.mxu0 0
      %2110 = vmatpush1.bf16.xpose.msra.mxu0 0
      %2111 = vmatprep.subr.bf16.mxu0 0
      %2112 = vmatpush1.bf16.xpose.msra.mxu0 0
      %2113 = vmatprep.subr.bf16.mxu0 0
      %2114 = vmatpush1.bf16.xpose.msra.mxu0 0
      %2115 = vmatprep.subr.bf16.mxu0 0
      %2116 = vmatpush1.bf16.xpose.msra.mxu0 0
      %2117 = vmatprep.subr.bf16.mxu0 0
      %2118 = vmatpush1.bf16.xpose.msra.mxu0 0
      %2119 = vmatprep.subr.bf16.mxu0 0
      %2120 = vmatpush1.bf16.xpose.msra.mxu0 0
      %2121 = vmatprep.mubr.bf16.mxu0 0
      %2122 = vmatmul.mubr.bf16.gmra.mrb[0].mxu0 %v2084
      %v2123 = vpop.f32.mrb[0].mxu0
      %v2124 = vadd.f32 %v578, %v2123
      %v2125 = vpop.f32.mrb[0].mxu0
      %v2126 = vpop.f32.mrb[0].mxu0
      %v2127 = vadd.f32 %v579, %v2126
      %v2128 = vpop.f32.mrb[0].mxu0
      %2129 = vdwg.mxu0
      %2131 = vrot.lane.b32.xlu0 %v2075, 104
      %v2132 = vpop.permute.xlu0 %2131
      %2133 = vrot.lane.b32.xlu0 %v2075, 72
      %v2134 = vpop.permute.xlu0 %2133
      %v2136 = vsel %vm611, %v2132, 0
      %v2139 = vsel %vm611, %v2134, 0
      %2141 = vmatprep.subr.bf16.mxu0 0
      %2142 = vmatpush1.bf16.xpose.msra.mxu0 %v2139
      %2143 = vmatprep.subr.bf16.mxu0 0
      %2144 = vmatpush1.bf16.xpose.msra.mxu0 0
      %2145 = vmatprep.subr.bf16.mxu0 0
      %2146 = vmatpush1.bf16.xpose.msra.mxu0 0
      %2147 = vmatprep.subr.bf16.mxu0 0
      %2148 = vmatpush1.bf16.xpose.msra.mxu0 0
      %2149 = vmatprep.subr.bf16.mxu0 0
      %2150 = vmatpush1.bf16.xpose.msra.mxu0 0
      %2151 = vmatprep.subr.bf16.mxu0 0
      %2152 = vmatpush1.bf16.xpose.msra.mxu0 0
      %2153 = vmatprep.subr.bf16.mxu0 0
      %2154 = vmatpush1.bf16.xpose.msra.mxu0 0
      %2155 = vmatprep.subr.bf16.mxu0 0
      %2156 = vmatpush1.bf16.xpose.msra.mxu0 0
      %2157 = vmatprep.subr.bf16.mxu0 0
      %2158 = vmatpush1.bf16.xpose.msra.mxu0 0
      %2159 = vmatprep.subr.bf16.mxu0 0
      %2160 = vmatpush1.bf16.xpose.msra.mxu0 0
      %2161 = vmatprep.subr.bf16.mxu0 0
      %2162 = vmatpush1.bf16.xpose.msra.mxu0 0
      %2163 = vmatprep.subr.bf16.mxu0 0
      %2164 = vmatpush1.bf16.xpose.msra.mxu0 0
      %2165 = vmatprep.subr.bf16.mxu0 0
      %2166 = vmatpush1.bf16.xpose.msra.mxu0 0
      %2167 = vmatprep.subr.bf16.mxu0 0
      %2168 = vmatpush1.bf16.xpose.msra.mxu0 0
      %2169 = vmatprep.subr.bf16.mxu0 0
      %2170 = vmatpush1.bf16.xpose.msra.mxu0 0
      %2171 = vmatprep.subr.bf16.mxu0 0
      %2172 = vmatpush1.bf16.xpose.msra.mxu0 0
      %2173 = vmatprep.mubr.bf16.mxu0 0
      %2174 = vmatmul.mubr.bf16.gmra.mrb[0].mxu0 %v2136
      %v2175 = vpop.f32.mrb[0].mxu0
      %v2176 = vadd.f32 %v586, %v2175
      %v2177 = vpop.f32.mrb[0].mxu0
      %v2178 = vpop.f32.mrb[0].mxu0
      %v2179 = vadd.f32 %v587, %v2178
      %v2180 = vpop.f32.mrb[0].mxu0
      %2181 = vdwg.mxu0
      %2183 = vrot.lane.b32.xlu0 %v2076, 104
      %v2184 = vpop.permute.xlu0 %2183
      %2185 = vrot.lane.b32.xlu0 %v2076, 72
      %v2186 = vpop.permute.xlu0 %2185
      %v2188 = vsel %vm611, %v2184, 0
      %v2191 = vsel %vm611, %v2186, 0
      %2193 = vmatprep.subr.bf16.mxu0 0
      %2194 = vmatpush1.bf16.xpose.msra.mxu0 %v2191
      %2195 = vmatprep.subr.bf16.mxu0 0
      %2196 = vmatpush1.bf16.xpose.msra.mxu0 0
      %2197 = vmatprep.subr.bf16.mxu0 0
      %2198 = vmatpush1.bf16.xpose.msra.mxu0 0
      %2199 = vmatprep.subr.bf16.mxu0 0
      %2200 = vmatpush1.bf16.xpose.msra.mxu0 0
      %2201 = vmatprep.subr.bf16.mxu0 0
      %2202 = vmatpush1.bf16.xpose.msra.mxu0 0
      %2203 = vmatprep.subr.bf16.mxu0 0
      %2204 = vmatpush1.bf16.xpose.msra.mxu0 0
      %2205 = vmatprep.subr.bf16.mxu0 0
      %2206 = vmatpush1.bf16.xpose.msra.mxu0 0
      %2207 = vmatprep.subr.bf16.mxu0 0
      %2208 = vmatpush1.bf16.xpose.msra.mxu0 0
      %2209 = vmatprep.subr.bf16.mxu0 0
      %2210 = vmatpush1.bf16.xpose.msra.mxu0 0
      %2211 = vmatprep.subr.bf16.mxu0 0
      %2212 = vmatpush1.bf16.xpose.msra.mxu0 0
      %2213 = vmatprep.subr.bf16.mxu0 0
      %2214 = vmatpush1.bf16.xpose.msra.mxu0 0
      %2215 = vmatprep.subr.bf16.mxu0 0
      %2216 = vmatpush1.bf16.xpose.msra.mxu0 0
      %2217 = vmatprep.subr.bf16.mxu0 0
      %2218 = vmatpush1.bf16.xpose.msra.mxu0 0
      %2219 = vmatprep.subr.bf16.mxu0 0
      %2220 = vmatpush1.bf16.xpose.msra.mxu0 0
      %2221 = vmatprep.subr.bf16.mxu0 0
      %2222 = vmatpush1.bf16.xpose.msra.mxu0 0
      %2223 = vmatprep.subr.bf16.mxu0 0
      %2224 = vmatpush1.bf16.xpose.msra.mxu0 0
      %2225 = vmatprep.mubr.bf16.mxu0 0
      %2226 = vmatmul.mubr.bf16.gmra.mrb[0].mxu0 %v2188
      %v2227 = vpop.f32.mrb[0].mxu0
      %v2228 = vadd.f32 %v594, %v2227
      %v2229 = vpop.f32.mrb[0].mxu0
      %v2230 = vpop.f32.mrb[0].mxu0
      %v2231 = vadd.f32 %v595, %v2230
      %v2232 = vpop.f32.mrb[0].mxu0
      %2233 = vdwg.mxu0
      %2235 = vrot.lane.b32.xlu0 %v2077, 104
      %v2236 = vpop.permute.xlu0 %2235
      %2237 = vrot.lane.b32.xlu0 %v2077, 72
      %v2238 = vpop.permute.xlu0 %2237
      %v2240 = vsel %vm611, %v2236, 0
      %v2243 = vsel %vm611, %v2238, 0
      %2245 = vmatprep.subr.bf16.mxu0 0
      %2246 = vmatpush1.bf16.xpose.msra.mxu0 %v2243
      %2247 = vmatprep.subr.bf16.mxu0 0
      %2248 = vmatpush1.bf16.xpose.msra.mxu0 0
      %2249 = vmatprep.subr.bf16.mxu0 0
      %2250 = vmatpush1.bf16.xpose.msra.mxu0 0
      %2251 = vmatprep.subr.bf16.mxu0 0
      %2252 = vmatpush1.bf16.xpose.msra.mxu0 0
      %2253 = vmatprep.subr.bf16.mxu0 0
      %2254 = vmatpush1.bf16.xpose.msra.mxu0 0
      %2255 = vmatprep.subr.bf16.mxu0 0
      %2256 = vmatpush1.bf16.xpose.msra.mxu0 0
      %2257 = vmatprep.subr.bf16.mxu0 0
      %2258 = vmatpush1.bf16.xpose.msra.mxu0 0
      %2259 = vmatprep.subr.bf16.mxu0 0
      %2260 = vmatpush1.bf16.xpose.msra.mxu0 0
      %2261 = vmatprep.subr.bf16.mxu0 0
      %2262 = vmatpush1.bf16.xpose.msra.mxu0 0
      %2263 = vmatprep.subr.bf16.mxu0 0
      %2264 = vmatpush1.bf16.xpose.msra.mxu0 0
      %2265 = vmatprep.subr.bf16.mxu0 0
      %2266 = vmatpush1.bf16.xpose.msra.mxu0 0
      %2267 = vmatprep.subr.bf16.mxu0 0
      %2268 = vmatpush1.bf16.xpose.msra.mxu0 0
      %2269 = vmatprep.subr.bf16.mxu0 0
      %2270 = vmatpush1.bf16.xpose.msra.mxu0 0
      %2271 = vmatprep.subr.bf16.mxu0 0
      %2272 = vmatpush1.bf16.xpose.msra.mxu0 0
      %2273 = vmatprep.subr.bf16.mxu0 0
      %2274 = vmatpush1.bf16.xpose.msra.mxu0 0
      %2275 = vmatprep.subr.bf16.mxu0 0
      %2276 = vmatpush1.bf16.xpose.msra.mxu0 0
      %2277 = vmatprep.mubr.bf16.mxu0 0
      %2278 = vmatmul.mubr.bf16.gmra.mrb[0].mxu0 %v2240
      %v2279 = vpop.f32.mrb[0].mxu0
      %v2280 = vadd.f32 %v602, %v2279
      %v2281 = vpop.f32.mrb[0].mxu0
      %v2282 = vpop.f32.mrb[0].mxu0
      %v2283 = vadd.f32 %v603, %v2282
      %v2284 = vpop.f32.mrb[0].mxu0
      %2285 = vdwg.mxu0
      %v2286 = vsel %vm809, %v2124, -inf
      %2287 = vmax.xlane.f32.xlu0 %v2286
      %v2288 = vpop.xlane.xlu0 %2287
      %v2289 = vsel %vm809, %v2127, -inf
      %2290 = vmax.xlane.f32.xlu0 %v2289
      %v2291 = vpop.xlane.xlu0 %2290
      %v2292 = vsel %vm809, %v2176, -inf
      %2293 = vmax.xlane.f32.xlu0 %v2292
      %v2294 = vpop.xlane.xlu0 %2293
      %v2295 = vsel %vm809, %v2179, -inf
      %2296 = vmax.xlane.f32.xlu0 %v2295
      %v2297 = vpop.xlane.xlu0 %2296
      %v2298 = vsel %vm809, %v2228, -inf
      %2299 = vmax.xlane.f32.xlu0 %v2298
      %v2300 = vpop.xlane.xlu0 %2299
      %v2301 = vsel %vm809, %v2231, -inf
      %2302 = vmax.xlane.f32.xlu0 %v2301
      %v2303 = vpop.xlane.xlu0 %2302
      %v2304 = vsel %vm809, %v2280, -inf
      %2305 = vmax.xlane.f32.xlu0 %v2304
      %v2306 = vpop.xlane.xlu0 %2305
      %v2307 = vsel %vm809, %v2283, -inf
      %2308 = vmax.xlane.f32.xlu0 %v2307
      %v2309 = vpop.xlane.xlu0 %2308
      %v2310 = vsub.f32 %v2124, %v2288
      %v2311 = vsub.f32 %v2127, %v2291
      %v2312 = vsub.f32 %v2176, %v2294
      %v2313 = vsub.f32 %v2179, %v2297
      %v2314 = vsub.f32 %v2228, %v2300
      %v2315 = vsub.f32 %v2231, %v2303
      %v2316 = vsub.f32 %v2280, %v2306
      %v2317 = vsub.f32 %v2283, %v2309
      %v2318 = vmul.f32 %v2310, 1.442695
      %v2319 = vpow.pop %v2318
      %v2320 = vmul.f32 %v2311, 1.442695
      %v2321 = vpow.pop %v2320
      %v2322 = vmul.f32 %v2312, 1.442695
      %v2323 = vpow.pop %v2322
      %v2324 = vmul.f32 %v2313, 1.442695
      %v2325 = vpow.pop %v2324
      %v2326 = vmul.f32 %v2314, 1.442695
      %v2327 = vpow.pop %v2326
      %v2328 = vmul.f32 %v2315, 1.442695
      %v2329 = vpow.pop %v2328
      %v2330 = vmul.f32 %v2316, 1.442695
      %v2331 = vpow.pop %v2330
      %v2332 = vmul.f32 %v2317, 1.442695
      %v2333 = vpow.pop %v2332
      %v2334 = vsel %vm809, %v2319, 0.0
      %2335 = vadd.xlane.f32.xlu0 %v2334
      %v2336 = vpop.xlane.xlu0 %2335
      %v2337 = vsel %vm809, %v2321, 0.0
      %2338 = vadd.xlane.f32.xlu0 %v2337
      %v2339 = vpop.xlane.xlu0 %2338
      %v2340 = vsel %vm809, %v2323, 0.0
      %2341 = vadd.xlane.f32.xlu0 %v2340
      %v2342 = vpop.xlane.xlu0 %2341
      %v2343 = vsel %vm809, %v2325, 0.0
      %2344 = vadd.xlane.f32.xlu0 %v2343
      %v2345 = vpop.xlane.xlu0 %2344
      %v2346 = vsel %vm809, %v2327, 0.0
      %2347 = vadd.xlane.f32.xlu0 %v2346
      %v2348 = vpop.xlane.xlu0 %2347
      %v2349 = vsel %vm809, %v2329, 0.0
      %2350 = vadd.xlane.f32.xlu0 %v2349
      %v2351 = vpop.xlane.xlu0 %2350
      %v2352 = vsel %vm809, %v2331, 0.0
      %2353 = vadd.xlane.f32.xlu0 %v2352
      %v2354 = vpop.xlane.xlu0 %2353
      %v2355 = vsel %vm809, %v2333, 0.0
      %2356 = vadd.xlane.f32.xlu0 %v2355
      %v2357 = vpop.xlane.xlu0 %2356
      %v2358 = vrcp.pop %v2336
      %v2359 = vrcp.pop %v2339
      %v2360 = vrcp.pop %v2342
      %v2361 = vrcp.pop %v2345
      %v2362 = vrcp.pop %v2348
      %v2363 = vrcp.pop %v2351
      %v2364 = vrcp.pop %v2354
      %v2365 = vrcp.pop %v2357
      %v2366 = vmul.f32 %v2319, %v2358
      %v2367 = vmul.f32 %v2321, %v2359
      %v2368 = vmul.f32 %v2323, %v2360
      %v2369 = vmul.f32 %v2325, %v2361
      %v2370 = vmul.f32 %v2327, %v2362
      %v2371 = vmul.f32 %v2329, %v2363
      %v2372 = vmul.f32 %v2331, %v2364
      %v2373 = vmul.f32 %v2333, %v2365
      %v2374 = vpack.c.bf16 %v2367, %v2366
      %v2375 = vpack.c.bf16 %v2369, %v2368
      %v2376 = vpack.c.bf16 %v2371, %v2370
      %v2377 = vpack.c.bf16 %v2373, %v2372
      %2378 = vrot.lane.b32.xlu0 %v2074, 40
      %v2379 = vpop.permute.xlu0 %2378
      %v2382 = vsel %vm809, %v2374, 0
      %2384 = vmatprep.subr.bf16.mxu0 0
      %2385 = vmatpush1.bf16.msra.mxu0 %v2379
      %2386 = vmatprep.subr.bf16.mxu0 0
      %2387 = vmatpush1.bf16.msra.mxu0 0
      %2388 = vmatprep.subr.bf16.mxu0 0
      %2389 = vmatpush1.bf16.msra.mxu0 0
      %2390 = vmatprep.subr.bf16.mxu0 0
      %2391 = vmatpush1.bf16.msra.mxu0 0
      %2392 = vmatprep.subr.bf16.mxu0 0
      %2393 = vmatpush1.bf16.msra.mxu0 0
      %2394 = vmatprep.subr.bf16.mxu0 0
      %2395 = vmatpush1.bf16.msra.mxu0 0
      %2396 = vmatprep.subr.bf16.mxu0 0
      %2397 = vmatpush1.bf16.msra.mxu0 0
      %2398 = vmatprep.subr.bf16.mxu0 0
      %2399 = vmatpush1.bf16.msra.mxu0 0
      %2400 = vmatprep.subr.bf16.mxu0 0
      %2401 = vmatpush1.bf16.msra.mxu0 0
      %2402 = vmatprep.subr.bf16.mxu0 0
      %2403 = vmatpush1.bf16.msra.mxu0 0
      %2404 = vmatprep.subr.bf16.mxu0 0
      %2405 = vmatpush1.bf16.msra.mxu0 0
      %2406 = vmatprep.subr.bf16.mxu0 0
      %2407 = vmatpush1.bf16.msra.mxu0 0
      %2408 = vmatprep.subr.bf16.mxu0 0
      %2409 = vmatpush1.bf16.msra.mxu0 0
      %2410 = vmatprep.subr.bf16.mxu0 0
      %2411 = vmatpush1.bf16.msra.mxu0 0
      %2412 = vmatprep.subr.bf16.mxu0 0
      %2413 = vmatpush1.bf16.msra.mxu0 0
      %2414 = vmatprep.subr.bf16.mxu0 0
      %2415 = vmatpush1.bf16.msra.mxu0 0
      %2416 = vmatprep.mubr.bf16.mxu0 0
      %2417 = vmatmul.mubr.bf16.gmra.mrb[0].mxu0 %v2382
      %v2418 = vpop.f32.mrb[0].mxu0
      %v2419 = vadd.f32 0.0, %v2418
      %v2420 = vpop.f32.mrb[0].mxu0
      %v2421 = vpop.f32.mrb[0].mxu0
      %v2422 = vadd.f32 0.0, %v2421
      %v2423 = vpop.f32.mrb[0].mxu0
      %2424 = vdwg.mxu0
      %2425 = vrot.lane.b32.xlu0 %v2075, 40
      %v2426 = vpop.permute.xlu0 %2425
      %v2429 = vsel %vm809, %v2375, 0
      %2431 = vmatprep.subr.bf16.mxu0 0
      %2432 = vmatpush1.bf16.msra.mxu0 %v2426
      %2433 = vmatprep.subr.bf16.mxu0 0
      %2434 = vmatpush1.bf16.msra.mxu0 0
      %2435 = vmatprep.subr.bf16.mxu0 0
      %2436 = vmatpush1.bf16.msra.mxu0 0
      %2437 = vmatprep.subr.bf16.mxu0 0
      %2438 = vmatpush1.bf16.msra.mxu0 0
      %2439 = vmatprep.subr.bf16.mxu0 0
      %2440 = vmatpush1.bf16.msra.mxu0 0
      %2441 = vmatprep.subr.bf16.mxu0 0
      %2442 = vmatpush1.bf16.msra.mxu0 0
      %2443 = vmatprep.subr.bf16.mxu0 0
      %2444 = vmatpush1.bf16.msra.mxu0 0
      %2445 = vmatprep.subr.bf16.mxu0 0
      %2446 = vmatpush1.bf16.msra.mxu0 0
      %2447 = vmatprep.subr.bf16.mxu0 0
      %2448 = vmatpush1.bf16.msra.mxu0 0
      %2449 = vmatprep.subr.bf16.mxu0 0
      %2450 = vmatpush1.bf16.msra.mxu0 0
      %2451 = vmatprep.subr.bf16.mxu0 0
      %2452 = vmatpush1.bf16.msra.mxu0 0
      %2453 = vmatprep.subr.bf16.mxu0 0
      %2454 = vmatpush1.bf16.msra.mxu0 0
      %2455 = vmatprep.subr.bf16.mxu0 0
      %2456 = vmatpush1.bf16.msra.mxu0 0
      %2457 = vmatprep.subr.bf16.mxu0 0
      %2458 = vmatpush1.bf16.msra.mxu0 0
      %2459 = vmatprep.subr.bf16.mxu0 0
      %2460 = vmatpush1.bf16.msra.mxu0 0
      %2461 = vmatprep.subr.bf16.mxu0 0
      %2462 = vmatpush1.bf16.msra.mxu0 0
      %2463 = vmatprep.mubr.bf16.mxu0 0
      %2464 = vmatmul.mubr.bf16.gmra.mrb[0].mxu0 %v2429
      %v2465 = vpop.f32.mrb[0].mxu0
      %v2466 = vadd.f32 0.0, %v2465
      %v2467 = vpop.f32.mrb[0].mxu0
      %v2468 = vpop.f32.mrb[0].mxu0
      %v2469 = vadd.f32 0.0, %v2468
      %v2470 = vpop.f32.mrb[0].mxu0
      %2471 = vdwg.mxu0
      %2472 = vrot.lane.b32.xlu0 %v2076, 40
      %v2473 = vpop.permute.xlu0 %2472
      %v2476 = vsel %vm809, %v2376, 0
      %2478 = vmatprep.subr.bf16.mxu0 0
      %2479 = vmatpush1.bf16.msra.mxu0 %v2473
      %2480 = vmatprep.subr.bf16.mxu0 0
      %2481 = vmatpush1.bf16.msra.mxu0 0
      %2482 = vmatprep.subr.bf16.mxu0 0
      %2483 = vmatpush1.bf16.msra.mxu0 0
      %2484 = vmatprep.subr.bf16.mxu0 0
      %2485 = vmatpush1.bf16.msra.mxu0 0
      %2486 = vmatprep.subr.bf16.mxu0 0
      %2487 = vmatpush1.bf16.msra.mxu0 0
      %2488 = vmatprep.subr.bf16.mxu0 0
      %2489 = vmatpush1.bf16.msra.mxu0 0
      %2490 = vmatprep.subr.bf16.mxu0 0
      %2491 = vmatpush1.bf16.msra.mxu0 0
      %2492 = vmatprep.subr.bf16.mxu0 0
      %2493 = vmatpush1.bf16.msra.mxu0 0
      %2494 = vmatprep.subr.bf16.mxu0 0
      %2495 = vmatpush1.bf16.msra.mxu0 0
      %2496 = vmatprep.subr.bf16.mxu0 0
      %2497 = vmatpush1.bf16.msra.mxu0 0
      %2498 = vmatprep.subr.bf16.mxu0 0
      %2499 = vmatpush1.bf16.msra.mxu0 0
      %2500 = vmatprep.subr.bf16.mxu0 0
      %2501 = vmatpush1.bf16.msra.mxu0 0
      %2502 = vmatprep.subr.bf16.mxu0 0
      %2503 = vmatpush1.bf16.msra.mxu0 0
      %2504 = vmatprep.subr.bf16.mxu0 0
      %2505 = vmatpush1.bf16.msra.mxu0 0
      %2506 = vmatprep.subr.bf16.mxu0 0
      %2507 = vmatpush1.bf16.msra.mxu0 0
      %2508 = vmatprep.subr.bf16.mxu0 0
      %2509 = vmatpush1.bf16.msra.mxu0 0
      %2510 = vmatprep.mubr.bf16.mxu0 0
      %2511 = vmatmul.mubr.bf16.gmra.mrb[0].mxu0 %v2476
      %v2512 = vpop.f32.mrb[0].mxu0
      %v2513 = vadd.f32 0.0, %v2512
      %v2514 = vpop.f32.mrb[0].mxu0
      %v2515 = vpop.f32.mrb[0].mxu0
      %v2516 = vadd.f32 0.0, %v2515
      %v2517 = vpop.f32.mrb[0].mxu0
      %2518 = vdwg.mxu0
      %2519 = vrot.lane.b32.xlu0 %v2077, 40
      %v2520 = vpop.permute.xlu0 %2519
      %v2523 = vsel %vm809, %v2377, 0
      %2525 = vmatprep.subr.bf16.mxu0 0
      %2526 = vmatpush1.bf16.msra.mxu0 %v2520
      %2527 = vmatprep.subr.bf16.mxu0 0
      %2528 = vmatpush1.bf16.msra.mxu0 0
      %2529 = vmatprep.subr.bf16.mxu0 0
      %2530 = vmatpush1.bf16.msra.mxu0 0
      %2531 = vmatprep.subr.bf16.mxu0 0
      %2532 = vmatpush1.bf16.msra.mxu0 0
      %2533 = vmatprep.subr.bf16.mxu0 0
      %2534 = vmatpush1.bf16.msra.mxu0 0
      %2535 = vmatprep.subr.bf16.mxu0 0
      %2536 = vmatpush1.bf16.msra.mxu0 0
      %2537 = vmatprep.subr.bf16.mxu0 0
      %2538 = vmatpush1.bf16.msra.mxu0 0
      %2539 = vmatprep.subr.bf16.mxu0 0
      %2540 = vmatpush1.bf16.msra.mxu0 0
      %2541 = vmatprep.subr.bf16.mxu0 0
      %2542 = vmatpush1.bf16.msra.mxu0 0
      %2543 = vmatprep.subr.bf16.mxu0 0
      %2544 = vmatpush1.bf16.msra.mxu0 0
      %2545 = vmatprep.subr.bf16.mxu0 0
      %2546 = vmatpush1.bf16.msra.mxu0 0
      %2547 = vmatprep.subr.bf16.mxu0 0
      %2548 = vmatpush1.bf16.msra.mxu0 0
      %2549 = vmatprep.subr.bf16.mxu0 0
      %2550 = vmatpush1.bf16.msra.mxu0 0
      %2551 = vmatprep.subr.bf16.mxu0 0
      %2552 = vmatpush1.bf16.msra.mxu0 0
      %2553 = vmatprep.subr.bf16.mxu0 0
      %2554 = vmatpush1.bf16.msra.mxu0 0
      %2555 = vmatprep.subr.bf16.mxu0 0
      %2556 = vmatpush1.bf16.msra.mxu0 0
      %2557 = vmatprep.mubr.bf16.mxu0 0
      %2558 = vmatmul.mubr.bf16.gmra.mrb[0].mxu0 %v2523
      %v2559 = vpop.f32.mrb[0].mxu0
      %v2560 = vadd.f32 0.0, %v2559
      %v2561 = vpop.f32.mrb[0].mxu0
      %v2562 = vpop.f32.mrb[0].mxu0
      %v2563 = vadd.f32 0.0, %v2562
      %v2564 = vpop.f32.mrb[0].mxu0
      %2565 = vdwg.mxu0
      %2574 = vrot.lane.b32.xlu0 %v1435, 8
      %v2575 = vpop.permute.xlu0 %2574
      %2576 = vrot.lane.b32.xlu0 %v1438, 8
      %v2577 = vpop.permute.xlu0 %2576
      %2578 = vrot.lane.b32.xlu0 %v1482, 8
      %v2579 = vpop.permute.xlu0 %2578
      %2580 = vrot.lane.b32.xlu0 %v1485, 8
      %v2581 = vpop.permute.xlu0 %2580
      %2582 = vrot.lane.b32.xlu0 %v1529, 8
      %v2583 = vpop.permute.xlu0 %2582
      %2584 = vrot.lane.b32.xlu0 %v1532, 8
      %v2585 = vpop.permute.xlu0 %2584
      %2586 = vrot.lane.b32.xlu0 %v1576, 8
      %v2587 = vpop.permute.xlu0 %2586
      %2588 = vrot.lane.b32.xlu0 %v1579, 8
      %v2589 = vpop.permute.xlu0 %2588
      %2606 = vrot.lane.b32.xlu0 %v1927, 16
      %v2607 = vpop.permute.xlu0 %2606
      %2608 = vrot.lane.b32.xlu0 %v1930, 16
      %v2609 = vpop.permute.xlu0 %2608
      %2610 = vrot.lane.b32.xlu0 %v1974, 16
      %v2611 = vpop.permute.xlu0 %2610
      %2612 = vrot.lane.b32.xlu0 %v1977, 16
      %v2613 = vpop.permute.xlu0 %2612
      %2614 = vrot.lane.b32.xlu0 %v2021, 16
      %v2615 = vpop.permute.xlu0 %2614
      %2616 = vrot.lane.b32.xlu0 %v2024, 16
      %v2617 = vpop.permute.xlu0 %2616
      %2618 = vrot.lane.b32.xlu0 %v2068, 16
      %v2619 = vpop.permute.xlu0 %2618
      %2620 = vrot.lane.b32.xlu0 %v2071, 16
      %v2621 = vpop.permute.xlu0 %2620
      %2638 = vrot.lane.b32.xlu0 %v2419, 24
      %v2639 = vpop.permute.xlu0 %2638
      %2640 = vrot.lane.b32.xlu0 %v2422, 24
      %v2641 = vpop.permute.xlu0 %2640
      %2642 = vrot.lane.b32.xlu0 %v2466, 24
      %v2643 = vpop.permute.xlu0 %2642
      %2644 = vrot.lane.b32.xlu0 %v2469, 24
      %v2645 = vpop.permute.xlu0 %2644
      %2646 = vrot.lane.b32.xlu0 %v2513, 24
      %v2647 = vpop.permute.xlu0 %2646
      %2648 = vrot.lane.b32.xlu0 %v2516, 24
      %v2649 = vpop.permute.xlu0 %2648
      %2650 = vrot.lane.b32.xlu0 %v2560, 24
      %v2651 = vpop.permute.xlu0 %2650
      %2652 = vrot.lane.b32.xlu0 %v2563, 24
      %v2653 = vpop.permute.xlu0 %2652
      %v2662 = vsel %vm611, %v943, %v2575
      %v2663 = vsel %vm611, %v946, %v2577
      %v2664 = vsel %vm611, %v990, %v2579
      %v2665 = vsel %vm611, %v993, %v2581
      %v2666 = vsel %vm611, %v1037, %v2583
      %v2667 = vsel %vm611, %v1040, %v2585
      %v2668 = vsel %vm611, %v1084, %v2587
      %v2669 = vsel %vm611, %v1087, %v2589
      %v2670 = vsel %vm809, %v2662, %v2607
      %v2671 = vsel %vm809, %v2663, %v2609
      %v2672 = vsel %vm809, %v2664, %v2611
      %v2673 = vsel %vm809, %v2665, %v2613
      %v2674 = vsel %vm809, %v2666, %v2615
      %v2675 = vsel %vm809, %v2667, %v2617
      %v2676 = vsel %vm809, %v2668, %v2619
      %v2677 = vsel %vm809, %v2669, %v2621
      %vm2678 = vcmask 195584
      %v2679 = vsel %vm2678, %v2670, %v2639
      %v2680 = vsel %vm2678, %v2671, %v2641
      %v2681 = vsel %vm2678, %v2672, %v2643
      %v2682 = vsel %vm2678, %v2673, %v2645
      %v2683 = vsel %vm2678, %v2674, %v2647
      %v2684 = vsel %vm2678, %v2675, %v2649
      %v2685 = vsel %vm2678, %v2676, %v2651
      %v2686 = vsel %vm2678, %v2677, %v2653
      %v2687 = vpack.c.bf16 %v2680, %v2679
      %v2688 = vpack.c.bf16 %v2682, %v2681
      %v2689 = vpack.c.bf16 %v2684, %v2683
      %v2690 = vpack.c.bf16 %v2686, %v2685
      %v2691 = vld [vmem:[%s6] sm:$0xf]
      %v2692 = vld [vmem:[%s6 + $0x4] sm:$0xf]
      %v2693 = vld [vmem:[%s6 + $0x8] sm:$0xf]
      %v2694 = vld [vmem:[%s6 + $0xc] sm:$0xf]
      %v2695 = vld [vmem:[%s7] sm:$0x1]
      %v2697 = vlaneseq
      %v2698 = vshrl.u32 %v2697, 7
      %v2699 = vsub.s32 0, %v2698
      %v2700 = vrot.slane %v2695, %v2699
      %v2706 = vunpack.c.l.b16 %v2691
      %v2707 = vunpack.c.l.b16 %v2692
      %v2708 = vunpack.c.l.b16 %v2693
      %v2709 = vunpack.c.l.b16 %v2694
      %v2710 = vpack.c.b16 %v2707, %v2706
      %v2711 = vpack.c.b16 %v2709, %v2708
      %v2715 = vsel %vm323, %v2687, 0
      %v2718 = vsel %vm323, %v2688, 0
      %v2721 = vsel %vm323, %v2689, 0
      %v2724 = vsel %vm323, %v2690, 0
      %2726 = vmatprep.subr.bf16.mxu0 0
      %2727 = vmatpush1.bf16.msra.mxu0 %v2710
      %2728 = vmatprep.subr.bf16.mxu0 0
      %2729 = vmatpush1.bf16.msra.mxu0 %v2711
      %2730 = vmatprep.subr.bf16.mxu0 0
      %2731 = vmatpush1.bf16.msra.mxu0 0
      %2732 = vmatprep.subr.bf16.mxu0 0
      %2733 = vmatpush1.bf16.msra.mxu0 0
      %2734 = vmatprep.subr.bf16.mxu0 0
      %2735 = vmatpush1.bf16.msra.mxu0 0
      %2736 = vmatprep.subr.bf16.mxu0 0
      %2737 = vmatpush1.bf16.msra.mxu0 0
      %2738 = vmatprep.subr.bf16.mxu0 0
      %2739 = vmatpush1.bf16.msra.mxu0 0
      %2740 = vmatprep.subr.bf16.mxu0 0
      %2741 = vmatpush1.bf16.msra.mxu0 0
      %2742 = vmatprep.subr.bf16.mxu0 0
      %2743 = vmatpush1.bf16.msra.mxu0 0
      %2744 = vmatprep.subr.bf16.mxu0 0
      %2745 = vmatpush1.bf16.msra.mxu0 0
      %2746 = vmatprep.subr.bf16.mxu0 0
      %2747 = vmatpush1.bf16.msra.mxu0 0
      %2748 = vmatprep.subr.bf16.mxu0 0
      %2749 = vmatpush1.bf16.msra.mxu0 0
      %2750 = vmatprep.subr.bf16.mxu0 0
      %2751 = vmatpush1.bf16.msra.mxu0 0
      %2752 = vmatprep.subr.bf16.mxu0 0
      %2753 = vmatpush1.bf16.msra.mxu0 0
      %2754 = vmatprep.subr.bf16.mxu0 0
      %2755 = vmatpush1.bf16.msra.mxu0 0
      %2756 = vmatprep.subr.bf16.mxu0 0
      %2757 = vmatpush1.bf16.msra.mxu0 0
      %2758 = vmatprep.mubr.bf16.mxu0 0
      %2759 = vmatmul.mubr.bf16.gmra.mrb[0].mxu0 %v2715
      %v2760 = vpop.f32.mrb[0].mxu0
      %v2761 = vadd.f32 %v2700, %v2760
      %v2762 = vpop.f32.mrb[0].mxu0
      %v2763 = vpop.f32.mrb[0].mxu0
      %v2764 = vadd.f32 %v2700, %v2763
      %v2765 = vpop.f32.mrb[0].mxu0
      %2766 = vmatprep.mubr.bf16.mxu0 0
      %2767 = vmatmul.mubr.bf16.gmra.mrb[0].mxu0 %v2718
      %v2768 = vpop.f32.mrb[0].mxu0
      %v2769 = vadd.f32 %v2700, %v2768
      %v2770 = vpop.f32.mrb[0].mxu0
      %v2771 = vpop.f32.mrb[0].mxu0
      %v2772 = vadd.f32 %v2700, %v2771
      %v2773 = vpop.f32.mrb[0].mxu0
      %2774 = vmatprep.mubr.bf16.mxu0 0
      %2775 = vmatmul.mubr.bf16.gmra.mrb[0].mxu0 %v2721
      %v2776 = vpop.f32.mrb[0].mxu0
      %v2777 = vadd.f32 %v2700, %v2776
      %v2778 = vpop.f32.mrb[0].mxu0
      %v2779 = vpop.f32.mrb[0].mxu0
      %v2780 = vadd.f32 %v2700, %v2779
      %v2781 = vpop.f32.mrb[0].mxu0
      %2782 = vmatprep.mubr.bf16.mxu0 0
      %2783 = vmatmul.mubr.bf16.gmra.mrb[0].mxu0 %v2724
      %v2784 = vpop.f32.mrb[0].mxu0
      %v2785 = vadd.f32 %v2700, %v2784
      %v2786 = vpop.f32.mrb[0].mxu0
      %v2787 = vpop.f32.mrb[0].mxu0
      %v2788 = vadd.f32 %v2700, %v2787
      %v2789 = vpop.f32.mrb[0].mxu0
      %2790 = vdwg.mxu0
      %v2791 = vadd.f32 %v315, %v2761
      %v2792 = vadd.f32 %v316, %v2764
      %v2793 = vadd.f32 %v317, %v2769
      %v2794 = vadd.f32 %v318, %v2772
      %v2795 = vadd.f32 %v319, %v2777
      %v2796 = vadd.f32 %v320, %v2780
      %v2797 = vadd.f32 %v321, %v2785
      %v2798 = vadd.f32 %v322, %v2788
      %2799 = vst.msk [vmem:[%s312] sm:$0xff] %vm323, %v2791
      %2800 = vst.msk [vmem:[%s312 + $0x8] sm:$0xff] %vm323, %v2792
      %2801 = vst.msk [vmem:[%s312 + $0x10] sm:$0xff] %vm323, %v2793
      %2802 = vst.msk [vmem:[%s312 + $0x18] sm:$0xff] %vm323, %v2794
      %2803 = vst.msk [vmem:[%s312 + $0x20] sm:$0xff] %vm323, %v2795
      %2804 = vst.msk [vmem:[%s312 + $0x28] sm:$0xff] %vm323, %v2796
      %2805 = vst.msk [vmem:[%s312 + $0x30] sm:$0xff] %vm323, %v2797
      %2806 = vst.msk [vmem:[%s312 + $0x38] sm:$0xff] %vm323, %v2798
      %s2807 = smul.u32 4, %s19
      %p2808 = scmp.lt.s32.totalorder %s2807, 15
      %s2809 = scalar_select %p2808, %s2807, 15
      %s2810 = smul.addr %s2809, 2
      %s2811 = smul.addr %s2810, 8
      %s2812 = scalar_lea.vmem %s8, %s2811
      // Predicated region
      $region53: #{space_transformer_forward.6} parent=51 // pred_check
        %p2813 = pneg %p210
      $region54: #{space_transformer_forward.6} parent=51 // pred_check_branch
        %2815 = sbr.rel (%p2813) target = $region56
      $region55: #{space_transformer_forward.6} parent=51 // pred_region
        %s2816 = smul.u32 4, %s19
      $region56: #{space_transformer_forward.6} parent=51 // pred_fallthru
        _
    $region52: #{space_transformer_forward.6} parent=5 // pred_fallthru
      _
    %p2817 = scmp.le.s32.totalorder 2, %s14
    // Predicated region
    $region57: #{space_transformer_forward.6} parent=5 // pred_check
      %p2818 = pneg %p2817
    $region58: #{space_transformer_forward.6} parent=5 // pred_check_branch
      %2820 = sbr.rel (%p2818) target = $region60
    $region59: #{space_transformer_forward.6} parent=5 // pred_region
      %s2821 = ssub.s32 %s14, 2
      // Predicated region
      $region61: #{space_transformer_forward.6} parent=59 // pred_check
        %p2822 = pneg %p216
      $region62: #{space_transformer_forward.6} parent=59 // pred_check_branch
        %2824 = sbr.rel (%p2822) target = $region64
      $region63: #{space_transformer_forward.6} parent=59 // pred_region
        %s2825 = smul.u32 4, %s20
        %p2826 = scmp.lt.s32.totalorder %s2825, 15
        %s2827 = scalar_select %p2826, %s2825, 15
        %s2828 = smul.addr %s2827, 2
        %s2829 = smul.addr %s2828, 8
        %s2830 = scalar_lea.vmem %s8, %s2829
      $region64: #{space_transformer_forward.6} parent=59 // pred_fallthru
        _
    $region60: #{space_transformer_forward.6} parent=5 // pred_fallthru
      _
  $region6: #{space_transformer_forward.6} parent=0 // loop_footer
    %s18 = sadd.s32 1, %s14
  $region7: #{space_transformer_forward.6} parent=0 // loop_footer_branch
    %13 = sbr.rel target = $region3
  $region8: #{space_transformer_forward.6} parent=0 // loop_exit
    _

// kernel: space_transformer_forward.4
$region0: #{space_transformer_forward.4}
  #allocation0 [shape = 'u32[]', space=smem, size = 0x4, offset = 0x4, fixed_abs, tag = 'smem constant byte address 0x4 - core index']
  #allocation1 [shape = 'u32[144,128]{1,0:T(1,128)}', space=vmem, size = 0x12000, scoped, tag = 'internal scratch']
  #allocation2 [shape = 'bf16[8,16,96]{2,1,0:T(16,128)(2,1)}', space=vmem, size = 0x8000, scoped, tag = 'scratch operand']
  %s0 = inlined_call_operand.vmem [shape: f32[16,16,32], index: 0, kind: input, shape index: {}]
  %s1 = inlined_call_operand.vmem [shape: f32[1,4,16,16], index: 1, kind: input, shape index: {}]
  %s2 = inlined_call_operand.vmem [shape: f32[1,1,32], index: 2, kind: input, shape index: {}]
  %s3 = inlined_call_operand.vmem [shape: f32[1,1,32], index: 3, kind: input, shape index: {}]
  %s4 = inlined_call_operand.vmem [shape: bf16[32,96], index: 4, kind: input, shape index: {}]
  %s5 = inlined_call_operand.vmem [shape: f32[1,96], index: 5, kind: input, shape index: {}]
  %s6 = inlined_call_operand.vmem [shape: bf16[32,32], index: 6, kind: input, shape index: {}]
  %s7 = inlined_call_operand.vmem [shape: f32[1,32], index: 7, kind: input, shape index: {}]
  %s8 = inlined_call_operand.vmem [shape: f32[16,16,32], index: 8, kind: output, shape index: {}]
  %s9 = sld [smem:[#allocation0]]
  $region65: #{space_transformer_forward.4} parent=0
    _
  %s11 = ssub.s32 1, %s9
  %s12 = scalar_select 0, %s11, %s9
  loop: start=0, step=1, limit=4
  $region2: #{space_transformer_forward.4} parent=0 // loop_pre_header
    _
  $region3: #{space_transformer_forward.4} parent=0 // loop_header
    %s14 = sphi 0, %s18
    %p15 = scmp.ge.s32.totalorder %s14, 4
    %s24 = sphi 0, %s26
    %s27 = sphi 0, %s24
    %s28 = sphi 0, %s27
    %s44 = sphi 0, %s28
    %s48 = sphi 0, %s48
    %s50 = sphi 0, %s48
    %s51 = sphi 0, %s50
    %s65 = sphi 0, %s51
    %s69 = sphi 0, %s69
    %s71 = sphi 0, %s69
    %s72 = sphi 0, %s71
    %s86 = sphi 0, %s72
    %s90 = sphi 0, %s90
    %s92 = sphi 0, %s90
    %s93 = sphi 0, %s92
    %s107 = sphi 0, %s93
    %s111 = sphi 0, %s111
    %s113 = sphi 0, %s111
    %s114 = sphi 0, %s113
    %s128 = sphi 0, %s114
    %s132 = sphi 0, %s132
    %s134 = sphi 0, %s132
    %s135 = sphi 0, %s134
    %s149 = sphi 0, %s135
    %s153 = sphi 0, %s153
    %s155 = sphi 0, %s153
    %s156 = sphi 0, %s155
    %s170 = sphi 0, %s156
    %s174 = sphi 0, %s174
    %s176 = sphi 0, %s174
    %s177 = sphi 0, %s176
    %s191 = sphi 0, %s177
    %s197 = sphi 0, %s199
    %s200 = sphi 0, %s197
    %s201 = sphi 0, %s200
    %s217 = sphi 0, %s201
  $region4: #{space_transformer_forward.4} parent=0 // loop_header_branch
    %17 = sbr.rel (%p15) target = $region8
  $region5: #{space_transformer_forward.4} parent=0 // loop_body
    %s19 = ssub.s32 %s14, 1
    %s20 = ssub.s32 %s14, 2
    %s21 = sadd.s32 %s14, 1
    %s22 = ssub.s32 %s14, %s21
    %p23 = scmp.eq.s32.totalorder %s22, 0
    %s25 = sadd.s32 %s24, 1
    %s26 = scalar_select %p23, %s24, %s25
    %p29 = pneg %p23
    %p30 = scmp.eq.s32.totalorder %s14, 1
    %p31 = por %p29, %p30
    %p32 = scmp.ne.s32.totalorder %s24, %s27
    %p33 = scmp.eq.s32.totalorder %s14, 0
    %p34 = por %p32, %p33
    %p35 = scmp.ne.s32.totalorder %s24, %s27
    %p36 = scmp.eq.s32.totalorder %s19, 1
    %p37 = por %p35, %p36
    %p38 = scmp.ne.s32.totalorder %s27, %s28
    %p39 = scmp.eq.s32.totalorder %s19, 0
    %p40 = por %p38, %p39
    %p41 = scmp.ne.s32.totalorder %s27, %s28
    %p42 = scmp.eq.s32.totalorder %s20, 1
    %p43 = por %p41, %p42
    %p45 = scmp.ne.s32.totalorder %s28, %s44
    %p46 = scmp.eq.s32.totalorder %s20, 0
    %p47 = por %p45, %p46
    %s49 = sadd.s32 %s48, 1
    %p52 = scmp.eq.s32.totalorder %s14, 1
    %p53 = scmp.ne.s32.totalorder %s48, %s50
    %p54 = scmp.eq.s32.totalorder %s14, 0
    %p55 = por %p53, %p54
    %p56 = scmp.ne.s32.totalorder %s48, %s50
    %p57 = scmp.eq.s32.totalorder %s19, 1
    %p58 = por %p56, %p57
    %p59 = scmp.ne.s32.totalorder %s50, %s51
    %p60 = scmp.eq.s32.totalorder %s19, 0
    %p61 = por %p59, %p60
    %p62 = scmp.ne.s32.totalorder %s50, %s51
    %p63 = scmp.eq.s32.totalorder %s20, 1
    %p64 = por %p62, %p63
    %p66 = scmp.ne.s32.totalorder %s51, %s65
    %p67 = scmp.eq.s32.totalorder %s20, 0
    %p68 = por %p66, %p67
    %s70 = sadd.s32 %s69, 1
    %p73 = scmp.eq.s32.totalorder %s14, 1
    %p74 = scmp.ne.s32.totalorder %s69, %s71
    %p75 = scmp.eq.s32.totalorder %s14, 0
    %p76 = por %p74, %p75
    %p77 = scmp.ne.s32.totalorder %s69, %s71
    %p78 = scmp.eq.s32.totalorder %s19, 1
    %p79 = por %p77, %p78
    %p80 = scmp.ne.s32.totalorder %s71, %s72
    %p81 = scmp.eq.s32.totalorder %s19, 0
    %p82 = por %p80, %p81
    %p83 = scmp.ne.s32.totalorder %s71, %s72
    %p84 = scmp.eq.s32.totalorder %s20, 1
    %p85 = por %p83, %p84
    %p87 = scmp.ne.s32.totalorder %s72, %s86
    %p88 = scmp.eq.s32.totalorder %s20, 0
    %p89 = por %p87, %p88
    %s91 = sadd.s32 %s90, 1
    %p94 = scmp.eq.s32.totalorder %s14, 1
    %p95 = scmp.ne.s32.totalorder %s90, %s92
    %p96 = scmp.eq.s32.totalorder %s14, 0
    %p97 = por %p95, %p96
    %p98 = scmp.ne.s32.totalorder %s90, %s92
    %p99 = scmp.eq.s32.totalorder %s19, 1
    %p100 = por %p98, %p99
    %p101 = scmp.ne.s32.totalorder %s92, %s93
    %p102 = scmp.eq.s32.totalorder %s19, 0
    %p103 = por %p101, %p102
    %p104 = scmp.ne.s32.totalorder %s92, %s93
    %p105 = scmp.eq.s32.totalorder %s20, 1
    %p106 = por %p104, %p105
    %p108 = scmp.ne.s32.totalorder %s93, %s107
    %p109 = scmp.eq.s32.totalorder %s20, 0
    %p110 = por %p108, %p109
    %s112 = sadd.s32 %s111, 1
    %p115 = scmp.eq.s32.totalorder %s14, 1
    %p116 = scmp.ne.s32.totalorder %s111, %s113
    %p117 = scmp.eq.s32.totalorder %s14, 0
    %p118 = por %p116, %p117
    %p119 = scmp.ne.s32.totalorder %s111, %s113
    %p120 = scmp.eq.s32.totalorder %s19, 1
    %p121 = por %p119, %p120
    %p122 = scmp.ne.s32.totalorder %s113, %s114
    %p123 = scmp.eq.s32.totalorder %s19, 0
    %p124 = por %p122, %p123
    %p125 = scmp.ne.s32.totalorder %s113, %s114
    %p126 = scmp.eq.s32.totalorder %s20, 1
    %p127 = por %p125, %p126
    %p129 = scmp.ne.s32.totalorder %s114, %s128
    %p130 = scmp.eq.s32.totalorder %s20, 0
    %p131 = por %p129, %p130
    %s133 = sadd.s32 %s132, 1
    %p136 = scmp.eq.s32.totalorder %s14, 1
    %p137 = scmp.ne.s32.totalorder %s132, %s134
    %p138 = scmp.eq.s32.totalorder %s14, 0
    %p139 = por %p137, %p138
    %p140 = scmp.ne.s32.totalorder %s132, %s134
    %p141 = scmp.eq.s32.totalorder %s19, 1
    %p142 = por %p140, %p141
    %p143 = scmp.ne.s32.totalorder %s134, %s135
    %p144 = scmp.eq.s32.totalorder %s19, 0
    %p145 = por %p143, %p144
    %p146 = scmp.ne.s32.totalorder %s134, %s135
    %p147 = scmp.eq.s32.totalorder %s20, 1
    %p148 = por %p146, %p147
    %p150 = scmp.ne.s32.totalorder %s135, %s149
    %p151 = scmp.eq.s32.totalorder %s20, 0
    %p152 = por %p150, %p151
    %s154 = sadd.s32 %s153, 1
    %p157 = scmp.eq.s32.totalorder %s14, 1
    %p158 = scmp.ne.s32.totalorder %s153, %s155
    %p159 = scmp.eq.s32.totalorder %s14, 0
    %p160 = por %p158, %p159
    %p161 = scmp.ne.s32.totalorder %s153, %s155
    %p162 = scmp.eq.s32.totalorder %s19, 1
    %p163 = por %p161, %p162
    %p164 = scmp.ne.s32.totalorder %s155, %s156
    %p165 = scmp.eq.s32.totalorder %s19, 0
    %p166 = por %p164, %p165
    %p167 = scmp.ne.s32.totalorder %s155, %s156
    %p168 = scmp.eq.s32.totalorder %s20, 1
    %p169 = por %p167, %p168
    %p171 = scmp.ne.s32.totalorder %s156, %s170
    %p172 = scmp.eq.s32.totalorder %s20, 0
    %p173 = por %p171, %p172
    %s175 = sadd.s32 %s174, 1
    %p178 = scmp.eq.s32.totalorder %s14, 1
    %p179 = scmp.ne.s32.totalorder %s174, %s176
    %p180 = scmp.eq.s32.totalorder %s14, 0
    %p181 = por %p179, %p180
    %p182 = scmp.ne.s32.totalorder %s174, %s176
    %p183 = scmp.eq.s32.totalorder %s19, 1
    %p184 = por %p182, %p183
    %p185 = scmp.ne.s32.totalorder %s176, %s177
    %p186 = scmp.eq.s32.totalorder %s19, 0
    %p187 = por %p185, %p186
    %p188 = scmp.ne.s32.totalorder %s176, %s177
    %p189 = scmp.eq.s32.totalorder %s20, 1
    %p190 = por %p188, %p189
    %p192 = scmp.ne.s32.totalorder %s177, %s191
    %p193 = scmp.eq.s32.totalorder %s20, 0
    %p194 = por %p192, %p193
    %s195 = ssub.s32 %s14, %s21
    %p196 = scmp.eq.s32.totalorder %s195, 0
    %s198 = sadd.s32 %s197, 1
    %s199 = scalar_select %p196, %s197, %s198
    %p202 = pneg %p196
    %p203 = scmp.eq.s32.totalorder %s14, 1
    %p204 = por %p202, %p203
    %p205 = scmp.ne.s32.totalorder %s197, %s200
    %p206 = scmp.eq.s32.totalorder %s14, 0
    %p207 = por %p205, %p206
    %p208 = scmp.ne.s32.totalorder %s197, %s200
    %p209 = scmp.eq.s32.totalorder %s19, 1
    %p210 = por %p208, %p209
    %p211 = scmp.ne.s32.totalorder %s200, %s201
    %p212 = scmp.eq.s32.totalorder %s19, 0
    %p213 = por %p211, %p212
    %p214 = scmp.ne.s32.totalorder %s200, %s201
    %p215 = scmp.eq.s32.totalorder %s20, 1
    %p216 = por %p214, %p215
    %p218 = scmp.ne.s32.totalorder %s201, %s217
    %p219 = scmp.eq.s32.totalorder %s20, 0
    %p220 = por %p218, %p219
    %p221 = scmp.le.s32.totalorder 1, %s14
    %p222 = scmp.lt.s32.totalorder %s14, 3
    %p223 = pnand %p221, %p222
    %p224 = pneg %p223
    // Predicated region
    $region9: #{space_transformer_forward.4} parent=5 // pred_check
      _
    $region10: #{space_transformer_forward.4} parent=5 // pred_check_branch
      %226 = sbr.rel (%p223) target = $region12
    $region11: #{space_transformer_forward.4} parent=5 // pred_region
      %s227 = ssub.s32 %s14, 1
      // Predicated region
      $region13: #{space_transformer_forward.4} parent=11 // pred_check
        %p228 = pneg %p61
      $region14: #{space_transformer_forward.4} parent=11 // pred_check_branch
        %230 = sbr.rel (%p228) target = $region16
      $region15: #{space_transformer_forward.4} parent=11 // pred_region
        _
      $region16: #{space_transformer_forward.4} parent=11 // pred_fallthru
        _
      // Predicated region
      $region17: #{space_transformer_forward.4} parent=11 // pred_check
        %p231 = pneg %p82
      $region18: #{space_transformer_forward.4} parent=11 // pred_check_branch
        %233 = sbr.rel (%p231) target = $region20
      $region19: #{space_transformer_forward.4} parent=11 // pred_region
        _
      $region20: #{space_transformer_forward.4} parent=11 // pred_fallthru
        _
      // Predicated region
      $region21: #{space_transformer_forward.4} parent=11 // pred_check
        %p234 = pneg %p103
      $region22: #{space_transformer_forward.4} parent=11 // pred_check_branch
        %236 = sbr.rel (%p234) target = $region24
      $region23: #{space_transformer_forward.4} parent=11 // pred_region
        _
      $region24: #{space_transformer_forward.4} parent=11 // pred_fallthru
        _
      // Predicated region
      $region25: #{space_transformer_forward.4} parent=11 // pred_check
        %p237 = pneg %p124
      $region26: #{space_transformer_forward.4} parent=11 // pred_check_branch
        %239 = sbr.rel (%p237) target = $region28
      $region27: #{space_transformer_forward.4} parent=11 // pred_region
        _
      $region28: #{space_transformer_forward.4} parent=11 // pred_fallthru
        _
      // Predicated region
      $region29: #{space_transformer_forward.4} parent=11 // pred_check
        %p240 = pneg %p145
      $region30: #{space_transformer_forward.4} parent=11 // pred_check_branch
        %242 = sbr.rel (%p240) target = $region32
      $region31: #{space_transformer_forward.4} parent=11 // pred_region
        _
      $region32: #{space_transformer_forward.4} parent=11 // pred_fallthru
        _
      // Predicated region
      $region33: #{space_transformer_forward.4} parent=11 // pred_check
        %p243 = pneg %p166
      $region34: #{space_transformer_forward.4} parent=11 // pred_check_branch
        %245 = sbr.rel (%p243) target = $region36
      $region35: #{space_transformer_forward.4} parent=11 // pred_region
        _
      $region36: #{space_transformer_forward.4} parent=11 // pred_fallthru
        _
      // Predicated region
      $region37: #{space_transformer_forward.4} parent=11 // pred_check
        %p246 = pneg %p187
      $region38: #{space_transformer_forward.4} parent=11 // pred_check_branch
        %248 = sbr.rel (%p246) target = $region40
      $region39: #{space_transformer_forward.4} parent=11 // pred_region
        _
      $region40: #{space_transformer_forward.4} parent=11 // pred_fallthru
        _
    $region12: #{space_transformer_forward.4} parent=5 // pred_fallthru
      _
    %p249 = scmp.lt.s32.totalorder %s14, 2
    // Predicated region
    $region41: #{space_transformer_forward.4} parent=5 // pred_check
      %p250 = pneg %p249
    $region42: #{space_transformer_forward.4} parent=5 // pred_check_branch
      %252 = sbr.rel (%p250) target = $region44
    $region43: #{space_transformer_forward.4} parent=5 // pred_region
      // Predicated region
      $region45: #{space_transformer_forward.4} parent=43 // pred_check
        %p253 = pneg %p34
      $region46: #{space_transformer_forward.4} parent=43 // pred_check_branch
        %255 = sbr.rel (%p253) target = $region48
      $region47: #{space_transformer_forward.4} parent=43 // pred_region
        %s256 = smul.u32 8, %s14
        %p257 = scmp.lt.s32.totalorder %s256, 15
        %s258 = scalar_select %p257, %s256, 15
        %s259 = smul.addr %s258, 2
        %s260 = smul.addr %s259, 8
        %s261 = scalar_lea.vmem %s0, %s260
        %s262 = smul.u32 8, %s14
      $region48: #{space_transformer_forward.4} parent=43 // pred_fallthru
        _
    $region44: #{space_transformer_forward.4} parent=5 // pred_fallthru
      _
    %p263 = scmp.le.s32.totalorder 1, %s14
    %p264 = scmp.lt.s32.totalorder %s14, 3
    %p265 = pnand %p263, %p264
    %p266 = pneg %p265
    // Predicated region
    $region49: #{space_transformer_forward.4} parent=5 // pred_check
      _
    $region50: #{space_transformer_forward.4} parent=5 // pred_check_branch
      %268 = sbr.rel (%p265) target = $region52
    $region51: #{space_transformer_forward.4} parent=5 // pred_region
      %s269 = ssub.s32 %s14, 1
      %s270 = smul.u32 8, %s19
      %p271 = scmp.lt.s32.totalorder %s270, 15
      %s272 = scalar_select %p271, %s270, 15
      %s273 = smul.addr %s272, 2
      %s274 = smul.addr %s273, 8
      %s275 = scalar_lea.vmem %s0, %s274
      %p276 = pneg %p40
      %p277 = pneg %p37
      %p278 = pneg %p61
      %p279 = pneg %p58
      %p280 = pneg %p82
      %p281 = pneg %p79
      %p282 = pneg %p103
      %p283 = pneg %p100
      %p284 = pneg %p124
      %p285 = pneg %p121
      %p286 = pneg %p145
      %p287 = pneg %p142
      %p288 = pneg %p166
      %p289 = pneg %p163
      %p290 = pneg %p187
      %p291 = pneg %p184
      %p292 = pneg %p213
      %p293 = pneg %p210
      %s294 = smul.u32 8, %s19
      %p295 = scmp.lt.s32.totalorder %s294, 15
      %s296 = scalar_select %p295, %s294, 15
      %s297 = smul.addr %s296, 2
      %s298 = smul.addr %s297, 8
      %s299 = scalar_lea.vmem %s8, %s298
      %s300 = smul.u32 8, %s19
      %p301 = scmp.lt.s32.totalorder %s300, 15
      %s302 = scalar_select %p301, %s300, 15
      %s303 = smul.addr %s302, 2
      %s304 = smul.addr %s303, 8
      %s305 = scalar_lea.vmem %s0, %s304
      %s306 = smul.u32 8, %s19
      %s307 = smul.u32 8, %s19
      %p308 = scmp.lt.s32.totalorder %s307, 15
      %s309 = scalar_select %p308, %s307, 15
      %s310 = smul.addr %s309, 2
      %s311 = smul.addr %s310, 8
      %s312 = scalar_lea.vmem %s8, %s311
      %s313 = smul.u32 8, %s19
      %v315 = vld [vmem:[%s305] sm:$0xff]
      %v316 = vld [vmem:[%s305 + $0x8] sm:$0xff]
      %v317 = vld [vmem:[%s305 + $0x10] sm:$0xff]
      %v318 = vld [vmem:[%s305 + $0x18] sm:$0xff]
      %v319 = vld [vmem:[%s305 + $0x20] sm:$0xff]
      %v320 = vld [vmem:[%s305 + $0x28] sm:$0xff]
      %v321 = vld [vmem:[%s305 + $0x30] sm:$0xff]
      %v322 = vld [vmem:[%s305 + $0x38] sm:$0xff]
      %v323 = vld [vmem:[%s305 + $0x40] sm:$0xff]
      %v324 = vld [vmem:[%s305 + $0x48] sm:$0xff]
      %v325 = vld [vmem:[%s305 + $0x50] sm:$0xff]
      %v326 = vld [vmem:[%s305 + $0x58] sm:$0xff]
      %v327 = vld [vmem:[%s305 + $0x60] sm:$0xff]
      %v328 = vld [vmem:[%s305 + $0x68] sm:$0xff]
      %v329 = vld [vmem:[%s305 + $0x70] sm:$0xff]
      %v330 = vld [vmem:[%s305 + $0x78] sm:$0xff]
      %vm331 = vcmask 261120
      %v332 = vsel %vm331, %v315, 0.0
      %333 = vadd.xlane.f32.xlu0 %v332
      %v334 = vpop.xlane.xlu0 %333
      %v335 = vsel %vm331, %v316, 0.0
      %336 = vadd.xlane.f32.xlu0 %v335
      %v337 = vpop.xlane.xlu0 %336
      %v338 = vsel %vm331, %v317, 0.0
      %339 = vadd.xlane.f32.xlu0 %v338
      %v340 = vpop.xlane.xlu0 %339
      %v341 = vsel %vm331, %v318, 0.0
      %342 = vadd.xlane.f32.xlu0 %v341
      %v343 = vpop.xlane.xlu0 %342
      %v344 = vsel %vm331, %v319, 0.0
      %345 = vadd.xlane.f32.xlu0 %v344
      %v346 = vpop.xlane.xlu0 %345
      %v347 = vsel %vm331, %v320, 0.0
      %348 = vadd.xlane.f32.xlu0 %v347
      %v349 = vpop.xlane.xlu0 %348
      %v350 = vsel %vm331, %v321, 0.0
      %351 = vadd.xlane.f32.xlu0 %v350
      %v352 = vpop.xlane.xlu0 %351
      %v353 = vsel %vm331, %v322, 0.0
      %354 = vadd.xlane.f32.xlu0 %v353
      %v355 = vpop.xlane.xlu0 %354
      %v356 = vsel %vm331, %v323, 0.0
      %357 = vadd.xlane.f32.xlu0 %v356
      %v358 = vpop.xlane.xlu0 %357
      %v359 = vsel %vm331, %v324, 0.0
      %360 = vadd.xlane.f32.xlu0 %v359
      %v361 = vpop.xlane.xlu0 %360
      %v362 = vsel %vm331, %v325, 0.0
      %363 = vadd.xlane.f32.xlu0 %v362
      %v364 = vpop.xlane.xlu0 %363
      %v365 = vsel %vm331, %v326, 0.0
      %366 = vadd.xlane.f32.xlu0 %v365
      %v367 = vpop.xlane.xlu0 %366
      %v368 = vsel %vm331, %v327, 0.0
      %369 = vadd.xlane.f32.xlu0 %v368
      %v370 = vpop.xlane.xlu0 %369
      %v371 = vsel %vm331, %v328, 0.0
      %372 = vadd.xlane.f32.xlu0 %v371
      %v373 = vpop.xlane.xlu0 %372
      %v374 = vsel %vm331, %v329, 0.0
      %375 = vadd.xlane.f32.xlu0 %v374
      %v376 = vpop.xlane.xlu0 %375
      %v377 = vsel %vm331, %v330, 0.0
      %378 = vadd.xlane.f32.xlu0 %v377
      %v379 = vpop.xlane.xlu0 %378
      %v380 = vrcp.pop 32.0
      %v381 = vmul.f32 %v334, %v380
      %v382 = vmul.f32 %v337, %v380
      %v383 = vmul.f32 %v340, %v380
      %v384 = vmul.f32 %v343, %v380
      %v385 = vmul.f32 %v346, %v380
      %v386 = vmul.f32 %v349, %v380
      %v387 = vmul.f32 %v352, %v380
      %v388 = vmul.f32 %v355, %v380
      %v389 = vmul.f32 %v358, %v380
      %v390 = vmul.f32 %v361, %v380
      %v391 = vmul.f32 %v364, %v380
      %v392 = vmul.f32 %v367, %v380
      %v393 = vmul.f32 %v370, %v380
      %v394 = vmul.f32 %v373, %v380
      %v395 = vmul.f32 %v376, %v380
      %v396 = vmul.f32 %v379, %v380
      %v397 = vsub.f32 %v315, %v381
      %v398 = vsub.f32 %v316, %v382
      %v399 = vsub.f32 %v317, %v383
      %v400 = vsub.f32 %v318, %v384
      %v401 = vsub.f32 %v319, %v385
      %v402 = vsub.f32 %v320, %v386
      %v403 = vsub.f32 %v321, %v387
      %v404 = vsub.f32 %v322, %v388
      %v405 = vsub.f32 %v323, %v389
      %v406 = vsub.f32 %v324, %v390
      %v407 = vsub.f32 %v325, %v391
      %v408 = vsub.f32 %v326, %v392
      %v409 = vsub.f32 %v327, %v393
      %v410 = vsub.f32 %v328, %v394
      %v411 = vsub.f32 %v329, %v395
      %v412 = vsub.f32 %v330, %v396
      %v413 = vmul.f32 %v397, %v397
      %v414 = vmul.f32 %v398, %v398
      %v415 = vmul.f32 %v399, %v399
      %v416 = vmul.f32 %v400, %v400
      %v417 = vmul.f32 %v401, %v401
      %v418 = vmul.f32 %v402, %v402
      %v419 = vmul.f32 %v403, %v403
      %v420 = vmul.f32 %v404, %v404
      %v421 = vmul.f32 %v405, %v405
      %v422 = vmul.f32 %v406, %v406
      %v423 = vmul.f32 %v407, %v407
      %v424 = vmul.f32 %v408, %v408
      %v425 = vmul.f32 %v409, %v409
      %v426 = vmul.f32 %v410, %v410
      %v427 = vmul.f32 %v411, %v411
      %v428 = vmul.f32 %v412, %v412
      %v429 = vsel %vm331, %v413, 0.0
      %430 = vadd.xlane.f32.xlu0 %v429
      %v431 = vpop.xlane.xlu0 %430
      %v432 = vsel %vm331, %v414, 0.0
      %433 = vadd.xlane.f32.xlu0 %v432
      %v434 = vpop.xlane.xlu0 %433
      %v435 = vsel %vm331, %v415, 0.0
      %436 = vadd.xlane.f32.xlu0 %v435
      %v437 = vpop.xlane.xlu0 %436
      %v438 = vsel %vm331, %v416, 0.0
      %439 = vadd.xlane.f32.xlu0 %v438
      %v440 = vpop.xlane.xlu0 %439
      %v441 = vsel %vm331, %v417, 0.0
      %442 = vadd.xlane.f32.xlu0 %v441
      %v443 = vpop.xlane.xlu0 %442
      %v444 = vsel %vm331, %v418, 0.0
      %445 = vadd.xlane.f32.xlu0 %v444
      %v446 = vpop.xlane.xlu0 %445
      %v447 = vsel %vm331, %v419, 0.0
      %448 = vadd.xlane.f32.xlu0 %v447
      %v449 = vpop.xlane.xlu0 %448
      %v450 = vsel %vm331, %v420, 0.0
      %451 = vadd.xlane.f32.xlu0 %v450
      %v452 = vpop.xlane.xlu0 %451
      %v453 = vsel %vm331, %v421, 0.0
      %454 = vadd.xlane.f32.xlu0 %v453
      %v455 = vpop.xlane.xlu0 %454
      %v456 = vsel %vm331, %v422, 0.0
      %457 = vadd.xlane.f32.xlu0 %v456
      %v458 = vpop.xlane.xlu0 %457
      %v459 = vsel %vm331, %v423, 0.0
      %460 = vadd.xlane.f32.xlu0 %v459
      %v461 = vpop.xlane.xlu0 %460
      %v462 = vsel %vm331, %v424, 0.0
      %463 = vadd.xlane.f32.xlu0 %v462
      %v464 = vpop.xlane.xlu0 %463
      %v465 = vsel %vm331, %v425, 0.0
      %466 = vadd.xlane.f32.xlu0 %v465
      %v467 = vpop.xlane.xlu0 %466
      %v468 = vsel %vm331, %v426, 0.0
      %469 = vadd.xlane.f32.xlu0 %v468
      %v470 = vpop.xlane.xlu0 %469
      %v471 = vsel %vm331, %v427, 0.0
      %472 = vadd.xlane.f32.xlu0 %v471
      %v473 = vpop.xlane.xlu0 %472
      %v474 = vsel %vm331, %v428, 0.0
      %475 = vadd.xlane.f32.xlu0 %v474
      %v476 = vpop.xlane.xlu0 %475
      %v477 = vmul.f32 %v431, %v380
      %v478 = vmul.f32 %v434, %v380
      %v479 = vmul.f32 %v437, %v380
      %v480 = vmul.f32 %v440, %v380
      %v481 = vmul.f32 %v443, %v380
      %v482 = vmul.f32 %v446, %v380
      %v483 = vmul.f32 %v449, %v380
      %v484 = vmul.f32 %v452, %v380
      %v485 = vmul.f32 %v455, %v380
      %v486 = vmul.f32 %v458, %v380
      %v487 = vmul.f32 %v461, %v380
      %v488 = vmul.f32 %v464, %v380
      %v489 = vmul.f32 %v467, %v380
      %v490 = vmul.f32 %v470, %v380
      %v491 = vmul.f32 %v473, %v380
      %v492 = vmul.f32 %v476, %v380
      %v493 = vadd.f32 %v477, 1e-05
      %v494 = vadd.f32 %v478, 1e-05
      %v495 = vadd.f32 %v479, 1e-05
      %v496 = vadd.f32 %v480, 1e-05
      %v497 = vadd.f32 %v481, 1e-05
      %v498 = vadd.f32 %v482, 1e-05
      %v499 = vadd.f32 %v483, 1e-05
      %v500 = vadd.f32 %v484, 1e-05
      %v501 = vadd.f32 %v485, 1e-05
      %v502 = vadd.f32 %v486, 1e-05
      %v503 = vadd.f32 %v487, 1e-05
      %v504 = vadd.f32 %v488, 1e-05
      %v505 = vadd.f32 %v489, 1e-05
      %v506 = vadd.f32 %v490, 1e-05
      %v507 = vadd.f32 %v491, 1e-05
      %v508 = vadd.f32 %v492, 1e-05
      %v509 = vrsqrt.pop %v493
      %v510 = vrsqrt.pop %v494
      %v511 = vrsqrt.pop %v495
      %v512 = vrsqrt.pop %v496
      %v513 = vrsqrt.pop %v497
      %v514 = vrsqrt.pop %v498
      %v515 = vrsqrt.pop %v499
      %v516 = vrsqrt.pop %v500
      %v517 = vrsqrt.pop %v501
      %v518 = vrsqrt.pop %v502
      %v519 = vrsqrt.pop %v503
      %v520 = vrsqrt.pop %v504
      %v521 = vrsqrt.pop %v505
      %v522 = vrsqrt.pop %v506
      %v523 = vrsqrt.pop %v507
      %v524 = vrsqrt.pop %v508
      %v525 = vmul.f32 %v397, %v509
      %v526 = vmul.f32 %v398, %v510
      %v527 = vmul.f32 %v399, %v511
      %v528 = vmul.f32 %v400, %v512
      %v529 = vmul.f32 %v401, %v513
      %v530 = vmul.f32 %v402, %v514
      %v531 = vmul.f32 %v403, %v515
      %v532 = vmul.f32 %v404, %v516
      %v533 = vmul.f32 %v405, %v517
      %v534 = vmul.f32 %v406, %v518
      %v535 = vmul.f32 %v407, %v519
      %v536 = vmul.f32 %v408, %v520
      %v537 = vmul.f32 %v409, %v521
      %v538 = vmul.f32 %v410, %v522
      %v539 = vmul.f32 %v411, %v523
      %v540 = vmul.f32 %v412, %v524
      %v541 = vld [vmem:[%s2] sm:$0x1]
      %v543 = vlaneseq
      %v544 = vshrl.u32 %v543, 7
      %v545 = vsub.s32 0, %v544
      %v546 = vrot.slane %v541, %v545
      %v548 = vmul.f32 %v525, %v546
      %v549 = vmul.f32 %v526, %v546
      %v550 = vmul.f32 %v527, %v546
      %v551 = vmul.f32 %v528, %v546
      %v552 = vmul.f32 %v529, %v546
      %v553 = vmul.f32 %v530, %v546
      %v554 = vmul.f32 %v531, %v546
      %v555 = vmul.f32 %v532, %v546
      %v556 = vmul.f32 %v533, %v546
      %v557 = vmul.f32 %v534, %v546
      %v558 = vmul.f32 %v535, %v546
      %v559 = vmul.f32 %v536, %v546
      %v560 = vmul.f32 %v537, %v546
      %v561 = vmul.f32 %v538, %v546
      %v562 = vmul.f32 %v539, %v546
      %v563 = vmul.f32 %v540, %v546
      %v564 = vld [vmem:[%s3] sm:$0x1]
      %v566 = vlaneseq
      %v567 = vshrl.u32 %v566, 7
      %v568 = vsub.s32 0, %v567
      %v569 = vrot.slane %v564, %v568
      %v571 = vadd.f32 %v548, %v569
      %v572 = vadd.f32 %v549, %v569
      %v573 = vadd.f32 %v550, %v569
      %v574 = vadd.f32 %v551, %v569
      %v575 = vadd.f32 %v552, %v569
      %v576 = vadd.f32 %v553, %v569
      %v577 = vadd.f32 %v554, %v569
      %v578 = vadd.f32 %v555, %v569
      %v579 = vadd.f32 %v556, %v569
      %v580 = vadd.f32 %v557, %v569
      %v581 = vadd.f32 %v558, %v569
      %v582 = vadd.f32 %v559, %v569
      %v583 = vadd.f32 %v560, %v569
      %v584 = vadd.f32 %v561, %v569
      %v585 = vadd.f32 %v562, %v569
      %v586 = vadd.f32 %v563, %v569
      %v587 = vpack.c.bf16 %v572, %v571
      %v588 = vpack.c.bf16 %v574, %v573
      %v589 = vpack.c.bf16 %v576, %v575
      %v590 = vpack.c.bf16 %v578, %v577
      %v591 = vpack.c.bf16 %v580, %v579
      %v592 = vpack.c.bf16 %v582, %v581
      %v593 = vpack.c.bf16 %v584, %v583
      %v594 = vpack.c.bf16 %v586, %v585
      %v595 = vld [vmem:[%s4] sm:$0xf]
      %v596 = vld [vmem:[%s4 + $0x4] sm:$0xf]
      %v597 = vld [vmem:[%s4 + $0x8] sm:$0xf]
      %v598 = vld [vmem:[%s4 + $0xc] sm:$0xf]
      %v599 = vld [vmem:[%s5] sm:$0x1]
      %v601 = vlaneseq
      %v602 = vshrl.u32 %v601, 7
      %v603 = vsub.s32 0, %v602
      %v604 = vrot.slane %v599, %v603
      %v610 = vunpack.c.l.b16 %v595
      %v611 = vunpack.c.l.b16 %v596
      %v612 = vunpack.c.l.b16 %v597
      %v613 = vunpack.c.l.b16 %v598
      %v614 = vpack.c.b16 %v611, %v610
      %v615 = vpack.c.b16 %v613, %v612
      %v619 = vsel %vm331, %v587, 0
      %v622 = vsel %vm331, %v588, 0
      %v625 = vsel %vm331, %v589, 0
      %v628 = vsel %vm331, %v590, 0
      %v631 = vsel %vm331, %v591, 0
      %v634 = vsel %vm331, %v592, 0
      %v637 = vsel %vm331, %v593, 0
      %v640 = vsel %vm331, %v594, 0
      %642 = vmatprep.subr.bf16.mxu0 0
      %643 = vmatpush1.bf16.msra.mxu0 %v614
      %644 = vmatprep.subr.bf16.mxu0 0
      %645 = vmatpush1.bf16.msra.mxu0 %v615
      %646 = vmatprep.subr.bf16.mxu0 0
      %647 = vmatpush1.bf16.msra.mxu0 0
      %648 = vmatprep.subr.bf16.mxu0 0
      %649 = vmatpush1.bf16.msra.mxu0 0
      %650 = vmatprep.subr.bf16.mxu0 0
      %651 = vmatpush1.bf16.msra.mxu0 0
      %652 = vmatprep.subr.bf16.mxu0 0
      %653 = vmatpush1.bf16.msra.mxu0 0
      %654 = vmatprep.subr.bf16.mxu0 0
      %655 = vmatpush1.bf16.msra.mxu0 0
      %656 = vmatprep.subr.bf16.mxu0 0
      %657 = vmatpush1.bf16.msra.mxu0 0
      %658 = vmatprep.subr.bf16.mxu0 0
      %659 = vmatpush1.bf16.msra.mxu0 0
      %660 = vmatprep.subr.bf16.mxu0 0
      %661 = vmatpush1.bf16.msra.mxu0 0
      %662 = vmatprep.subr.bf16.mxu0 0
      %663 = vmatpush1.bf16.msra.mxu0 0
      %664 = vmatprep.subr.bf16.mxu0 0
      %665 = vmatpush1.bf16.msra.mxu0 0
      %666 = vmatprep.subr.bf16.mxu0 0
      %667 = vmatpush1.bf16.msra.mxu0 0
      %668 = vmatprep.subr.bf16.mxu0 0
      %669 = vmatpush1.bf16.msra.mxu0 0
      %670 = vmatprep.subr.bf16.mxu0 0
      %671 = vmatpush1.bf16.msra.mxu0 0
      %672 = vmatprep.subr.bf16.mxu0 0
      %673 = vmatpush1.bf16.msra.mxu0 0
      %674 = vmatprep.mubr.bf16.mxu0 0
      %675 = vmatmul.mubr.bf16.gmra.mrb[0].mxu0 %v619
      %v676 = vpop.f32.mrb[0].mxu0
      %v677 = vadd.f32 %v604, %v676
      %v678 = vpop.f32.mrb[0].mxu0
      %v679 = vpop.f32.mrb[0].mxu0
      %v680 = vadd.f32 %v604, %v679
      %v681 = vpop.f32.mrb[0].mxu0
      %682 = vmatprep.mubr.bf16.mxu0 0
      %683 = vmatmul.mubr.bf16.gmra.mrb[0].mxu0 %v622
      %v684 = vpop.f32.mrb[0].mxu0
      %v685 = vadd.f32 %v604, %v684
      %v686 = vpop.f32.mrb[0].mxu0
      %v687 = vpop.f32.mrb[0].mxu0
      %v688 = vadd.f32 %v604, %v687
      %v689 = vpop.f32.mrb[0].mxu0
      %690 = vmatprep.mubr.bf16.mxu0 0
      %691 = vmatmul.mubr.bf16.gmra.mrb[0].mxu0 %v625
      %v692 = vpop.f32.mrb[0].mxu0
      %v693 = vadd.f32 %v604, %v692
      %v694 = vpop.f32.mrb[0].mxu0
      %v695 = vpop.f32.mrb[0].mxu0
      %v696 = vadd.f32 %v604, %v695
      %v697 = vpop.f32.mrb[0].mxu0
      %698 = vmatprep.mubr.bf16.mxu0 0
      %699 = vmatmul.mubr.bf16.gmra.mrb[0].mxu0 %v628
      %v700 = vpop.f32.mrb[0].mxu0
      %v701 = vadd.f32 %v604, %v700
      %v702 = vpop.f32.mrb[0].mxu0
      %v703 = vpop.f32.mrb[0].mxu0
      %v704 = vadd.f32 %v604, %v703
      %v705 = vpop.f32.mrb[0].mxu0
      %706 = vmatprep.mubr.bf16.mxu0 0
      %707 = vmatmul.mubr.bf16.gmra.mrb[0].mxu0 %v631
      %v708 = vpop.f32.mrb[0].mxu0
      %v709 = vadd.f32 %v604, %v708
      %v710 = vpop.f32.mrb[0].mxu0
      %v711 = vpop.f32.mrb[0].mxu0
      %v712 = vadd.f32 %v604, %v711
      %v713 = vpop.f32.mrb[0].mxu0
      %714 = vmatprep.mubr.bf16.mxu0 0
      %715 = vmatmul.mubr.bf16.gmra.mrb[0].mxu0 %v634
      %v716 = vpop.f32.mrb[0].mxu0
      %v717 = vadd.f32 %v604, %v716
      %v718 = vpop.f32.mrb[0].mxu0
      %v719 = vpop.f32.mrb[0].mxu0
      %v720 = vadd.f32 %v604, %v719
      %v721 = vpop.f32.mrb[0].mxu0
      %722 = vmatprep.mubr.bf16.mxu0 0
      %723 = vmatmul.mubr.bf16.gmra.mrb[0].mxu0 %v637
      %v724 = vpop.f32.mrb[0].mxu0
      %v725 = vadd.f32 %v604, %v724
      %v726 = vpop.f32.mrb[0].mxu0
      %v727 = vpop.f32.mrb[0].mxu0
      %v728 = vadd.f32 %v604, %v727
      %v729 = vpop.f32.mrb[0].mxu0
      %730 = vmatprep.mubr.bf16.mxu0 0
      %731 = vmatmul.mubr.bf16.gmra.mrb[0].mxu0 %v640
      %v732 = vpop.f32.mrb[0].mxu0
      %v733 = vadd.f32 %v604, %v732
      %v734 = vpop.f32.mrb[0].mxu0
      %v735 = vpop.f32.mrb[0].mxu0
      %v736 = vadd.f32 %v604, %v735
      %v737 = vpop.f32.mrb[0].mxu0
      %738 = vdwg.mxu0
      %v739 = vpack.c.bf16 %v680, %v677
      %v740 = vpack.c.bf16 %v688, %v685
      %v741 = vpack.c.bf16 %v696, %v693
      %v742 = vpack.c.bf16 %v704, %v701
      %v743 = vpack.c.bf16 %v712, %v709
      %v744 = vpack.c.bf16 %v720, %v717
      %v745 = vpack.c.bf16 %v728, %v725
      %v746 = vpack.c.bf16 %v736, %v733
      %vm747 = vcmask 785408
      %748 = vst.msk [vmem:[#allocation2] sm:$0xff] %vm747, %v739
      %749 = vst.msk [vmem:[#allocation2 + $0x8] sm:$0xff] %vm747, %v740
      %750 = vst.msk [vmem:[#allocation2 + $0x10] sm:$0xff] %vm747, %v741
      %751 = vst.msk [vmem:[#allocation2 + $0x18] sm:$0xff] %vm747, %v742
      %752 = vst.msk [vmem:[#allocation2 + $0x20] sm:$0xff] %vm747, %v743
      %753 = vst.msk [vmem:[#allocation2 + $0x28] sm:$0xff] %vm747, %v744
      %754 = vst.msk [vmem:[#allocation2 + $0x30] sm:$0xff] %vm747, %v745
      %755 = vst.msk [vmem:[#allocation2 + $0x38] sm:$0xff] %vm747, %v746
      %v756 = vld [vmem:[%s1] sm:$0xff]
      %v757 = vld [vmem:[%s1 + $0x8] sm:$0xff]
      %v758 = vld [vmem:[%s1 + $0x10] sm:$0xff]
      %v759 = vld [vmem:[%s1 + $0x18] sm:$0xff]
      %v760 = vld [vmem:[%s1 + $0x20] sm:$0xff]
      %v761 = vld [vmem:[%s1 + $0x28] sm:$0xff]
      %v762 = vld [vmem:[%s1 + $0x30] sm:$0xff]
      %v763 = vld [vmem:[%s1 + $0x38] sm:$0xff]
      %v764 = vld [vmem:[#allocation2] sm:$0xff]
      %v765 = vld [vmem:[#allocation2 + $0x8] sm:$0xff]
      %v766 = vld [vmem:[#allocation2 + $0x10] sm:$0xff]
      %v767 = vld [vmem:[#allocation2 + $0x18] sm:$0xff]
      %v768 = vld [vmem:[#allocation2 + $0x20] sm:$0xff]
      %v769 = vld [vmem:[#allocation2 + $0x28] sm:$0xff]
      %v770 = vld [vmem:[#allocation2 + $0x30] sm:$0xff]
      %v771 = vld [vmem:[#allocation2 + $0x38] sm:$0xff]
      %773 = vrot.lane.b32.xlu0 %v764, 96
      %v774 = vpop.permute.xlu0 %773
      %vm775 = vcmask 64512
      %v777 = vsel %vm775, %v764, 0
      %v780 = vsel %vm775, %v774, 0
      %782 = vmatprep.subr.bf16.mxu0 0
      %783 = vmatpush1.bf16.xpose.msra.mxu0 %v780
      %784 = vmatprep.subr.bf16.mxu0 0
      %785 = vmatpush1.bf16.xpose.msra.mxu0 0
      %786 = vmatprep.subr.bf16.mxu0 0
      %787 = vmatpush1.bf16.xpose.msra.mxu0 0
      %788 = vmatprep.subr.bf16.mxu0 0
      %789 = vmatpush1.bf16.xpose.msra.mxu0 0
      %790 = vmatprep.subr.bf16.mxu0 0
      %791 = vmatpush1.bf16.xpose.msra.mxu0 0
      %792 = vmatprep.subr.bf16.mxu0 0
      %793 = vmatpush1.bf16.xpose.msra.mxu0 0
      %794 = vmatprep.subr.bf16.mxu0 0
      %795 = vmatpush1.bf16.xpose.msra.mxu0 0
      %796 = vmatprep.subr.bf16.mxu0 0
      %797 = vmatpush1.bf16.xpose.msra.mxu0 0
      %798 = vmatprep.subr.bf16.mxu0 0
      %799 = vmatpush1.bf16.xpose.msra.mxu0 0
      %800 = vmatprep.subr.bf16.mxu0 0
      %801 = vmatpush1.bf16.xpose.msra.mxu0 0
      %802 = vmatprep.subr.bf16.mxu0 0
      %803 = vmatpush1.bf16.xpose.msra.mxu0 0
      %804 = vmatprep.subr.bf16.mxu0 0
      %805 = vmatpush1.bf16.xpose.msra.mxu0 0
      %806 = vmatprep.subr.bf16.mxu0 0
      %807 = vmatpush1.bf16.xpose.msra.mxu0 0
      %808 = vmatprep.subr.bf16.mxu0 0
      %809 = vmatpush1.bf16.xpose.msra.mxu0 0
      %810 = vmatprep.subr.bf16.mxu0 0
      %811 = vmatpush1.bf16.xpose.msra.mxu0 0
      %812 = vmatprep.subr.bf16.mxu0 0
      %813 = vmatpush1.bf16.xpose.msra.mxu0 0
      %814 = vmatprep.mubr.bf16.mxu0 0
      %815 = vmatmul.mubr.bf16.gmra.mrb[0].mxu0 %v777
      %v816 = vpop.f32.mrb[0].mxu0
      %v817 = vadd.f32 %v756, %v816
      %v818 = vpop.f32.mrb[0].mxu0
      %v819 = vpop.f32.mrb[0].mxu0
      %v820 = vadd.f32 %v757, %v819
      %v821 = vpop.f32.mrb[0].mxu0
      %822 = vdwg.mxu0
      %824 = vrot.lane.b32.xlu0 %v765, 96
      %v825 = vpop.permute.xlu0 %824
      %v827 = vsel %vm775, %v765, 0
      %v830 = vsel %vm775, %v825, 0
      %832 = vmatprep.subr.bf16.mxu0 0
      %833 = vmatpush1.bf16.xpose.msra.mxu0 %v830
      %834 = vmatprep.subr.bf16.mxu0 0
      %835 = vmatpush1.bf16.xpose.msra.mxu0 0
      %836 = vmatprep.subr.bf16.mxu0 0
      %837 = vmatpush1.bf16.xpose.msra.mxu0 0
      %838 = vmatprep.subr.bf16.mxu0 0
      %839 = vmatpush1.bf16.xpose.msra.mxu0 0
      %840 = vmatprep.subr.bf16.mxu0 0
      %841 = vmatpush1.bf16.xpose.msra.mxu0 0
      %842 = vmatprep.subr.bf16.mxu0 0
      %843 = vmatpush1.bf16.xpose.msra.mxu0 0
      %844 = vmatprep.subr.bf16.mxu0 0
      %845 = vmatpush1.bf16.xpose.msra.mxu0 0
      %846 = vmatprep.subr.bf16.mxu0 0
      %847 = vmatpush1.bf16.xpose.msra.mxu0 0
      %848 = vmatprep.subr.bf16.mxu0 0
      %849 = vmatpush1.bf16.xpose.msra.mxu0 0
      %850 = vmatprep.subr.bf16.mxu0 0
      %851 = vmatpush1.bf16.xpose.msra.mxu0 0
      %852 = vmatprep.subr.bf16.mxu0 0
      %853 = vmatpush1.bf16.xpose.msra.mxu0 0
      %854 = vmatprep.subr.bf16.mxu0 0
      %855 = vmatpush1.bf16.xpose.msra.mxu0 0
      %856 = vmatprep.subr.bf16.mxu0 0
      %857 = vmatpush1.bf16.xpose.msra.mxu0 0
      %858 = vmatprep.subr.bf16.mxu0 0
      %859 = vmatpush1.bf16.xpose.msra.mxu0 0
      %860 = vmatprep.subr.bf16.mxu0 0
      %861 = vmatpush1.bf16.xpose.msra.mxu0 0
      %862 = vmatprep.subr.bf16.mxu0 0
      %863 = vmatpush1.bf16.xpose.msra.mxu0 0
      %864 = vmatprep.mubr.bf16.mxu0 0
      %865 = vmatmul.mubr.bf16.gmra.mrb[0].mxu0 %v827
      %v866 = vpop.f32.mrb[0].mxu0
      %v867 = vadd.f32 %v756, %v866
      %v868 = vpop.f32.mrb[0].mxu0
      %v869 = vpop.f32.mrb[0].mxu0
      %v870 = vadd.f32 %v757, %v869
      %v871 = vpop.f32.mrb[0].mxu0
      %872 = vdwg.mxu0
      %874 = vrot.lane.b32.xlu0 %v766, 96
      %v875 = vpop.permute.xlu0 %874
      %v877 = vsel %vm775, %v766, 0
      %v880 = vsel %vm775, %v875, 0
      %882 = vmatprep.subr.bf16.mxu0 0
      %883 = vmatpush1.bf16.xpose.msra.mxu0 %v880
      %884 = vmatprep.subr.bf16.mxu0 0
      %885 = vmatpush1.bf16.xpose.msra.mxu0 0
      %886 = vmatprep.subr.bf16.mxu0 0
      %887 = vmatpush1.bf16.xpose.msra.mxu0 0
      %888 = vmatprep.subr.bf16.mxu0 0
      %889 = vmatpush1.bf16.xpose.msra.mxu0 0
      %890 = vmatprep.subr.bf16.mxu0 0
      %891 = vmatpush1.bf16.xpose.msra.mxu0 0
      %892 = vmatprep.subr.bf16.mxu0 0
      %893 = vmatpush1.bf16.xpose.msra.mxu0 0
      %894 = vmatprep.subr.bf16.mxu0 0
      %895 = vmatpush1.bf16.xpose.msra.mxu0 0
      %896 = vmatprep.subr.bf16.mxu0 0
      %897 = vmatpush1.bf16.xpose.msra.mxu0 0
      %898 = vmatprep.subr.bf16.mxu0 0
      %899 = vmatpush1.bf16.xpose.msra.mxu0 0
      %900 = vmatprep.subr.bf16.mxu0 0
      %901 = vmatpush1.bf16.xpose.msra.mxu0 0
      %902 = vmatprep.subr.bf16.mxu0 0
      %903 = vmatpush1.bf16.xpose.msra.mxu0 0
      %904 = vmatprep.subr.bf16.mxu0 0
      %905 = vmatpush1.bf16.xpose.msra.mxu0 0
      %906 = vmatprep.subr.bf16.mxu0 0
      %907 = vmatpush1.bf16.xpose.msra.mxu0 0
      %908 = vmatprep.subr.bf16.mxu0 0
      %909 = vmatpush1.bf16.xpose.msra.mxu0 0
      %910 = vmatprep.subr.bf16.mxu0 0
      %911 = vmatpush1.bf16.xpose.msra.mxu0 0
      %912 = vmatprep.subr.bf16.mxu0 0
      %913 = vmatpush1.bf16.xpose.msra.mxu0 0
      %914 = vmatprep.mubr.bf16.mxu0 0
      %915 = vmatmul.mubr.bf16.gmra.mrb[0].mxu0 %v877
      %v916 = vpop.f32.mrb[0].mxu0
      %v917 = vadd.f32 %v756, %v916
      %v918 = vpop.f32.mrb[0].mxu0
      %v919 = vpop.f32.mrb[0].mxu0
      %v920 = vadd.f32 %v757, %v919
      %v921 = vpop.f32.mrb[0].mxu0
      %922 = vdwg.mxu0
      %924 = vrot.lane.b32.xlu0 %v767, 96
      %v925 = vpop.permute.xlu0 %924
      %v927 = vsel %vm775, %v767, 0
      %v930 = vsel %vm775, %v925, 0
      %932 = vmatprep.subr.bf16.mxu0 0
      %933 = vmatpush1.bf16.xpose.msra.mxu0 %v930
      %934 = vmatprep.subr.bf16.mxu0 0
      %935 = vmatpush1.bf16.xpose.msra.mxu0 0
      %936 = vmatprep.subr.bf16.mxu0 0
      %937 = vmatpush1.bf16.xpose.msra.mxu0 0
      %938 = vmatprep.subr.bf16.mxu0 0
      %939 = vmatpush1.bf16.xpose.msra.mxu0 0
      %940 = vmatprep.subr.bf16.mxu0 0
      %941 = vmatpush1.bf16.xpose.msra.mxu0 0
      %942 = vmatprep.subr.bf16.mxu0 0
      %943 = vmatpush1.bf16.xpose.msra.mxu0 0
      %944 = vmatprep.subr.bf16.mxu0 0
      %945 = vmatpush1.bf16.xpose.msra.mxu0 0
      %946 = vmatprep.subr.bf16.mxu0 0
      %947 = vmatpush1.bf16.xpose.msra.mxu0 0
      %948 = vmatprep.subr.bf16.mxu0 0
      %949 = vmatpush1.bf16.xpose.msra.mxu0 0
      %950 = vmatprep.subr.bf16.mxu0 0
      %951 = vmatpush1.bf16.xpose.msra.mxu0 0
      %952 = vmatprep.subr.bf16.mxu0 0
      %953 = vmatpush1.bf16.xpose.msra.mxu0 0
      %954 = vmatprep.subr.bf16.mxu0 0
      %955 = vmatpush1.bf16.xpose.msra.mxu0 0
      %956 = vmatprep.subr.bf16.mxu0 0
      %957 = vmatpush1.bf16.xpose.msra.mxu0 0
      %958 = vmatprep.subr.bf16.mxu0 0
      %959 = vmatpush1.bf16.xpose.msra.mxu0 0
      %960 = vmatprep.subr.bf16.mxu0 0
      %961 = vmatpush1.bf16.xpose.msra.mxu0 0
      %962 = vmatprep.subr.bf16.mxu0 0
      %963 = vmatpush1.bf16.xpose.msra.mxu0 0
      %964 = vmatprep.mubr.bf16.mxu0 0
      %965 = vmatmul.mubr.bf16.gmra.mrb[0].mxu0 %v927
      %v966 = vpop.f32.mrb[0].mxu0
      %v967 = vadd.f32 %v756, %v966
      %v968 = vpop.f32.mrb[0].mxu0
      %v969 = vpop.f32.mrb[0].mxu0
      %v970 = vadd.f32 %v757, %v969
      %v971 = vpop.f32.mrb[0].mxu0
      %972 = vdwg.mxu0
      %974 = vrot.lane.b32.xlu0 %v768, 96
      %v975 = vpop.permute.xlu0 %974
      %v977 = vsel %vm775, %v768, 0
      %v980 = vsel %vm775, %v975, 0
      %982 = vmatprep.subr.bf16.mxu0 0
      %983 = vmatpush1.bf16.xpose.msra.mxu0 %v980
      %984 = vmatprep.subr.bf16.mxu0 0
      %985 = vmatpush1.bf16.xpose.msra.mxu0 0
      %986 = vmatprep.subr.bf16.mxu0 0
      %987 = vmatpush1.bf16.xpose.msra.mxu0 0
      %988 = vmatprep.subr.bf16.mxu0 0
      %989 = vmatpush1.bf16.xpose.msra.mxu0 0
      %990 = vmatprep.subr.bf16.mxu0 0
      %991 = vmatpush1.bf16.xpose.msra.mxu0 0
      %992 = vmatprep.subr.bf16.mxu0 0
      %993 = vmatpush1.bf16.xpose.msra.mxu0 0
      %994 = vmatprep.subr.bf16.mxu0 0
      %995 = vmatpush1.bf16.xpose.msra.mxu0 0
      %996 = vmatprep.subr.bf16.mxu0 0
      %997 = vmatpush1.bf16.xpose.msra.mxu0 0
      %998 = vmatprep.subr.bf16.mxu0 0
      %999 = vmatpush1.bf16.xpose.msra.mxu0 0
      %1000 = vmatprep.subr.bf16.mxu0 0
      %1001 = vmatpush1.bf16.xpose.msra.mxu0 0
      %1002 = vmatprep.subr.bf16.mxu0 0
      %1003 = vmatpush1.bf16.xpose.msra.mxu0 0
      %1004 = vmatprep.subr.bf16.mxu0 0
      %1005 = vmatpush1.bf16.xpose.msra.mxu0 0
      %1006 = vmatprep.subr.bf16.mxu0 0
      %1007 = vmatpush1.bf16.xpose.msra.mxu0 0
      %1008 = vmatprep.subr.bf16.mxu0 0
      %1009 = vmatpush1.bf16.xpose.msra.mxu0 0
      %1010 = vmatprep.subr.bf16.mxu0 0
      %1011 = vmatpush1.bf16.xpose.msra.mxu0 0
      %1012 = vmatprep.subr.bf16.mxu0 0
      %1013 = vmatpush1.bf16.xpose.msra.mxu0 0
      %1014 = vmatprep.mubr.bf16.mxu0 0
      %1015 = vmatmul.mubr.bf16.gmra.mrb[0].mxu0 %v977
      %v1016 = vpop.f32.mrb[0].mxu0
      %v1017 = vadd.f32 %v756, %v1016
      %v1018 = vpop.f32.mrb[0].mxu0
      %v1019 = vpop.f32.mrb[0].mxu0
      %v1020 = vadd.f32 %v757, %v1019
      %v1021 = vpop.f32.mrb[0].mxu0
      %1022 = vdwg.mxu0
      %1024 = vrot.lane.b32.xlu0 %v769, 96
      %v1025 = vpop.permute.xlu0 %1024
      %v1027 = vsel %vm775, %v769, 0
      %v1030 = vsel %vm775, %v1025, 0
      %1032 = vmatprep.subr.bf16.mxu0 0
      %1033 = vmatpush1.bf16.xpose.msra.mxu0 %v1030
      %1034 = vmatprep.subr.bf16.mxu0 0
      %1035 = vmatpush1.bf16.xpose.msra.mxu0 0
      %1036 = vmatprep.subr.bf16.mxu0 0
      %1037 = vmatpush1.bf16.xpose.msra.mxu0 0
      %1038 = vmatprep.subr.bf16.mxu0 0
      %1039 = vmatpush1.bf16.xpose.msra.mxu0 0
      %1040 = vmatprep.subr.bf16.mxu0 0
      %1041 = vmatpush1.bf16.xpose.msra.mxu0 0
      %1042 = vmatprep.subr.bf16.mxu0 0
      %1043 = vmatpush1.bf16.xpose.msra.mxu0 0
      %1044 = vmatprep.subr.bf16.mxu0 0
      %1045 = vmatpush1.bf16.xpose.msra.mxu0 0
      %1046 = vmatprep.subr.bf16.mxu0 0
      %1047 = vmatpush1.bf16.xpose.msra.mxu0 0
      %1048 = vmatprep.subr.bf16.mxu0 0
      %1049 = vmatpush1.bf16.xpose.msra.mxu0 0
      %1050 = vmatprep.subr.bf16.mxu0 0
      %1051 = vmatpush1.bf16.xpose.msra.mxu0 0
      %1052 = vmatprep.subr.bf16.mxu0 0
      %1053 = vmatpush1.bf16.xpose.msra.mxu0 0
      %1054 = vmatprep.subr.bf16.mxu0 0
      %1055 = vmatpush1.bf16.xpose.msra.mxu0 0
      %1056 = vmatprep.subr.bf16.mxu0 0
      %1057 = vmatpush1.bf16.xpose.msra.mxu0 0
      %1058 = vmatprep.subr.bf16.mxu0 0
      %1059 = vmatpush1.bf16.xpose.msra.mxu0 0
      %1060 = vmatprep.subr.bf16.mxu0 0
      %1061 = vmatpush1.bf16.xpose.msra.mxu0 0
      %1062 = vmatprep.subr.bf16.mxu0 0
      %1063 = vmatpush1.bf16.xpose.msra.mxu0 0
      %1064 = vmatprep.mubr.bf16.mxu0 0
      %1065 = vmatmul.mubr.bf16.gmra.mrb[0].mxu0 %v1027
      %v1066 = vpop.f32.mrb[0].mxu0
      %v1067 = vadd.f32 %v756, %v1066
      %v1068 = vpop.f32.mrb[0].mxu0
      %v1069 = vpop.f32.mrb[0].mxu0
      %v1070 = vadd.f32 %v757, %v1069
      %v1071 = vpop.f32.mrb[0].mxu0
      %1072 = vdwg.mxu0
      %1074 = vrot.lane.b32.xlu0 %v770, 96
      %v1075 = vpop.permute.xlu0 %1074
      %v1077 = vsel %vm775, %v770, 0
      %v1080 = vsel %vm775, %v1075, 0
      %1082 = vmatprep.subr.bf16.mxu0 0
      %1083 = vmatpush1.bf16.xpose.msra.mxu0 %v1080
      %1084 = vmatprep.subr.bf16.mxu0 0
      %1085 = vmatpush1.bf16.xpose.msra.mxu0 0
      %1086 = vmatprep.subr.bf16.mxu0 0
      %1087 = vmatpush1.bf16.xpose.msra.mxu0 0
      %1088 = vmatprep.subr.bf16.mxu0 0
      %1089 = vmatpush1.bf16.xpose.msra.mxu0 0
      %1090 = vmatprep.subr.bf16.mxu0 0
      %1091 = vmatpush1.bf16.xpose.msra.mxu0 0
      %1092 = vmatprep.subr.bf16.mxu0 0
      %1093 = vmatpush1.bf16.xpose.msra.mxu0 0
      %1094 = vmatprep.subr.bf16.mxu0 0
      %1095 = vmatpush1.bf16.xpose.msra.mxu0 0
      %1096 = vmatprep.subr.bf16.mxu0 0
      %1097 = vmatpush1.bf16.xpose.msra.mxu0 0
      %1098 = vmatprep.subr.bf16.mxu0 0
      %1099 = vmatpush1.bf16.xpose.msra.mxu0 0
      %1100 = vmatprep.subr.bf16.mxu0 0
      %1101 = vmatpush1.bf16.xpose.msra.mxu0 0
      %1102 = vmatprep.subr.bf16.mxu0 0
      %1103 = vmatpush1.bf16.xpose.msra.mxu0 0
      %1104 = vmatprep.subr.bf16.mxu0 0
      %1105 = vmatpush1.bf16.xpose.msra.mxu0 0
      %1106 = vmatprep.subr.bf16.mxu0 0
      %1107 = vmatpush1.bf16.xpose.msra.mxu0 0
      %1108 = vmatprep.subr.bf16.mxu0 0
      %1109 = vmatpush1.bf16.xpose.msra.mxu0 0
      %1110 = vmatprep.subr.bf16.mxu0 0
      %1111 = vmatpush1.bf16.xpose.msra.mxu0 0
      %1112 = vmatprep.subr.bf16.mxu0 0
      %1113 = vmatpush1.bf16.xpose.msra.mxu0 0
      %1114 = vmatprep.mubr.bf16.mxu0 0
      %1115 = vmatmul.mubr.bf16.gmra.mrb[0].mxu0 %v1077
      %v1116 = vpop.f32.mrb[0].mxu0
      %v1117 = vadd.f32 %v756, %v1116
      %v1118 = vpop.f32.mrb[0].mxu0
      %v1119 = vpop.f32.mrb[0].mxu0
      %v1120 = vadd.f32 %v757, %v1119
      %v1121 = vpop.f32.mrb[0].mxu0
      %1122 = vdwg.mxu0
      %1124 = vrot.lane.b32.xlu0 %v771, 96
      %v1125 = vpop.permute.xlu0 %1124
      %v1127 = vsel %vm775, %v771, 0
      %v1130 = vsel %vm775, %v1125, 0
      %1132 = vmatprep.subr.bf16.mxu0 0
      %1133 = vmatpush1.bf16.xpose.msra.mxu0 %v1130
      %1134 = vmatprep.subr.bf16.mxu0 0
      %1135 = vmatpush1.bf16.xpose.msra.mxu0 0
      %1136 = vmatprep.subr.bf16.mxu0 0
      %1137 = vmatpush1.bf16.xpose.msra.mxu0 0
      %1138 = vmatprep.subr.bf16.mxu0 0
      %1139 = vmatpush1.bf16.xpose.msra.mxu0 0
      %1140 = vmatprep.subr.bf16.mxu0 0
      %1141 = vmatpush1.bf16.xpose.msra.mxu0 0
      %1142 = vmatprep.subr.bf16.mxu0 0
      %1143 = vmatpush1.bf16.xpose.msra.mxu0 0
      %1144 = vmatprep.subr.bf16.mxu0 0
      %1145 = vmatpush1.bf16.xpose.msra.mxu0 0
      %1146 = vmatprep.subr.bf16.mxu0 0
      %1147 = vmatpush1.bf16.xpose.msra.mxu0 0
      %1148 = vmatprep.subr.bf16.mxu0 0
      %1149 = vmatpush1.bf16.xpose.msra.mxu0 0
      %1150 = vmatprep.subr.bf16.mxu0 0
      %1151 = vmatpush1.bf16.xpose.msra.mxu0 0
      %1152 = vmatprep.subr.bf16.mxu0 0
      %1153 = vmatpush1.bf16.xpose.msra.mxu0 0
      %1154 = vmatprep.subr.bf16.mxu0 0
      %1155 = vmatpush1.bf16.xpose.msra.mxu0 0
      %1156 = vmatprep.subr.bf16.mxu0 0
      %1157 = vmatpush1.bf16.xpose.msra.mxu0 0
      %1158 = vmatprep.subr.bf16.mxu0 0
      %1159 = vmatpush1.bf16.xpose.msra.mxu0 0
      %1160 = vmatprep.subr.bf16.mxu0 0
      %1161 = vmatpush1.bf16.xpose.msra.mxu0 0
      %1162 = vmatprep.subr.bf16.mxu0 0
      %1163 = vmatpush1.bf16.xpose.msra.mxu0 0
      %1164 = vmatprep.mubr.bf16.mxu0 0
      %1165 = vmatmul.mubr.bf16.gmra.mrb[0].mxu0 %v1127
      %v1166 = vpop.f32.mrb[0].mxu0
      %v1167 = vadd.f32 %v756, %v1166
      %v1168 = vpop.f32.mrb[0].mxu0
      %v1169 = vpop.f32.mrb[0].mxu0
      %v1170 = vadd.f32 %v757, %v1169
      %v1171 = vpop.f32.mrb[0].mxu0
      %1172 = vdwg.mxu0
      %vm1173 = vcmask 130048
      %v1174 = vsel %vm1173, %v817, -inf
      %1175 = vmax.xlane.f32.xlu0 %v1174
      %v1176 = vpop.xlane.xlu0 %1175
      %v1177 = vsel %vm1173, %v820, -inf
      %1178 = vmax.xlane.f32.xlu0 %v1177
      %v1179 = vpop.xlane.xlu0 %1178
      %v1180 = vsel %vm1173, %v867, -inf
      %1181 = vmax.xlane.f32.xlu0 %v1180
      %v1182 = vpop.xlane.xlu0 %1181
      %v1183 = vsel %vm1173, %v870, -inf
      %1184 = vmax.xlane.f32.xlu0 %v1183
      %v1185 = vpop.xlane.xlu0 %1184
      %v1186 = vsel %vm1173, %v917, -inf
      %1187 = vmax.xlane.f32.xlu0 %v1186
      %v1188 = vpop.xlane.xlu0 %1187
      %v1189 = vsel %vm1173, %v920, -inf
      %1190 = vmax.xlane.f32.xlu0 %v1189
      %v1191 = vpop.xlane.xlu0 %1190
      %v1192 = vsel %vm1173, %v967, -inf
      %1193 = vmax.xlane.f32.xlu0 %v1192
      %v1194 = vpop.xlane.xlu0 %1193
      %v1195 = vsel %vm1173, %v970, -inf
      %1196 = vmax.xlane.f32.xlu0 %v1195
      %v1197 = vpop.xlane.xlu0 %1196
      %v1198 = vsel %vm1173, %v1017, -inf
      %1199 = vmax.xlane.f32.xlu0 %v1198
      %v1200 = vpop.xlane.xlu0 %1199
      %v1201 = vsel %vm1173, %v1020, -inf
      %1202 = vmax.xlane.f32.xlu0 %v1201
      %v1203 = vpop.xlane.xlu0 %1202
      %v1204 = vsel %vm1173, %v1067, -inf
      %1205 = vmax.xlane.f32.xlu0 %v1204
      %v1206 = vpop.xlane.xlu0 %1205
      %v1207 = vsel %vm1173, %v1070, -inf
      %1208 = vmax.xlane.f32.xlu0 %v1207
      %v1209 = vpop.xlane.xlu0 %1208
      %v1210 = vsel %vm1173, %v1117, -inf
      %1211 = vmax.xlane.f32.xlu0 %v1210
      %v1212 = vpop.xlane.xlu0 %1211
      %v1213 = vsel %vm1173, %v1120, -inf
      %1214 = vmax.xlane.f32.xlu0 %v1213
      %v1215 = vpop.xlane.xlu0 %1214
      %v1216 = vsel %vm1173, %v1167, -inf
      %1217 = vmax.xlane.f32.xlu0 %v1216
      %v1218 = vpop.xlane.xlu0 %1217
      %v1219 = vsel %vm1173, %v1170, -inf
      %1220 = vmax.xlane.f32.xlu0 %v1219
      %v1221 = vpop.xlane.xlu0 %1220
      %v1222 = vsub.f32 %v817, %v1176
      %v1223 = vsub.f32 %v820, %v1179
      %v1224 = vsub.f32 %v867, %v1182
      %v1225 = vsub.f32 %v870, %v1185
      %v1226 = vsub.f32 %v917, %v1188
      %v1227 = vsub.f32 %v920, %v1191
      %v1228 = vsub.f32 %v967, %v1194
      %v1229 = vsub.f32 %v970, %v1197
      %v1230 = vsub.f32 %v1017, %v1200
      %v1231 = vsub.f32 %v1020, %v1203
      %v1232 = vsub.f32 %v1067, %v1206
      %v1233 = vsub.f32 %v1070, %v1209
      %v1234 = vsub.f32 %v1117, %v1212
      %v1235 = vsub.f32 %v1120, %v1215
      %v1236 = vsub.f32 %v1167, %v1218
      %v1237 = vsub.f32 %v1170, %v1221
      %v1238 = vmul.f32 %v1222, 1.442695
      %v1239 = vpow.pop %v1238
      %v1240 = vmul.f32 %v1223, 1.442695
      %v1241 = vpow.pop %v1240
      %v1242 = vmul.f32 %v1224, 1.442695
      %v1243 = vpow.pop %v1242
      %v1244 = vmul.f32 %v1225, 1.442695
      %v1245 = vpow.pop %v1244
      %v1246 = vmul.f32 %v1226, 1.442695
      %v1247 = vpow.pop %v1246
      %v1248 = vmul.f32 %v1227, 1.442695
      %v1249 = vpow.pop %v1248
      %v1250 = vmul.f32 %v1228, 1.442695
      %v1251 = vpow.pop %v1250
      %v1252 = vmul.f32 %v1229, 1.442695
      %v1253 = vpow.pop %v1252
      %v1254 = vmul.f32 %v1230, 1.442695
      %v1255 = vpow.pop %v1254
      %v1256 = vmul.f32 %v1231, 1.442695
      %v1257 = vpow.pop %v1256
      %v1258 = vmul.f32 %v1232, 1.442695
      %v1259 = vpow.pop %v1258
      %v1260 = vmul.f32 %v1233, 1.442695
      %v1261 = vpow.pop %v1260
      %v1262 = vmul.f32 %v1234, 1.442695
      %v1263 = vpow.pop %v1262
      %v1264 = vmul.f32 %v1235, 1.442695
      %v1265 = vpow.pop %v1264
      %v1266 = vmul.f32 %v1236, 1.442695
      %v1267 = vpow.pop %v1266
      %v1268 = vmul.f32 %v1237, 1.442695
      %v1269 = vpow.pop %v1268
      %v1270 = vsel %vm1173, %v1239, 0.0
      %1271 = vadd.xlane.f32.xlu0 %v1270
      %v1272 = vpop.xlane.xlu0 %1271
      %v1273 = vsel %vm1173, %v1241, 0.0
      %1274 = vadd.xlane.f32.xlu0 %v1273
      %v1275 = vpop.xlane.xlu0 %1274
      %v1276 = vsel %vm1173, %v1243, 0.0
      %1277 = vadd.xlane.f32.xlu0 %v1276
      %v1278 = vpop.xlane.xlu0 %1277
      %v1279 = vsel %vm1173, %v1245, 0.0
      %1280 = vadd.xlane.f32.xlu0 %v1279
      %v1281 = vpop.xlane.xlu0 %1280
      %v1282 = vsel %vm1173, %v1247, 0.0
      %1283 = vadd.xlane.f32.xlu0 %v1282
      %v1284 = vpop.xlane.xlu0 %1283
      %v1285 = vsel %vm1173, %v1249, 0.0
      %1286 = vadd.xlane.f32.xlu0 %v1285
      %v1287 = vpop.xlane.xlu0 %1286
      %v1288 = vsel %vm1173, %v1251, 0.0
      %1289 = vadd.xlane.f32.xlu0 %v1288
      %v1290 = vpop.xlane.xlu0 %1289
      %v1291 = vsel %vm1173, %v1253, 0.0
      %1292 = vadd.xlane.f32.xlu0 %v1291
      %v1293 = vpop.xlane.xlu0 %1292
      %v1294 = vsel %vm1173, %v1255, 0.0
      %1295 = vadd.xlane.f32.xlu0 %v1294
      %v1296 = vpop.xlane.xlu0 %1295
      %v1297 = vsel %vm1173, %v1257, 0.0
      %1298 = vadd.xlane.f32.xlu0 %v1297
      %v1299 = vpop.xlane.xlu0 %1298
      %v1300 = vsel %vm1173, %v1259, 0.0
      %1301 = vadd.xlane.f32.xlu0 %v1300
      %v1302 = vpop.xlane.xlu0 %1301
      %v1303 = vsel %vm1173, %v1261, 0.0
      %1304 = vadd.xlane.f32.xlu0 %v1303
      %v1305 = vpop.xlane.xlu0 %1304
      %v1306 = vsel %vm1173, %v1263, 0.0
      %1307 = vadd.xlane.f32.xlu0 %v1306
      %v1308 = vpop.xlane.xlu0 %1307
      %v1309 = vsel %vm1173, %v1265, 0.0
      %1310 = vadd.xlane.f32.xlu0 %v1309
      %v1311 = vpop.xlane.xlu0 %1310
      %v1312 = vsel %vm1173, %v1267, 0.0
      %1313 = vadd.xlane.f32.xlu0 %v1312
      %v1314 = vpop.xlane.xlu0 %1313
      %v1315 = vsel %vm1173, %v1269, 0.0
      %1316 = vadd.xlane.f32.xlu0 %v1315
      %v1317 = vpop.xlane.xlu0 %1316
      %v1318 = vrcp.pop %v1272
      %v1319 = vrcp.pop %v1275
      %v1320 = vrcp.pop %v1278
      %v1321 = vrcp.pop %v1281
      %v1322 = vrcp.pop %v1284
      %v1323 = vrcp.pop %v1287
      %v1324 = vrcp.pop %v1290
      %v1325 = vrcp.pop %v1293
      %v1326 = vrcp.pop %v1296
      %v1327 = vrcp.pop %v1299
      %v1328 = vrcp.pop %v1302
      %v1329 = vrcp.pop %v1305
      %v1330 = vrcp.pop %v1308
      %v1331 = vrcp.pop %v1311
      %v1332 = vrcp.pop %v1314
      %v1333 = vrcp.pop %v1317
      %v1334 = vmul.f32 %v1239, %v1318
      %v1335 = vmul.f32 %v1241, %v1319
      %v1336 = vmul.f32 %v1243, %v1320
      %v1337 = vmul.f32 %v1245, %v1321
      %v1338 = vmul.f32 %v1247, %v1322
      %v1339 = vmul.f32 %v1249, %v1323
      %v1340 = vmul.f32 %v1251, %v1324
      %v1341 = vmul.f32 %v1253, %v1325
      %v1342 = vmul.f32 %v1255, %v1326
      %v1343 = vmul.f32 %v1257, %v1327
      %v1344 = vmul.f32 %v1259, %v1328
      %v1345 = vmul.f32 %v1261, %v1329
      %v1346 = vmul.f32 %v1263, %v1330
      %v1347 = vmul.f32 %v1265, %v1331
      %v1348 = vmul.f32 %v1267, %v1332
      %v1349 = vmul.f32 %v1269, %v1333
      %v1350 = vpack.c.bf16 %v1335, %v1334
      %v1351 = vpack.c.bf16 %v1337, %v1336
      %v1352 = vpack.c.bf16 %v1339, %v1338
      %v1353 = vpack.c.bf16 %v1341, %v1340
      %v1354 = vpack.c.bf16 %v1343, %v1342
      %v1355 = vpack.c.bf16 %v1345, %v1344
      %v1356 = vpack.c.bf16 %v1347, %v1346
      %v1357 = vpack.c.bf16 %v1349, %v1348
      %1358 = vrot.lane.b32.xlu0 %v764, 64
      %v1359 = vpop.permute.xlu0 %1358
      %v1362 = vsel %vm1173, %v1350, 0
      %1364 = vmatprep.subr.bf16.mxu0 0
      %1365 = vmatpush1.bf16.msra.mxu0 %v1359
      %1366 = vmatprep.subr.bf16.mxu0 0
      %1367 = vmatpush1.bf16.msra.mxu0 0
      %1368 = vmatprep.subr.bf16.mxu0 0
      %1369 = vmatpush1.bf16.msra.mxu0 0
      %1370 = vmatprep.subr.bf16.mxu0 0
      %1371 = vmatpush1.bf16.msra.mxu0 0
      %1372 = vmatprep.subr.bf16.mxu0 0
      %1373 = vmatpush1.bf16.msra.mxu0 0
      %1374 = vmatprep.subr.bf16.mxu0 0
      %1375 = vmatpush1.bf16.msra.mxu0 0
      %1376 = vmatprep.subr.bf16.mxu0 0
      %1377 = vmatpush1.bf16.msra.mxu0 0
      %1378 = vmatprep.subr.bf16.mxu0 0
      %1379 = vmatpush1.bf16.msra.mxu0 0
      %1380 = vmatprep.subr.bf16.mxu0 0
      %1381 = vmatpush1.bf16.msra.mxu0 0
      %1382 = vmatprep.subr.bf16.mxu0 0
      %1383 = vmatpush1.bf16.msra.mxu0 0
      %1384 = vmatprep.subr.bf16.mxu0 0
      %1385 = vmatpush1.bf16.msra.mxu0 0
      %1386 = vmatprep.subr.bf16.mxu0 0
      %1387 = vmatpush1.bf16.msra.mxu0 0
      %1388 = vmatprep.subr.bf16.mxu0 0
      %1389 = vmatpush1.bf16.msra.mxu0 0
      %1390 = vmatprep.subr.bf16.mxu0 0
      %1391 = vmatpush1.bf16.msra.mxu0 0
      %1392 = vmatprep.subr.bf16.mxu0 0
      %1393 = vmatpush1.bf16.msra.mxu0 0
      %1394 = vmatprep.subr.bf16.mxu0 0
      %1395 = vmatpush1.bf16.msra.mxu0 0
      %1396 = vmatprep.mubr.bf16.mxu0 0
      %1397 = vmatmul.mubr.bf16.gmra.mrb[0].mxu0 %v1362
      %v1398 = vpop.f32.mrb[0].mxu0
      %v1399 = vadd.f32 0.0, %v1398
      %v1400 = vpop.f32.mrb[0].mxu0
      %v1401 = vpop.f32.mrb[0].mxu0
      %v1402 = vadd.f32 0.0, %v1401
      %v1403 = vpop.f32.mrb[0].mxu0
      %1404 = vdwg.mxu0
      %1405 = vrot.lane.b32.xlu0 %v765, 64
      %v1406 = vpop.permute.xlu0 %1405
      %v1409 = vsel %vm1173, %v1351, 0
      %1411 = vmatprep.subr.bf16.mxu0 0
      %1412 = vmatpush1.bf16.msra.mxu0 %v1406
      %1413 = vmatprep.subr.bf16.mxu0 0
      %1414 = vmatpush1.bf16.msra.mxu0 0
      %1415 = vmatprep.subr.bf16.mxu0 0
      %1416 = vmatpush1.bf16.msra.mxu0 0
      %1417 = vmatprep.subr.bf16.mxu0 0
      %1418 = vmatpush1.bf16.msra.mxu0 0
      %1419 = vmatprep.subr.bf16.mxu0 0
      %1420 = vmatpush1.bf16.msra.mxu0 0
      %1421 = vmatprep.subr.bf16.mxu0 0
      %1422 = vmatpush1.bf16.msra.mxu0 0
      %1423 = vmatprep.subr.bf16.mxu0 0
      %1424 = vmatpush1.bf16.msra.mxu0 0
      %1425 = vmatprep.subr.bf16.mxu0 0
      %1426 = vmatpush1.bf16.msra.mxu0 0
      %1427 = vmatprep.subr.bf16.mxu0 0
      %1428 = vmatpush1.bf16.msra.mxu0 0
      %1429 = vmatprep.subr.bf16.mxu0 0
      %1430 = vmatpush1.bf16.msra.mxu0 0
      %1431 = vmatprep.subr.bf16.mxu0 0
      %1432 = vmatpush1.bf16.msra.mxu0 0
      %1433 = vmatprep.subr.bf16.mxu0 0
      %1434 = vmatpush1.bf16.msra.mxu0 0
      %1435 = vmatprep.subr.bf16.mxu0 0
      %1436 = vmatpush1.bf16.msra.mxu0 0
      %1437 = vmatprep.subr.bf16.mxu0 0
      %1438 = vmatpush1.bf16.msra.mxu0 0
      %1439 = vmatprep.subr.bf16.mxu0 0
      %1440 = vmatpush1.bf16.msra.mxu0 0
      %1441 = vmatprep.subr.bf16.mxu0 0
      %1442 = vmatpush1.bf16.msra.mxu0 0
      %1443 = vmatprep.mubr.bf16.mxu0 0
      %1444 = vmatmul.mubr.bf16.gmra.mrb[0].mxu0 %v1409
      %v1445 = vpop.f32.mrb[0].mxu0
      %v1446 = vadd.f32 0.0, %v1445
      %v1447 = vpop.f32.mrb[0].mxu0
      %v1448 = vpop.f32.mrb[0].mxu0
      %v1449 = vadd.f32 0.0, %v1448
      %v1450 = vpop.f32.mrb[0].mxu0
      %1451 = vdwg.mxu0
      %1452 = vrot.lane.b32.xlu0 %v766, 64
      %v1453 = vpop.permute.xlu0 %1452
      %v1456 = vsel %vm1173, %v1352, 0
      %1458 = vmatprep.subr.bf16.mxu0 0
      %1459 = vmatpush1.bf16.msra.mxu0 %v1453
      %1460 = vmatprep.subr.bf16.mxu0 0
      %1461 = vmatpush1.bf16.msra.mxu0 0
      %1462 = vmatprep.subr.bf16.mxu0 0
      %1463 = vmatpush1.bf16.msra.mxu0 0
      %1464 = vmatprep.subr.bf16.mxu0 0
      %1465 = vmatpush1.bf16.msra.mxu0 0
      %1466 = vmatprep.subr.bf16.mxu0 0
      %1467 = vmatpush1.bf16.msra.mxu0 0
      %1468 = vmatprep.subr.bf16.mxu0 0
      %1469 = vmatpush1.bf16.msra.mxu0 0
      %1470 = vmatprep.subr.bf16.mxu0 0
      %1471 = vmatpush1.bf16.msra.mxu0 0
      %1472 = vmatprep.subr.bf16.mxu0 0
      %1473 = vmatpush1.bf16.msra.mxu0 0
      %1474 = vmatprep.subr.bf16.mxu0 0
      %1475 = vmatpush1.bf16.msra.mxu0 0
      %1476 = vmatprep.subr.bf16.mxu0 0
      %1477 = vmatpush1.bf16.msra.mxu0 0
      %1478 = vmatprep.subr.bf16.mxu0 0
      %1479 = vmatpush1.bf16.msra.mxu0 0
      %1480 = vmatprep.subr.bf16.mxu0 0
      %1481 = vmatpush1.bf16.msra.mxu0 0
      %1482 = vmatprep.subr.bf16.mxu0 0
      %1483 = vmatpush1.bf16.msra.mxu0 0
      %1484 = vmatprep.subr.bf16.mxu0 0
      %1485 = vmatpush1.bf16.msra.mxu0 0
      %1486 = vmatprep.subr.bf16.mxu0 0
      %1487 = vmatpush1.bf16.msra.mxu0 0
      %1488 = vmatprep.subr.bf16.mxu0 0
      %1489 = vmatpush1.bf16.msra.mxu0 0
      %1490 = vmatprep.mubr.bf16.mxu0 0
      %1491 = vmatmul.mubr.bf16.gmra.mrb[0].mxu0 %v1456
      %v1492 = vpop.f32.mrb[0].mxu0
      %v1493 = vadd.f32 0.0, %v1492
      %v1494 = vpop.f32.mrb[0].mxu0
      %v1495 = vpop.f32.mrb[0].mxu0
      %v1496 = vadd.f32 0.0, %v1495
      %v1497 = vpop.f32.mrb[0].mxu0
      %1498 = vdwg.mxu0
      %1499 = vrot.lane.b32.xlu0 %v767, 64
      %v1500 = vpop.permute.xlu0 %1499
      %v1503 = vsel %vm1173, %v1353, 0
      %1505 = vmatprep.subr.bf16.mxu0 0
      %1506 = vmatpush1.bf16.msra.mxu0 %v1500
      %1507 = vmatprep.subr.bf16.mxu0 0
      %1508 = vmatpush1.bf16.msra.mxu0 0
      %1509 = vmatprep.subr.bf16.mxu0 0
      %1510 = vmatpush1.bf16.msra.mxu0 0
      %1511 = vmatprep.subr.bf16.mxu0 0
      %1512 = vmatpush1.bf16.msra.mxu0 0
      %1513 = vmatprep.subr.bf16.mxu0 0
      %1514 = vmatpush1.bf16.msra.mxu0 0
      %1515 = vmatprep.subr.bf16.mxu0 0
      %1516 = vmatpush1.bf16.msra.mxu0 0
      %1517 = vmatprep.subr.bf16.mxu0 0
      %1518 = vmatpush1.bf16.msra.mxu0 0
      %1519 = vmatprep.subr.bf16.mxu0 0
      %1520 = vmatpush1.bf16.msra.mxu0 0
      %1521 = vmatprep.subr.bf16.mxu0 0
      %1522 = vmatpush1.bf16.msra.mxu0 0
      %1523 = vmatprep.subr.bf16.mxu0 0
      %1524 = vmatpush1.bf16.msra.mxu0 0
      %1525 = vmatprep.subr.bf16.mxu0 0
      %1526 = vmatpush1.bf16.msra.mxu0 0
      %1527 = vmatprep.subr.bf16.mxu0 0
      %1528 = vmatpush1.bf16.msra.mxu0 0
      %1529 = vmatprep.subr.bf16.mxu0 0
      %1530 = vmatpush1.bf16.msra.mxu0 0
      %1531 = vmatprep.subr.bf16.mxu0 0
      %1532 = vmatpush1.bf16.msra.mxu0 0
      %1533 = vmatprep.subr.bf16.mxu0 0
      %1534 = vmatpush1.bf16.msra.mxu0 0
      %1535 = vmatprep.subr.bf16.mxu0 0
      %1536 = vmatpush1.bf16.msra.mxu0 0
      %1537 = vmatprep.mubr.bf16.mxu0 0
      %1538 = vmatmul.mubr.bf16.gmra.mrb[0].mxu0 %v1503
      %v1539 = vpop.f32.mrb[0].mxu0
      %v1540 = vadd.f32 0.0, %v1539
      %v1541 = vpop.f32.mrb[0].mxu0
      %v1542 = vpop.f32.mrb[0].mxu0
      %v1543 = vadd.f32 0.0, %v1542
      %v1544 = vpop.f32.mrb[0].mxu0
      %1545 = vdwg.mxu0
      %1546 = vrot.lane.b32.xlu0 %v768, 64
      %v1547 = vpop.permute.xlu0 %1546
      %v1550 = vsel %vm1173, %v1354, 0
      %1552 = vmatprep.subr.bf16.mxu0 0
      %1553 = vmatpush1.bf16.msra.mxu0 %v1547
      %1554 = vmatprep.subr.bf16.mxu0 0
      %1555 = vmatpush1.bf16.msra.mxu0 0
      %1556 = vmatprep.subr.bf16.mxu0 0
      %1557 = vmatpush1.bf16.msra.mxu0 0
      %1558 = vmatprep.subr.bf16.mxu0 0
      %1559 = vmatpush1.bf16.msra.mxu0 0
      %1560 = vmatprep.subr.bf16.mxu0 0
      %1561 = vmatpush1.bf16.msra.mxu0 0
      %1562 = vmatprep.subr.bf16.mxu0 0
      %1563 = vmatpush1.bf16.msra.mxu0 0
      %1564 = vmatprep.subr.bf16.mxu0 0
      %1565 = vmatpush1.bf16.msra.mxu0 0
      %1566 = vmatprep.subr.bf16.mxu0 0
      %1567 = vmatpush1.bf16.msra.mxu0 0
      %1568 = vmatprep.subr.bf16.mxu0 0
      %1569 = vmatpush1.bf16.msra.mxu0 0
      %1570 = vmatprep.subr.bf16.mxu0 0
      %1571 = vmatpush1.bf16.msra.mxu0 0
      %1572 = vmatprep.subr.bf16.mxu0 0
      %1573 = vmatpush1.bf16.msra.mxu0 0
      %1574 = vmatprep.subr.bf16.mxu0 0
      %1575 = vmatpush1.bf16.msra.mxu0 0
      %1576 = vmatprep.subr.bf16.mxu0 0
      %1577 = vmatpush1.bf16.msra.mxu0 0
      %1578 = vmatprep.subr.bf16.mxu0 0
      %1579 = vmatpush1.bf16.msra.mxu0 0
      %1580 = vmatprep.subr.bf16.mxu0 0
      %1581 = vmatpush1.bf16.msra.mxu0 0
      %1582 = vmatprep.subr.bf16.mxu0 0
      %1583 = vmatpush1.bf16.msra.mxu0 0
      %1584 = vmatprep.mubr.bf16.mxu0 0
      %1585 = vmatmul.mubr.bf16.gmra.mrb[0].mxu0 %v1550
      %v1586 = vpop.f32.mrb[0].mxu0
      %v1587 = vadd.f32 0.0, %v1586
      %v1588 = vpop.f32.mrb[0].mxu0
      %v1589 = vpop.f32.mrb[0].mxu0
      %v1590 = vadd.f32 0.0, %v1589
      %v1591 = vpop.f32.mrb[0].mxu0
      %1592 = vdwg.mxu0
      %1593 = vrot.lane.b32.xlu0 %v769, 64
      %v1594 = vpop.permute.xlu0 %1593
      %v1597 = vsel %vm1173, %v1355, 0
      %1599 = vmatprep.subr.bf16.mxu0 0
      %1600 = vmatpush1.bf16.msra.mxu0 %v1594
      %1601 = vmatprep.subr.bf16.mxu0 0
      %1602 = vmatpush1.bf16.msra.mxu0 0
      %1603 = vmatprep.subr.bf16.mxu0 0
      %1604 = vmatpush1.bf16.msra.mxu0 0
      %1605 = vmatprep.subr.bf16.mxu0 0
      %1606 = vmatpush1.bf16.msra.mxu0 0
      %1607 = vmatprep.subr.bf16.mxu0 0
      %1608 = vmatpush1.bf16.msra.mxu0 0
      %1609 = vmatprep.subr.bf16.mxu0 0
      %1610 = vmatpush1.bf16.msra.mxu0 0
      %1611 = vmatprep.subr.bf16.mxu0 0
      %1612 = vmatpush1.bf16.msra.mxu0 0
      %1613 = vmatprep.subr.bf16.mxu0 0
      %1614 = vmatpush1.bf16.msra.mxu0 0
      %1615 = vmatprep.subr.bf16.mxu0 0
      %1616 = vmatpush1.bf16.msra.mxu0 0
      %1617 = vmatprep.subr.bf16.mxu0 0
      %1618 = vmatpush1.bf16.msra.mxu0 0
      %1619 = vmatprep.subr.bf16.mxu0 0
      %1620 = vmatpush1.bf16.msra.mxu0 0
      %1621 = vmatprep.subr.bf16.mxu0 0
      %1622 = vmatpush1.bf16.msra.mxu0 0
      %1623 = vmatprep.subr.bf16.mxu0 0
      %1624 = vmatpush1.bf16.msra.mxu0 0
      %1625 = vmatprep.subr.bf16.mxu0 0
      %1626 = vmatpush1.bf16.msra.mxu0 0
      %1627 = vmatprep.subr.bf16.mxu0 0
      %1628 = vmatpush1.bf16.msra.mxu0 0
      %1629 = vmatprep.subr.bf16.mxu0 0
      %1630 = vmatpush1.bf16.msra.mxu0 0
      %1631 = vmatprep.mubr.bf16.mxu0 0
      %1632 = vmatmul.mubr.bf16.gmra.mrb[0].mxu0 %v1597
      %v1633 = vpop.f32.mrb[0].mxu0
      %v1634 = vadd.f32 0.0, %v1633
      %v1635 = vpop.f32.mrb[0].mxu0
      %v1636 = vpop.f32.mrb[0].mxu0
      %v1637 = vadd.f32 0.0, %v1636
      %v1638 = vpop.f32.mrb[0].mxu0
      %1639 = vdwg.mxu0
      %1640 = vrot.lane.b32.xlu0 %v770, 64
      %v1641 = vpop.permute.xlu0 %1640
      %v1644 = vsel %vm1173, %v1356, 0
      %1646 = vmatprep.subr.bf16.mxu0 0
      %1647 = vmatpush1.bf16.msra.mxu0 %v1641
      %1648 = vmatprep.subr.bf16.mxu0 0
      %1649 = vmatpush1.bf16.msra.mxu0 0
      %1650 = vmatprep.subr.bf16.mxu0 0
      %1651 = vmatpush1.bf16.msra.mxu0 0
      %1652 = vmatprep.subr.bf16.mxu0 0
      %1653 = vmatpush1.bf16.msra.mxu0 0
      %1654 = vmatprep.subr.bf16.mxu0 0
      %1655 = vmatpush1.bf16.msra.mxu0 0
      %1656 = vmatprep.subr.bf16.mxu0 0
      %1657 = vmatpush1.bf16.msra.mxu0 0
      %1658 = vmatprep.subr.bf16.mxu0 0
      %1659 = vmatpush1.bf16.msra.mxu0 0
      %1660 = vmatprep.subr.bf16.mxu0 0
      %1661 = vmatpush1.bf16.msra.mxu0 0
      %1662 = vmatprep.subr.bf16.mxu0 0
      %1663 = vmatpush1.bf16.msra.mxu0 0
      %1664 = vmatprep.subr.bf16.mxu0 0
      %1665 = vmatpush1.bf16.msra.mxu0 0
      %1666 = vmatprep.subr.bf16.mxu0 0
      %1667 = vmatpush1.bf16.msra.mxu0 0
      %1668 = vmatprep.subr.bf16.mxu0 0
      %1669 = vmatpush1.bf16.msra.mxu0 0
      %1670 = vmatprep.subr.bf16.mxu0 0
      %1671 = vmatpush1.bf16.msra.mxu0 0
      %1672 = vmatprep.subr.bf16.mxu0 0
      %1673 = vmatpush1.bf16.msra.mxu0 0
      %1674 = vmatprep.subr.bf16.mxu0 0
      %1675 = vmatpush1.bf16.msra.mxu0 0
      %1676 = vmatprep.subr.bf16.mxu0 0
      %1677 = vmatpush1.bf16.msra.mxu0 0
      %1678 = vmatprep.mubr.bf16.mxu0 0
      %1679 = vmatmul.mubr.bf16.gmra.mrb[0].mxu0 %v1644
      %v1680 = vpop.f32.mrb[0].mxu0
      %v1681 = vadd.f32 0.0, %v1680
      %v1682 = vpop.f32.mrb[0].mxu0
      %v1683 = vpop.f32.mrb[0].mxu0
      %v1684 = vadd.f32 0.0, %v1683
      %v1685 = vpop.f32.mrb[0].mxu0
      %1686 = vdwg.mxu0
      %1687 = vrot.lane.b32.xlu0 %v771, 64
      %v1688 = vpop.permute.xlu0 %1687
      %v1691 = vsel %vm1173, %v1357, 0
      %1693 = vmatprep.subr.bf16.mxu0 0
      %1694 = vmatpush1.bf16.msra.mxu0 %v1688
      %1695 = vmatprep.subr.bf16.mxu0 0
      %1696 = vmatpush1.bf16.msra.mxu0 0
      %1697 = vmatprep.subr.bf16.mxu0 0
      %1698 = vmatpush1.bf16.msra.mxu0 0
      %1699 = vmatprep.subr.bf16.mxu0 0
      %1700 = vmatpush1.bf16.msra.mxu0 0
      %1701 = vmatprep.subr.bf16.mxu0 0
      %1702 = vmatpush1.bf16.msra.mxu0 0
      %1703 = vmatprep.subr.bf16.mxu0 0
      %1704 = vmatpush1.bf16.msra.mxu0 0
      %1705 = vmatprep.subr.bf16.mxu0 0
      %1706 = vmatpush1.bf16.msra.mxu0 0
      %1707 = vmatprep.subr.bf16.mxu0 0
      %1708 = vmatpush1.bf16.msra.mxu0 0
      %1709 = vmatprep.subr.bf16.mxu0 0
      %1710 = vmatpush1.bf16.msra.mxu0 0
      %1711 = vmatprep.subr.bf16.mxu0 0
      %1712 = vmatpush1.bf16.msra.mxu0 0
      %1713 = vmatprep.subr.bf16.mxu0 0
      %1714 = vmatpush1.bf16.msra.mxu0 0
      %1715 = vmatprep.subr.bf16.mxu0 0
      %1716 = vmatpush1.bf16.msra.mxu0 0
      %1717 = vmatprep.subr.bf16.mxu0 0
      %1718 = vmatpush1.bf16.msra.mxu0 0
      %1719 = vmatprep.subr.bf16.mxu0 0
      %1720 = vmatpush1.bf16.msra.mxu0 0
      %1721 = vmatprep.subr.bf16.mxu0 0
      %1722 = vmatpush1.bf16.msra.mxu0 0
      %1723 = vmatprep.subr.bf16.mxu0 0
      %1724 = vmatpush1.bf16.msra.mxu0 0
      %1725 = vmatprep.mubr.bf16.mxu0 0
      %1726 = vmatmul.mubr.bf16.gmra.mrb[0].mxu0 %v1691
      %v1727 = vpop.f32.mrb[0].mxu0
      %v1728 = vadd.f32 0.0, %v1727
      %v1729 = vpop.f32.mrb[0].mxu0
      %v1730 = vpop.f32.mrb[0].mxu0
      %v1731 = vadd.f32 0.0, %v1730
      %v1732 = vpop.f32.mrb[0].mxu0
      %1733 = vdwg.mxu0
      %v1734 = vld [vmem:[#allocation2] sm:$0xff]
      %v1735 = vld [vmem:[#allocation2 + $0x8] sm:$0xff]
      %v1736 = vld [vmem:[#allocation2 + $0x10] sm:$0xff]
      %v1737 = vld [vmem:[#allocation2 + $0x18] sm:$0xff]
      %v1738 = vld [vmem:[#allocation2 + $0x20] sm:$0xff]
      %v1739 = vld [vmem:[#allocation2 + $0x28] sm:$0xff]
      %v1740 = vld [vmem:[#allocation2 + $0x30] sm:$0xff]
      %v1741 = vld [vmem:[#allocation2 + $0x38] sm:$0xff]
      %1743 = vrot.lane.b32.xlu0 %v1734, 120
      %v1744 = vpop.permute.xlu0 %1743
      %1745 = vrot.lane.b32.xlu0 %v1734, 88
      %v1746 = vpop.permute.xlu0 %1745
      %v1748 = vsel %vm775, %v1744, 0
      %v1751 = vsel %vm775, %v1746, 0
      %1753 = vmatprep.subr.bf16.mxu0 0
      %1754 = vmatpush1.bf16.xpose.msra.mxu0 %v1751
      %1755 = vmatprep.subr.bf16.mxu0 0
      %1756 = vmatpush1.bf16.xpose.msra.mxu0 0
      %1757 = vmatprep.subr.bf16.mxu0 0
      %1758 = vmatpush1.bf16.xpose.msra.mxu0 0
      %1759 = vmatprep.subr.bf16.mxu0 0
      %1760 = vmatpush1.bf16.xpose.msra.mxu0 0
      %1761 = vmatprep.subr.bf16.mxu0 0
      %1762 = vmatpush1.bf16.xpose.msra.mxu0 0
      %1763 = vmatprep.subr.bf16.mxu0 0
      %1764 = vmatpush1.bf16.xpose.msra.mxu0 0
      %1765 = vmatprep.subr.bf16.mxu0 0
      %1766 = vmatpush1.bf16.xpose.msra.mxu0 0
      %1767 = vmatprep.subr.bf16.mxu0 0
      %1768 = vmatpush1.bf16.xpose.msra.mxu0 0
      %1769 = vmatprep.subr.bf16.mxu0 0
      %1770 = vmatpush1.bf16.xpose.msra.mxu0 0
      %1771 = vmatprep.subr.bf16.mxu0 0
      %1772 = vmatpush1.bf16.xpose.msra.mxu0 0
      %1773 = vmatprep.subr.bf16.mxu0 0
      %1774 = vmatpush1.bf16.xpose.msra.mxu0 0
      %1775 = vmatprep.subr.bf16.mxu0 0
      %1776 = vmatpush1.bf16.xpose.msra.mxu0 0
      %1777 = vmatprep.subr.bf16.mxu0 0
      %1778 = vmatpush1.bf16.xpose.msra.mxu0 0
      %1779 = vmatprep.subr.bf16.mxu0 0
      %1780 = vmatpush1.bf16.xpose.msra.mxu0 0
      %1781 = vmatprep.subr.bf16.mxu0 0
      %1782 = vmatpush1.bf16.xpose.msra.mxu0 0
      %1783 = vmatprep.subr.bf16.mxu0 0
      %1784 = vmatpush1.bf16.xpose.msra.mxu0 0
      %1785 = vmatprep.mubr.bf16.mxu0 0
      %1786 = vmatmul.mubr.bf16.gmra.mrb[0].mxu0 %v1748
      %v1787 = vpop.f32.mrb[0].mxu0
      %v1788 = vadd.f32 %v758, %v1787
      %v1789 = vpop.f32.mrb[0].mxu0
      %v1790 = vpop.f32.mrb[0].mxu0
      %v1791 = vadd.f32 %v759, %v1790
      %v1792 = vpop.f32.mrb[0].mxu0
      %1793 = vdwg.mxu0
      %1795 = vrot.lane.b32.xlu0 %v1735, 120
      %v1796 = vpop.permute.xlu0 %1795
      %1797 = vrot.lane.b32.xlu0 %v1735, 88
      %v1798 = vpop.permute.xlu0 %1797
      %v1800 = vsel %vm775, %v1796, 0
      %v1803 = vsel %vm775, %v1798, 0
      %1805 = vmatprep.subr.bf16.mxu0 0
      %1806 = vmatpush1.bf16.xpose.msra.mxu0 %v1803
      %1807 = vmatprep.subr.bf16.mxu0 0
      %1808 = vmatpush1.bf16.xpose.msra.mxu0 0
      %1809 = vmatprep.subr.bf16.mxu0 0
      %1810 = vmatpush1.bf16.xpose.msra.mxu0 0
      %1811 = vmatprep.subr.bf16.mxu0 0
      %1812 = vmatpush1.bf16.xpose.msra.mxu0 0
      %1813 = vmatprep.subr.bf16.mxu0 0
      %1814 = vmatpush1.bf16.xpose.msra.mxu0 0
      %1815 = vmatprep.subr.bf16.mxu0 0
      %1816 = vmatpush1.bf16.xpose.msra.mxu0 0
      %1817 = vmatprep.subr.bf16.mxu0 0
      %1818 = vmatpush1.bf16.xpose.msra.mxu0 0
      %1819 = vmatprep.subr.bf16.mxu0 0
      %1820 = vmatpush1.bf16.xpose.msra.mxu0 0
      %1821 = vmatprep.subr.bf16.mxu0 0
      %1822 = vmatpush1.bf16.xpose.msra.mxu0 0
      %1823 = vmatprep.subr.bf16.mxu0 0
      %1824 = vmatpush1.bf16.xpose.msra.mxu0 0
      %1825 = vmatprep.subr.bf16.mxu0 0
      %1826 = vmatpush1.bf16.xpose.msra.mxu0 0
      %1827 = vmatprep.subr.bf16.mxu0 0
      %1828 = vmatpush1.bf16.xpose.msra.mxu0 0
      %1829 = vmatprep.subr.bf16.mxu0 0
      %1830 = vmatpush1.bf16.xpose.msra.mxu0 0
      %1831 = vmatprep.subr.bf16.mxu0 0
      %1832 = vmatpush1.bf16.xpose.msra.mxu0 0
      %1833 = vmatprep.subr.bf16.mxu0 0
      %1834 = vmatpush1.bf16.xpose.msra.mxu0 0
      %1835 = vmatprep.subr.bf16.mxu0 0
      %1836 = vmatpush1.bf16.xpose.msra.mxu0 0
      %1837 = vmatprep.mubr.bf16.mxu0 0
      %1838 = vmatmul.mubr.bf16.gmra.mrb[0].mxu0 %v1800
      %v1839 = vpop.f32.mrb[0].mxu0
      %v1840 = vadd.f32 %v758, %v1839
      %v1841 = vpop.f32.mrb[0].mxu0
      %v1842 = vpop.f32.mrb[0].mxu0
      %v1843 = vadd.f32 %v759, %v1842
      %v1844 = vpop.f32.mrb[0].mxu0
      %1845 = vdwg.mxu0
      %1847 = vrot.lane.b32.xlu0 %v1736, 120
      %v1848 = vpop.permute.xlu0 %1847
      %1849 = vrot.lane.b32.xlu0 %v1736, 88
      %v1850 = vpop.permute.xlu0 %1849
      %v1852 = vsel %vm775, %v1848, 0
      %v1855 = vsel %vm775, %v1850, 0
      %1857 = vmatprep.subr.bf16.mxu0 0
      %1858 = vmatpush1.bf16.xpose.msra.mxu0 %v1855
      %1859 = vmatprep.subr.bf16.mxu0 0
      %1860 = vmatpush1.bf16.xpose.msra.mxu0 0
      %1861 = vmatprep.subr.bf16.mxu0 0
      %1862 = vmatpush1.bf16.xpose.msra.mxu0 0
      %1863 = vmatprep.subr.bf16.mxu0 0
      %1864 = vmatpush1.bf16.xpose.msra.mxu0 0
      %1865 = vmatprep.subr.bf16.mxu0 0
      %1866 = vmatpush1.bf16.xpose.msra.mxu0 0
      %1867 = vmatprep.subr.bf16.mxu0 0
      %1868 = vmatpush1.bf16.xpose.msra.mxu0 0
      %1869 = vmatprep.subr.bf16.mxu0 0
      %1870 = vmatpush1.bf16.xpose.msra.mxu0 0
      %1871 = vmatprep.subr.bf16.mxu0 0
      %1872 = vmatpush1.bf16.xpose.msra.mxu0 0
      %1873 = vmatprep.subr.bf16.mxu0 0
      %1874 = vmatpush1.bf16.xpose.msra.mxu0 0
      %1875 = vmatprep.subr.bf16.mxu0 0
      %1876 = vmatpush1.bf16.xpose.msra.mxu0 0
      %1877 = vmatprep.subr.bf16.mxu0 0
      %1878 = vmatpush1.bf16.xpose.msra.mxu0 0
      %1879 = vmatprep.subr.bf16.mxu0 0
      %1880 = vmatpush1.bf16.xpose.msra.mxu0 0
      %1881 = vmatprep.subr.bf16.mxu0 0
      %1882 = vmatpush1.bf16.xpose.msra.mxu0 0
      %1883 = vmatprep.subr.bf16.mxu0 0
      %1884 = vmatpush1.bf16.xpose.msra.mxu0 0
      %1885 = vmatprep.subr.bf16.mxu0 0
      %1886 = vmatpush1.bf16.xpose.msra.mxu0 0
      %1887 = vmatprep.subr.bf16.mxu0 0
      %1888 = vmatpush1.bf16.xpose.msra.mxu0 0
      %1889 = vmatprep.mubr.bf16.mxu0 0
      %1890 = vmatmul.mubr.bf16.gmra.mrb[0].mxu0 %v1852
      %v1891 = vpop.f32.mrb[0].mxu0
      %v1892 = vadd.f32 %v758, %v1891
      %v1893 = vpop.f32.mrb[0].mxu0
      %v1894 = vpop.f32.mrb[0].mxu0
      %v1895 = vadd.f32 %v759, %v1894
      %v1896 = vpop.f32.mrb[0].mxu0
      %1897 = vdwg.mxu0
      %1899 = vrot.lane.b32.xlu0 %v1737, 120
      %v1900 = vpop.permute.xlu0 %1899
      %1901 = vrot.lane.b32.xlu0 %v1737, 88
      %v1902 = vpop.permute.xlu0 %1901
      %v1904 = vsel %vm775, %v1900, 0
      %v1907 = vsel %vm775, %v1902, 0
      %1909 = vmatprep.subr.bf16.mxu0 0
      %1910 = vmatpush1.bf16.xpose.msra.mxu0 %v1907
      %1911 = vmatprep.subr.bf16.mxu0 0
      %1912 = vmatpush1.bf16.xpose.msra.mxu0 0
      %1913 = vmatprep.subr.bf16.mxu0 0
      %1914 = vmatpush1.bf16.xpose.msra.mxu0 0
      %1915 = vmatprep.subr.bf16.mxu0 0
      %1916 = vmatpush1.bf16.xpose.msra.mxu0 0
      %1917 = vmatprep.subr.bf16.mxu0 0
      %1918 = vmatpush1.bf16.xpose.msra.mxu0 0
      %1919 = vmatprep.subr.bf16.mxu0 0
      %1920 = vmatpush1.bf16.xpose.msra.mxu0 0
      %1921 = vmatprep.subr.bf16.mxu0 0
      %1922 = vmatpush1.bf16.xpose.msra.mxu0 0
      %1923 = vmatprep.subr.bf16.mxu0 0
      %1924 = vmatpush1.bf16.xpose.msra.mxu0 0
      %1925 = vmatprep.subr.bf16.mxu0 0
      %1926 = vmatpush1.bf16.xpose.msra.mxu0 0
      %1927 = vmatprep.subr.bf16.mxu0 0
      %1928 = vmatpush1.bf16.xpose.msra.mxu0 0
      %1929 = vmatprep.subr.bf16.mxu0 0
      %1930 = vmatpush1.bf16.xpose.msra.mxu0 0
      %1931 = vmatprep.subr.bf16.mxu0 0
      %1932 = vmatpush1.bf16.xpose.msra.mxu0 0
      %1933 = vmatprep.subr.bf16.mxu0 0
      %1934 = vmatpush1.bf16.xpose.msra.mxu0 0
      %1935 = vmatprep.subr.bf16.mxu0 0
      %1936 = vmatpush1.bf16.xpose.msra.mxu0 0
      %1937 = vmatprep.subr.bf16.mxu0 0
      %1938 = vmatpush1.bf16.xpose.msra.mxu0 0
      %1939 = vmatprep.subr.bf16.mxu0 0
      %1940 = vmatpush1.bf16.xpose.msra.mxu0 0
      %1941 = vmatprep.mubr.bf16.mxu0 0
      %1942 = vmatmul.mubr.bf16.gmra.mrb[0].mxu0 %v1904
      %v1943 = vpop.f32.mrb[0].mxu0
      %v1944 = vadd.f32 %v758, %v1943
      %v1945 = vpop.f32.mrb[0].mxu0
      %v1946 = vpop.f32.mrb[0].mxu0
      %v1947 = vadd.f32 %v759, %v1946
      %v1948 = vpop.f32.mrb[0].mxu0
      %1949 = vdwg.mxu0
      %1951 = vrot.lane.b32.xlu0 %v1738, 120
      %v1952 = vpop.permute.xlu0 %1951
      %1953 = vrot.lane.b32.xlu0 %v1738, 88
      %v1954 = vpop.permute.xlu0 %1953
      %v1956 = vsel %vm775, %v1952, 0
      %v1959 = vsel %vm775, %v1954, 0
      %1961 = vmatprep.subr.bf16.mxu0 0
      %1962 = vmatpush1.bf16.xpose.msra.mxu0 %v1959
      %1963 = vmatprep.subr.bf16.mxu0 0
      %1964 = vmatpush1.bf16.xpose.msra.mxu0 0
      %1965 = vmatprep.subr.bf16.mxu0 0
      %1966 = vmatpush1.bf16.xpose.msra.mxu0 0
      %1967 = vmatprep.subr.bf16.mxu0 0
      %1968 = vmatpush1.bf16.xpose.msra.mxu0 0
      %1969 = vmatprep.subr.bf16.mxu0 0
      %1970 = vmatpush1.bf16.xpose.msra.mxu0 0
      %1971 = vmatprep.subr.bf16.mxu0 0
      %1972 = vmatpush1.bf16.xpose.msra.mxu0 0
      %1973 = vmatprep.subr.bf16.mxu0 0
      %1974 = vmatpush1.bf16.xpose.msra.mxu0 0
      %1975 = vmatprep.subr.bf16.mxu0 0
      %1976 = vmatpush1.bf16.xpose.msra.mxu0 0
      %1977 = vmatprep.subr.bf16.mxu0 0
      %1978 = vmatpush1.bf16.xpose.msra.mxu0 0
      %1979 = vmatprep.subr.bf16.mxu0 0
      %1980 = vmatpush1.bf16.xpose.msra.mxu0 0
      %1981 = vmatprep.subr.bf16.mxu0 0
      %1982 = vmatpush1.bf16.xpose.msra.mxu0 0
      %1983 = vmatprep.subr.bf16.mxu0 0
      %1984 = vmatpush1.bf16.xpose.msra.mxu0 0
      %1985 = vmatprep.subr.bf16.mxu0 0
      %1986 = vmatpush1.bf16.xpose.msra.mxu0 0
      %1987 = vmatprep.subr.bf16.mxu0 0
      %1988 = vmatpush1.bf16.xpose.msra.mxu0 0
      %1989 = vmatprep.subr.bf16.mxu0 0
      %1990 = vmatpush1.bf16.xpose.msra.mxu0 0
      %1991 = vmatprep.subr.bf16.mxu0 0
      %1992 = vmatpush1.bf16.xpose.msra.mxu0 0
      %1993 = vmatprep.mubr.bf16.mxu0 0
      %1994 = vmatmul.mubr.bf16.gmra.mrb[0].mxu0 %v1956
      %v1995 = vpop.f32.mrb[0].mxu0
      %v1996 = vadd.f32 %v758, %v1995
      %v1997 = vpop.f32.mrb[0].mxu0
      %v1998 = vpop.f32.mrb[0].mxu0
      %v1999 = vadd.f32 %v759, %v1998
      %v2000 = vpop.f32.mrb[0].mxu0
      %2001 = vdwg.mxu0
      %2003 = vrot.lane.b32.xlu0 %v1739, 120
      %v2004 = vpop.permute.xlu0 %2003
      %2005 = vrot.lane.b32.xlu0 %v1739, 88
      %v2006 = vpop.permute.xlu0 %2005
      %v2008 = vsel %vm775, %v2004, 0
      %v2011 = vsel %vm775, %v2006, 0
      %2013 = vmatprep.subr.bf16.mxu0 0
      %2014 = vmatpush1.bf16.xpose.msra.mxu0 %v2011
      %2015 = vmatprep.subr.bf16.mxu0 0
      %2016 = vmatpush1.bf16.xpose.msra.mxu0 0
      %2017 = vmatprep.subr.bf16.mxu0 0
      %2018 = vmatpush1.bf16.xpose.msra.mxu0 0
      %2019 = vmatprep.subr.bf16.mxu0 0
      %2020 = vmatpush1.bf16.xpose.msra.mxu0 0
      %2021 = vmatprep.subr.bf16.mxu0 0
      %2022 = vmatpush1.bf16.xpose.msra.mxu0 0
      %2023 = vmatprep.subr.bf16.mxu0 0
      %2024 = vmatpush1.bf16.xpose.msra.mxu0 0
      %2025 = vmatprep.subr.bf16.mxu0 0
      %2026 = vmatpush1.bf16.xpose.msra.mxu0 0
      %2027 = vmatprep.subr.bf16.mxu0 0
      %2028 = vmatpush1.bf16.xpose.msra.mxu0 0
      %2029 = vmatprep.subr.bf16.mxu0 0
      %2030 = vmatpush1.bf16.xpose.msra.mxu0 0
      %2031 = vmatprep.subr.bf16.mxu0 0
      %2032 = vmatpush1.bf16.xpose.msra.mxu0 0
      %2033 = vmatprep.subr.bf16.mxu0 0
      %2034 = vmatpush1.bf16.xpose.msra.mxu0 0
      %2035 = vmatprep.subr.bf16.mxu0 0
      %2036 = vmatpush1.bf16.xpose.msra.mxu0 0
      %2037 = vmatprep.subr.bf16.mxu0 0
      %2038 = vmatpush1.bf16.xpose.msra.mxu0 0
      %2039 = vmatprep.subr.bf16.mxu0 0
      %2040 = vmatpush1.bf16.xpose.msra.mxu0 0
      %2041 = vmatprep.subr.bf16.mxu0 0
      %2042 = vmatpush1.bf16.xpose.msra.mxu0 0
      %2043 = vmatprep.subr.bf16.mxu0 0
      %2044 = vmatpush1.bf16.xpose.msra.mxu0 0
      %2045 = vmatprep.mubr.bf16.mxu0 0
      %2046 = vmatmul.mubr.bf16.gmra.mrb[0].mxu0 %v2008
      %v2047 = vpop.f32.mrb[0].mxu0
      %v2048 = vadd.f32 %v758, %v2047
      %v2049 = vpop.f32.mrb[0].mxu0
      %v2050 = vpop.f32.mrb[0].mxu0
      %v2051 = vadd.f32 %v759, %v2050
      %v2052 = vpop.f32.mrb[0].mxu0
      %2053 = vdwg.mxu0
      %2055 = vrot.lane.b32.xlu0 %v1740, 120
      %v2056 = vpop.permute.xlu0 %2055
      %2057 = vrot.lane.b32.xlu0 %v1740, 88
      %v2058 = vpop.permute.xlu0 %2057
      %v2060 = vsel %vm775, %v2056, 0
      %v2063 = vsel %vm775, %v2058, 0
      %2065 = vmatprep.subr.bf16.mxu0 0
      %2066 = vmatpush1.bf16.xpose.msra.mxu0 %v2063
      %2067 = vmatprep.subr.bf16.mxu0 0
      %2068 = vmatpush1.bf16.xpose.msra.mxu0 0
      %2069 = vmatprep.subr.bf16.mxu0 0
      %2070 = vmatpush1.bf16.xpose.msra.mxu0 0
      %2071 = vmatprep.subr.bf16.mxu0 0
      %2072 = vmatpush1.bf16.xpose.msra.mxu0 0
      %2073 = vmatprep.subr.bf16.mxu0 0
      %2074 = vmatpush1.bf16.xpose.msra.mxu0 0
      %2075 = vmatprep.subr.bf16.mxu0 0
      %2076 = vmatpush1.bf16.xpose.msra.mxu0 0
      %2077 = vmatprep.subr.bf16.mxu0 0
      %2078 = vmatpush1.bf16.xpose.msra.mxu0 0
      %2079 = vmatprep.subr.bf16.mxu0 0
      %2080 = vmatpush1.bf16.xpose.msra.mxu0 0
      %2081 = vmatprep.subr.bf16.mxu0 0
      %2082 = vmatpush1.bf16.xpose.msra.mxu0 0
      %2083 = vmatprep.subr.bf16.mxu0 0
      %2084 = vmatpush1.bf16.xpose.msra.mxu0 0
      %2085 = vmatprep.subr.bf16.mxu0 0
      %2086 = vmatpush1.bf16.xpose.msra.mxu0 0
      %2087 = vmatprep.subr.bf16.mxu0 0
      %2088 = vmatpush1.bf16.xpose.msra.mxu0 0
      %2089 = vmatprep.subr.bf16.mxu0 0
      %2090 = vmatpush1.bf16.xpose.msra.mxu0 0
      %2091 = vmatprep.subr.bf16.mxu0 0
      %2092 = vmatpush1.bf16.xpose.msra.mxu0 0
      %2093 = vmatprep.subr.bf16.mxu0 0
      %2094 = vmatpush1.bf16.xpose.msra.mxu0 0
      %2095 = vmatprep.subr.bf16.mxu0 0
      %2096 = vmatpush1.bf16.xpose.msra.mxu0 0
      %2097 = vmatprep.mubr.bf16.mxu0 0
      %2098 = vmatmul.mubr.bf16.gmra.mrb[0].mxu0 %v2060
      %v2099 = vpop.f32.mrb[0].mxu0
      %v2100 = vadd.f32 %v758, %v2099
      %v2101 = vpop.f32.mrb[0].mxu0
      %v2102 = vpop.f32.mrb[0].mxu0
      %v2103 = vadd.f32 %v759, %v2102
      %v2104 = vpop.f32.mrb[0].mxu0
      %2105 = vdwg.mxu0
      %2107 = vrot.lane.b32.xlu0 %v1741, 120
      %v2108 = vpop.permute.xlu0 %2107
      %2109 = vrot.lane.b32.xlu0 %v1741, 88
      %v2110 = vpop.permute.xlu0 %2109
      %v2112 = vsel %vm775, %v2108, 0
      %v2115 = vsel %vm775, %v2110, 0
      %2117 = vmatprep.subr.bf16.mxu0 0
      %2118 = vmatpush1.bf16.xpose.msra.mxu0 %v2115
      %2119 = vmatprep.subr.bf16.mxu0 0
      %2120 = vmatpush1.bf16.xpose.msra.mxu0 0
      %2121 = vmatprep.subr.bf16.mxu0 0
      %2122 = vmatpush1.bf16.xpose.msra.mxu0 0
      %2123 = vmatprep.subr.bf16.mxu0 0
      %2124 = vmatpush1.bf16.xpose.msra.mxu0 0
      %2125 = vmatprep.subr.bf16.mxu0 0
      %2126 = vmatpush1.bf16.xpose.msra.mxu0 0
      %2127 = vmatprep.subr.bf16.mxu0 0
      %2128 = vmatpush1.bf16.xpose.msra.mxu0 0
      %2129 = vmatprep.subr.bf16.mxu0 0
      %2130 = vmatpush1.bf16.xpose.msra.mxu0 0
      %2131 = vmatprep.subr.bf16.mxu0 0
      %2132 = vmatpush1.bf16.xpose.msra.mxu0 0
      %2133 = vmatprep.subr.bf16.mxu0 0
      %2134 = vmatpush1.bf16.xpose.msra.mxu0 0
      %2135 = vmatprep.subr.bf16.mxu0 0
      %2136 = vmatpush1.bf16.xpose.msra.mxu0 0
      %2137 = vmatprep.subr.bf16.mxu0 0
      %2138 = vmatpush1.bf16.xpose.msra.mxu0 0
      %2139 = vmatprep.subr.bf16.mxu0 0
      %2140 = vmatpush1.bf16.xpose.msra.mxu0 0
      %2141 = vmatprep.subr.bf16.mxu0 0
      %2142 = vmatpush1.bf16.xpose.msra.mxu0 0
      %2143 = vmatprep.subr.bf16.mxu0 0
      %2144 = vmatpush1.bf16.xpose.msra.mxu0 0
      %2145 = vmatprep.subr.bf16.mxu0 0
      %2146 = vmatpush1.bf16.xpose.msra.mxu0 0
      %2147 = vmatprep.subr.bf16.mxu0 0
      %2148 = vmatpush1.bf16.xpose.msra.mxu0 0
      %2149 = vmatprep.mubr.bf16.mxu0 0
      %2150 = vmatmul.mubr.bf16.gmra.mrb[0].mxu0 %v2112
      %v2151 = vpop.f32.mrb[0].mxu0
      %v2152 = vadd.f32 %v758, %v2151
      %v2153 = vpop.f32.mrb[0].mxu0
      %v2154 = vpop.f32.mrb[0].mxu0
      %v2155 = vadd.f32 %v759, %v2154
      %v2156 = vpop.f32.mrb[0].mxu0
      %2157 = vdwg.mxu0
      %v2158 = vsel %vm1173, %v1788, -inf
      %2159 = vmax.xlane.f32.xlu0 %v2158
      %v2160 = vpop.xlane.xlu0 %2159
      %v2161 = vsel %vm1173, %v1791, -inf
      %2162 = vmax.xlane.f32.xlu0 %v2161
      %v2163 = vpop.xlane.xlu0 %2162
      %v2164 = vsel %vm1173, %v1840, -inf
      %2165 = vmax.xlane.f32.xlu0 %v2164
      %v2166 = vpop.xlane.xlu0 %2165
      %v2167 = vsel %vm1173, %v1843, -inf
      %2168 = vmax.xlane.f32.xlu0 %v2167
      %v2169 = vpop.xlane.xlu0 %2168
      %v2170 = vsel %vm1173, %v1892, -inf
      %2171 = vmax.xlane.f32.xlu0 %v2170
      %v2172 = vpop.xlane.xlu0 %2171
      %v2173 = vsel %vm1173, %v1895, -inf
      %2174 = vmax.xlane.f32.xlu0 %v2173
      %v2175 = vpop.xlane.xlu0 %2174
      %v2176 = vsel %vm1173, %v1944, -inf
      %2177 = vmax.xlane.f32.xlu0 %v2176
      %v2178 = vpop.xlane.xlu0 %2177
      %v2179 = vsel %vm1173, %v1947, -inf
      %2180 = vmax.xlane.f32.xlu0 %v2179
      %v2181 = vpop.xlane.xlu0 %2180
      %v2182 = vsel %vm1173, %v1996, -inf
      %2183 = vmax.xlane.f32.xlu0 %v2182
      %v2184 = vpop.xlane.xlu0 %2183
      %v2185 = vsel %vm1173, %v1999, -inf
      %2186 = vmax.xlane.f32.xlu0 %v2185
      %v2187 = vpop.xlane.xlu0 %2186
      %v2188 = vsel %vm1173, %v2048, -inf
      %2189 = vmax.xlane.f32.xlu0 %v2188
      %v2190 = vpop.xlane.xlu0 %2189
      %v2191 = vsel %vm1173, %v2051, -inf
      %2192 = vmax.xlane.f32.xlu0 %v2191
      %v2193 = vpop.xlane.xlu0 %2192
      %v2194 = vsel %vm1173, %v2100, -inf
      %2195 = vmax.xlane.f32.xlu0 %v2194
      %v2196 = vpop.xlane.xlu0 %2195
      %v2197 = vsel %vm1173, %v2103, -inf
      %2198 = vmax.xlane.f32.xlu0 %v2197
      %v2199 = vpop.xlane.xlu0 %2198
      %v2200 = vsel %vm1173, %v2152, -inf
      %2201 = vmax.xlane.f32.xlu0 %v2200
      %v2202 = vpop.xlane.xlu0 %2201
      %v2203 = vsel %vm1173, %v2155, -inf
      %2204 = vmax.xlane.f32.xlu0 %v2203
      %v2205 = vpop.xlane.xlu0 %2204
      %v2206 = vsub.f32 %v1788, %v2160
      %v2207 = vsub.f32 %v1791, %v2163
      %v2208 = vsub.f32 %v1840, %v2166
      %v2209 = vsub.f32 %v1843, %v2169
      %v2210 = vsub.f32 %v1892, %v2172
      %v2211 = vsub.f32 %v1895, %v2175
      %v2212 = vsub.f32 %v1944, %v2178
      %v2213 = vsub.f32 %v1947, %v2181
      %v2214 = vsub.f32 %v1996, %v2184
      %v2215 = vsub.f32 %v1999, %v2187
      %v2216 = vsub.f32 %v2048, %v2190
      %v2217 = vsub.f32 %v2051, %v2193
      %v2218 = vsub.f32 %v2100, %v2196
      %v2219 = vsub.f32 %v2103, %v2199
      %v2220 = vsub.f32 %v2152, %v2202
      %v2221 = vsub.f32 %v2155, %v2205
      %v2222 = vmul.f32 %v2206, 1.442695
      %v2223 = vpow.pop %v2222
      %v2224 = vmul.f32 %v2207, 1.442695
      %v2225 = vpow.pop %v2224
      %v2226 = vmul.f32 %v2208, 1.442695
      %v2227 = vpow.pop %v2226
      %v2228 = vmul.f32 %v2209, 1.442695
      %v2229 = vpow.pop %v2228
      %v2230 = vmul.f32 %v2210, 1.442695
      %v2231 = vpow.pop %v2230
      %v2232 = vmul.f32 %v2211, 1.442695
      %v2233 = vpow.pop %v2232
      %v2234 = vmul.f32 %v2212, 1.442695
      %v2235 = vpow.pop %v2234
      %v2236 = vmul.f32 %v2213, 1.442695
      %v2237 = vpow.pop %v2236
      %v2238 = vmul.f32 %v2214, 1.442695
      %v2239 = vpow.pop %v2238
      %v2240 = vmul.f32 %v2215, 1.442695
      %v2241 = vpow.pop %v2240
      %v2242 = vmul.f32 %v2216, 1.442695
      %v2243 = vpow.pop %v2242
      %v2244 = vmul.f32 %v2217, 1.442695
      %v2245 = vpow.pop %v2244
      %v2246 = vmul.f32 %v2218, 1.442695
      %v2247 = vpow.pop %v2246
      %v2248 = vmul.f32 %v2219, 1.442695
      %v2249 = vpow.pop %v2248
      %v2250 = vmul.f32 %v2220, 1.442695
      %v2251 = vpow.pop %v2250
      %v2252 = vmul.f32 %v2221, 1.442695
      %v2253 = vpow.pop %v2252
      %v2254 = vsel %vm1173, %v2223, 0.0
      %2255 = vadd.xlane.f32.xlu0 %v2254
      %v2256 = vpop.xlane.xlu0 %2255
      %v2257 = vsel %vm1173, %v2225, 0.0
      %2258 = vadd.xlane.f32.xlu0 %v2257
      %v2259 = vpop.xlane.xlu0 %2258
      %v2260 = vsel %vm1173, %v2227, 0.0
      %2261 = vadd.xlane.f32.xlu0 %v2260
      %v2262 = vpop.xlane.xlu0 %2261
      %v2263 = vsel %vm1173, %v2229, 0.0
      %2264 = vadd.xlane.f32.xlu0 %v2263
      %v2265 = vpop.xlane.xlu0 %2264
      %v2266 = vsel %vm1173, %v2231, 0.0
      %2267 = vadd.xlane.f32.xlu0 %v2266
      %v2268 = vpop.xlane.xlu0 %2267
      %v2269 = vsel %vm1173, %v2233, 0.0
      %2270 = vadd.xlane.f32.xlu0 %v2269
      %v2271 = vpop.xlane.xlu0 %2270
      %v2272 = vsel %vm1173, %v2235, 0.0
      %2273 = vadd.xlane.f32.xlu0 %v2272
      %v2274 = vpop.xlane.xlu0 %2273
      %v2275 = vsel %vm1173, %v2237, 0.0
      %2276 = vadd.xlane.f32.xlu0 %v2275
      %v2277 = vpop.xlane.xlu0 %2276
      %v2278 = vsel %vm1173, %v2239, 0.0
      %2279 = vadd.xlane.f32.xlu0 %v2278
      %v2280 = vpop.xlane.xlu0 %2279
      %v2281 = vsel %vm1173, %v2241, 0.0
      %2282 = vadd.xlane.f32.xlu0 %v2281
      %v2283 = vpop.xlane.xlu0 %2282
      %v2284 = vsel %vm1173, %v2243, 0.0
      %2285 = vadd.xlane.f32.xlu0 %v2284
      %v2286 = vpop.xlane.xlu0 %2285
      %v2287 = vsel %vm1173, %v2245, 0.0
      %2288 = vadd.xlane.f32.xlu0 %v2287
      %v2289 = vpop.xlane.xlu0 %2288
      %v2290 = vsel %vm1173, %v2247, 0.0
      %2291 = vadd.xlane.f32.xlu0 %v2290
      %v2292 = vpop.xlane.xlu0 %2291
      %v2293 = vsel %vm1173, %v2249, 0.0
      %2294 = vadd.xlane.f32.xlu0 %v2293
      %v2295 = vpop.xlane.xlu0 %2294
      %v2296 = vsel %vm1173, %v2251, 0.0
      %2297 = vadd.xlane.f32.xlu0 %v2296
      %v2298 = vpop.xlane.xlu0 %2297
      %v2299 = vsel %vm1173, %v2253, 0.0
      %2300 = vadd.xlane.f32.xlu0 %v2299
      %v2301 = vpop.xlane.xlu0 %2300
      %v2302 = vrcp.pop %v2256
      %v2303 = vrcp.pop %v2259
      %v2304 = vrcp.pop %v2262
      %v2305 = vrcp.pop %v2265
      %v2306 = vrcp.pop %v2268
      %v2307 = vrcp.pop %v2271
      %v2308 = vrcp.pop %v2274
      %v2309 = vrcp.pop %v2277
      %v2310 = vrcp.pop %v2280
      %v2311 = vrcp.pop %v2283
      %v2312 = vrcp.pop %v2286
      %v2313 = vrcp.pop %v2289
      %v2314 = vrcp.pop %v2292
      %v2315 = vrcp.pop %v2295
      %v2316 = vrcp.pop %v2298
      %v2317 = vrcp.pop %v2301
      %v2318 = vmul.f32 %v2223, %v2302
      %v2319 = vmul.f32 %v2225, %v2303
      %v2320 = vmul.f32 %v2227, %v2304
      %v2321 = vmul.f32 %v2229, %v2305
      %v2322 = vmul.f32 %v2231, %v2306
      %v2323 = vmul.f32 %v2233, %v2307
      %v2324 = vmul.f32 %v2235, %v2308
      %v2325 = vmul.f32 %v2237, %v2309
      %v2326 = vmul.f32 %v2239, %v2310
      %v2327 = vmul.f32 %v2241, %v2311
      %v2328 = vmul.f32 %v2243, %v2312
      %v2329 = vmul.f32 %v2245, %v2313
      %v2330 = vmul.f32 %v2247, %v2314
      %v2331 = vmul.f32 %v2249, %v2315
      %v2332 = vmul.f32 %v2251, %v2316
      %v2333 = vmul.f32 %v2253, %v2317
      %v2334 = vpack.c.bf16 %v2319, %v2318
      %v2335 = vpack.c.bf16 %v2321, %v2320
      %v2336 = vpack.c.bf16 %v2323, %v2322
      %v2337 = vpack.c.bf16 %v2325, %v2324
      %v2338 = vpack.c.bf16 %v2327, %v2326
      %v2339 = vpack.c.bf16 %v2329, %v2328
      %v2340 = vpack.c.bf16 %v2331, %v2330
      %v2341 = vpack.c.bf16 %v2333, %v2332
      %2342 = vrot.lane.b32.xlu0 %v1734, 56
      %v2343 = vpop.permute.xlu0 %2342
      %v2346 = vsel %vm1173, %v2334, 0
      %2348 = vmatprep.subr.bf16.mxu0 0
      %2349 = vmatpush1.bf16.msra.mxu0 %v2343
      %2350 = vmatprep.subr.bf16.mxu0 0
      %2351 = vmatpush1.bf16.msra.mxu0 0
      %2352 = vmatprep.subr.bf16.mxu0 0
      %2353 = vmatpush1.bf16.msra.mxu0 0
      %2354 = vmatprep.subr.bf16.mxu0 0
      %2355 = vmatpush1.bf16.msra.mxu0 0
      %2356 = vmatprep.subr.bf16.mxu0 0
      %2357 = vmatpush1.bf16.msra.mxu0 0
      %2358 = vmatprep.subr.bf16.mxu0 0
      %2359 = vmatpush1.bf16.msra.mxu0 0
      %2360 = vmatprep.subr.bf16.mxu0 0
      %2361 = vmatpush1.bf16.msra.mxu0 0
      %2362 = vmatprep.subr.bf16.mxu0 0
      %2363 = vmatpush1.bf16.msra.mxu0 0
      %2364 = vmatprep.subr.bf16.mxu0 0
      %2365 = vmatpush1.bf16.msra.mxu0 0
      %2366 = vmatprep.subr.bf16.mxu0 0
      %2367 = vmatpush1.bf16.msra.mxu0 0
      %2368 = vmatprep.subr.bf16.mxu0 0
      %2369 = vmatpush1.bf16.msra.mxu0 0
      %2370 = vmatprep.subr.bf16.mxu0 0
      %2371 = vmatpush1.bf16.msra.mxu0 0
      %2372 = vmatprep.subr.bf16.mxu0 0
      %2373 = vmatpush1.bf16.msra.mxu0 0
      %2374 = vmatprep.subr.bf16.mxu0 0
      %2375 = vmatpush1.bf16.msra.mxu0 0
      %2376 = vmatprep.subr.bf16.mxu0 0
      %2377 = vmatpush1.bf16.msra.mxu0 0
      %2378 = vmatprep.subr.bf16.mxu0 0
      %2379 = vmatpush1.bf16.msra.mxu0 0
      %2380 = vmatprep.mubr.bf16.mxu0 0
      %2381 = vmatmul.mubr.bf16.gmra.mrb[0].mxu0 %v2346
      %v2382 = vpop.f32.mrb[0].mxu0
      %v2383 = vadd.f32 0.0, %v2382
      %v2384 = vpop.f32.mrb[0].mxu0
      %v2385 = vpop.f32.mrb[0].mxu0
      %v2386 = vadd.f32 0.0, %v2385
      %v2387 = vpop.f32.mrb[0].mxu0
      %2388 = vdwg.mxu0
      %2389 = vrot.lane.b32.xlu0 %v1735, 56
      %v2390 = vpop.permute.xlu0 %2389
      %v2393 = vsel %vm1173, %v2335, 0
      %2395 = vmatprep.subr.bf16.mxu0 0
      %2396 = vmatpush1.bf16.msra.mxu0 %v2390
      %2397 = vmatprep.subr.bf16.mxu0 0
      %2398 = vmatpush1.bf16.msra.mxu0 0
      %2399 = vmatprep.subr.bf16.mxu0 0
      %2400 = vmatpush1.bf16.msra.mxu0 0
      %2401 = vmatprep.subr.bf16.mxu0 0
      %2402 = vmatpush1.bf16.msra.mxu0 0
      %2403 = vmatprep.subr.bf16.mxu0 0
      %2404 = vmatpush1.bf16.msra.mxu0 0
      %2405 = vmatprep.subr.bf16.mxu0 0
      %2406 = vmatpush1.bf16.msra.mxu0 0
      %2407 = vmatprep.subr.bf16.mxu0 0
      %2408 = vmatpush1.bf16.msra.mxu0 0
      %2409 = vmatprep.subr.bf16.mxu0 0
      %2410 = vmatpush1.bf16.msra.mxu0 0
      %2411 = vmatprep.subr.bf16.mxu0 0
      %2412 = vmatpush1.bf16.msra.mxu0 0
      %2413 = vmatprep.subr.bf16.mxu0 0
      %2414 = vmatpush1.bf16.msra.mxu0 0
      %2415 = vmatprep.subr.bf16.mxu0 0
      %2416 = vmatpush1.bf16.msra.mxu0 0
      %2417 = vmatprep.subr.bf16.mxu0 0
      %2418 = vmatpush1.bf16.msra.mxu0 0
      %2419 = vmatprep.subr.bf16.mxu0 0
      %2420 = vmatpush1.bf16.msra.mxu0 0
      %2421 = vmatprep.subr.bf16.mxu0 0
      %2422 = vmatpush1.bf16.msra.mxu0 0
      %2423 = vmatprep.subr.bf16.mxu0 0
      %2424 = vmatpush1.bf16.msra.mxu0 0
      %2425 = vmatprep.subr.bf16.mxu0 0
      %2426 = vmatpush1.bf16.msra.mxu0 0
      %2427 = vmatprep.mubr.bf16.mxu0 0
      %2428 = vmatmul.mubr.bf16.gmra.mrb[0].mxu0 %v2393
      %v2429 = vpop.f32.mrb[0].mxu0
      %v2430 = vadd.f32 0.0, %v2429
      %v2431 = vpop.f32.mrb[0].mxu0
      %v2432 = vpop.f32.mrb[0].mxu0
      %v2433 = vadd.f32 0.0, %v2432
      %v2434 = vpop.f32.mrb[0].mxu0
      %2435 = vdwg.mxu0
      %2436 = vrot.lane.b32.xlu0 %v1736, 56
      %v2437 = vpop.permute.xlu0 %2436
      %v2440 = vsel %vm1173, %v2336, 0
      %2442 = vmatprep.subr.bf16.mxu0 0
      %2443 = vmatpush1.bf16.msra.mxu0 %v2437
      %2444 = vmatprep.subr.bf16.mxu0 0
      %2445 = vmatpush1.bf16.msra.mxu0 0
      %2446 = vmatprep.subr.bf16.mxu0 0
      %2447 = vmatpush1.bf16.msra.mxu0 0
      %2448 = vmatprep.subr.bf16.mxu0 0
      %2449 = vmatpush1.bf16.msra.mxu0 0
      %2450 = vmatprep.subr.bf16.mxu0 0
      %2451 = vmatpush1.bf16.msra.mxu0 0
      %2452 = vmatprep.subr.bf16.mxu0 0
      %2453 = vmatpush1.bf16.msra.mxu0 0
      %2454 = vmatprep.subr.bf16.mxu0 0
      %2455 = vmatpush1.bf16.msra.mxu0 0
      %2456 = vmatprep.subr.bf16.mxu0 0
      %2457 = vmatpush1.bf16.msra.mxu0 0
      %2458 = vmatprep.subr.bf16.mxu0 0
      %2459 = vmatpush1.bf16.msra.mxu0 0
      %2460 = vmatprep.subr.bf16.mxu0 0
      %2461 = vmatpush1.bf16.msra.mxu0 0
      %2462 = vmatprep.subr.bf16.mxu0 0
      %2463 = vmatpush1.bf16.msra.mxu0 0
      %2464 = vmatprep.subr.bf16.mxu0 0
      %2465 = vmatpush1.bf16.msra.mxu0 0
      %2466 = vmatprep.subr.bf16.mxu0 0
      %2467 = vmatpush1.bf16.msra.mxu0 0
      %2468 = vmatprep.subr.bf16.mxu0 0
      %2469 = vmatpush1.bf16.msra.mxu0 0
      %2470 = vmatprep.subr.bf16.mxu0 0
      %2471 = vmatpush1.bf16.msra.mxu0 0
      %2472 = vmatprep.subr.bf16.mxu0 0
      %2473 = vmatpush1.bf16.msra.mxu0 0
      %2474 = vmatprep.mubr.bf16.mxu0 0
      %2475 = vmatmul.mubr.bf16.gmra.mrb[0].mxu0 %v2440
      %v2476 = vpop.f32.mrb[0].mxu0
      %v2477 = vadd.f32 0.0, %v2476
      %v2478 = vpop.f32.mrb[0].mxu0
      %v2479 = vpop.f32.mrb[0].mxu0
      %v2480 = vadd.f32 0.0, %v2479
      %v2481 = vpop.f32.mrb[0].mxu0
      %2482 = vdwg.mxu0
      %2483 = vrot.lane.b32.xlu0 %v1737, 56
      %v2484 = vpop.permute.xlu0 %2483
      %v2487 = vsel %vm1173, %v2337, 0
      %2489 = vmatprep.subr.bf16.mxu0 0
      %2490 = vmatpush1.bf16.msra.mxu0 %v2484
      %2491 = vmatprep.subr.bf16.mxu0 0
      %2492 = vmatpush1.bf16.msra.mxu0 0
      %2493 = vmatprep.subr.bf16.mxu0 0
      %2494 = vmatpush1.bf16.msra.mxu0 0
      %2495 = vmatprep.subr.bf16.mxu0 0
      %2496 = vmatpush1.bf16.msra.mxu0 0
      %2497 = vmatprep.subr.bf16.mxu0 0
      %2498 = vmatpush1.bf16.msra.mxu0 0
      %2499 = vmatprep.subr.bf16.mxu0 0
      %2500 = vmatpush1.bf16.msra.mxu0 0
      %2501 = vmatprep.subr.bf16.mxu0 0
      %2502 = vmatpush1.bf16.msra.mxu0 0
      %2503 = vmatprep.subr.bf16.mxu0 0
      %2504 = vmatpush1.bf16.msra.mxu0 0
      %2505 = vmatprep.subr.bf16.mxu0 0
      %2506 = vmatpush1.bf16.msra.mxu0 0
      %2507 = vmatprep.subr.bf16.mxu0 0
      %2508 = vmatpush1.bf16.msra.mxu0 0
      %2509 = vmatprep.subr.bf16.mxu0 0
      %2510 = vmatpush1.bf16.msra.mxu0 0
      %2511 = vmatprep.subr.bf16.mxu0 0
      %2512 = vmatpush1.bf16.msra.mxu0 0
      %2513 = vmatprep.subr.bf16.mxu0 0
      %2514 = vmatpush1.bf16.msra.mxu0 0
      %2515 = vmatprep.subr.bf16.mxu0 0
      %2516 = vmatpush1.bf16.msra.mxu0 0
      %2517 = vmatprep.subr.bf16.mxu0 0
      %2518 = vmatpush1.bf16.msra.mxu0 0
      %2519 = vmatprep.subr.bf16.mxu0 0
      %2520 = vmatpush1.bf16.msra.mxu0 0
      %2521 = vmatprep.mubr.bf16.mxu0 0
      %2522 = vmatmul.mubr.bf16.gmra.mrb[0].mxu0 %v2487
      %v2523 = vpop.f32.mrb[0].mxu0
      %v2524 = vadd.f32 0.0, %v2523
      %v2525 = vpop.f32.mrb[0].mxu0
      %v2526 = vpop.f32.mrb[0].mxu0
      %v2527 = vadd.f32 0.0, %v2526
      %v2528 = vpop.f32.mrb[0].mxu0
      %2529 = vdwg.mxu0
      %2530 = vrot.lane.b32.xlu0 %v1738, 56
      %v2531 = vpop.permute.xlu0 %2530
      %v2534 = vsel %vm1173, %v2338, 0
      %2536 = vmatprep.subr.bf16.mxu0 0
      %2537 = vmatpush1.bf16.msra.mxu0 %v2531
      %2538 = vmatprep.subr.bf16.mxu0 0
      %2539 = vmatpush1.bf16.msra.mxu0 0
      %2540 = vmatprep.subr.bf16.mxu0 0
      %2541 = vmatpush1.bf16.msra.mxu0 0
      %2542 = vmatprep.subr.bf16.mxu0 0
      %2543 = vmatpush1.bf16.msra.mxu0 0
      %2544 = vmatprep.subr.bf16.mxu0 0
      %2545 = vmatpush1.bf16.msra.mxu0 0
      %2546 = vmatprep.subr.bf16.mxu0 0
      %2547 = vmatpush1.bf16.msra.mxu0 0
      %2548 = vmatprep.subr.bf16.mxu0 0
      %2549 = vmatpush1.bf16.msra.mxu0 0
      %2550 = vmatprep.subr.bf16.mxu0 0
      %2551 = vmatpush1.bf16.msra.mxu0 0
      %2552 = vmatprep.subr.bf16.mxu0 0
      %2553 = vmatpush1.bf16.msra.mxu0 0
      %2554 = vmatprep.subr.bf16.mxu0 0
      %2555 = vmatpush1.bf16.msra.mxu0 0
      %2556 = vmatprep.subr.bf16.mxu0 0
      %2557 = vmatpush1.bf16.msra.mxu0 0
      %2558 = vmatprep.subr.bf16.mxu0 0
      %2559 = vmatpush1.bf16.msra.mxu0 0
      %2560 = vmatprep.subr.bf16.mxu0 0
      %2561 = vmatpush1.bf16.msra.mxu0 0
      %2562 = vmatprep.subr.bf16.mxu0 0
      %2563 = vmatpush1.bf16.msra.mxu0 0
      %2564 = vmatprep.subr.bf16.mxu0 0
      %2565 = vmatpush1.bf16.msra.mxu0 0
      %2566 = vmatprep.subr.bf16.mxu0 0
      %2567 = vmatpush1.bf16.msra.mxu0 0
      %2568 = vmatprep.mubr.bf16.mxu0 0
      %2569 = vmatmul.mubr.bf16.gmra.mrb[0].mxu0 %v2534
      %v2570 = vpop.f32.mrb[0].mxu0
      %v2571 = vadd.f32 0.0, %v2570
      %v2572 = vpop.f32.mrb[0].mxu0
      %v2573 = vpop.f32.mrb[0].mxu0
      %v2574 = vadd.f32 0.0, %v2573
      %v2575 = vpop.f32.mrb[0].mxu0
      %2576 = vdwg.mxu0
      %2577 = vrot.lane.b32.xlu0 %v1739, 56
      %v2578 = vpop.permute.xlu0 %2577
      %v2581 = vsel %vm1173, %v2339, 0
      %2583 = vmatprep.subr.bf16.mxu0 0
      %2584 = vmatpush1.bf16.msra.mxu0 %v2578
      %2585 = vmatprep.subr.bf16.mxu0 0
      %2586 = vmatpush1.bf16.msra.mxu0 0
      %2587 = vmatprep.subr.bf16.mxu0 0
      %2588 = vmatpush1.bf16.msra.mxu0 0
      %2589 = vmatprep.subr.bf16.mxu0 0
      %2590 = vmatpush1.bf16.msra.mxu0 0
      %2591 = vmatprep.subr.bf16.mxu0 0
      %2592 = vmatpush1.bf16.msra.mxu0 0
      %2593 = vmatprep.subr.bf16.mxu0 0
      %2594 = vmatpush1.bf16.msra.mxu0 0
      %2595 = vmatprep.subr.bf16.mxu0 0
      %2596 = vmatpush1.bf16.msra.mxu0 0
      %2597 = vmatprep.subr.bf16.mxu0 0
      %2598 = vmatpush1.bf16.msra.mxu0 0
      %2599 = vmatprep.subr.bf16.mxu0 0
      %2600 = vmatpush1.bf16.msra.mxu0 0
      %2601 = vmatprep.subr.bf16.mxu0 0
      %2602 = vmatpush1.bf16.msra.mxu0 0
      %2603 = vmatprep.subr.bf16.mxu0 0
      %2604 = vmatpush1.bf16.msra.mxu0 0
      %2605 = vmatprep.subr.bf16.mxu0 0
      %2606 = vmatpush1.bf16.msra.mxu0 0
      %2607 = vmatprep.subr.bf16.mxu0 0
      %2608 = vmatpush1.bf16.msra.mxu0 0
      %2609 = vmatprep.subr.bf16.mxu0 0
      %2610 = vmatpush1.bf16.msra.mxu0 0
      %2611 = vmatprep.subr.bf16.mxu0 0
      %2612 = vmatpush1.bf16.msra.mxu0 0
      %2613 = vmatprep.subr.bf16.mxu0 0
      %2614 = vmatpush1.bf16.msra.mxu0 0
      %2615 = vmatprep.mubr.bf16.mxu0 0
      %2616 = vmatmul.mubr.bf16.gmra.mrb[0].mxu0 %v2581
      %v2617 = vpop.f32.mrb[0].mxu0
      %v2618 = vadd.f32 0.0, %v2617
      %v2619 = vpop.f32.mrb[0].mxu0
      %v2620 = vpop.f32.mrb[0].mxu0
      %v2621 = vadd.f32 0.0, %v2620
      %v2622 = vpop.f32.mrb[0].mxu0
      %2623 = vdwg.mxu0
      %2624 = vrot.lane.b32.xlu0 %v1740, 56
      %v2625 = vpop.permute.xlu0 %2624
      %v2628 = vsel %vm1173, %v2340, 0
      %2630 = vmatprep.subr.bf16.mxu0 0
      %2631 = vmatpush1.bf16.msra.mxu0 %v2625
      %2632 = vmatprep.subr.bf16.mxu0 0
      %2633 = vmatpush1.bf16.msra.mxu0 0
      %2634 = vmatprep.subr.bf16.mxu0 0
      %2635 = vmatpush1.bf16.msra.mxu0 0
      %2636 = vmatprep.subr.bf16.mxu0 0
      %2637 = vmatpush1.bf16.msra.mxu0 0
      %2638 = vmatprep.subr.bf16.mxu0 0
      %2639 = vmatpush1.bf16.msra.mxu0 0
      %2640 = vmatprep.subr.bf16.mxu0 0
      %2641 = vmatpush1.bf16.msra.mxu0 0
      %2642 = vmatprep.subr.bf16.mxu0 0
      %2643 = vmatpush1.bf16.msra.mxu0 0
      %2644 = vmatprep.subr.bf16.mxu0 0
      %2645 = vmatpush1.bf16.msra.mxu0 0
      %2646 = vmatprep.subr.bf16.mxu0 0
      %2647 = vmatpush1.bf16.msra.mxu0 0
      %2648 = vmatprep.subr.bf16.mxu0 0
      %2649 = vmatpush1.bf16.msra.mxu0 0
      %2650 = vmatprep.subr.bf16.mxu0 0
      %2651 = vmatpush1.bf16.msra.mxu0 0
      %2652 = vmatprep.subr.bf16.mxu0 0
      %2653 = vmatpush1.bf16.msra.mxu0 0
      %2654 = vmatprep.subr.bf16.mxu0 0
      %2655 = vmatpush1.bf16.msra.mxu0 0
      %2656 = vmatprep.subr.bf16.mxu0 0
      %2657 = vmatpush1.bf16.msra.mxu0 0
      %2658 = vmatprep.subr.bf16.mxu0 0
      %2659 = vmatpush1.bf16.msra.mxu0 0
      %2660 = vmatprep.subr.bf16.mxu0 0
      %2661 = vmatpush1.bf16.msra.mxu0 0
      %2662 = vmatprep.mubr.bf16.mxu0 0
      %2663 = vmatmul.mubr.bf16.gmra.mrb[0].mxu0 %v2628
      %v2664 = vpop.f32.mrb[0].mxu0
      %v2665 = vadd.f32 0.0, %v2664
      %v2666 = vpop.f32.mrb[0].mxu0
      %v2667 = vpop.f32.mrb[0].mxu0
      %v2668 = vadd.f32 0.0, %v2667
      %v2669 = vpop.f32.mrb[0].mxu0
      %2670 = vdwg.mxu0
      %2671 = vrot.lane.b32.xlu0 %v1741, 56
      %v2672 = vpop.permute.xlu0 %2671
      %v2675 = vsel %vm1173, %v2341, 0
      %2677 = vmatprep.subr.bf16.mxu0 0
      %2678 = vmatpush1.bf16.msra.mxu0 %v2672
      %2679 = vmatprep.subr.bf16.mxu0 0
      %2680 = vmatpush1.bf16.msra.mxu0 0
      %2681 = vmatprep.subr.bf16.mxu0 0
      %2682 = vmatpush1.bf16.msra.mxu0 0
      %2683 = vmatprep.subr.bf16.mxu0 0
      %2684 = vmatpush1.bf16.msra.mxu0 0
      %2685 = vmatprep.subr.bf16.mxu0 0
      %2686 = vmatpush1.bf16.msra.mxu0 0
      %2687 = vmatprep.subr.bf16.mxu0 0
      %2688 = vmatpush1.bf16.msra.mxu0 0
      %2689 = vmatprep.subr.bf16.mxu0 0
      %2690 = vmatpush1.bf16.msra.mxu0 0
      %2691 = vmatprep.subr.bf16.mxu0 0
      %2692 = vmatpush1.bf16.msra.mxu0 0
      %2693 = vmatprep.subr.bf16.mxu0 0
      %2694 = vmatpush1.bf16.msra.mxu0 0
      %2695 = vmatprep.subr.bf16.mxu0 0
      %2696 = vmatpush1.bf16.msra.mxu0 0
      %2697 = vmatprep.subr.bf16.mxu0 0
      %2698 = vmatpush1.bf16.msra.mxu0 0
      %2699 = vmatprep.subr.bf16.mxu0 0
      %2700 = vmatpush1.bf16.msra.mxu0 0
      %2701 = vmatprep.subr.bf16.mxu0 0
      %2702 = vmatpush1.bf16.msra.mxu0 0
      %2703 = vmatprep.subr.bf16.mxu0 0
      %2704 = vmatpush1.bf16.msra.mxu0 0
      %2705 = vmatprep.subr.bf16.mxu0 0
      %2706 = vmatpush1.bf16.msra.mxu0 0
      %2707 = vmatprep.subr.bf16.mxu0 0
      %2708 = vmatpush1.bf16.msra.mxu0 0
      %2709 = vmatprep.mubr.bf16.mxu0 0
      %2710 = vmatmul.mubr.bf16.gmra.mrb[0].mxu0 %v2675
      %v2711 = vpop.f32.mrb[0].mxu0
      %v2712 = vadd.f32 0.0, %v2711
      %v2713 = vpop.f32.mrb[0].mxu0
      %v2714 = vpop.f32.mrb[0].mxu0
      %v2715 = vadd.f32 0.0, %v2714
      %v2716 = vpop.f32.mrb[0].mxu0
      %2717 = vdwg.mxu0
      %v2718 = vld [vmem:[#allocation2] sm:$0xff]
      %v2719 = vld [vmem:[#allocation2 + $0x8] sm:$0xff]
      %v2720 = vld [vmem:[#allocation2 + $0x10] sm:$0xff]
      %v2721 = vld [vmem:[#allocation2 + $0x18] sm:$0xff]
      %v2722 = vld [vmem:[#allocation2 + $0x20] sm:$0xff]
      %v2723 = vld [vmem:[#allocation2 + $0x28] sm:$0xff]
      %v2724 = vld [vmem:[#allocation2 + $0x30] sm:$0xff]
      %v2725 = vld [vmem:[#allocation2 + $0x38] sm:$0xff]
      %2727 = vrot.lane.b32.xlu0 %v2718, 112
      %v2728 = vpop.permute.xlu0 %2727
      %2729 = vrot.lane.b32.xlu0 %v2718, 80
      %v2730 = vpop.permute.xlu0 %2729
      %v2732 = vsel %vm775, %v2728, 0
      %v2735 = vsel %vm775, %v2730, 0
      %2737 = vmatprep.subr.bf16.mxu0 0
      %2738 = vmatpush1.bf16.xpose.msra.mxu0 %v2735
      %2739 = vmatprep.subr.bf16.mxu0 0
      %2740 = vmatpush1.bf16.xpose.msra.mxu0 0
      %2741 = vmatprep.subr.bf16.mxu0 0
      %2742 = vmatpush1.bf16.xpose.msra.mxu0 0
      %2743 = vmatprep.subr.bf16.mxu0 0
      %2744 = vmatpush1.bf16.xpose.msra.mxu0 0
      %2745 = vmatprep.subr.bf16.mxu0 0
      %2746 = vmatpush1.bf16.xpose.msra.mxu0 0
      %2747 = vmatprep.subr.bf16.mxu0 0
      %2748 = vmatpush1.bf16.xpose.msra.mxu0 0
      %2749 = vmatprep.subr.bf16.mxu0 0
      %2750 = vmatpush1.bf16.xpose.msra.mxu0 0
      %2751 = vmatprep.subr.bf16.mxu0 0
      %2752 = vmatpush1.bf16.xpose.msra.mxu0 0
      %2753 = vmatprep.subr.bf16.mxu0 0
      %2754 = vmatpush1.bf16.xpose.msra.mxu0 0
      %2755 = vmatprep.subr.bf16.mxu0 0
      %2756 = vmatpush1.bf16.xpose.msra.mxu0 0
      %2757 = vmatprep.subr.bf16.mxu0 0
      %2758 = vmatpush1.bf16.xpose.msra.mxu0 0
      %2759 = vmatprep.subr.bf16.mxu0 0
      %2760 = vmatpush1.bf16.xpose.msra.mxu0 0
      %2761 = vmatprep.subr.bf16.mxu0 0
      %2762 = vmatpush1.bf16.xpose.msra.mxu0 0
      %2763 = vmatprep.subr.bf16.mxu0 0
      %2764 = vmatpush1.bf16.xpose.msra.mxu0 0
      %2765 = vmatprep.subr.bf16.mxu0 0
      %2766 = vmatpush1.bf16.xpose.msra.mxu0 0
      %2767 = vmatprep.subr.bf16.mxu0 0
      %2768 = vmatpush1.bf16.xpose.msra.mxu0 0
      %2769 = vmatprep.mubr.bf16.mxu0 0
      %2770 = vmatmul.mubr.bf16.gmra.mrb[0].mxu0 %v2732
      %v2771 = vpop.f32.mrb[0].mxu0
      %v2772 = vadd.f32 %v760, %v2771
      %v2773 = vpop.f32.mrb[0].mxu0
      %v2774 = vpop.f32.mrb[0].mxu0
      %v2775 = vadd.f32 %v761, %v2774
      %v2776 = vpop.f32.mrb[0].mxu0
      %2777 = vdwg.mxu0
      %2779 = vrot.lane.b32.xlu0 %v2719, 112
      %v2780 = vpop.permute.xlu0 %2779
      %2781 = vrot.lane.b32.xlu0 %v2719, 80
      %v2782 = vpop.permute.xlu0 %2781
      %v2784 = vsel %vm775, %v2780, 0
      %v2787 = vsel %vm775, %v2782, 0
      %2789 = vmatprep.subr.bf16.mxu0 0
      %2790 = vmatpush1.bf16.xpose.msra.mxu0 %v2787
      %2791 = vmatprep.subr.bf16.mxu0 0
      %2792 = vmatpush1.bf16.xpose.msra.mxu0 0
      %2793 = vmatprep.subr.bf16.mxu0 0
      %2794 = vmatpush1.bf16.xpose.msra.mxu0 0
      %2795 = vmatprep.subr.bf16.mxu0 0
      %2796 = vmatpush1.bf16.xpose.msra.mxu0 0
      %2797 = vmatprep.subr.bf16.mxu0 0
      %2798 = vmatpush1.bf16.xpose.msra.mxu0 0
      %2799 = vmatprep.subr.bf16.mxu0 0
      %2800 = vmatpush1.bf16.xpose.msra.mxu0 0
      %2801 = vmatprep.subr.bf16.mxu0 0
      %2802 = vmatpush1.bf16.xpose.msra.mxu0 0
      %2803 = vmatprep.subr.bf16.mxu0 0
      %2804 = vmatpush1.bf16.xpose.msra.mxu0 0
      %2805 = vmatprep.subr.bf16.mxu0 0
      %2806 = vmatpush1.bf16.xpose.msra.mxu0 0
      %2807 = vmatprep.subr.bf16.mxu0 0
      %2808 = vmatpush1.bf16.xpose.msra.mxu0 0
      %2809 = vmatprep.subr.bf16.mxu0 0
      %2810 = vmatpush1.bf16.xpose.msra.mxu0 0
      %2811 = vmatprep.subr.bf16.mxu0 0
      %2812 = vmatpush1.bf16.xpose.msra.mxu0 0
      %2813 = vmatprep.subr.bf16.mxu0 0
      %2814 = vmatpush1.bf16.xpose.msra.mxu0 0
      %2815 = vmatprep.subr.bf16.mxu0 0
      %2816 = vmatpush1.bf16.xpose.msra.mxu0 0
      %2817 = vmatprep.subr.bf16.mxu0 0
      %2818 = vmatpush1.bf16.xpose.msra.mxu0 0
      %2819 = vmatprep.subr.bf16.mxu0 0
      %2820 = vmatpush1.bf16.xpose.msra.mxu0 0
      %2821 = vmatprep.mubr.bf16.mxu0 0
      %2822 = vmatmul.mubr.bf16.gmra.mrb[0].mxu0 %v2784
      %v2823 = vpop.f32.mrb[0].mxu0
      %v2824 = vadd.f32 %v760, %v2823
      %v2825 = vpop.f32.mrb[0].mxu0
      %v2826 = vpop.f32.mrb[0].mxu0
      %v2827 = vadd.f32 %v761, %v2826
      %v2828 = vpop.f32.mrb[0].mxu0
      %2829 = vdwg.mxu0
      %2831 = vrot.lane.b32.xlu0 %v2720, 112
      %v2832 = vpop.permute.xlu0 %2831
      %2833 = vrot.lane.b32.xlu0 %v2720, 80
      %v2834 = vpop.permute.xlu0 %2833
      %v2836 = vsel %vm775, %v2832, 0
      %v2839 = vsel %vm775, %v2834, 0
      %2841 = vmatprep.subr.bf16.mxu0 0
      %2842 = vmatpush1.bf16.xpose.msra.mxu0 %v2839
      %2843 = vmatprep.subr.bf16.mxu0 0
      %2844 = vmatpush1.bf16.xpose.msra.mxu0 0
      %2845 = vmatprep.subr.bf16.mxu0 0
      %2846 = vmatpush1.bf16.xpose.msra.mxu0 0
      %2847 = vmatprep.subr.bf16.mxu0 0
      %2848 = vmatpush1.bf16.xpose.msra.mxu0 0
      %2849 = vmatprep.subr.bf16.mxu0 0
      %2850 = vmatpush1.bf16.xpose.msra.mxu0 0
      %2851 = vmatprep.subr.bf16.mxu0 0
      %2852 = vmatpush1.bf16.xpose.msra.mxu0 0
      %2853 = vmatprep.subr.bf16.mxu0 0
      %2854 = vmatpush1.bf16.xpose.msra.mxu0 0
      %2855 = vmatprep.subr.bf16.mxu0 0
      %2856 = vmatpush1.bf16.xpose.msra.mxu0 0
      %2857 = vmatprep.subr.bf16.mxu0 0
      %2858 = vmatpush1.bf16.xpose.msra.mxu0 0
      %2859 = vmatprep.subr.bf16.mxu0 0
      %2860 = vmatpush1.bf16.xpose.msra.mxu0 0
      %2861 = vmatprep.subr.bf16.mxu0 0
      %2862 = vmatpush1.bf16.xpose.msra.mxu0 0
      %2863 = vmatprep.subr.bf16.mxu0 0
      %2864 = vmatpush1.bf16.xpose.msra.mxu0 0
      %2865 = vmatprep.subr.bf16.mxu0 0
      %2866 = vmatpush1.bf16.xpose.msra.mxu0 0
      %2867 = vmatprep.subr.bf16.mxu0 0
      %2868 = vmatpush1.bf16.xpose.msra.mxu0 0
      %2869 = vmatprep.subr.bf16.mxu0 0
      %2870 = vmatpush1.bf16.xpose.msra.mxu0 0
      %2871 = vmatprep.subr.bf16.mxu0 0
      %2872 = vmatpush1.bf16.xpose.msra.mxu0 0
      %2873 = vmatprep.mubr.bf16.mxu0 0
      %2874 = vmatmul.mubr.bf16.gmra.mrb[0].mxu0 %v2836
      %v2875 = vpop.f32.mrb[0].mxu0
      %v2876 = vadd.f32 %v760, %v2875
      %v2877 = vpop.f32.mrb[0].mxu0
      %v2878 = vpop.f32.mrb[0].mxu0
      %v2879 = vadd.f32 %v761, %v2878
      %v2880 = vpop.f32.mrb[0].mxu0
      %2881 = vdwg.mxu0
      %2883 = vrot.lane.b32.xlu0 %v2721, 112
      %v2884 = vpop.permute.xlu0 %2883
      %2885 = vrot.lane.b32.xlu0 %v2721, 80
      %v2886 = vpop.permute.xlu0 %2885
      %v2888 = vsel %vm775, %v2884, 0
      %v2891 = vsel %vm775, %v2886, 0
      %2893 = vmatprep.subr.bf16.mxu0 0
      %2894 = vmatpush1.bf16.xpose.msra.mxu0 %v2891
      %2895 = vmatprep.subr.bf16.mxu0 0
      %2896 = vmatpush1.bf16.xpose.msra.mxu0 0
      %2897 = vmatprep.subr.bf16.mxu0 0
      %2898 = vmatpush1.bf16.xpose.msra.mxu0 0
      %2899 = vmatprep.subr.bf16.mxu0 0
      %2900 = vmatpush1.bf16.xpose.msra.mxu0 0
      %2901 = vmatprep.subr.bf16.mxu0 0
      %2902 = vmatpush1.bf16.xpose.msra.mxu0 0
      %2903 = vmatprep.subr.bf16.mxu0 0
      %2904 = vmatpush1.bf16.xpose.msra.mxu0 0
      %2905 = vmatprep.subr.bf16.mxu0 0
      %2906 = vmatpush1.bf16.xpose.msra.mxu0 0
      %2907 = vmatprep.subr.bf16.mxu0 0
      %2908 = vmatpush1.bf16.xpose.msra.mxu0 0
      %2909 = vmatprep.subr.bf16.mxu0 0
      %2910 = vmatpush1.bf16.xpose.msra.mxu0 0
      %2911 = vmatprep.subr.bf16.mxu0 0
      %2912 = vmatpush1.bf16.xpose.msra.mxu0 0
      %2913 = vmatprep.subr.bf16.mxu0 0
      %2914 = vmatpush1.bf16.xpose.msra.mxu0 0
      %2915 = vmatprep.subr.bf16.mxu0 0
      %2916 = vmatpush1.bf16.xpose.msra.mxu0 0
      %2917 = vmatprep.subr.bf16.mxu0 0
      %2918 = vmatpush1.bf16.xpose.msra.mxu0 0
      %2919 = vmatprep.subr.bf16.mxu0 0
      %2920 = vmatpush1.bf16.xpose.msra.mxu0 0
      %2921 = vmatprep.subr.bf16.mxu0 0
      %2922 = vmatpush1.bf16.xpose.msra.mxu0 0
      %2923 = vmatprep.subr.bf16.mxu0 0
      %2924 = vmatpush1.bf16.xpose.msra.mxu0 0
      %2925 = vmatprep.mubr.bf16.mxu0 0
      %2926 = vmatmul.mubr.bf16.gmra.mrb[0].mxu0 %v2888
      %v2927 = vpop.f32.mrb[0].mxu0
      %v2928 = vadd.f32 %v760, %v2927
      %v2929 = vpop.f32.mrb[0].mxu0
      %v2930 = vpop.f32.mrb[0].mxu0
      %v2931 = vadd.f32 %v761, %v2930
      %v2932 = vpop.f32.mrb[0].mxu0
      %2933 = vdwg.mxu0
      %2935 = vrot.lane.b32.xlu0 %v2722, 112
      %v2936 = vpop.permute.xlu0 %2935
      %2937 = vrot.lane.b32.xlu0 %v2722, 80
      %v2938 = vpop.permute.xlu0 %2937
      %v2940 = vsel %vm775, %v2936, 0
      %v2943 = vsel %vm775, %v2938, 0
      %2945 = vmatprep.subr.bf16.mxu0 0
      %2946 = vmatpush1.bf16.xpose.msra.mxu0 %v2943
      %2947 = vmatprep.subr.bf16.mxu0 0
      %2948 = vmatpush1.bf16.xpose.msra.mxu0 0
      %2949 = vmatprep.subr.bf16.mxu0 0
      %2950 = vmatpush1.bf16.xpose.msra.mxu0 0
      %2951 = vmatprep.subr.bf16.mxu0 0
      %2952 = vmatpush1.bf16.xpose.msra.mxu0 0
      %2953 = vmatprep.subr.bf16.mxu0 0
      %2954 = vmatpush1.bf16.xpose.msra.mxu0 0
      %2955 = vmatprep.subr.bf16.mxu0 0
      %2956 = vmatpush1.bf16.xpose.msra.mxu0 0
      %2957 = vmatprep.subr.bf16.mxu0 0
      %2958 = vmatpush1.bf16.xpose.msra.mxu0 0
      %2959 = vmatprep.subr.bf16.mxu0 0
      %2960 = vmatpush1.bf16.xpose.msra.mxu0 0
      %2961 = vmatprep.subr.bf16.mxu0 0
      %2962 = vmatpush1.bf16.xpose.msra.mxu0 0
      %2963 = vmatprep.subr.bf16.mxu0 0
      %2964 = vmatpush1.bf16.xpose.msra.mxu0 0
      %2965 = vmatprep.subr.bf16.mxu0 0
      %2966 = vmatpush1.bf16.xpose.msra.mxu0 0
      %2967 = vmatprep.subr.bf16.mxu0 0
      %2968 = vmatpush1.bf16.xpose.msra.mxu0 0
      %2969 = vmatprep.subr.bf16.mxu0 0
      %2970 = vmatpush1.bf16.xpose.msra.mxu0 0
      %2971 = vmatprep.subr.bf16.mxu0 0
      %2972 = vmatpush1.bf16.xpose.msra.mxu0 0
      %2973 = vmatprep.subr.bf16.mxu0 0
      %2974 = vmatpush1.bf16.xpose.msra.mxu0 0
      %2975 = vmatprep.subr.bf16.mxu0 0
      %2976 = vmatpush1.bf16.xpose.msra.mxu0 0
      %2977 = vmatprep.mubr.bf16.mxu0 0
      %2978 = vmatmul.mubr.bf16.gmra.mrb[0].mxu0 %v2940
      %v2979 = vpop.f32.mrb[0].mxu0
      %v2980 = vadd.f32 %v760, %v2979
      %v2981 = vpop.f32.mrb[0].mxu0
      %v2982 = vpop.f32.mrb[0].mxu0
      %v2983 = vadd.f32 %v761, %v2982
      %v2984 = vpop.f32.mrb[0].mxu0
      %2985 = vdwg.mxu0
      %2987 = vrot.lane.b32.xlu0 %v2723, 112
      %v2988 = vpop.permute.xlu0 %2987
      %2989 = vrot.lane.b32.xlu0 %v2723, 80
      %v2990 = vpop.permute.xlu0 %2989
      %v2992 = vsel %vm775, %v2988, 0
      %v2995 = vsel %vm775, %v2990, 0
      %2997 = vmatprep.subr.bf16.mxu0 0
      %2998 = vmatpush1.bf16.xpose.msra.mxu0 %v2995
      %2999 = vmatprep.subr.bf16.mxu0 0
      %3000 = vmatpush1.bf16.xpose.msra.mxu0 0
      %3001 = vmatprep.subr.bf16.mxu0 0
      %3002 = vmatpush1.bf16.xpose.msra.mxu0 0
      %3003 = vmatprep.subr.bf16.mxu0 0
      %3004 = vmatpush1.bf16.xpose.msra.mxu0 0
      %3005 = vmatprep.subr.bf16.mxu0 0
      %3006 = vmatpush1.bf16.xpose.msra.mxu0 0
      %3007 = vmatprep.subr.bf16.mxu0 0
      %3008 = vmatpush1.bf16.xpose.msra.mxu0 0
      %3009 = vmatprep.subr.bf16.mxu0 0
      %3010 = vmatpush1.bf16.xpose.msra.mxu0 0
      %3011 = vmatprep.subr.bf16.mxu0 0
      %3012 = vmatpush1.bf16.xpose.msra.mxu0 0
      %3013 = vmatprep.subr.bf16.mxu0 0
      %3014 = vmatpush1.bf16.xpose.msra.mxu0 0
      %3015 = vmatprep.subr.bf16.mxu0 0
      %3016 = vmatpush1.bf16.xpose.msra.mxu0 0
      %3017 = vmatprep.subr.bf16.mxu0 0
      %3018 = vmatpush1.bf16.xpose.msra.mxu0 0
      %3019 = vmatprep.subr.bf16.mxu0 0
      %3020 = vmatpush1.bf16.xpose.msra.mxu0 0
      %3021 = vmatprep.subr.bf16.mxu0 0
      %3022 = vmatpush1.bf16.xpose.msra.mxu0 0
      %3023 = vmatprep.subr.bf16.mxu0 0
      %3024 = vmatpush1.bf16.xpose.msra.mxu0 0
      %3025 = vmatprep.subr.bf16.mxu0 0
      %3026 = vmatpush1.bf16.xpose.msra.mxu0 0
      %3027 = vmatprep.subr.bf16.mxu0 0
      %3028 = vmatpush1.bf16.xpose.msra.mxu0 0
      %3029 = vmatprep.mubr.bf16.mxu0 0
      %3030 = vmatmul.mubr.bf16.gmra.mrb[0].mxu0 %v2992
      %v3031 = vpop.f32.mrb[0].mxu0
      %v3032 = vadd.f32 %v760, %v3031
      %v3033 = vpop.f32.mrb[0].mxu0
      %v3034 = vpop.f32.mrb[0].mxu0
      %v3035 = vadd.f32 %v761, %v3034
      %v3036 = vpop.f32.mrb[0].mxu0
      %3037 = vdwg.mxu0
      %3039 = vrot.lane.b32.xlu0 %v2724, 112
      %v3040 = vpop.permute.xlu0 %3039
      %3041 = vrot.lane.b32.xlu0 %v2724, 80
      %v3042 = vpop.permute.xlu0 %3041
      %v3044 = vsel %vm775, %v3040, 0
      %v3047 = vsel %vm775, %v3042, 0
      %3049 = vmatprep.subr.bf16.mxu0 0
      %3050 = vmatpush1.bf16.xpose.msra.mxu0 %v3047
      %3051 = vmatprep.subr.bf16.mxu0 0
      %3052 = vmatpush1.bf16.xpose.msra.mxu0 0
      %3053 = vmatprep.subr.bf16.mxu0 0
      %3054 = vmatpush1.bf16.xpose.msra.mxu0 0
      %3055 = vmatprep.subr.bf16.mxu0 0
      %3056 = vmatpush1.bf16.xpose.msra.mxu0 0
      %3057 = vmatprep.subr.bf16.mxu0 0
      %3058 = vmatpush1.bf16.xpose.msra.mxu0 0
      %3059 = vmatprep.subr.bf16.mxu0 0
      %3060 = vmatpush1.bf16.xpose.msra.mxu0 0
      %3061 = vmatprep.subr.bf16.mxu0 0
      %3062 = vmatpush1.bf16.xpose.msra.mxu0 0
      %3063 = vmatprep.subr.bf16.mxu0 0
      %3064 = vmatpush1.bf16.xpose.msra.mxu0 0
      %3065 = vmatprep.subr.bf16.mxu0 0
      %3066 = vmatpush1.bf16.xpose.msra.mxu0 0
      %3067 = vmatprep.subr.bf16.mxu0 0
      %3068 = vmatpush1.bf16.xpose.msra.mxu0 0
      %3069 = vmatprep.subr.bf16.mxu0 0
      %3070 = vmatpush1.bf16.xpose.msra.mxu0 0
      %3071 = vmatprep.subr.bf16.mxu0 0
      %3072 = vmatpush1.bf16.xpose.msra.mxu0 0
      %3073 = vmatprep.subr.bf16.mxu0 0
      %3074 = vmatpush1.bf16.xpose.msra.mxu0 0
      %3075 = vmatprep.subr.bf16.mxu0 0
      %3076 = vmatpush1.bf16.xpose.msra.mxu0 0
      %3077 = vmatprep.subr.bf16.mxu0 0
      %3078 = vmatpush1.bf16.xpose.msra.mxu0 0
      %3079 = vmatprep.subr.bf16.mxu0 0
      %3080 = vmatpush1.bf16.xpose.msra.mxu0 0
      %3081 = vmatprep.mubr.bf16.mxu0 0
      %3082 = vmatmul.mubr.bf16.gmra.mrb[0].mxu0 %v3044
      %v3083 = vpop.f32.mrb[0].mxu0
      %v3084 = vadd.f32 %v760, %v3083
      %v3085 = vpop.f32.mrb[0].mxu0
      %v3086 = vpop.f32.mrb[0].mxu0
      %v3087 = vadd.f32 %v761, %v3086
      %v3088 = vpop.f32.mrb[0].mxu0
      %3089 = vdwg.mxu0
      %3091 = vrot.lane.b32.xlu0 %v2725, 112
      %v3092 = vpop.permute.xlu0 %3091
      %3093 = vrot.lane.b32.xlu0 %v2725, 80
      %v3094 = vpop.permute.xlu0 %3093
      %v3096 = vsel %vm775, %v3092, 0
      %v3099 = vsel %vm775, %v3094, 0
      %3101 = vmatprep.subr.bf16.mxu0 0
      %3102 = vmatpush1.bf16.xpose.msra.mxu0 %v3099
      %3103 = vmatprep.subr.bf16.mxu0 0
      %3104 = vmatpush1.bf16.xpose.msra.mxu0 0
      %3105 = vmatprep.subr.bf16.mxu0 0
      %3106 = vmatpush1.bf16.xpose.msra.mxu0 0
      %3107 = vmatprep.subr.bf16.mxu0 0
      %3108 = vmatpush1.bf16.xpose.msra.mxu0 0
      %3109 = vmatprep.subr.bf16.mxu0 0
      %3110 = vmatpush1.bf16.xpose.msra.mxu0 0
      %3111 = vmatprep.subr.bf16.mxu0 0
      %3112 = vmatpush1.bf16.xpose.msra.mxu0 0
      %3113 = vmatprep.subr.bf16.mxu0 0
      %3114 = vmatpush1.bf16.xpose.msra.mxu0 0
      %3115 = vmatprep.subr.bf16.mxu0 0
      %3116 = vmatpush1.bf16.xpose.msra.mxu0 0
      %3117 = vmatprep.subr.bf16.mxu0 0
      %3118 = vmatpush1.bf16.xpose.msra.mxu0 0
      %3119 = vmatprep.subr.bf16.mxu0 0
      %3120 = vmatpush1.bf16.xpose.msra.mxu0 0
      %3121 = vmatprep.subr.bf16.mxu0 0
      %3122 = vmatpush1.bf16.xpose.msra.mxu0 0
      %3123 = vmatprep.subr.bf16.mxu0 0
      %3124 = vmatpush1.bf16.xpose.msra.mxu0 0
      %3125 = vmatprep.subr.bf16.mxu0 0
      %3126 = vmatpush1.bf16.xpose.msra.mxu0 0
      %3127 = vmatprep.subr.bf16.mxu0 0
      %3128 = vmatpush1.bf16.xpose.msra.mxu0 0
      %3129 = vmatprep.subr.bf16.mxu0 0
      %3130 = vmatpush1.bf16.xpose.msra.mxu0 0
      %3131 = vmatprep.subr.bf16.mxu0 0
      %3132 = vmatpush1.bf16.xpose.msra.mxu0 0
      %3133 = vmatprep.mubr.bf16.mxu0 0
      %3134 = vmatmul.mubr.bf16.gmra.mrb[0].mxu0 %v3096
      %v3135 = vpop.f32.mrb[0].mxu0
      %v3136 = vadd.f32 %v760, %v3135
      %v3137 = vpop.f32.mrb[0].mxu0
      %v3138 = vpop.f32.mrb[0].mxu0
      %v3139 = vadd.f32 %v761, %v3138
      %v3140 = vpop.f32.mrb[0].mxu0
      %3141 = vdwg.mxu0
      %v3142 = vsel %vm1173, %v2772, -inf
      %3143 = vmax.xlane.f32.xlu0 %v3142
      %v3144 = vpop.xlane.xlu0 %3143
      %v3145 = vsel %vm1173, %v2775, -inf
      %3146 = vmax.xlane.f32.xlu0 %v3145
      %v3147 = vpop.xlane.xlu0 %3146
      %v3148 = vsel %vm1173, %v2824, -inf
      %3149 = vmax.xlane.f32.xlu0 %v3148
      %v3150 = vpop.xlane.xlu0 %3149
      %v3151 = vsel %vm1173, %v2827, -inf
      %3152 = vmax.xlane.f32.xlu0 %v3151
      %v3153 = vpop.xlane.xlu0 %3152
      %v3154 = vsel %vm1173, %v2876, -inf
      %3155 = vmax.xlane.f32.xlu0 %v3154
      %v3156 = vpop.xlane.xlu0 %3155
      %v3157 = vsel %vm1173, %v2879, -inf
      %3158 = vmax.xlane.f32.xlu0 %v3157
      %v3159 = vpop.xlane.xlu0 %3158
      %v3160 = vsel %vm1173, %v2928, -inf
      %3161 = vmax.xlane.f32.xlu0 %v3160
      %v3162 = vpop.xlane.xlu0 %3161
      %v3163 = vsel %vm1173, %v2931, -inf
      %3164 = vmax.xlane.f32.xlu0 %v3163
      %v3165 = vpop.xlane.xlu0 %3164
      %v3166 = vsel %vm1173, %v2980, -inf
      %3167 = vmax.xlane.f32.xlu0 %v3166
      %v3168 = vpop.xlane.xlu0 %3167
      %v3169 = vsel %vm1173, %v2983, -inf
      %3170 = vmax.xlane.f32.xlu0 %v3169
      %v3171 = vpop.xlane.xlu0 %3170
      %v3172 = vsel %vm1173, %v3032, -inf
      %3173 = vmax.xlane.f32.xlu0 %v3172
      %v3174 = vpop.xlane.xlu0 %3173
      %v3175 = vsel %vm1173, %v3035, -inf
      %3176 = vmax.xlane.f32.xlu0 %v3175
      %v3177 = vpop.xlane.xlu0 %3176
      %v3178 = vsel %vm1173, %v3084, -inf
      %3179 = vmax.xlane.f32.xlu0 %v3178
      %v3180 = vpop.xlane.xlu0 %3179
      %v3181 = vsel %vm1173, %v3087, -inf
      %3182 = vmax.xlane.f32.xlu0 %v3181
      %v3183 = vpop.xlane.xlu0 %3182
      %v3184 = vsel %vm1173, %v3136, -inf
      %3185 = vmax.xlane.f32.xlu0 %v3184
      %v3186 = vpop.xlane.xlu0 %3185
      %v3187 = vsel %vm1173, %v3139, -inf
      %3188 = vmax.xlane.f32.xlu0 %v3187
      %v3189 = vpop.xlane.xlu0 %3188
      %v3190 = vsub.f32 %v2772, %v3144
      %v3191 = vsub.f32 %v2775, %v3147
      %v3192 = vsub.f32 %v2824, %v3150
      %v3193 = vsub.f32 %v2827, %v3153
      %v3194 = vsub.f32 %v2876, %v3156
      %v3195 = vsub.f32 %v2879, %v3159
      %v3196 = vsub.f32 %v2928, %v3162
      %v3197 = vsub.f32 %v2931, %v3165
      %v3198 = vsub.f32 %v2980, %v3168
      %v3199 = vsub.f32 %v2983, %v3171
      %v3200 = vsub.f32 %v3032, %v3174
      %v3201 = vsub.f32 %v3035, %v3177
      %v3202 = vsub.f32 %v3084, %v3180
      %v3203 = vsub.f32 %v3087, %v3183
      %v3204 = vsub.f32 %v3136, %v3186
      %v3205 = vsub.f32 %v3139, %v3189
      %v3206 = vmul.f32 %v3190, 1.442695
      %v3207 = vpow.pop %v3206
      %v3208 = vmul.f32 %v3191, 1.442695
      %v3209 = vpow.pop %v3208
      %v3210 = vmul.f32 %v3192, 1.442695
      %v3211 = vpow.pop %v3210
      %v3212 = vmul.f32 %v3193, 1.442695
      %v3213 = vpow.pop %v3212
      %v3214 = vmul.f32 %v3194, 1.442695
      %v3215 = vpow.pop %v3214
      %v3216 = vmul.f32 %v3195, 1.442695
      %v3217 = vpow.pop %v3216
      %v3218 = vmul.f32 %v3196, 1.442695
      %v3219 = vpow.pop %v3218
      %v3220 = vmul.f32 %v3197, 1.442695
      %v3221 = vpow.pop %v3220
      %v3222 = vmul.f32 %v3198, 1.442695
      %v3223 = vpow.pop %v3222
      %v3224 = vmul.f32 %v3199, 1.442695
      %v3225 = vpow.pop %v3224
      %v3226 = vmul.f32 %v3200, 1.442695
      %v3227 = vpow.pop %v3226
      %v3228 = vmul.f32 %v3201, 1.442695
      %v3229 = vpow.pop %v3228
      %v3230 = vmul.f32 %v3202, 1.442695
      %v3231 = vpow.pop %v3230
      %v3232 = vmul.f32 %v3203, 1.442695
      %v3233 = vpow.pop %v3232
      %v3234 = vmul.f32 %v3204, 1.442695
      %v3235 = vpow.pop %v3234
      %v3236 = vmul.f32 %v3205, 1.442695
      %v3237 = vpow.pop %v3236
      %v3238 = vsel %vm1173, %v3207, 0.0
      %3239 = vadd.xlane.f32.xlu0 %v3238
      %v3240 = vpop.xlane.xlu0 %3239
      %v3241 = vsel %vm1173, %v3209, 0.0
      %3242 = vadd.xlane.f32.xlu0 %v3241
      %v3243 = vpop.xlane.xlu0 %3242
      %v3244 = vsel %vm1173, %v3211, 0.0
      %3245 = vadd.xlane.f32.xlu0 %v3244
      %v3246 = vpop.xlane.xlu0 %3245
      %v3247 = vsel %vm1173, %v3213, 0.0
      %3248 = vadd.xlane.f32.xlu0 %v3247
      %v3249 = vpop.xlane.xlu0 %3248
      %v3250 = vsel %vm1173, %v3215, 0.0
      %3251 = vadd.xlane.f32.xlu0 %v3250
      %v3252 = vpop.xlane.xlu0 %3251
      %v3253 = vsel %vm1173, %v3217, 0.0
      %3254 = vadd.xlane.f32.xlu0 %v3253
      %v3255 = vpop.xlane.xlu0 %3254
      %v3256 = vsel %vm1173, %v3219, 0.0
      %3257 = vadd.xlane.f32.xlu0 %v3256
      %v3258 = vpop.xlane.xlu0 %3257
      %v3259 = vsel %vm1173, %v3221, 0.0
      %3260 = vadd.xlane.f32.xlu0 %v3259
      %v3261 = vpop.xlane.xlu0 %3260
      %v3262 = vsel %vm1173, %v3223, 0.0
      %3263 = vadd.xlane.f32.xlu0 %v3262
      %v3264 = vpop.xlane.xlu0 %3263
      %v3265 = vsel %vm1173, %v3225, 0.0
      %3266 = vadd.xlane.f32.xlu0 %v3265
      %v3267 = vpop.xlane.xlu0 %3266
      %v3268 = vsel %vm1173, %v3227, 0.0
      %3269 = vadd.xlane.f32.xlu0 %v3268
      %v3270 = vpop.xlane.xlu0 %3269
      %v3271 = vsel %vm1173, %v3229, 0.0
      %3272 = vadd.xlane.f32.xlu0 %v3271
      %v3273 = vpop.xlane.xlu0 %3272
      %v3274 = vsel %vm1173, %v3231, 0.0
      %3275 = vadd.xlane.f32.xlu0 %v3274
      %v3276 = vpop.xlane.xlu0 %3275
      %v3277 = vsel %vm1173, %v3233, 0.0
      %3278 = vadd.xlane.f32.xlu0 %v3277
      %v3279 = vpop.xlane.xlu0 %3278
      %v3280 = vsel %vm1173, %v3235, 0.0
      %3281 = vadd.xlane.f32.xlu0 %v3280
      %v3282 = vpop.xlane.xlu0 %3281
      %v3283 = vsel %vm1173, %v3237, 0.0
      %3284 = vadd.xlane.f32.xlu0 %v3283
      %v3285 = vpop.xlane.xlu0 %3284
      %v3286 = vrcp.pop %v3240
      %v3287 = vrcp.pop %v3243
      %v3288 = vrcp.pop %v3246
      %v3289 = vrcp.pop %v3249
      %v3290 = vrcp.pop %v3252
      %v3291 = vrcp.pop %v3255
      %v3292 = vrcp.pop %v3258
      %v3293 = vrcp.pop %v3261
      %v3294 = vrcp.pop %v3264
      %v3295 = vrcp.pop %v3267
      %v3296 = vrcp.pop %v3270
      %v3297 = vrcp.pop %v3273
      %v3298 = vrcp.pop %v3276
      %v3299 = vrcp.pop %v3279
      %v3300 = vrcp.pop %v3282
      %v3301 = vrcp.pop %v3285
      %v3302 = vmul.f32 %v3207, %v3286
      %v3303 = vmul.f32 %v3209, %v3287
      %v3304 = vmul.f32 %v3211, %v3288
      %v3305 = vmul.f32 %v3213, %v3289
      %v3306 = vmul.f32 %v3215, %v3290
      %v3307 = vmul.f32 %v3217, %v3291
      %v3308 = vmul.f32 %v3219, %v3292
      %v3309 = vmul.f32 %v3221, %v3293
      %v3310 = vmul.f32 %v3223, %v3294
      %v3311 = vmul.f32 %v3225, %v3295
      %v3312 = vmul.f32 %v3227, %v3296
      %v3313 = vmul.f32 %v3229, %v3297
      %v3314 = vmul.f32 %v3231, %v3298
      %v3315 = vmul.f32 %v3233, %v3299
      %v3316 = vmul.f32 %v3235, %v3300
      %v3317 = vmul.f32 %v3237, %v3301
      %v3318 = vpack.c.bf16 %v3303, %v3302
      %v3319 = vpack.c.bf16 %v3305, %v3304
      %v3320 = vpack.c.bf16 %v3307, %v3306
      %v3321 = vpack.c.bf16 %v3309, %v3308
      %v3322 = vpack.c.bf16 %v3311, %v3310
      %v3323 = vpack.c.bf16 %v3313, %v3312
      %v3324 = vpack.c.bf16 %v3315, %v3314
      %v3325 = vpack.c.bf16 %v3317, %v3316
      %3326 = vrot.lane.b32.xlu0 %v2718, 48
      %v3327 = vpop.permute.xlu0 %3326
      %v3330 = vsel %vm1173, %v3318, 0
      %3332 = vmatprep.subr.bf16.mxu0 0
      %3333 = vmatpush1.bf16.msra.mxu0 %v3327
      %3334 = vmatprep.subr.bf16.mxu0 0
      %3335 = vmatpush1.bf16.msra.mxu0 0
      %3336 = vmatprep.subr.bf16.mxu0 0
      %3337 = vmatpush1.bf16.msra.mxu0 0
      %3338 = vmatprep.subr.bf16.mxu0 0
      %3339 = vmatpush1.bf16.msra.mxu0 0
      %3340 = vmatprep.subr.bf16.mxu0 0
      %3341 = vmatpush1.bf16.msra.mxu0 0
      %3342 = vmatprep.subr.bf16.mxu0 0
      %3343 = vmatpush1.bf16.msra.mxu0 0
      %3344 = vmatprep.subr.bf16.mxu0 0
      %3345 = vmatpush1.bf16.msra.mxu0 0
      %3346 = vmatprep.subr.bf16.mxu0 0
      %3347 = vmatpush1.bf16.msra.mxu0 0
      %3348 = vmatprep.subr.bf16.mxu0 0
      %3349 = vmatpush1.bf16.msra.mxu0 0
      %3350 = vmatprep.subr.bf16.mxu0 0
      %3351 = vmatpush1.bf16.msra.mxu0 0
      %3352 = vmatprep.subr.bf16.mxu0 0
      %3353 = vmatpush1.bf16.msra.mxu0 0
      %3354 = vmatprep.subr.bf16.mxu0 0
      %3355 = vmatpush1.bf16.msra.mxu0 0
      %3356 = vmatprep.subr.bf16.mxu0 0
      %3357 = vmatpush1.bf16.msra.mxu0 0
      %3358 = vmatprep.subr.bf16.mxu0 0
      %3359 = vmatpush1.bf16.msra.mxu0 0
      %3360 = vmatprep.subr.bf16.mxu0 0
      %3361 = vmatpush1.bf16.msra.mxu0 0
      %3362 = vmatprep.subr.bf16.mxu0 0
      %3363 = vmatpush1.bf16.msra.mxu0 0
      %3364 = vmatprep.mubr.bf16.mxu0 0
      %3365 = vmatmul.mubr.bf16.gmra.mrb[0].mxu0 %v3330
      %v3366 = vpop.f32.mrb[0].mxu0
      %v3367 = vadd.f32 0.0, %v3366
      %v3368 = vpop.f32.mrb[0].mxu0
      %v3369 = vpop.f32.mrb[0].mxu0
      %v3370 = vadd.f32 0.0, %v3369
      %v3371 = vpop.f32.mrb[0].mxu0
      %3372 = vdwg.mxu0
      %3373 = vrot.lane.b32.xlu0 %v2719, 48
      %v3374 = vpop.permute.xlu0 %3373
      %v3377 = vsel %vm1173, %v3319, 0
      %3379 = vmatprep.subr.bf16.mxu0 0
      %3380 = vmatpush1.bf16.msra.mxu0 %v3374
      %3381 = vmatprep.subr.bf16.mxu0 0
      %3382 = vmatpush1.bf16.msra.mxu0 0
      %3383 = vmatprep.subr.bf16.mxu0 0
      %3384 = vmatpush1.bf16.msra.mxu0 0
      %3385 = vmatprep.subr.bf16.mxu0 0
      %3386 = vmatpush1.bf16.msra.mxu0 0
      %3387 = vmatprep.subr.bf16.mxu0 0
      %3388 = vmatpush1.bf16.msra.mxu0 0
      %3389 = vmatprep.subr.bf16.mxu0 0
      %3390 = vmatpush1.bf16.msra.mxu0 0
      %3391 = vmatprep.subr.bf16.mxu0 0
      %3392 = vmatpush1.bf16.msra.mxu0 0
      %3393 = vmatprep.subr.bf16.mxu0 0
      %3394 = vmatpush1.bf16.msra.mxu0 0
      %3395 = vmatprep.subr.bf16.mxu0 0
      %3396 = vmatpush1.bf16.msra.mxu0 0
      %3397 = vmatprep.subr.bf16.mxu0 0
      %3398 = vmatpush1.bf16.msra.mxu0 0
      %3399 = vmatprep.subr.bf16.mxu0 0
      %3400 = vmatpush1.bf16.msra.mxu0 0
      %3401 = vmatprep.subr.bf16.mxu0 0
      %3402 = vmatpush1.bf16.msra.mxu0 0
      %3403 = vmatprep.subr.bf16.mxu0 0
      %3404 = vmatpush1.bf16.msra.mxu0 0
      %3405 = vmatprep.subr.bf16.mxu0 0
      %3406 = vmatpush1.bf16.msra.mxu0 0
      %3407 = vmatprep.subr.bf16.mxu0 0
      %3408 = vmatpush1.bf16.msra.mxu0 0
      %3409 = vmatprep.subr.bf16.mxu0 0
      %3410 = vmatpush1.bf16.msra.mxu0 0
      %3411 = vmatprep.mubr.bf16.mxu0 0
      %3412 = vmatmul.mubr.bf16.gmra.mrb[0].mxu0 %v3377
      %v3413 = vpop.f32.mrb[0].mxu0
      %v3414 = vadd.f32 0.0, %v3413
      %v3415 = vpop.f32.mrb[0].mxu0
      %v3416 = vpop.f32.mrb[0].mxu0
      %v3417 = vadd.f32 0.0, %v3416
      %v3418 = vpop.f32.mrb[0].mxu0
      %3419 = vdwg.mxu0
      %3420 = vrot.lane.b32.xlu0 %v2720, 48
      %v3421 = vpop.permute.xlu0 %3420
      %v3424 = vsel %vm1173, %v3320, 0
      %3426 = vmatprep.subr.bf16.mxu0 0
      %3427 = vmatpush1.bf16.msra.mxu0 %v3421
      %3428 = vmatprep.subr.bf16.mxu0 0
      %3429 = vmatpush1.bf16.msra.mxu0 0
      %3430 = vmatprep.subr.bf16.mxu0 0
      %3431 = vmatpush1.bf16.msra.mxu0 0
      %3432 = vmatprep.subr.bf16.mxu0 0
      %3433 = vmatpush1.bf16.msra.mxu0 0
      %3434 = vmatprep.subr.bf16.mxu0 0
      %3435 = vmatpush1.bf16.msra.mxu0 0
      %3436 = vmatprep.subr.bf16.mxu0 0
      %3437 = vmatpush1.bf16.msra.mxu0 0
      %3438 = vmatprep.subr.bf16.mxu0 0
      %3439 = vmatpush1.bf16.msra.mxu0 0
      %3440 = vmatprep.subr.bf16.mxu0 0
      %3441 = vmatpush1.bf16.msra.mxu0 0
      %3442 = vmatprep.subr.bf16.mxu0 0
      %3443 = vmatpush1.bf16.msra.mxu0 0
      %3444 = vmatprep.subr.bf16.mxu0 0
      %3445 = vmatpush1.bf16.msra.mxu0 0
      %3446 = vmatprep.subr.bf16.mxu0 0
      %3447 = vmatpush1.bf16.msra.mxu0 0
      %3448 = vmatprep.subr.bf16.mxu0 0
      %3449 = vmatpush1.bf16.msra.mxu0 0
      %3450 = vmatprep.subr.bf16.mxu0 0
      %3451 = vmatpush1.bf16.msra.mxu0 0
      %3452 = vmatprep.subr.bf16.mxu0 0
      %3453 = vmatpush1.bf16.msra.mxu0 0
      %3454 = vmatprep.subr.bf16.mxu0 0
      %3455 = vmatpush1.bf16.msra.mxu0 0
      %3456 = vmatprep.subr.bf16.mxu0 0
      %3457 = vmatpush1.bf16.msra.mxu0 0
      %3458 = vmatprep.mubr.bf16.mxu0 0
      %3459 = vmatmul.mubr.bf16.gmra.mrb[0].mxu0 %v3424
      %v3460 = vpop.f32.mrb[0].mxu0
      %v3461 = vadd.f32 0.0, %v3460
      %v3462 = vpop.f32.mrb[0].mxu0
      %v3463 = vpop.f32.mrb[0].mxu0
      %v3464 = vadd.f32 0.0, %v3463
      %v3465 = vpop.f32.mrb[0].mxu0
      %3466 = vdwg.mxu0
      %3467 = vrot.lane.b32.xlu0 %v2721, 48
      %v3468 = vpop.permute.xlu0 %3467
      %v3471 = vsel %vm1173, %v3321, 0
      %3473 = vmatprep.subr.bf16.mxu0 0
      %3474 = vmatpush1.bf16.msra.mxu0 %v3468
      %3475 = vmatprep.subr.bf16.mxu0 0
      %3476 = vmatpush1.bf16.msra.mxu0 0
      %3477 = vmatprep.subr.bf16.mxu0 0
      %3478 = vmatpush1.bf16.msra.mxu0 0
      %3479 = vmatprep.subr.bf16.mxu0 0
      %3480 = vmatpush1.bf16.msra.mxu0 0
      %3481 = vmatprep.subr.bf16.mxu0 0
      %3482 = vmatpush1.bf16.msra.mxu0 0
      %3483 = vmatprep.subr.bf16.mxu0 0
      %3484 = vmatpush1.bf16.msra.mxu0 0
      %3485 = vmatprep.subr.bf16.mxu0 0
      %3486 = vmatpush1.bf16.msra.mxu0 0
      %3487 = vmatprep.subr.bf16.mxu0 0
      %3488 = vmatpush1.bf16.msra.mxu0 0
      %3489 = vmatprep.subr.bf16.mxu0 0
      %3490 = vmatpush1.bf16.msra.mxu0 0
      %3491 = vmatprep.subr.bf16.mxu0 0
      %3492 = vmatpush1.bf16.msra.mxu0 0
      %3493 = vmatprep.subr.bf16.mxu0 0
      %3494 = vmatpush1.bf16.msra.mxu0 0
      %3495 = vmatprep.subr.bf16.mxu0 0
      %3496 = vmatpush1.bf16.msra.mxu0 0
      %3497 = vmatprep.subr.bf16.mxu0 0
      %3498 = vmatpush1.bf16.msra.mxu0 0
      %3499 = vmatprep.subr.bf16.mxu0 0
      %3500 = vmatpush1.bf16.msra.mxu0 0
      %3501 = vmatprep.subr.bf16.mxu0 0
      %3502 = vmatpush1.bf16.msra.mxu0 0
      %3503 = vmatprep.subr.bf16.mxu0 0
      %3504 = vmatpush1.bf16.msra.mxu0 0
      %3505 = vmatprep.mubr.bf16.mxu0 0
      %3506 = vmatmul.mubr.bf16.gmra.mrb[0].mxu0 %v3471
      %v3507 = vpop.f32.mrb[0].mxu0
      %v3508 = vadd.f32 0.0, %v3507
      %v3509 = vpop.f32.mrb[0].mxu0
      %v3510 = vpop.f32.mrb[0].mxu0
      %v3511 = vadd.f32 0.0, %v3510
      %v3512 = vpop.f32.mrb[0].mxu0
      %3513 = vdwg.mxu0
      %3514 = vrot.lane.b32.xlu0 %v2722, 48
      %v3515 = vpop.permute.xlu0 %3514
      %v3518 = vsel %vm1173, %v3322, 0
      %3520 = vmatprep.subr.bf16.mxu0 0
      %3521 = vmatpush1.bf16.msra.mxu0 %v3515
      %3522 = vmatprep.subr.bf16.mxu0 0
      %3523 = vmatpush1.bf16.msra.mxu0 0
      %3524 = vmatprep.subr.bf16.mxu0 0
      %3525 = vmatpush1.bf16.msra.mxu0 0
      %3526 = vmatprep.subr.bf16.mxu0 0
      %3527 = vmatpush1.bf16.msra.mxu0 0
      %3528 = vmatprep.subr.bf16.mxu0 0
      %3529 = vmatpush1.bf16.msra.mxu0 0
      %3530 = vmatprep.subr.bf16.mxu0 0
      %3531 = vmatpush1.bf16.msra.mxu0 0
      %3532 = vmatprep.subr.bf16.mxu0 0
      %3533 = vmatpush1.bf16.msra.mxu0 0
      %3534 = vmatprep.subr.bf16.mxu0 0
      %3535 = vmatpush1.bf16.msra.mxu0 0
      %3536 = vmatprep.subr.bf16.mxu0 0
      %3537 = vmatpush1.bf16.msra.mxu0 0
      %3538 = vmatprep.subr.bf16.mxu0 0
      %3539 = vmatpush1.bf16.msra.mxu0 0
      %3540 = vmatprep.subr.bf16.mxu0 0
      %3541 = vmatpush1.bf16.msra.mxu0 0
      %3542 = vmatprep.subr.bf16.mxu0 0
      %3543 = vmatpush1.bf16.msra.mxu0 0
      %3544 = vmatprep.subr.bf16.mxu0 0
      %3545 = vmatpush1.bf16.msra.mxu0 0
      %3546 = vmatprep.subr.bf16.mxu0 0
      %3547 = vmatpush1.bf16.msra.mxu0 0
      %3548 = vmatprep.subr.bf16.mxu0 0
      %3549 = vmatpush1.bf16.msra.mxu0 0
      %3550 = vmatprep.subr.bf16.mxu0 0
      %3551 = vmatpush1.bf16.msra.mxu0 0
      %3552 = vmatprep.mubr.bf16.mxu0 0
      %3553 = vmatmul.mubr.bf16.gmra.mrb[0].mxu0 %v3518
      %v3554 = vpop.f32.mrb[0].mxu0
      %v3555 = vadd.f32 0.0, %v3554
      %v3556 = vpop.f32.mrb[0].mxu0
      %v3557 = vpop.f32.mrb[0].mxu0
      %v3558 = vadd.f32 0.0, %v3557
      %v3559 = vpop.f32.mrb[0].mxu0
      %3560 = vdwg.mxu0
      %3561 = vrot.lane.b32.xlu0 %v2723, 48
      %v3562 = vpop.permute.xlu0 %3561
      %v3565 = vsel %vm1173, %v3323, 0
      %3567 = vmatprep.subr.bf16.mxu0 0
      %3568 = vmatpush1.bf16.msra.mxu0 %v3562
      %3569 = vmatprep.subr.bf16.mxu0 0
      %3570 = vmatpush1.bf16.msra.mxu0 0
      %3571 = vmatprep.subr.bf16.mxu0 0
      %3572 = vmatpush1.bf16.msra.mxu0 0
      %3573 = vmatprep.subr.bf16.mxu0 0
      %3574 = vmatpush1.bf16.msra.mxu0 0
      %3575 = vmatprep.subr.bf16.mxu0 0
      %3576 = vmatpush1.bf16.msra.mxu0 0
      %3577 = vmatprep.subr.bf16.mxu0 0
      %3578 = vmatpush1.bf16.msra.mxu0 0
      %3579 = vmatprep.subr.bf16.mxu0 0
      %3580 = vmatpush1.bf16.msra.mxu0 0
      %3581 = vmatprep.subr.bf16.mxu0 0
      %3582 = vmatpush1.bf16.msra.mxu0 0
      %3583 = vmatprep.subr.bf16.mxu0 0
      %3584 = vmatpush1.bf16.msra.mxu0 0
      %3585 = vmatprep.subr.bf16.mxu0 0
      %3586 = vmatpush1.bf16.msra.mxu0 0
      %3587 = vmatprep.subr.bf16.mxu0 0
      %3588 = vmatpush1.bf16.msra.mxu0 0
      %3589 = vmatprep.subr.bf16.mxu0 0
      %3590 = vmatpush1.bf16.msra.mxu0 0
      %3591 = vmatprep.subr.bf16.mxu0 0
      %3592 = vmatpush1.bf16.msra.mxu0 0
      %3593 = vmatprep.subr.bf16.mxu0 0
      %3594 = vmatpush1.bf16.msra.mxu0 0
      %3595 = vmatprep.subr.bf16.mxu0 0
      %3596 = vmatpush1.bf16.msra.mxu0 0
      %3597 = vmatprep.subr.bf16.mxu0 0
      %3598 = vmatpush1.bf16.msra.mxu0 0
      %3599 = vmatprep.mubr.bf16.mxu0 0
      %3600 = vmatmul.mubr.bf16.gmra.mrb[0].mxu0 %v3565
      %v3601 = vpop.f32.mrb[0].mxu0
      %v3602 = vadd.f32 0.0, %v3601
      %v3603 = vpop.f32.mrb[0].mxu0
      %v3604 = vpop.f32.mrb[0].mxu0
      %v3605 = vadd.f32 0.0, %v3604
      %v3606 = vpop.f32.mrb[0].mxu0
      %3607 = vdwg.mxu0
      %3608 = vrot.lane.b32.xlu0 %v2724, 48
      %v3609 = vpop.permute.xlu0 %3608
      %v3612 = vsel %vm1173, %v3324, 0
      %3614 = vmatprep.subr.bf16.mxu0 0
      %3615 = vmatpush1.bf16.msra.mxu0 %v3609
      %3616 = vmatprep.subr.bf16.mxu0 0
      %3617 = vmatpush1.bf16.msra.mxu0 0
      %3618 = vmatprep.subr.bf16.mxu0 0
      %3619 = vmatpush1.bf16.msra.mxu0 0
      %3620 = vmatprep.subr.bf16.mxu0 0
      %3621 = vmatpush1.bf16.msra.mxu0 0
      %3622 = vmatprep.subr.bf16.mxu0 0
      %3623 = vmatpush1.bf16.msra.mxu0 0
      %3624 = vmatprep.subr.bf16.mxu0 0
      %3625 = vmatpush1.bf16.msra.mxu0 0
      %3626 = vmatprep.subr.bf16.mxu0 0
      %3627 = vmatpush1.bf16.msra.mxu0 0
      %3628 = vmatprep.subr.bf16.mxu0 0
      %3629 = vmatpush1.bf16.msra.mxu0 0
      %3630 = vmatprep.subr.bf16.mxu0 0
      %3631 = vmatpush1.bf16.msra.mxu0 0
      %3632 = vmatprep.subr.bf16.mxu0 0
      %3633 = vmatpush1.bf16.msra.mxu0 0
      %3634 = vmatprep.subr.bf16.mxu0 0
      %3635 = vmatpush1.bf16.msra.mxu0 0
      %3636 = vmatprep.subr.bf16.mxu0 0
      %3637 = vmatpush1.bf16.msra.mxu0 0
      %3638 = vmatprep.subr.bf16.mxu0 0
      %3639 = vmatpush1.bf16.msra.mxu0 0
      %3640 = vmatprep.subr.bf16.mxu0 0
      %3641 = vmatpush1.bf16.msra.mxu0 0
      %3642 = vmatprep.subr.bf16.mxu0 0
      %3643 = vmatpush1.bf16.msra.mxu0 0
      %3644 = vmatprep.subr.bf16.mxu0 0
      %3645 = vmatpush1.bf16.msra.mxu0 0
      %3646 = vmatprep.mubr.bf16.mxu0 0
      %3647 = vmatmul.mubr.bf16.gmra.mrb[0].mxu0 %v3612
      %v3648 = vpop.f32.mrb[0].mxu0
      %v3649 = vadd.f32 0.0, %v3648
      %v3650 = vpop.f32.mrb[0].mxu0
      %v3651 = vpop.f32.mrb[0].mxu0
      %v3652 = vadd.f32 0.0, %v3651
      %v3653 = vpop.f32.mrb[0].mxu0
      %3654 = vdwg.mxu0
      %3655 = vrot.lane.b32.xlu0 %v2725, 48
      %v3656 = vpop.permute.xlu0 %3655
      %v3659 = vsel %vm1173, %v3325, 0
      %3661 = vmatprep.subr.bf16.mxu0 0
      %3662 = vmatpush1.bf16.msra.mxu0 %v3656
      %3663 = vmatprep.subr.bf16.mxu0 0
      %3664 = vmatpush1.bf16.msra.mxu0 0
      %3665 = vmatprep.subr.bf16.mxu0 0
      %3666 = vmatpush1.bf16.msra.mxu0 0
      %3667 = vmatprep.subr.bf16.mxu0 0
      %3668 = vmatpush1.bf16.msra.mxu0 0
      %3669 = vmatprep.subr.bf16.mxu0 0
      %3670 = vmatpush1.bf16.msra.mxu0 0
      %3671 = vmatprep.subr.bf16.mxu0 0
      %3672 = vmatpush1.bf16.msra.mxu0 0
      %3673 = vmatprep.subr.bf16.mxu0 0
      %3674 = vmatpush1.bf16.msra.mxu0 0
      %3675 = vmatprep.subr.bf16.mxu0 0
      %3676 = vmatpush1.bf16.msra.mxu0 0
      %3677 = vmatprep.subr.bf16.mxu0 0
      %3678 = vmatpush1.bf16.msra.mxu0 0
      %3679 = vmatprep.subr.bf16.mxu0 0
      %3680 = vmatpush1.bf16.msra.mxu0 0
      %3681 = vmatprep.subr.bf16.mxu0 0
      %3682 = vmatpush1.bf16.msra.mxu0 0
      %3683 = vmatprep.subr.bf16.mxu0 0
      %3684 = vmatpush1.bf16.msra.mxu0 0
      %3685 = vmatprep.subr.bf16.mxu0 0
      %3686 = vmatpush1.bf16.msra.mxu0 0
      %3687 = vmatprep.subr.bf16.mxu0 0
      %3688 = vmatpush1.bf16.msra.mxu0 0
      %3689 = vmatprep.subr.bf16.mxu0 0
      %3690 = vmatpush1.bf16.msra.mxu0 0
      %3691 = vmatprep.subr.bf16.mxu0 0
      %3692 = vmatpush1.bf16.msra.mxu0 0
      %3693 = vmatprep.mubr.bf16.mxu0 0
      %3694 = vmatmul.mubr.bf16.gmra.mrb[0].mxu0 %v3659
      %v3695 = vpop.f32.mrb[0].mxu0
      %v3696 = vadd.f32 0.0, %v3695
      %v3697 = vpop.f32.mrb[0].mxu0
      %v3698 = vpop.f32.mrb[0].mxu0
      %v3699 = vadd.f32 0.0, %v3698
      %v3700 = vpop.f32.mrb[0].mxu0
      %3701 = vdwg.mxu0
      %v3702 = vld [vmem:[#allocation2] sm:$0xff]
      %v3703 = vld [vmem:[#allocation2 + $0x8] sm:$0xff]
      %v3704 = vld [vmem:[#allocation2 + $0x10] sm:$0xff]
      %v3705 = vld [vmem:[#allocation2 + $0x18] sm:$0xff]
      %v3706 = vld [vmem:[#allocation2 + $0x20] sm:$0xff]
      %v3707 = vld [vmem:[#allocation2 + $0x28] sm:$0xff]
      %v3708 = vld [vmem:[#allocation2 + $0x30] sm:$0xff]
      %v3709 = vld [vmem:[#allocation2 + $0x38] sm:$0xff]
      %3711 = vrot.lane.b32.xlu0 %v3702, 104
      %v3712 = vpop.permute.xlu0 %3711
      %3713 = vrot.lane.b32.xlu0 %v3702, 72
      %v3714 = vpop.permute.xlu0 %3713
      %v3716 = vsel %vm775, %v3712, 0
      %v3719 = vsel %vm775, %v3714, 0
      %3721 = vmatprep.subr.bf16.mxu0 0
      %3722 = vmatpush1.bf16.xpose.msra.mxu0 %v3719
      %3723 = vmatprep.subr.bf16.mxu0 0
      %3724 = vmatpush1.bf16.xpose.msra.mxu0 0
      %3725 = vmatprep.subr.bf16.mxu0 0
      %3726 = vmatpush1.bf16.xpose.msra.mxu0 0
      %3727 = vmatprep.subr.bf16.mxu0 0
      %3728 = vmatpush1.bf16.xpose.msra.mxu0 0
      %3729 = vmatprep.subr.bf16.mxu0 0
      %3730 = vmatpush1.bf16.xpose.msra.mxu0 0
      %3731 = vmatprep.subr.bf16.mxu0 0
      %3732 = vmatpush1.bf16.xpose.msra.mxu0 0
      %3733 = vmatprep.subr.bf16.mxu0 0
      %3734 = vmatpush1.bf16.xpose.msra.mxu0 0
      %3735 = vmatprep.subr.bf16.mxu0 0
      %3736 = vmatpush1.bf16.xpose.msra.mxu0 0
      %3737 = vmatprep.subr.bf16.mxu0 0
      %3738 = vmatpush1.bf16.xpose.msra.mxu0 0
      %3739 = vmatprep.subr.bf16.mxu0 0
      %3740 = vmatpush1.bf16.xpose.msra.mxu0 0
      %3741 = vmatprep.subr.bf16.mxu0 0
      %3742 = vmatpush1.bf16.xpose.msra.mxu0 0
      %3743 = vmatprep.subr.bf16.mxu0 0
      %3744 = vmatpush1.bf16.xpose.msra.mxu0 0
      %3745 = vmatprep.subr.bf16.mxu0 0
      %3746 = vmatpush1.bf16.xpose.msra.mxu0 0
      %3747 = vmatprep.subr.bf16.mxu0 0
      %3748 = vmatpush1.bf16.xpose.msra.mxu0 0
      %3749 = vmatprep.subr.bf16.mxu0 0
      %3750 = vmatpush1.bf16.xpose.msra.mxu0 0
      %3751 = vmatprep.subr.bf16.mxu0 0
      %3752 = vmatpush1.bf16.xpose.msra.mxu0 0
      %3753 = vmatprep.mubr.bf16.mxu0 0
      %3754 = vmatmul.mubr.bf16.gmra.mrb[0].mxu0 %v3716
      %v3755 = vpop.f32.mrb[0].mxu0
      %v3756 = vadd.f32 %v762, %v3755
      %v3757 = vpop.f32.mrb[0].mxu0
      %v3758 = vpop.f32.mrb[0].mxu0
      %v3759 = vadd.f32 %v763, %v3758
      %v3760 = vpop.f32.mrb[0].mxu0
      %3761 = vdwg.mxu0
      %3763 = vrot.lane.b32.xlu0 %v3703, 104
      %v3764 = vpop.permute.xlu0 %3763
      %3765 = vrot.lane.b32.xlu0 %v3703, 72
      %v3766 = vpop.permute.xlu0 %3765
      %v3768 = vsel %vm775, %v3764, 0
      %v3771 = vsel %vm775, %v3766, 0
      %3773 = vmatprep.subr.bf16.mxu0 0
      %3774 = vmatpush1.bf16.xpose.msra.mxu0 %v3771
      %3775 = vmatprep.subr.bf16.mxu0 0
      %3776 = vmatpush1.bf16.xpose.msra.mxu0 0
      %3777 = vmatprep.subr.bf16.mxu0 0
      %3778 = vmatpush1.bf16.xpose.msra.mxu0 0
      %3779 = vmatprep.subr.bf16.mxu0 0
      %3780 = vmatpush1.bf16.xpose.msra.mxu0 0
      %3781 = vmatprep.subr.bf16.mxu0 0
      %3782 = vmatpush1.bf16.xpose.msra.mxu0 0
      %3783 = vmatprep.subr.bf16.mxu0 0
      %3784 = vmatpush1.bf16.xpose.msra.mxu0 0
      %3785 = vmatprep.subr.bf16.mxu0 0
      %3786 = vmatpush1.bf16.xpose.msra.mxu0 0
      %3787 = vmatprep.subr.bf16.mxu0 0
      %3788 = vmatpush1.bf16.xpose.msra.mxu0 0
      %3789 = vmatprep.subr.bf16.mxu0 0
      %3790 = vmatpush1.bf16.xpose.msra.mxu0 0
      %3791 = vmatprep.subr.bf16.mxu0 0
      %3792 = vmatpush1.bf16.xpose.msra.mxu0 0
      %3793 = vmatprep.subr.bf16.mxu0 0
      %3794 = vmatpush1.bf16.xpose.msra.mxu0 0
      %3795 = vmatprep.subr.bf16.mxu0 0
      %3796 = vmatpush1.bf16.xpose.msra.mxu0 0
      %3797 = vmatprep.subr.bf16.mxu0 0
      %3798 = vmatpush1.bf16.xpose.msra.mxu0 0
      %3799 = vmatprep.subr.bf16.mxu0 0
      %3800 = vmatpush1.bf16.xpose.msra.mxu0 0
      %3801 = vmatprep.subr.bf16.mxu0 0
      %3802 = vmatpush1.bf16.xpose.msra.mxu0 0
      %3803 = vmatprep.subr.bf16.mxu0 0
      %3804 = vmatpush1.bf16.xpose.msra.mxu0 0
      %3805 = vmatprep.mubr.bf16.mxu0 0
      %3806 = vmatmul.mubr.bf16.gmra.mrb[0].mxu0 %v3768
      %v3807 = vpop.f32.mrb[0].mxu0
      %v3808 = vadd.f32 %v762, %v3807
      %v3809 = vpop.f32.mrb[0].mxu0
      %v3810 = vpop.f32.mrb[0].mxu0
      %v3811 = vadd.f32 %v763, %v3810
      %v3812 = vpop.f32.mrb[0].mxu0
      %3813 = vdwg.mxu0
      %3815 = vrot.lane.b32.xlu0 %v3704, 104
      %v3816 = vpop.permute.xlu0 %3815
      %3817 = vrot.lane.b32.xlu0 %v3704, 72
      %v3818 = vpop.permute.xlu0 %3817
      %v3820 = vsel %vm775, %v3816, 0
      %v3823 = vsel %vm775, %v3818, 0
      %3825 = vmatprep.subr.bf16.mxu0 0
      %3826 = vmatpush1.bf16.xpose.msra.mxu0 %v3823
      %3827 = vmatprep.subr.bf16.mxu0 0
      %3828 = vmatpush1.bf16.xpose.msra.mxu0 0
      %3829 = vmatprep.subr.bf16.mxu0 0
      %3830 = vmatpush1.bf16.xpose.msra.mxu0 0
      %3831 = vmatprep.subr.bf16.mxu0 0
      %3832 = vmatpush1.bf16.xpose.msra.mxu0 0
      %3833 = vmatprep.subr.bf16.mxu0 0
      %3834 = vmatpush1.bf16.xpose.msra.mxu0 0
      %3835 = vmatprep.subr.bf16.mxu0 0
      %3836 = vmatpush1.bf16.xpose.msra.mxu0 0
      %3837 = vmatprep.subr.bf16.mxu0 0
      %3838 = vmatpush1.bf16.xpose.msra.mxu0 0
      %3839 = vmatprep.subr.bf16.mxu0 0
      %3840 = vmatpush1.bf16.xpose.msra.mxu0 0
      %3841 = vmatprep.subr.bf16.mxu0 0
      %3842 = vmatpush1.bf16.xpose.msra.mxu0 0
      %3843 = vmatprep.subr.bf16.mxu0 0
      %3844 = vmatpush1.bf16.xpose.msra.mxu0 0
      %3845 = vmatprep.subr.bf16.mxu0 0
      %3846 = vmatpush1.bf16.xpose.msra.mxu0 0
      %3847 = vmatprep.subr.bf16.mxu0 0
      %3848 = vmatpush1.bf16.xpose.msra.mxu0 0
      %3849 = vmatprep.subr.bf16.mxu0 0
      %3850 = vmatpush1.bf16.xpose.msra.mxu0 0
      %3851 = vmatprep.subr.bf16.mxu0 0
      %3852 = vmatpush1.bf16.xpose.msra.mxu0 0
      %3853 = vmatprep.subr.bf16.mxu0 0
      %3854 = vmatpush1.bf16.xpose.msra.mxu0 0
      %3855 = vmatprep.subr.bf16.mxu0 0
      %3856 = vmatpush1.bf16.xpose.msra.mxu0 0
      %3857 = vmatprep.mubr.bf16.mxu0 0
      %3858 = vmatmul.mubr.bf16.gmra.mrb[0].mxu0 %v3820
      %v3859 = vpop.f32.mrb[0].mxu0
      %v3860 = vadd.f32 %v762, %v3859
      %v3861 = vpop.f32.mrb[0].mxu0
      %v3862 = vpop.f32.mrb[0].mxu0
      %v3863 = vadd.f32 %v763, %v3862
      %v3864 = vpop.f32.mrb[0].mxu0
      %3865 = vdwg.mxu0
      %3867 = vrot.lane.b32.xlu0 %v3705, 104
      %v3868 = vpop.permute.xlu0 %3867
      %3869 = vrot.lane.b32.xlu0 %v3705, 72
      %v3870 = vpop.permute.xlu0 %3869
      %v3872 = vsel %vm775, %v3868, 0
      %v3875 = vsel %vm775, %v3870, 0
      %3877 = vmatprep.subr.bf16.mxu0 0
      %3878 = vmatpush1.bf16.xpose.msra.mxu0 %v3875
      %3879 = vmatprep.subr.bf16.mxu0 0
      %3880 = vmatpush1.bf16.xpose.msra.mxu0 0
      %3881 = vmatprep.subr.bf16.mxu0 0
      %3882 = vmatpush1.bf16.xpose.msra.mxu0 0
      %3883 = vmatprep.subr.bf16.mxu0 0
      %3884 = vmatpush1.bf16.xpose.msra.mxu0 0
      %3885 = vmatprep.subr.bf16.mxu0 0
      %3886 = vmatpush1.bf16.xpose.msra.mxu0 0
      %3887 = vmatprep.subr.bf16.mxu0 0
      %3888 = vmatpush1.bf16.xpose.msra.mxu0 0
      %3889 = vmatprep.subr.bf16.mxu0 0
      %3890 = vmatpush1.bf16.xpose.msra.mxu0 0
      %3891 = vmatprep.subr.bf16.mxu0 0
      %3892 = vmatpush1.bf16.xpose.msra.mxu0 0
      %3893 = vmatprep.subr.bf16.mxu0 0
      %3894 = vmatpush1.bf16.xpose.msra.mxu0 0
      %3895 = vmatprep.subr.bf16.mxu0 0
      %3896 = vmatpush1.bf16.xpose.msra.mxu0 0
      %3897 = vmatprep.subr.bf16.mxu0 0
      %3898 = vmatpush1.bf16.xpose.msra.mxu0 0
      %3899 = vmatprep.subr.bf16.mxu0 0
      %3900 = vmatpush1.bf16.xpose.msra.mxu0 0
      %3901 = vmatprep.subr.bf16.mxu0 0
      %3902 = vmatpush1.bf16.xpose.msra.mxu0 0
      %3903 = vmatprep.subr.bf16.mxu0 0
      %3904 = vmatpush1.bf16.xpose.msra.mxu0 0
      %3905 = vmatprep.subr.bf16.mxu0 0
      %3906 = vmatpush1.bf16.xpose.msra.mxu0 0
      %3907 = vmatprep.subr.bf16.mxu0 0
      %3908 = vmatpush1.bf16.xpose.msra.mxu0 0
      %3909 = vmatprep.mubr.bf16.mxu0 0
      %3910 = vmatmul.mubr.bf16.gmra.mrb[0].mxu0 %v3872
      %v3911 = vpop.f32.mrb[0].mxu0
      %v3912 = vadd.f32 %v762, %v3911
      %v3913 = vpop.f32.mrb[0].mxu0
      %v3914 = vpop.f32.mrb[0].mxu0
      %v3915 = vadd.f32 %v763, %v3914
      %v3916 = vpop.f32.mrb[0].mxu0
      %3917 = vdwg.mxu0
      %3919 = vrot.lane.b32.xlu0 %v3706, 104
      %v3920 = vpop.permute.xlu0 %3919
      %3921 = vrot.lane.b32.xlu0 %v3706, 72
      %v3922 = vpop.permute.xlu0 %3921
      %v3924 = vsel %vm775, %v3920, 0
      %v3927 = vsel %vm775, %v3922, 0
      %3929 = vmatprep.subr.bf16.mxu0 0
      %3930 = vmatpush1.bf16.xpose.msra.mxu0 %v3927
      %3931 = vmatprep.subr.bf16.mxu0 0
      %3932 = vmatpush1.bf16.xpose.msra.mxu0 0
      %3933 = vmatprep.subr.bf16.mxu0 0
      %3934 = vmatpush1.bf16.xpose.msra.mxu0 0
      %3935 = vmatprep.subr.bf16.mxu0 0
      %3936 = vmatpush1.bf16.xpose.msra.mxu0 0
      %3937 = vmatprep.subr.bf16.mxu0 0
      %3938 = vmatpush1.bf16.xpose.msra.mxu0 0
      %3939 = vmatprep.subr.bf16.mxu0 0
      %3940 = vmatpush1.bf16.xpose.msra.mxu0 0
      %3941 = vmatprep.subr.bf16.mxu0 0
      %3942 = vmatpush1.bf16.xpose.msra.mxu0 0
      %3943 = vmatprep.subr.bf16.mxu0 0
      %3944 = vmatpush1.bf16.xpose.msra.mxu0 0
      %3945 = vmatprep.subr.bf16.mxu0 0
      %3946 = vmatpush1.bf16.xpose.msra.mxu0 0
      %3947 = vmatprep.subr.bf16.mxu0 0
      %3948 = vmatpush1.bf16.xpose.msra.mxu0 0
      %3949 = vmatprep.subr.bf16.mxu0 0
      %3950 = vmatpush1.bf16.xpose.msra.mxu0 0
      %3951 = vmatprep.subr.bf16.mxu0 0
      %3952 = vmatpush1.bf16.xpose.msra.mxu0 0
      %3953 = vmatprep.subr.bf16.mxu0 0
      %3954 = vmatpush1.bf16.xpose.msra.mxu0 0
      %3955 = vmatprep.subr.bf16.mxu0 0
      %3956 = vmatpush1.bf16.xpose.msra.mxu0 0
      %3957 = vmatprep.subr.bf16.mxu0 0
      %3958 = vmatpush1.bf16.xpose.msra.mxu0 0
      %3959 = vmatprep.subr.bf16.mxu0 0
      %3960 = vmatpush1.bf16.xpose.msra.mxu0 0
      %3961 = vmatprep.mubr.bf16.mxu0 0
      %3962 = vmatmul.mubr.bf16.gmra.mrb[0].mxu0 %v3924
      %v3963 = vpop.f32.mrb[0].mxu0
      %v3964 = vadd.f32 %v762, %v3963
      %v3965 = vpop.f32.mrb[0].mxu0
      %v3966 = vpop.f32.mrb[0].mxu0
      %v3967 = vadd.f32 %v763, %v3966
      %v3968 = vpop.f32.mrb[0].mxu0
      %3969 = vdwg.mxu0
      %3971 = vrot.lane.b32.xlu0 %v3707, 104
      %v3972 = vpop.permute.xlu0 %3971
      %3973 = vrot.lane.b32.xlu0 %v3707, 72
      %v3974 = vpop.permute.xlu0 %3973
      %v3976 = vsel %vm775, %v3972, 0
      %v3979 = vsel %vm775, %v3974, 0
      %3981 = vmatprep.subr.bf16.mxu0 0
      %3982 = vmatpush1.bf16.xpose.msra.mxu0 %v3979
      %3983 = vmatprep.subr.bf16.mxu0 0
      %3984 = vmatpush1.bf16.xpose.msra.mxu0 0
      %3985 = vmatprep.subr.bf16.mxu0 0
      %3986 = vmatpush1.bf16.xpose.msra.mxu0 0
      %3987 = vmatprep.subr.bf16.mxu0 0
      %3988 = vmatpush1.bf16.xpose.msra.mxu0 0
      %3989 = vmatprep.subr.bf16.mxu0 0
      %3990 = vmatpush1.bf16.xpose.msra.mxu0 0
      %3991 = vmatprep.subr.bf16.mxu0 0
      %3992 = vmatpush1.bf16.xpose.msra.mxu0 0
      %3993 = vmatprep.subr.bf16.mxu0 0
      %3994 = vmatpush1.bf16.xpose.msra.mxu0 0
      %3995 = vmatprep.subr.bf16.mxu0 0
      %3996 = vmatpush1.bf16.xpose.msra.mxu0 0
      %3997 = vmatprep.subr.bf16.mxu0 0
      %3998 = vmatpush1.bf16.xpose.msra.mxu0 0
      %3999 = vmatprep.subr.bf16.mxu0 0
      %4000 = vmatpush1.bf16.xpose.msra.mxu0 0
      %4001 = vmatprep.subr.bf16.mxu0 0
      %4002 = vmatpush1.bf16.xpose.msra.mxu0 0
      %4003 = vmatprep.subr.bf16.mxu0 0
      %4004 = vmatpush1.bf16.xpose.msra.mxu0 0
      %4005 = vmatprep.subr.bf16.mxu0 0
      %4006 = vmatpush1.bf16.xpose.msra.mxu0 0
      %4007 = vmatprep.subr.bf16.mxu0 0
      %4008 = vmatpush1.bf16.xpose.msra.mxu0 0
      %4009 = vmatprep.subr.bf16.mxu0 0
      %4010 = vmatpush1.bf16.xpose.msra.mxu0 0
      %4011 = vmatprep.subr.bf16.mxu0 0
      %4012 = vmatpush1.bf16.xpose.msra.mxu0 0
      %4013 = vmatprep.mubr.bf16.mxu0 0
      %4014 = vmatmul.mubr.bf16.gmra.mrb[0].mxu0 %v3976
      %v4015 = vpop.f32.mrb[0].mxu0
      %v4016 = vadd.f32 %v762, %v4015
      %v4017 = vpop.f32.mrb[0].mxu0
      %v4018 = vpop.f32.mrb[0].mxu0
      %v4019 = vadd.f32 %v763, %v4018
      %v4020 = vpop.f32.mrb[0].mxu0
      %4021 = vdwg.mxu0
      %4023 = vrot.lane.b32.xlu0 %v3708, 104
      %v4024 = vpop.permute.xlu0 %4023
      %4025 = vrot.lane.b32.xlu0 %v3708, 72
      %v4026 = vpop.permute.xlu0 %4025
      %v4028 = vsel %vm775, %v4024, 0
      %v4031 = vsel %vm775, %v4026, 0
      %4033 = vmatprep.subr.bf16.mxu0 0
      %4034 = vmatpush1.bf16.xpose.msra.mxu0 %v4031
      %4035 = vmatprep.subr.bf16.mxu0 0
      %4036 = vmatpush1.bf16.xpose.msra.mxu0 0
      %4037 = vmatprep.subr.bf16.mxu0 0
      %4038 = vmatpush1.bf16.xpose.msra.mxu0 0
      %4039 = vmatprep.subr.bf16.mxu0 0
      %4040 = vmatpush1.bf16.xpose.msra.mxu0 0
      %4041 = vmatprep.subr.bf16.mxu0 0
      %4042 = vmatpush1.bf16.xpose.msra.mxu0 0
      %4043 = vmatprep.subr.bf16.mxu0 0
      %4044 = vmatpush1.bf16.xpose.msra.mxu0 0
      %4045 = vmatprep.subr.bf16.mxu0 0
      %4046 = vmatpush1.bf16.xpose.msra.mxu0 0
      %4047 = vmatprep.subr.bf16.mxu0 0
      %4048 = vmatpush1.bf16.xpose.msra.mxu0 0
      %4049 = vmatprep.subr.bf16.mxu0 0
      %4050 = vmatpush1.bf16.xpose.msra.mxu0 0
      %4051 = vmatprep.subr.bf16.mxu0 0
      %4052 = vmatpush1.bf16.xpose.msra.mxu0 0
      %4053 = vmatprep.subr.bf16.mxu0 0
      %4054 = vmatpush1.bf16.xpose.msra.mxu0 0
      %4055 = vmatprep.subr.bf16.mxu0 0
      %4056 = vmatpush1.bf16.xpose.msra.mxu0 0
      %4057 = vmatprep.subr.bf16.mxu0 0
      %4058 = vmatpush1.bf16.xpose.msra.mxu0 0
      %4059 = vmatprep.subr.bf16.mxu0 0
      %4060 = vmatpush1.bf16.xpose.msra.mxu0 0
      %4061 = vmatprep.subr.bf16.mxu0 0
      %4062 = vmatpush1.bf16.xpose.msra.mxu0 0
      %4063 = vmatprep.subr.bf16.mxu0 0
      %4064 = vmatpush1.bf16.xpose.msra.mxu0 0
      %4065 = vmatprep.mubr.bf16.mxu0 0
      %4066 = vmatmul.mubr.bf16.gmra.mrb[0].mxu0 %v4028
      %v4067 = vpop.f32.mrb[0].mxu0
      %v4068 = vadd.f32 %v762, %v4067
      %v4069 = vpop.f32.mrb[0].mxu0
      %v4070 = vpop.f32.mrb[0].mxu0
      %v4071 = vadd.f32 %v763, %v4070
      %v4072 = vpop.f32.mrb[0].mxu0
      %4073 = vdwg.mxu0
      %4075 = vrot.lane.b32.xlu0 %v3709, 104
      %v4076 = vpop.permute.xlu0 %4075
      %4077 = vrot.lane.b32.xlu0 %v3709, 72
      %v4078 = vpop.permute.xlu0 %4077
      %v4080 = vsel %vm775, %v4076, 0
      %v4083 = vsel %vm775, %v4078, 0
      %4085 = vmatprep.subr.bf16.mxu0 0
      %4086 = vmatpush1.bf16.xpose.msra.mxu0 %v4083
      %4087 = vmatprep.subr.bf16.mxu0 0
      %4088 = vmatpush1.bf16.xpose.msra.mxu0 0
      %4089 = vmatprep.subr.bf16.mxu0 0
      %4090 = vmatpush1.bf16.xpose.msra.mxu0 0
      %4091 = vmatprep.subr.bf16.mxu0 0
      %4092 = vmatpush1.bf16.xpose.msra.mxu0 0
      %4093 = vmatprep.subr.bf16.mxu0 0
      %4094 = vmatpush1.bf16.xpose.msra.mxu0 0
      %4095 = vmatprep.subr.bf16.mxu0 0
      %4096 = vmatpush1.bf16.xpose.msra.mxu0 0
      %4097 = vmatprep.subr.bf16.mxu0 0
      %4098 = vmatpush1.bf16.xpose.msra.mxu0 0
      %4099 = vmatprep.subr.bf16.mxu0 0
      %4100 = vmatpush1.bf16.xpose.msra.mxu0 0
      %4101 = vmatprep.subr.bf16.mxu0 0
      %4102 = vmatpush1.bf16.xpose.msra.mxu0 0
      %4103 = vmatprep.subr.bf16.mxu0 0
      %4104 = vmatpush1.bf16.xpose.msra.mxu0 0
      %4105 = vmatprep.subr.bf16.mxu0 0
      %4106 = vmatpush1.bf16.xpose.msra.mxu0 0
      %4107 = vmatprep.subr.bf16.mxu0 0
      %4108 = vmatpush1.bf16.xpose.msra.mxu0 0
      %4109 = vmatprep.subr.bf16.mxu0 0
      %4110 = vmatpush1.bf16.xpose.msra.mxu0 0
      %4111 = vmatprep.subr.bf16.mxu0 0
      %4112 = vmatpush1.bf16.xpose.msra.mxu0 0
      %4113 = vmatprep.subr.bf16.mxu0 0
      %4114 = vmatpush1.bf16.xpose.msra.mxu0 0
      %4115 = vmatprep.subr.bf16.mxu0 0
      %4116 = vmatpush1.bf16.xpose.msra.mxu0 0
      %4117 = vmatprep.mubr.bf16.mxu0 0
      %4118 = vmatmul.mubr.bf16.gmra.mrb[0].mxu0 %v4080
      %v4119 = vpop.f32.mrb[0].mxu0
      %v4120 = vadd.f32 %v762, %v4119
      %v4121 = vpop.f32.mrb[0].mxu0
      %v4122 = vpop.f32.mrb[0].mxu0
      %v4123 = vadd.f32 %v763, %v4122
      %v4124 = vpop.f32.mrb[0].mxu0
      %4125 = vdwg.mxu0
      %v4126 = vsel %vm1173, %v3756, -inf
      %4127 = vmax.xlane.f32.xlu0 %v4126
      %v4128 = vpop.xlane.xlu0 %4127
      %v4129 = vsel %vm1173, %v3759, -inf
      %4130 = vmax.xlane.f32.xlu0 %v4129
      %v4131 = vpop.xlane.xlu0 %4130
      %v4132 = vsel %vm1173, %v3808, -inf
      %4133 = vmax.xlane.f32.xlu0 %v4132
      %v4134 = vpop.xlane.xlu0 %4133
      %v4135 = vsel %vm1173, %v3811, -inf
      %4136 = vmax.xlane.f32.xlu0 %v4135
      %v4137 = vpop.xlane.xlu0 %4136
      %v4138 = vsel %vm1173, %v3860, -inf
      %4139 = vmax.xlane.f32.xlu0 %v4138
      %v4140 = vpop.xlane.xlu0 %4139
      %v4141 = vsel %vm1173, %v3863, -inf
      %4142 = vmax.xlane.f32.xlu0 %v4141
      %v4143 = vpop.xlane.xlu0 %4142
      %v4144 = vsel %vm1173, %v3912, -inf
      %4145 = vmax.xlane.f32.xlu0 %v4144
      %v4146 = vpop.xlane.xlu0 %4145
      %v4147 = vsel %vm1173, %v3915, -inf
      %4148 = vmax.xlane.f32.xlu0 %v4147
      %v4149 = vpop.xlane.xlu0 %4148
      %v4150 = vsel %vm1173, %v3964, -inf
      %4151 = vmax.xlane.f32.xlu0 %v4150
      %v4152 = vpop.xlane.xlu0 %4151
      %v4153 = vsel %vm1173, %v3967, -inf
      %4154 = vmax.xlane.f32.xlu0 %v4153
      %v4155 = vpop.xlane.xlu0 %4154
      %v4156 = vsel %vm1173, %v4016, -inf
      %4157 = vmax.xlane.f32.xlu0 %v4156
      %v4158 = vpop.xlane.xlu0 %4157
      %v4159 = vsel %vm1173, %v4019, -inf
      %4160 = vmax.xlane.f32.xlu0 %v4159
      %v4161 = vpop.xlane.xlu0 %4160
      %v4162 = vsel %vm1173, %v4068, -inf
      %4163 = vmax.xlane.f32.xlu0 %v4162
      %v4164 = vpop.xlane.xlu0 %4163
      %v4165 = vsel %vm1173, %v4071, -inf
      %4166 = vmax.xlane.f32.xlu0 %v4165
      %v4167 = vpop.xlane.xlu0 %4166
      %v4168 = vsel %vm1173, %v4120, -inf
      %4169 = vmax.xlane.f32.xlu0 %v4168
      %v4170 = vpop.xlane.xlu0 %4169
      %v4171 = vsel %vm1173, %v4123, -inf
      %4172 = vmax.xlane.f32.xlu0 %v4171
      %v4173 = vpop.xlane.xlu0 %4172
      %v4174 = vsub.f32 %v3756, %v4128
      %v4175 = vsub.f32 %v3759, %v4131
      %v4176 = vsub.f32 %v3808, %v4134
      %v4177 = vsub.f32 %v3811, %v4137
      %v4178 = vsub.f32 %v3860, %v4140
      %v4179 = vsub.f32 %v3863, %v4143
      %v4180 = vsub.f32 %v3912, %v4146
      %v4181 = vsub.f32 %v3915, %v4149
      %v4182 = vsub.f32 %v3964, %v4152
      %v4183 = vsub.f32 %v3967, %v4155
      %v4184 = vsub.f32 %v4016, %v4158
      %v4185 = vsub.f32 %v4019, %v4161
      %v4186 = vsub.f32 %v4068, %v4164
      %v4187 = vsub.f32 %v4071, %v4167
      %v4188 = vsub.f32 %v4120, %v4170
      %v4189 = vsub.f32 %v4123, %v4173
      %v4190 = vmul.f32 %v4174, 1.442695
      %v4191 = vpow.pop %v4190
      %v4192 = vmul.f32 %v4175, 1.442695
      %v4193 = vpow.pop %v4192
      %v4194 = vmul.f32 %v4176, 1.442695
      %v4195 = vpow.pop %v4194
      %v4196 = vmul.f32 %v4177, 1.442695
      %v4197 = vpow.pop %v4196
      %v4198 = vmul.f32 %v4178, 1.442695
      %v4199 = vpow.pop %v4198
      %v4200 = vmul.f32 %v4179, 1.442695
      %v4201 = vpow.pop %v4200
      %v4202 = vmul.f32 %v4180, 1.442695
      %v4203 = vpow.pop %v4202
      %v4204 = vmul.f32 %v4181, 1.442695
      %v4205 = vpow.pop %v4204
      %v4206 = vmul.f32 %v4182, 1.442695
      %v4207 = vpow.pop %v4206
      %v4208 = vmul.f32 %v4183, 1.442695
      %v4209 = vpow.pop %v4208
      %v4210 = vmul.f32 %v4184, 1.442695
      %v4211 = vpow.pop %v4210
      %v4212 = vmul.f32 %v4185, 1.442695
      %v4213 = vpow.pop %v4212
      %v4214 = vmul.f32 %v4186, 1.442695
      %v4215 = vpow.pop %v4214
      %v4216 = vmul.f32 %v4187, 1.442695
      %v4217 = vpow.pop %v4216
      %v4218 = vmul.f32 %v4188, 1.442695
      %v4219 = vpow.pop %v4218
      %v4220 = vmul.f32 %v4189, 1.442695
      %v4221 = vpow.pop %v4220
      %v4222 = vsel %vm1173, %v4191, 0.0
      %4223 = vadd.xlane.f32.xlu0 %v4222
      %v4224 = vpop.xlane.xlu0 %4223
      %v4225 = vsel %vm1173, %v4193, 0.0
      %4226 = vadd.xlane.f32.xlu0 %v4225
      %v4227 = vpop.xlane.xlu0 %4226
      %v4228 = vsel %vm1173, %v4195, 0.0
      %4229 = vadd.xlane.f32.xlu0 %v4228
      %v4230 = vpop.xlane.xlu0 %4229
      %v4231 = vsel %vm1173, %v4197, 0.0
      %4232 = vadd.xlane.f32.xlu0 %v4231
      %v4233 = vpop.xlane.xlu0 %4232
      %v4234 = vsel %vm1173, %v4199, 0.0
      %4235 = vadd.xlane.f32.xlu0 %v4234
      %v4236 = vpop.xlane.xlu0 %4235
      %v4237 = vsel %vm1173, %v4201, 0.0
      %4238 = vadd.xlane.f32.xlu0 %v4237
      %v4239 = vpop.xlane.xlu0 %4238
      %v4240 = vsel %vm1173, %v4203, 0.0
      %4241 = vadd.xlane.f32.xlu0 %v4240
      %v4242 = vpop.xlane.xlu0 %4241
      %v4243 = vsel %vm1173, %v4205, 0.0
      %4244 = vadd.xlane.f32.xlu0 %v4243
      %v4245 = vpop.xlane.xlu0 %4244
      %v4246 = vsel %vm1173, %v4207, 0.0
      %4247 = vadd.xlane.f32.xlu0 %v4246
      %v4248 = vpop.xlane.xlu0 %4247
      %v4249 = vsel %vm1173, %v4209, 0.0
      %4250 = vadd.xlane.f32.xlu0 %v4249
      %v4251 = vpop.xlane.xlu0 %4250
      %v4252 = vsel %vm1173, %v4211, 0.0
      %4253 = vadd.xlane.f32.xlu0 %v4252
      %v4254 = vpop.xlane.xlu0 %4253
      %v4255 = vsel %vm1173, %v4213, 0.0
      %4256 = vadd.xlane.f32.xlu0 %v4255
      %v4257 = vpop.xlane.xlu0 %4256
      %v4258 = vsel %vm1173, %v4215, 0.0
      %4259 = vadd.xlane.f32.xlu0 %v4258
      %v4260 = vpop.xlane.xlu0 %4259
      %v4261 = vsel %vm1173, %v4217, 0.0
      %4262 = vadd.xlane.f32.xlu0 %v4261
      %v4263 = vpop.xlane.xlu0 %4262
      %v4264 = vsel %vm1173, %v4219, 0.0
      %4265 = vadd.xlane.f32.xlu0 %v4264
      %v4266 = vpop.xlane.xlu0 %4265
      %v4267 = vsel %vm1173, %v4221, 0.0
      %4268 = vadd.xlane.f32.xlu0 %v4267
      %v4269 = vpop.xlane.xlu0 %4268
      %v4270 = vrcp.pop %v4224
      %v4271 = vrcp.pop %v4227
      %v4272 = vrcp.pop %v4230
      %v4273 = vrcp.pop %v4233
      %v4274 = vrcp.pop %v4236
      %v4275 = vrcp.pop %v4239
      %v4276 = vrcp.pop %v4242
      %v4277 = vrcp.pop %v4245
      %v4278 = vrcp.pop %v4248
      %v4279 = vrcp.pop %v4251
      %v4280 = vrcp.pop %v4254
      %v4281 = vrcp.pop %v4257
      %v4282 = vrcp.pop %v4260
      %v4283 = vrcp.pop %v4263
      %v4284 = vrcp.pop %v4266
      %v4285 = vrcp.pop %v4269
      %v4286 = vmul.f32 %v4191, %v4270
      %v4287 = vmul.f32 %v4193, %v4271
      %v4288 = vmul.f32 %v4195, %v4272
      %v4289 = vmul.f32 %v4197, %v4273
      %v4290 = vmul.f32 %v4199, %v4274
      %v4291 = vmul.f32 %v4201, %v4275
      %v4292 = vmul.f32 %v4203, %v4276
      %v4293 = vmul.f32 %v4205, %v4277
      %v4294 = vmul.f32 %v4207, %v4278
      %v4295 = vmul.f32 %v4209, %v4279
      %v4296 = vmul.f32 %v4211, %v4280
      %v4297 = vmul.f32 %v4213, %v4281
      %v4298 = vmul.f32 %v4215, %v4282
      %v4299 = vmul.f32 %v4217, %v4283
      %v4300 = vmul.f32 %v4219, %v4284
      %v4301 = vmul.f32 %v4221, %v4285
      %v4302 = vpack.c.bf16 %v4287, %v4286
      %v4303 = vpack.c.bf16 %v4289, %v4288
      %v4304 = vpack.c.bf16 %v4291, %v4290
      %v4305 = vpack.c.bf16 %v4293, %v4292
      %v4306 = vpack.c.bf16 %v4295, %v4294
      %v4307 = vpack.c.bf16 %v4297, %v4296
      %v4308 = vpack.c.bf16 %v4299, %v4298
      %v4309 = vpack.c.bf16 %v4301, %v4300
      %4310 = vrot.lane.b32.xlu0 %v3702, 40
      %v4311 = vpop.permute.xlu0 %4310
      %v4314 = vsel %vm1173, %v4302, 0
      %4316 = vmatprep.subr.bf16.mxu0 0
      %4317 = vmatpush1.bf16.msra.mxu0 %v4311
      %4318 = vmatprep.subr.bf16.mxu0 0
      %4319 = vmatpush1.bf16.msra.mxu0 0
      %4320 = vmatprep.subr.bf16.mxu0 0
      %4321 = vmatpush1.bf16.msra.mxu0 0
      %4322 = vmatprep.subr.bf16.mxu0 0
      %4323 = vmatpush1.bf16.msra.mxu0 0
      %4324 = vmatprep.subr.bf16.mxu0 0
      %4325 = vmatpush1.bf16.msra.mxu0 0
      %4326 = vmatprep.subr.bf16.mxu0 0
      %4327 = vmatpush1.bf16.msra.mxu0 0
      %4328 = vmatprep.subr.bf16.mxu0 0
      %4329 = vmatpush1.bf16.msra.mxu0 0
      %4330 = vmatprep.subr.bf16.mxu0 0
      %4331 = vmatpush1.bf16.msra.mxu0 0
      %4332 = vmatprep.subr.bf16.mxu0 0
      %4333 = vmatpush1.bf16.msra.mxu0 0
      %4334 = vmatprep.subr.bf16.mxu0 0
      %4335 = vmatpush1.bf16.msra.mxu0 0
      %4336 = vmatprep.subr.bf16.mxu0 0
      %4337 = vmatpush1.bf16.msra.mxu0 0
      %4338 = vmatprep.subr.bf16.mxu0 0
      %4339 = vmatpush1.bf16.msra.mxu0 0
      %4340 = vmatprep.subr.bf16.mxu0 0
      %4341 = vmatpush1.bf16.msra.mxu0 0
      %4342 = vmatprep.subr.bf16.mxu0 0
      %4343 = vmatpush1.bf16.msra.mxu0 0
      %4344 = vmatprep.subr.bf16.mxu0 0
      %4345 = vmatpush1.bf16.msra.mxu0 0
      %4346 = vmatprep.subr.bf16.mxu0 0
      %4347 = vmatpush1.bf16.msra.mxu0 0
      %4348 = vmatprep.mubr.bf16.mxu0 0
      %4349 = vmatmul.mubr.bf16.gmra.mrb[0].mxu0 %v4314
      %v4350 = vpop.f32.mrb[0].mxu0
      %v4351 = vadd.f32 0.0, %v4350
      %v4352 = vpop.f32.mrb[0].mxu0
      %v4353 = vpop.f32.mrb[0].mxu0
      %v4354 = vadd.f32 0.0, %v4353
      %v4355 = vpop.f32.mrb[0].mxu0
      %4356 = vdwg.mxu0
      %4357 = vrot.lane.b32.xlu0 %v3703, 40
      %v4358 = vpop.permute.xlu0 %4357
      %v4361 = vsel %vm1173, %v4303, 0
      %4363 = vmatprep.subr.bf16.mxu0 0
      %4364 = vmatpush1.bf16.msra.mxu0 %v4358
      %4365 = vmatprep.subr.bf16.mxu0 0
      %4366 = vmatpush1.bf16.msra.mxu0 0
      %4367 = vmatprep.subr.bf16.mxu0 0
      %4368 = vmatpush1.bf16.msra.mxu0 0
      %4369 = vmatprep.subr.bf16.mxu0 0
      %4370 = vmatpush1.bf16.msra.mxu0 0
      %4371 = vmatprep.subr.bf16.mxu0 0
      %4372 = vmatpush1.bf16.msra.mxu0 0
      %4373 = vmatprep.subr.bf16.mxu0 0
      %4374 = vmatpush1.bf16.msra.mxu0 0
      %4375 = vmatprep.subr.bf16.mxu0 0
      %4376 = vmatpush1.bf16.msra.mxu0 0
      %4377 = vmatprep.subr.bf16.mxu0 0
      %4378 = vmatpush1.bf16.msra.mxu0 0
      %4379 = vmatprep.subr.bf16.mxu0 0
      %4380 = vmatpush1.bf16.msra.mxu0 0
      %4381 = vmatprep.subr.bf16.mxu0 0
      %4382 = vmatpush1.bf16.msra.mxu0 0
      %4383 = vmatprep.subr.bf16.mxu0 0
      %4384 = vmatpush1.bf16.msra.mxu0 0
      %4385 = vmatprep.subr.bf16.mxu0 0
      %4386 = vmatpush1.bf16.msra.mxu0 0
      %4387 = vmatprep.subr.bf16.mxu0 0
      %4388 = vmatpush1.bf16.msra.mxu0 0
      %4389 = vmatprep.subr.bf16.mxu0 0
      %4390 = vmatpush1.bf16.msra.mxu0 0
      %4391 = vmatprep.subr.bf16.mxu0 0
      %4392 = vmatpush1.bf16.msra.mxu0 0
      %4393 = vmatprep.subr.bf16.mxu0 0
      %4394 = vmatpush1.bf16.msra.mxu0 0
      %4395 = vmatprep.mubr.bf16.mxu0 0
      %4396 = vmatmul.mubr.bf16.gmra.mrb[0].mxu0 %v4361
      %v4397 = vpop.f32.mrb[0].mxu0
      %v4398 = vadd.f32 0.0, %v4397
      %v4399 = vpop.f32.mrb[0].mxu0
      %v4400 = vpop.f32.mrb[0].mxu0
      %v4401 = vadd.f32 0.0, %v4400
      %v4402 = vpop.f32.mrb[0].mxu0
      %4403 = vdwg.mxu0
      %4404 = vrot.lane.b32.xlu0 %v3704, 40
      %v4405 = vpop.permute.xlu0 %4404
      %v4408 = vsel %vm1173, %v4304, 0
      %4410 = vmatprep.subr.bf16.mxu0 0
      %4411 = vmatpush1.bf16.msra.mxu0 %v4405
      %4412 = vmatprep.subr.bf16.mxu0 0
      %4413 = vmatpush1.bf16.msra.mxu0 0
      %4414 = vmatprep.subr.bf16.mxu0 0
      %4415 = vmatpush1.bf16.msra.mxu0 0
      %4416 = vmatprep.subr.bf16.mxu0 0
      %4417 = vmatpush1.bf16.msra.mxu0 0
      %4418 = vmatprep.subr.bf16.mxu0 0
      %4419 = vmatpush1.bf16.msra.mxu0 0
      %4420 = vmatprep.subr.bf16.mxu0 0
      %4421 = vmatpush1.bf16.msra.mxu0 0
      %4422 = vmatprep.subr.bf16.mxu0 0
      %4423 = vmatpush1.bf16.msra.mxu0 0
      %4424 = vmatprep.subr.bf16.mxu0 0
      %4425 = vmatpush1.bf16.msra.mxu0 0
      %4426 = vmatprep.subr.bf16.mxu0 0
      %4427 = vmatpush1.bf16.msra.mxu0 0
      %4428 = vmatprep.subr.bf16.mxu0 0
      %4429 = vmatpush1.bf16.msra.mxu0 0
      %4430 = vmatprep.subr.bf16.mxu0 0
      %4431 = vmatpush1.bf16.msra.mxu0 0
      %4432 = vmatprep.subr.bf16.mxu0 0
      %4433 = vmatpush1.bf16.msra.mxu0 0
      %4434 = vmatprep.subr.bf16.mxu0 0
      %4435 = vmatpush1.bf16.msra.mxu0 0
      %4436 = vmatprep.subr.bf16.mxu0 0
      %4437 = vmatpush1.bf16.msra.mxu0 0
      %4438 = vmatprep.subr.bf16.mxu0 0
      %4439 = vmatpush1.bf16.msra.mxu0 0
      %4440 = vmatprep.subr.bf16.mxu0 0
      %4441 = vmatpush1.bf16.msra.mxu0 0
      %4442 = vmatprep.mubr.bf16.mxu0 0
      %4443 = vmatmul.mubr.bf16.gmra.mrb[0].mxu0 %v4408
      %v4444 = vpop.f32.mrb[0].mxu0
      %v4445 = vadd.f32 0.0, %v4444
      %v4446 = vpop.f32.mrb[0].mxu0
      %v4447 = vpop.f32.mrb[0].mxu0
      %v4448 = vadd.f32 0.0, %v4447
      %v4449 = vpop.f32.mrb[0].mxu0
      %4450 = vdwg.mxu0
      %4451 = vrot.lane.b32.xlu0 %v3705, 40
      %v4452 = vpop.permute.xlu0 %4451
      %v4455 = vsel %vm1173, %v4305, 0
      %4457 = vmatprep.subr.bf16.mxu0 0
      %4458 = vmatpush1.bf16.msra.mxu0 %v4452
      %4459 = vmatprep.subr.bf16.mxu0 0
      %4460 = vmatpush1.bf16.msra.mxu0 0
      %4461 = vmatprep.subr.bf16.mxu0 0
      %4462 = vmatpush1.bf16.msra.mxu0 0
      %4463 = vmatprep.subr.bf16.mxu0 0
      %4464 = vmatpush1.bf16.msra.mxu0 0
      %4465 = vmatprep.subr.bf16.mxu0 0
      %4466 = vmatpush1.bf16.msra.mxu0 0
      %4467 = vmatprep.subr.bf16.mxu0 0
      %4468 = vmatpush1.bf16.msra.mxu0 0
      %4469 = vmatprep.subr.bf16.mxu0 0
      %4470 = vmatpush1.bf16.msra.mxu0 0
      %4471 = vmatprep.subr.bf16.mxu0 0
      %4472 = vmatpush1.bf16.msra.mxu0 0
      %4473 = vmatprep.subr.bf16.mxu0 0
      %4474 = vmatpush1.bf16.msra.mxu0 0
      %4475 = vmatprep.subr.bf16.mxu0 0
      %4476 = vmatpush1.bf16.msra.mxu0 0
      %4477 = vmatprep.subr.bf16.mxu0 0
      %4478 = vmatpush1.bf16.msra.mxu0 0
      %4479 = vmatprep.subr.bf16.mxu0 0
      %4480 = vmatpush1.bf16.msra.mxu0 0
      %4481 = vmatprep.subr.bf16.mxu0 0
      %4482 = vmatpush1.bf16.msra.mxu0 0
      %4483 = vmatprep.subr.bf16.mxu0 0
      %4484 = vmatpush1.bf16.msra.mxu0 0
      %4485 = vmatprep.subr.bf16.mxu0 0
      %4486 = vmatpush1.bf16.msra.mxu0 0
      %4487 = vmatprep.subr.bf16.mxu0 0
      %4488 = vmatpush1.bf16.msra.mxu0 0
      %4489 = vmatprep.mubr.bf16.mxu0 0
      %4490 = vmatmul.mubr.bf16.gmra.mrb[0].mxu0 %v4455
      %v4491 = vpop.f32.mrb[0].mxu0
      %v4492 = vadd.f32 0.0, %v4491
      %v4493 = vpop.f32.mrb[0].mxu0
      %v4494 = vpop.f32.mrb[0].mxu0
      %v4495 = vadd.f32 0.0, %v4494
      %v4496 = vpop.f32.mrb[0].mxu0
      %4497 = vdwg.mxu0
      %4498 = vrot.lane.b32.xlu0 %v3706, 40
      %v4499 = vpop.permute.xlu0 %4498
      %v4502 = vsel %vm1173, %v4306, 0
      %4504 = vmatprep.subr.bf16.mxu0 0
      %4505 = vmatpush1.bf16.msra.mxu0 %v4499
      %4506 = vmatprep.subr.bf16.mxu0 0
      %4507 = vmatpush1.bf16.msra.mxu0 0
      %4508 = vmatprep.subr.bf16.mxu0 0
      %4509 = vmatpush1.bf16.msra.mxu0 0
      %4510 = vmatprep.subr.bf16.mxu0 0
      %4511 = vmatpush1.bf16.msra.mxu0 0
      %4512 = vmatprep.subr.bf16.mxu0 0
      %4513 = vmatpush1.bf16.msra.mxu0 0
      %4514 = vmatprep.subr.bf16.mxu0 0
      %4515 = vmatpush1.bf16.msra.mxu0 0
      %4516 = vmatprep.subr.bf16.mxu0 0
      %4517 = vmatpush1.bf16.msra.mxu0 0
      %4518 = vmatprep.subr.bf16.mxu0 0
      %4519 = vmatpush1.bf16.msra.mxu0 0
      %4520 = vmatprep.subr.bf16.mxu0 0
      %4521 = vmatpush1.bf16.msra.mxu0 0
      %4522 = vmatprep.subr.bf16.mxu0 0
      %4523 = vmatpush1.bf16.msra.mxu0 0
      %4524 = vmatprep.subr.bf16.mxu0 0
      %4525 = vmatpush1.bf16.msra.mxu0 0
      %4526 = vmatprep.subr.bf16.mxu0 0
      %4527 = vmatpush1.bf16.msra.mxu0 0
      %4528 = vmatprep.subr.bf16.mxu0 0
      %4529 = vmatpush1.bf16.msra.mxu0 0
      %4530 = vmatprep.subr.bf16.mxu0 0
      %4531 = vmatpush1.bf16.msra.mxu0 0
      %4532 = vmatprep.subr.bf16.mxu0 0
      %4533 = vmatpush1.bf16.msra.mxu0 0
      %4534 = vmatprep.subr.bf16.mxu0 0
      %4535 = vmatpush1.bf16.msra.mxu0 0
      %4536 = vmatprep.mubr.bf16.mxu0 0
      %4537 = vmatmul.mubr.bf16.gmra.mrb[0].mxu0 %v4502
      %v4538 = vpop.f32.mrb[0].mxu0
      %v4539 = vadd.f32 0.0, %v4538
      %v4540 = vpop.f32.mrb[0].mxu0
      %v4541 = vpop.f32.mrb[0].mxu0
      %v4542 = vadd.f32 0.0, %v4541
      %v4543 = vpop.f32.mrb[0].mxu0
      %4544 = vdwg.mxu0
      %4545 = vrot.lane.b32.xlu0 %v3707, 40
      %v4546 = vpop.permute.xlu0 %4545
      %v4549 = vsel %vm1173, %v4307, 0
      %4551 = vmatprep.subr.bf16.mxu0 0
      %4552 = vmatpush1.bf16.msra.mxu0 %v4546
      %4553 = vmatprep.subr.bf16.mxu0 0
      %4554 = vmatpush1.bf16.msra.mxu0 0
      %4555 = vmatprep.subr.bf16.mxu0 0
      %4556 = vmatpush1.bf16.msra.mxu0 0
      %4557 = vmatprep.subr.bf16.mxu0 0
      %4558 = vmatpush1.bf16.msra.mxu0 0
      %4559 = vmatprep.subr.bf16.mxu0 0
      %4560 = vmatpush1.bf16.msra.mxu0 0
      %4561 = vmatprep.subr.bf16.mxu0 0
      %4562 = vmatpush1.bf16.msra.mxu0 0
      %4563 = vmatprep.subr.bf16.mxu0 0
      %4564 = vmatpush1.bf16.msra.mxu0 0
      %4565 = vmatprep.subr.bf16.mxu0 0
      %4566 = vmatpush1.bf16.msra.mxu0 0
      %4567 = vmatprep.subr.bf16.mxu0 0
      %4568 = vmatpush1.bf16.msra.mxu0 0
      %4569 = vmatprep.subr.bf16.mxu0 0
      %4570 = vmatpush1.bf16.msra.mxu0 0
      %4571 = vmatprep.subr.bf16.mxu0 0
      %4572 = vmatpush1.bf16.msra.mxu0 0
      %4573 = vmatprep.subr.bf16.mxu0 0
      %4574 = vmatpush1.bf16.msra.mxu0 0
      %4575 = vmatprep.subr.bf16.mxu0 0
      %4576 = vmatpush1.bf16.msra.mxu0 0
      %4577 = vmatprep.subr.bf16.mxu0 0
      %4578 = vmatpush1.bf16.msra.mxu0 0
      %4579 = vmatprep.subr.bf16.mxu0 0
      %4580 = vmatpush1.bf16.msra.mxu0 0
      %4581 = vmatprep.subr.bf16.mxu0 0
      %4582 = vmatpush1.bf16.msra.mxu0 0
      %4583 = vmatprep.mubr.bf16.mxu0 0
      %4584 = vmatmul.mubr.bf16.gmra.mrb[0].mxu0 %v4549
      %v4585 = vpop.f32.mrb[0].mxu0
      %v4586 = vadd.f32 0.0, %v4585
      %v4587 = vpop.f32.mrb[0].mxu0
      %v4588 = vpop.f32.mrb[0].mxu0
      %v4589 = vadd.f32 0.0, %v4588
      %v4590 = vpop.f32.mrb[0].mxu0
      %4591 = vdwg.mxu0
      %4592 = vrot.lane.b32.xlu0 %v3708, 40
      %v4593 = vpop.permute.xlu0 %4592
      %v4596 = vsel %vm1173, %v4308, 0
      %4598 = vmatprep.subr.bf16.mxu0 0
      %4599 = vmatpush1.bf16.msra.mxu0 %v4593
      %4600 = vmatprep.subr.bf16.mxu0 0
      %4601 = vmatpush1.bf16.msra.mxu0 0
      %4602 = vmatprep.subr.bf16.mxu0 0
      %4603 = vmatpush1.bf16.msra.mxu0 0
      %4604 = vmatprep.subr.bf16.mxu0 0
      %4605 = vmatpush1.bf16.msra.mxu0 0
      %4606 = vmatprep.subr.bf16.mxu0 0
      %4607 = vmatpush1.bf16.msra.mxu0 0
      %4608 = vmatprep.subr.bf16.mxu0 0
      %4609 = vmatpush1.bf16.msra.mxu0 0
      %4610 = vmatprep.subr.bf16.mxu0 0
      %4611 = vmatpush1.bf16.msra.mxu0 0
      %4612 = vmatprep.subr.bf16.mxu0 0
      %4613 = vmatpush1.bf16.msra.mxu0 0
      %4614 = vmatprep.subr.bf16.mxu0 0
      %4615 = vmatpush1.bf16.msra.mxu0 0
      %4616 = vmatprep.subr.bf16.mxu0 0
      %4617 = vmatpush1.bf16.msra.mxu0 0
      %4618 = vmatprep.subr.bf16.mxu0 0
      %4619 = vmatpush1.bf16.msra.mxu0 0
      %4620 = vmatprep.subr.bf16.mxu0 0
      %4621 = vmatpush1.bf16.msra.mxu0 0
      %4622 = vmatprep.subr.bf16.mxu0 0
      %4623 = vmatpush1.bf16.msra.mxu0 0
      %4624 = vmatprep.subr.bf16.mxu0 0
      %4625 = vmatpush1.bf16.msra.mxu0 0
      %4626 = vmatprep.subr.bf16.mxu0 0
      %4627 = vmatpush1.bf16.msra.mxu0 0
      %4628 = vmatprep.subr.bf16.mxu0 0
      %4629 = vmatpush1.bf16.msra.mxu0 0
      %4630 = vmatprep.mubr.bf16.mxu0 0
      %4631 = vmatmul.mubr.bf16.gmra.mrb[0].mxu0 %v4596
      %v4632 = vpop.f32.mrb[0].mxu0
      %v4633 = vadd.f32 0.0, %v4632
      %v4634 = vpop.f32.mrb[0].mxu0
      %v4635 = vpop.f32.mrb[0].mxu0
      %v4636 = vadd.f32 0.0, %v4635
      %v4637 = vpop.f32.mrb[0].mxu0
      %4638 = vdwg.mxu0
      %4639 = vrot.lane.b32.xlu0 %v3709, 40
      %v4640 = vpop.permute.xlu0 %4639
      %v4643 = vsel %vm1173, %v4309, 0
      %4645 = vmatprep.subr.bf16.mxu0 0
      %4646 = vmatpush1.bf16.msra.mxu0 %v4640
      %4647 = vmatprep.subr.bf16.mxu0 0
      %4648 = vmatpush1.bf16.msra.mxu0 0
      %4649 = vmatprep.subr.bf16.mxu0 0
      %4650 = vmatpush1.bf16.msra.mxu0 0
      %4651 = vmatprep.subr.bf16.mxu0 0
      %4652 = vmatpush1.bf16.msra.mxu0 0
      %4653 = vmatprep.subr.bf16.mxu0 0
      %4654 = vmatpush1.bf16.msra.mxu0 0
      %4655 = vmatprep.subr.bf16.mxu0 0
      %4656 = vmatpush1.bf16.msra.mxu0 0
      %4657 = vmatprep.subr.bf16.mxu0 0
      %4658 = vmatpush1.bf16.msra.mxu0 0
      %4659 = vmatprep.subr.bf16.mxu0 0
      %4660 = vmatpush1.bf16.msra.mxu0 0
      %4661 = vmatprep.subr.bf16.mxu0 0
      %4662 = vmatpush1.bf16.msra.mxu0 0
      %4663 = vmatprep.subr.bf16.mxu0 0
      %4664 = vmatpush1.bf16.msra.mxu0 0
      %4665 = vmatprep.subr.bf16.mxu0 0
      %4666 = vmatpush1.bf16.msra.mxu0 0
      %4667 = vmatprep.subr.bf16.mxu0 0
      %4668 = vmatpush1.bf16.msra.mxu0 0
      %4669 = vmatprep.subr.bf16.mxu0 0
      %4670 = vmatpush1.bf16.msra.mxu0 0
      %4671 = vmatprep.subr.bf16.mxu0 0
      %4672 = vmatpush1.bf16.msra.mxu0 0
      %4673 = vmatprep.subr.bf16.mxu0 0
      %4674 = vmatpush1.bf16.msra.mxu0 0
      %4675 = vmatprep.subr.bf16.mxu0 0
      %4676 = vmatpush1.bf16.msra.mxu0 0
      %4677 = vmatprep.mubr.bf16.mxu0 0
      %4678 = vmatmul.mubr.bf16.gmra.mrb[0].mxu0 %v4643
      %v4679 = vpop.f32.mrb[0].mxu0
      %v4680 = vadd.f32 0.0, %v4679
      %v4681 = vpop.f32.mrb[0].mxu0
      %v4682 = vpop.f32.mrb[0].mxu0
      %v4683 = vadd.f32 0.0, %v4682
      %v4684 = vpop.f32.mrb[0].mxu0
      %4685 = vdwg.mxu0
      %4702 = vrot.lane.b32.xlu0 %v2383, 8
      %v4703 = vpop.permute.xlu0 %4702
      %4704 = vrot.lane.b32.xlu0 %v2386, 8
      %v4705 = vpop.permute.xlu0 %4704
      %4706 = vrot.lane.b32.xlu0 %v2430, 8
      %v4707 = vpop.permute.xlu0 %4706
      %4708 = vrot.lane.b32.xlu0 %v2433, 8
      %v4709 = vpop.permute.xlu0 %4708
      %4710 = vrot.lane.b32.xlu0 %v2477, 8
      %v4711 = vpop.permute.xlu0 %4710
      %4712 = vrot.lane.b32.xlu0 %v2480, 8
      %v4713 = vpop.permute.xlu0 %4712
      %4714 = vrot.lane.b32.xlu0 %v2524, 8
      %v4715 = vpop.permute.xlu0 %4714
      %4716 = vrot.lane.b32.xlu0 %v2527, 8
      %v4717 = vpop.permute.xlu0 %4716
      %4718 = vrot.lane.b32.xlu0 %v2571, 8
      %v4719 = vpop.permute.xlu0 %4718
      %4720 = vrot.lane.b32.xlu0 %v2574, 8
      %v4721 = vpop.permute.xlu0 %4720
      %4722 = vrot.lane.b32.xlu0 %v2618, 8
      %v4723 = vpop.permute.xlu0 %4722
      %4724 = vrot.lane.b32.xlu0 %v2621, 8
      %v4725 = vpop.permute.xlu0 %4724
      %4726 = vrot.lane.b32.xlu0 %v2665, 8
      %v4727 = vpop.permute.xlu0 %4726
      %4728 = vrot.lane.b32.xlu0 %v2668, 8
      %v4729 = vpop.permute.xlu0 %4728
      %4730 = vrot.lane.b32.xlu0 %v2712, 8
      %v4731 = vpop.permute.xlu0 %4730
      %4732 = vrot.lane.b32.xlu0 %v2715, 8
      %v4733 = vpop.permute.xlu0 %4732
      %4766 = vrot.lane.b32.xlu0 %v3367, 16
      %v4767 = vpop.permute.xlu0 %4766
      %4768 = vrot.lane.b32.xlu0 %v3370, 16
      %v4769 = vpop.permute.xlu0 %4768
      %4770 = vrot.lane.b32.xlu0 %v3414, 16
      %v4771 = vpop.permute.xlu0 %4770
      %4772 = vrot.lane.b32.xlu0 %v3417, 16
      %v4773 = vpop.permute.xlu0 %4772
      %4774 = vrot.lane.b32.xlu0 %v3461, 16
      %v4775 = vpop.permute.xlu0 %4774
      %4776 = vrot.lane.b32.xlu0 %v3464, 16
      %v4777 = vpop.permute.xlu0 %4776
      %4778 = vrot.lane.b32.xlu0 %v3508, 16
      %v4779 = vpop.permute.xlu0 %4778
      %4780 = vrot.lane.b32.xlu0 %v3511, 16
      %v4781 = vpop.permute.xlu0 %4780
      %4782 = vrot.lane.b32.xlu0 %v3555, 16
      %v4783 = vpop.permute.xlu0 %4782
      %4784 = vrot.lane.b32.xlu0 %v3558, 16
      %v4785 = vpop.permute.xlu0 %4784
      %4786 = vrot.lane.b32.xlu0 %v3602, 16
      %v4787 = vpop.permute.xlu0 %4786
      %4788 = vrot.lane.b32.xlu0 %v3605, 16
      %v4789 = vpop.permute.xlu0 %4788
      %4790 = vrot.lane.b32.xlu0 %v3649, 16
      %v4791 = vpop.permute.xlu0 %4790
      %4792 = vrot.lane.b32.xlu0 %v3652, 16
      %v4793 = vpop.permute.xlu0 %4792
      %4794 = vrot.lane.b32.xlu0 %v3696, 16
      %v4795 = vpop.permute.xlu0 %4794
      %4796 = vrot.lane.b32.xlu0 %v3699, 16
      %v4797 = vpop.permute.xlu0 %4796
      %4830 = vrot.lane.b32.xlu0 %v4351, 24
      %v4831 = vpop.permute.xlu0 %4830
      %4832 = vrot.lane.b32.xlu0 %v4354, 24
      %v4833 = vpop.permute.xlu0 %4832
      %4834 = vrot.lane.b32.xlu0 %v4398, 24
      %v4835 = vpop.permute.xlu0 %4834
      %4836 = vrot.lane.b32.xlu0 %v4401, 24
      %v4837 = vpop.permute.xlu0 %4836
      %4838 = vrot.lane.b32.xlu0 %v4445, 24
      %v4839 = vpop.permute.xlu0 %4838
      %4840 = vrot.lane.b32.xlu0 %v4448, 24
      %v4841 = vpop.permute.xlu0 %4840
      %4842 = vrot.lane.b32.xlu0 %v4492, 24
      %v4843 = vpop.permute.xlu0 %4842
      %4844 = vrot.lane.b32.xlu0 %v4495, 24
      %v4845 = vpop.permute.xlu0 %4844
      %4846 = vrot.lane.b32.xlu0 %v4539, 24
      %v4847 = vpop.permute.xlu0 %4846
      %4848 = vrot.lane.b32.xlu0 %v4542, 24
      %v4849 = vpop.permute.xlu0 %4848
      %4850 = vrot.lane.b32.xlu0 %v4586, 24
      %v4851 = vpop.permute.xlu0 %4850
      %4852 = vrot.lane.b32.xlu0 %v4589, 24
      %v4853 = vpop.permute.xlu0 %4852
      %4854 = vrot.lane.b32.xlu0 %v4633, 24
      %v4855 = vpop.permute.xlu0 %4854
      %4856 = vrot.lane.b32.xlu0 %v4636, 24
      %v4857 = vpop.permute.xlu0 %4856
      %4858 = vrot.lane.b32.xlu0 %v4680, 24
      %v4859 = vpop.permute.xlu0 %4858
      %4860 = vrot.lane.b32.xlu0 %v4683, 24
      %v4861 = vpop.permute.xlu0 %4860
      %v4878 = vsel %vm775, %v1399, %v4703
      %v4879 = vsel %vm775, %v1402, %v4705
      %v4880 = vsel %vm775, %v1446, %v4707
      %v4881 = vsel %vm775, %v1449, %v4709
      %v4882 = vsel %vm775, %v1493, %v4711
      %v4883 = vsel %vm775, %v1496, %v4713
      %v4884 = vsel %vm775, %v1540, %v4715
      %v4885 = vsel %vm775, %v1543, %v4717
      %v4886 = vsel %vm775, %v1587, %v4719
      %v4887 = vsel %vm775, %v1590, %v4721
      %v4888 = vsel %vm775, %v1634, %v4723
      %v4889 = vsel %vm775, %v1637, %v4725
      %v4890 = vsel %vm775, %v1681, %v4727
      %v4891 = vsel %vm775, %v1684, %v4729
      %v4892 = vsel %vm775, %v1728, %v4731
      %v4893 = vsel %vm775, %v1731, %v4733
      %v4894 = vsel %vm1173, %v4878, %v4767
      %v4895 = vsel %vm1173, %v4879, %v4769
      %v4896 = vsel %vm1173, %v4880, %v4771
      %v4897 = vsel %vm1173, %v4881, %v4773
      %v4898 = vsel %vm1173, %v4882, %v4775
      %v4899 = vsel %vm1173, %v4883, %v4777
      %v4900 = vsel %vm1173, %v4884, %v4779
      %v4901 = vsel %vm1173, %v4885, %v4781
      %v4902 = vsel %vm1173, %v4886, %v4783
      %v4903 = vsel %vm1173, %v4887, %v4785
      %v4904 = vsel %vm1173, %v4888, %v4787
      %v4905 = vsel %vm1173, %v4889, %v4789
      %v4906 = vsel %vm1173, %v4890, %v4791
      %v4907 = vsel %vm1173, %v4891, %v4793
      %v4908 = vsel %vm1173, %v4892, %v4795
      %v4909 = vsel %vm1173, %v4893, %v4797
      %vm4910 = vcmask 195584
      %v4911 = vsel %vm4910, %v4894, %v4831
      %v4912 = vsel %vm4910, %v4895, %v4833
      %v4913 = vsel %vm4910, %v4896, %v4835
      %v4914 = vsel %vm4910, %v4897, %v4837
      %v4915 = vsel %vm4910, %v4898, %v4839
      %v4916 = vsel %vm4910, %v4899, %v4841
      %v4917 = vsel %vm4910, %v4900, %v4843
      %v4918 = vsel %vm4910, %v4901, %v4845
      %v4919 = vsel %vm4910, %v4902, %v4847
      %v4920 = vsel %vm4910, %v4903, %v4849
      %v4921 = vsel %vm4910, %v4904, %v4851
      %v4922 = vsel %vm4910, %v4905, %v4853
      %v4923 = vsel %vm4910, %v4906, %v4855
      %v4924 = vsel %vm4910, %v4907, %v4857
      %v4925 = vsel %vm4910, %v4908, %v4859
      %v4926 = vsel %vm4910, %v4909, %v4861
      %v4927 = vpack.c.bf16 %v4912, %v4911
      %v4928 = vpack.c.bf16 %v4914, %v4913
      %v4929 = vpack.c.bf16 %v4916, %v4915
      %v4930 = vpack.c.bf16 %v4918, %v4917
      %v4931 = vpack.c.bf16 %v4920, %v4919
      %v4932 = vpack.c.bf16 %v4922, %v4921
      %v4933 = vpack.c.bf16 %v4924, %v4923
      %v4934 = vpack.c.bf16 %v4926, %v4925
      %v4935 = vld [vmem:[%s6] sm:$0xf]
      %v4936 = vld [vmem:[%s6 + $0x4] sm:$0xf]
      %v4937 = vld [vmem:[%s6 + $0x8] sm:$0xf]
      %v4938 = vld [vmem:[%s6 + $0xc] sm:$0xf]
      %v4939 = vld [vmem:[%s7] sm:$0x1]
      %v4941 = vlaneseq
      %v4942 = vshrl.u32 %v4941, 7
      %v4943 = vsub.s32 0, %v4942
      %v4944 = vrot.slane %v4939, %v4943
      %v4950 = vunpack.c.l.b16 %v4935
      %v4951 = vunpack.c.l.b16 %v4936
      %v4952 = vunpack.c.l.b16 %v4937
      %v4953 = vunpack.c.l.b16 %v4938
      %v4954 = vpack.c.b16 %v4951, %v4950
      %v4955 = vpack.c.b16 %v4953, %v4952
      %v4959 = vsel %vm331, %v4927, 0
      %v4962 = vsel %vm331, %v4928, 0
      %v4965 = vsel %vm331, %v4929, 0
      %v4968 = vsel %vm331, %v4930, 0
      %v4971 = vsel %vm331, %v4931, 0
      %v4974 = vsel %vm331, %v4932, 0
      %v4977 = vsel %vm331, %v4933, 0
      %v4980 = vsel %vm331, %v4934, 0
      %4982 = vmatprep.subr.bf16.mxu0 0
      %4983 = vmatpush1.bf16.msra.mxu0 %v4954
      %4984 = vmatprep.subr.bf16.mxu0 0
      %4985 = vmatpush1.bf16.msra.mxu0 %v4955
      %4986 = vmatprep.subr.bf16.mxu0 0
      %4987 = vmatpush1.bf16.msra.mxu0 0
      %4988 = vmatprep.subr.bf16.mxu0 0
      %4989 = vmatpush1.bf16.msra.mxu0 0
      %4990 = vmatprep.subr.bf16.mxu0 0
      %4991 = vmatpush1.bf16.msra.mxu0 0
      %4992 = vmatprep.subr.bf16.mxu0 0
      %4993 = vmatpush1.bf16.msra.mxu0 0
      %4994 = vmatprep.subr.bf16.mxu0 0
      %4995 = vmatpush1.bf16.msra.mxu0 0
      %4996 = vmatprep.subr.bf16.mxu0 0
      %4997 = vmatpush1.bf16.msra.mxu0 0
      %4998 = vmatprep.subr.bf16.mxu0 0
      %4999 = vmatpush1.bf16.msra.mxu0 0
      %5000 = vmatprep.subr.bf16.mxu0 0
      %5001 = vmatpush1.bf16.msra.mxu0 0
      %5002 = vmatprep.subr.bf16.mxu0 0
      %5003 = vmatpush1.bf16.msra.mxu0 0
      %5004 = vmatprep.subr.bf16.mxu0 0
      %5005 = vmatpush1.bf16.msra.mxu0 0
      %5006 = vmatprep.subr.bf16.mxu0 0
      %5007 = vmatpush1.bf16.msra.mxu0 0
      %5008 = vmatprep.subr.bf16.mxu0 0
      %5009 = vmatpush1.bf16.msra.mxu0 0
      %5010 = vmatprep.subr.bf16.mxu0 0
      %5011 = vmatpush1.bf16.msra.mxu0 0
      %5012 = vmatprep.subr.bf16.mxu0 0
      %5013 = vmatpush1.bf16.msra.mxu0 0
      %5014 = vmatprep.mubr.bf16.mxu0 0
      %5015 = vmatmul.mubr.bf16.gmra.mrb[0].mxu0 %v4959
      %v5016 = vpop.f32.mrb[0].mxu0
      %v5017 = vadd.f32 %v4944, %v5016
      %v5018 = vpop.f32.mrb[0].mxu0
      %v5019 = vpop.f32.mrb[0].mxu0
      %v5020 = vadd.f32 %v4944, %v5019
      %v5021 = vpop.f32.mrb[0].mxu0
      %5022 = vmatprep.mubr.bf16.mxu0 0
      %5023 = vmatmul.mubr.bf16.gmra.mrb[0].mxu0 %v4962
      %v5024 = vpop.f32.mrb[0].mxu0
      %v5025 = vadd.f32 %v4944, %v5024
      %v5026 = vpop.f32.mrb[0].mxu0
      %v5027 = vpop.f32.mrb[0].mxu0
      %v5028 = vadd.f32 %v4944, %v5027
      %v5029 = vpop.f32.mrb[0].mxu0
      %5030 = vmatprep.mubr.bf16.mxu0 0
      %5031 = vmatmul.mubr.bf16.gmra.mrb[0].mxu0 %v4965
      %v5032 = vpop.f32.mrb[0].mxu0
      %v5033 = vadd.f32 %v4944, %v5032
      %v5034 = vpop.f32.mrb[0].mxu0
      %v5035 = vpop.f32.mrb[0].mxu0
      %v5036 = vadd.f32 %v4944, %v5035
      %v5037 = vpop.f32.mrb[0].mxu0
      %5038 = vmatprep.mubr.bf16.mxu0 0
      %5039 = vmatmul.mubr.bf16.gmra.mrb[0].mxu0 %v4968
      %v5040 = vpop.f32.mrb[0].mxu0
      %v5041 = vadd.f32 %v4944, %v5040
      %v5042 = vpop.f32.mrb[0].mxu0
      %v5043 = vpop.f32.mrb[0].mxu0
      %v5044 = vadd.f32 %v4944, %v5043
      %v5045 = vpop.f32.mrb[0].mxu0
      %5046 = vmatprep.mubr.bf16.mxu0 0
      %5047 = vmatmul.mubr.bf16.gmra.mrb[0].mxu0 %v4971
      %v5048 = vpop.f32.mrb[0].mxu0
      %v5049 = vadd.f32 %v4944, %v5048
      %v5050 = vpop.f32.mrb[0].mxu0
      %v5051 = vpop.f32.mrb[0].mxu0
      %v5052 = vadd.f32 %v4944, %v5051
      %v5053 = vpop.f32.mrb[0].mxu0
      %5054 = vmatprep.mubr.bf16.mxu0 0
      %5055 = vmatmul.mubr.bf16.gmra.mrb[0].mxu0 %v4974
      %v5056 = vpop.f32.mrb[0].mxu0
      %v5057 = vadd.f32 %v4944, %v5056
      %v5058 = vpop.f32.mrb[0].mxu0
      %v5059 = vpop.f32.mrb[0].mxu0
      %v5060 = vadd.f32 %v4944, %v5059
      %v5061 = vpop.f32.mrb[0].mxu0
      %5062 = vmatprep.mubr.bf16.mxu0 0
      %5063 = vmatmul.mubr.bf16.gmra.mrb[0].mxu0 %v4977
      %v5064 = vpop.f32.mrb[0].mxu0
      %v5065 = vadd.f32 %v4944, %v5064
      %v5066 = vpop.f32.mrb[0].mxu0
      %v5067 = vpop.f32.mrb[0].mxu0
      %v5068 = vadd.f32 %v4944, %v5067
      %v5069 = vpop.f32.mrb[0].mxu0
      %5070 = vmatprep.mubr.bf16.mxu0 0
      %5071 = vmatmul.mubr.bf16.gmra.mrb[0].mxu0 %v4980
      %v5072 = vpop.f32.mrb[0].mxu0
      %v5073 = vadd.f32 %v4944, %v5072
      %v5074 = vpop.f32.mrb[0].mxu0
      %v5075 = vpop.f32.mrb[0].mxu0
      %v5076 = vadd.f32 %v4944, %v5075
      %v5077 = vpop.f32.mrb[0].mxu0
      %5078 = vdwg.mxu0
      %v5079 = vadd.f32 %v315, %v5017
      %v5080 = vadd.f32 %v316, %v5020
      %v5081 = vadd.f32 %v317, %v5025
      %v5082 = vadd.f32 %v318, %v5028
      %v5083 = vadd.f32 %v319, %v5033
      %v5084 = vadd.f32 %v320, %v5036
      %v5085 = vadd.f32 %v321, %v5041
      %v5086 = vadd.f32 %v322, %v5044
      %v5087 = vadd.f32 %v323, %v5049
      %v5088 = vadd.f32 %v324, %v5052
      %v5089 = vadd.f32 %v325, %v5057
      %v5090 = vadd.f32 %v326, %v5060
      %v5091 = vadd.f32 %v327, %v5065
      %v5092 = vadd.f32 %v328, %v5068
      %v5093 = vadd.f32 %v329, %v5073
      %v5094 = vadd.f32 %v330, %v5076
      %5095 = vst.msk [vmem:[%s312] sm:$0xff] %vm331, %v5079
      %5096 = vst.msk [vmem:[%s312 + $0x8] sm:$0xff] %vm331, %v5080
      %5097 = vst.msk [vmem:[%s312 + $0x10] sm:$0xff] %vm331, %v5081
      %5098 = vst.msk [vmem:[%s312 + $0x18] sm:$0xff] %vm331, %v5082
      %5099 = vst.msk [vmem:[%s312 + $0x20] sm:$0xff] %vm331, %v5083
      %5100 = vst.msk [vmem:[%s312 + $0x28] sm:$0xff] %vm331, %v5084
      %5101 = vst.msk [vmem:[%s312 + $0x30] sm:$0xff] %vm331, %v5085
      %5102 = vst.msk [vmem:[%s312 + $0x38] sm:$0xff] %vm331, %v5086
      %5103 = vst.msk [vmem:[%s312 + $0x40] sm:$0xff] %vm331, %v5087
      %5104 = vst.msk [vmem:[%s312 + $0x48] sm:$0xff] %vm331, %v5088
      %5105 = vst.msk [vmem:[%s312 + $0x50] sm:$0xff] %vm331, %v5089
      %5106 = vst.msk [vmem:[%s312 + $0x58] sm:$0xff] %vm331, %v5090
      %5107 = vst.msk [vmem:[%s312 + $0x60] sm:$0xff] %vm331, %v5091
      %5108 = vst.msk [vmem:[%s312 + $0x68] sm:$0xff] %vm331, %v5092
      %5109 = vst.msk [vmem:[%s312 + $0x70] sm:$0xff] %vm331, %v5093
      %5110 = vst.msk [vmem:[%s312 + $0x78] sm:$0xff] %vm331, %v5094
      %s5111 = smul.u32 8, %s19
      %p5112 = scmp.lt.s32.totalorder %s5111, 15
      %s5113 = scalar_select %p5112, %s5111, 15
      %s5114 = smul.addr %s5113, 2
      %s5115 = smul.addr %s5114, 8
      %s5116 = scalar_lea.vmem %s8, %s5115
      // Predicated region
      $region53: #{space_transformer_forward.4} parent=51 // pred_check
        %p5117 = pneg %p210
      $region54: #{space_transformer_forward.4} parent=51 // pred_check_branch
        %5119 = sbr.rel (%p5117) target = $region56
      $region55: #{space_transformer_forward.4} parent=51 // pred_region
        %s5120 = smul.u32 8, %s19
      $region56: #{space_transformer_forward.4} parent=51 // pred_fallthru
        _
    $region52: #{space_transformer_forward.4} parent=5 // pred_fallthru
      _
    %p5121 = scmp.le.s32.totalorder 2, %s14
    // Predicated region
    $region57: #{space_transformer_forward.4} parent=5 // pred_check
      %p5122 = pneg %p5121
    $region58: #{space_transformer_forward.4} parent=5 // pred_check_branch
      %5124 = sbr.rel (%p5122) target = $region60
    $region59: #{space_transformer_forward.4} parent=5 // pred_region
      %s5125 = ssub.s32 %s14, 2
      // Predicated region
      $region61: #{space_transformer_forward.4} parent=59 // pred_check
        %p5126 = pneg %p216
      $region62: #{space_transformer_forward.4} parent=59 // pred_check_branch
        %5128 = sbr.rel (%p5126) target = $region64
      $region63: #{space_transformer_forward.4} parent=59 // pred_region
        %s5129 = smul.u32 8, %s20
        %p5130 = scmp.lt.s32.totalorder %s5129, 15
        %s5131 = scalar_select %p5130, %s5129, 15
        %s5132 = smul.addr %s5131, 2
        %s5133 = smul.addr %s5132, 8
        %s5134 = scalar_lea.vmem %s8, %s5133
      $region64: #{space_transformer_forward.4} parent=59 // pred_fallthru
        _
    $region60: #{space_transformer_forward.4} parent=5 // pred_fallthru
      _
  $region6: #{space_transformer_forward.4} parent=0 // loop_footer
    %s18 = sadd.s32 1, %s14
  $region7: #{space_transformer_forward.4} parent=0 // loop_footer_branch
    %13 = sbr.rel target = $region3
  $region8: #{space_transformer_forward.4} parent=0 // loop_exit
    _

</llo_original>
